<compile_context>
chip_gen: v7x
topology: tpu7x:2x2x1
jax: 0.10.0
libtpu: 0.0.40
codegen_flags: <defaults>
</compile_context>

<pallas_src>
import functools

import jax
import jax.numpy as jnp
from jax import lax
from jax.experimental import pallas as pl
from jax.experimental.pallas import tpu as pltpu


# ----------------------------------------------------------------------------
# Fused conv stack kernel: 5 x (Conv1d k=3 replicate-pad + affine + ReLU)
# Activations kept as (C, nb*L) slabs; neighbour taps via lane roll + edge fix.
# ----------------------------------------------------------------------------
def _make_conv_stack_kernel(num_layers, L, nb):
    def kernel(*args):
        x_ref = args[0]                                   # (nb, C0, L) f32
        out_ref = args[1 + 3 * num_layers]                # (nb, Cf, L) f32

        if nb == 1:
            a = x_ref[0]                                  # (C0, L)
        else:
            a = jnp.concatenate([x_ref[i] for i in range(nb)], axis=1)

        nl = nb * L
        col = lax.broadcasted_iota(jnp.int32, (1, nl), 1)
        is_first = (col % L) == 0                         # left replicate edge
        is_last = (col % L) == (L - 1)                    # right replicate edge

        for i in range(num_layers):
            w_ref = args[1 + 3 * i]                       # (3, Cout, Cin) bf16
            s_ref = args[2 + 3 * i]                       # (Cout, 1) f32
            b_ref = args[3 + 3 * i]                       # (Cout, 1) f32

            # x[l-1] / x[l+1] taps: XLU lane roll, edge columns fixed by a
            # VPU select (replicate padding); no scratch stores, no masked vst.
            xp = jnp.where(is_first, a, pltpu.roll(a, shift=1, axis=1))
            xn = jnp.where(is_last, a, pltpu.roll(a, shift=nl - 1, axis=1))
            a16 = a.astype(jnp.bfloat16)

            y = (jnp.dot(w_ref[0], xp.astype(jnp.bfloat16),
                         preferred_element_type=jnp.float32)
                 + jnp.dot(w_ref[1], a16, preferred_element_type=jnp.float32)
                 + jnp.dot(w_ref[2], xn.astype(jnp.bfloat16),
                           preferred_element_type=jnp.float32))
            y = y * s_ref[...] + b_ref[...]               # folded BN (or bias)
            a = jnp.maximum(y, 0.0)                       # ReLU

        if nb == 1:
            out_ref[0] = a.astype(out_ref.dtype)          # lane-dense (Cf, 160)
        else:
            for i in range(nb):
                out_ref[i] = a[:, i * L:(i + 1) * L].astype(out_ref.dtype)

    return kernel


def _pick_samples_per_block(N):
    # Pack several samples per grid step, but keep >=2 grid steps so v7x's
    # two TensorCores both get work.
    for nb in (8, 4, 2):
        if N % nb == 0 and N // nb >= 2:
            return nb
    return 1


def conv_stack(x_ncl, conv_params):
    """x_ncl: (N, C0, L) f32 (PyTorch layout). Returns (N, C_final, L) f32."""
    N, C0, L = x_ncl.shape
    num_layers = len(conv_params)
    c_final = conv_params[-1]["w_taps"].shape[1]
    nb = _pick_samples_per_block(N)

    inputs = [x_ncl]
    in_specs = [pl.BlockSpec((nb, C0, L), lambda n: (n, 0, 0))]
    flops = 0
    bytes_accessed = x_ncl.size * x_ncl.dtype.itemsize
    for p in conv_params:
        w, s, b = p["w_taps"], p["scale"], p["bias"]
        inputs += [w, s, b]
        in_specs += [pl.BlockSpec(w.shape, lambda n: (0, 0, 0)),
                     pl.BlockSpec(s.shape, lambda n: (0, 0)),
                     pl.BlockSpec(b.shape, lambda n: (0, 0))]
        flops += 2 * N * L * w.shape[0] * w.shape[1] * w.shape[2]
        bytes_accessed += (w.size * w.dtype.itemsize + s.size * 4 + b.size * 4)
    bytes_accessed += N * L * c_final * 4

    return pl.pallas_call(
        _make_conv_stack_kernel(num_layers, L, nb),
        grid=(N // nb,),
        out_shape=jax.ShapeDtypeStruct((N, c_final, L), jnp.float32),
        in_specs=in_specs,
        out_specs=pl.BlockSpec((nb, c_final, L), lambda n: (n, 0, 0)),
        compiler_params=pltpu.CompilerParams(
            dimension_semantics=("parallel",),
            vmem_limit_bytes=32 * 1024 * 1024),
        cost_estimate=pl.CostEstimate(flops=flops, transcendentals=0,
                                      bytes_accessed=bytes_accessed),
    )(*inputs)


# ----------------------------------------------------------------------------
# Fused multi-layer LSTM kernel (hoisted input projections, windowed recurrence)
# ----------------------------------------------------------------------------
def _make_lstm_stack_kernel(num_layers, T, B, H, U):
    n_in = 1 + 3 * num_layers + 2
    rows = U * B                      # rows handled per unrolled window

    def kernel(*args):
        in_refs = args[:n_in]
        y_ref, hT_ref, cT_ref = args[n_in:n_in + 3]
        xproj, ybuf = args[n_in + 3:]
        seq_ref = in_refs[0]                              # (T*B, I)
        h0_ref = in_refs[n_in - 2]                        # (num_layers, B, H)
        c0_ref = in_refs[n_in - 1]

        for l in range(num_layers):
            wih_ref = in_refs[1 + 3 * l]                  # (in_dim, 4H) bf16
            whh_ref = in_refs[2 + 3 * l]                  # (H, 4H) bf16
            b_ref = in_refs[3 + 3 * l]                    # (1, 4H) f32
            src_ref = seq_ref if l == 0 else ybuf
            out_ref = y_ref if l == num_layers - 1 else ybuf

            # Hoisted input projection for the whole sequence: one MXU GEMM.
            xproj[...] = (jnp.dot(src_ref[...].astype(jnp.bfloat16), wih_ref[...],
                                  preferred_element_type=jnp.float32)
                          + b_ref[...])
            whh = whh_ref[...]                            # bf16 (H, 4H)

            def window(w, carry):
                h, c = carry
                base = pl.multiple_of(w * rows, rows)
                xg = xproj[pl.ds(base, rows), :]          # one aligned chunk load
                hs = []
                for u in range(U):                        # U serial steps, unrolled
                    g = (xg[u * B:(u + 1) * B, :]
                         + jnp.dot(h.astype(jnp.bfloat16), whh,
                                   preferred_element_type=jnp.float32))
                    # gate columns pre-permuted to [i | f | o | g]:
                    sig = jax.nn.sigmoid(g[:, 0:3 * H])   # one EUP dispatch
                    gg = jnp.tanh(g[:, 3 * H:4 * H])
                    c = sig[:, H:2 * H] * c + sig[:, 0:H] * gg
                    h = sig[:, 2 * H:3 * H] * jnp.tanh(c)
                    hs.append(h)
                # one aligned multi-row store per window (no per-step masked vst)
                out_ref[pl.ds(base, rows), :] = jnp.concatenate(hs, axis=0)
                return (h, c)

            h_fin, c_fin = lax.fori_loop(0, T // U, window,
                                         (h0_ref[l], c0_ref[l]))
            hT_ref[l] = h_fin
            cT_ref[l] = c_fin

    return kernel


def lstm_stack(seq2d, lstm_params, h0, c0, *, T, B, H):
    """seq2d: (T*B, I) f32 with row = t*B + b. Returns y (T*B, H), hT, cT."""
    num_layers = len(lstm_params)
    TB = T * B
    U = next(u for u in (8, 4, 2, 1) if T % u == 0)

    inputs = [seq2d]
    flops = 0
    for p in lstm_params:
        inputs += [p["w_ih_t"], p["w_hh_t"], p["b"]]
        in_dim = p["w_ih_t"].shape[0]
        flops += 2 * TB * in_dim * 4 * H + 2 * TB * H * 4 * H
    inputs += [h0, c0]
    bytes_accessed = sum(a.size * a.dtype.itemsize for a in inputs)
    bytes_accessed += TB * H * 4 + 2 * num_layers * B * H * 4

    vmem = pl.BlockSpec(memory_space=pltpu.MemorySpace.VMEM)
    y, hT, cT = pl.pallas_call(
        _make_lstm_stack_kernel(num_layers, T, B, H, U),
        out_shape=(jax.ShapeDtypeStruct((TB, H), jnp.float32),
                   jax.ShapeDtypeStruct((num_layers, B, H), jnp.float32),
                   jax.ShapeDtypeStruct((num_layers, B, H), jnp.float32)),
        in_specs=[vmem] * len(inputs),
        out_specs=(vmem, vmem, vmem),
        scratch_shapes=[pltpu.VMEM((TB, 4 * H), jnp.float32),
                        pltpu.VMEM((TB, H), jnp.float32)],
        compiler_params=pltpu.CompilerParams(vmem_limit_bytes=32 * 1024 * 1024),
        cost_estimate=pl.CostEstimate(flops=flops,
                                      transcendentals=3 * TB * H * num_layers,
                                      bytes_accessed=bytes_accessed),
    )(*inputs)
    return y, hT, cT


# ----------------------------------------------------------------------------
# Final Linear kernel (single step: whole weight VMEM-resident, 512-lane store)
# ----------------------------------------------------------------------------
def _linear_kernel(x_ref, w_ref, b_ref, o_ref):
    o_ref[...] = (jnp.dot(x_ref[...].astype(jnp.bfloat16), w_ref[...],
                          preferred_element_type=jnp.float32) + b_ref[...])


def linear(x, w_t, b):
    M, K = x.shape
    _, Nf = w_t.shape
    vmem = pl.BlockSpec(memory_space=pltpu.MemorySpace.VMEM)
    return pl.pallas_call(
        _linear_kernel,
        out_shape=jax.ShapeDtypeStruct((M, Nf), jnp.float32),
        in_specs=[vmem, vmem, vmem],
        out_specs=vmem,
        compiler_params=pltpu.CompilerParams(vmem_limit_bytes=32 * 1024 * 1024),
        cost_estimate=pl.CostEstimate(
            flops=2 * M * K * Nf, transcendentals=0,
            bytes_accessed=(x.size * 4 + w_t.size * 2 + b.size * 4 + M * Nf * 4)),
    )(x, w_t, b)


# ----------------------------------------------------------------------------
# Parameter init: raw PyTorch-layout params + derived kernel params
# ----------------------------------------------------------------------------
def init_raw_params(key, num_channel, lstm_num):
    C = num_channel
    H = 2 * C
    chans = [C, 16 * C, 8 * C, 4 * C, 2 * C, C]
    keys = iter(jax.random.split(key, 4 * 5 + 4 * lstm_num + 2))
    raw = {"conv_w": [], "conv_b": [], "lstm": []}
    for i in range(5):
        cin, cout = chans[i], chans[i + 1]
        bound = 1.0 / (cin * 3) ** 0.5
        raw["conv_w"].append(jax.random.uniform(next(keys), (cout, cin, 3),
                                                jnp.float32, -bound, bound))
        raw["conv_b"].append(jax.random.uniform(next(keys), (cout,),
                                                jnp.float32, -bound, bound))
    for l in range(lstm_num):
        inp = C if l == 0 else H
        bound = 1.0 / H ** 0.5
        raw["lstm"].append(dict(
            w_ih=jax.random.uniform(next(keys), (4 * H, inp), jnp.float32, -bound, bound),
            w_hh=jax.random.uniform(next(keys), (4 * H, H), jnp.float32, -bound, bound),
            b_ih=jax.random.uniform(next(keys), (4 * H,), jnp.float32, -bound, bound),
            b_hh=jax.random.uniform(next(keys), (4 * H,), jnp.float32, -bound, bound)))
    in_f = H * 160
    bound = 1.0 / in_f ** 0.5
    raw["lin_w"] = jax.random.uniform(next(keys), (512, in_f), jnp.float32, -bound, bound)
    raw["lin_b"] = jax.random.uniform(next(keys), (512,), jnp.float32, -bound, bound)
    return raw


def to_kernel_params(raw, num_channel, lstm_num):
    C = num_channel
    H = 2 * C
    eps = 1e-5
    params = {"conv": [], "lstm": []}
    n_conv = len(raw["conv_w"])
    for i in range(n_conv):
        w, b = raw["conv_w"][i], raw["conv_b"][i]
        cout = w.shape[0]
        if i < n_conv - 1:
            # BatchNorm1d eval fold (gamma=1, beta=0, run_mean=0, run_var=1).
            s = 1.0 / jnp.sqrt(jnp.ones((cout,), jnp.float32) + eps)
            scale, bias = s, b * s
        else:
            scale, bias = jnp.ones((cout,), jnp.float32), b
        params["conv"].append({
            # (3, Cout, Cin): tap k weight = w[:, :, k], ready for W_k @ x_shift.
            "w_taps": jnp.transpose(w, (2, 0, 1)).astype(jnp.bfloat16),
            "scale": scale.reshape(cout, 1),
            "bias": bias.reshape(cout, 1)})

    # Permute PyTorch gate order (i, f, g, o) -> (i, f, o, g): one sigmoid
    # over [0, 3H) and one tanh over [3H, 4H) in the kernel.
    perm = jnp.concatenate([jnp.arange(0, 2 * H), jnp.arange(3 * H, 4 * H),
                            jnp.arange(2 * H, 3 * H)])
    for p in raw["lstm"]:
        params["lstm"].append({
            "w_ih_t": p["w_ih"].T[:, perm].astype(jnp.bfloat16),  # (in, 4H)
            "w_hh_t": p["w_hh"].T[:, perm].astype(jnp.bfloat16),  # (H, 4H)
            "b": (p["b_ih"] + p["b_hh"])[perm].reshape(1, 4 * H)})

    params["lin_w_t"] = raw["lin_w"].T.astype(jnp.bfloat16)
    params["lin_b"] = raw["lin_b"].reshape(1, 512)
    return params


# ----------------------------------------------------------------------------
# Full forward (mirrors N_VCNN_LSTM.forward, eval mode)
# ----------------------------------------------------------------------------
def n_vcnn_lstm_forward(params, x, hidden=None, *, num_channel, lstm_num):
    C = num_channel
    H = 2 * C
    N, Cin, L = x.shape
    assert Cin == C and (N * L) % 160 == 0

    # --- fused conv stack, PyTorch-native NCL layout in and out ---
    h_ncl = conv_stack(x.astype(jnp.float32), params["conv"])      # (N, C, L)

    # --- PyTorch x.view(160, -1, C): row-major reshape of NCL-contiguous data ---
    T = 160
    Bp = (N * L) // T
    seq2d = jnp.reshape(h_ncl, (T * Bp, C))                        # row = t*Bp + b

    if hidden is None:
        h0 = jnp.zeros((lstm_num, Bp, H), jnp.float32)
        c0 = jnp.zeros((lstm_num, Bp, H), jnp.float32)
    else:
        h0, c0 = hidden

    # --- fused multi-layer LSTM ---
    y2, hT, cT = lstm_stack(seq2d, params["lstm"], h0, c0, T=T, B=Bp, H=H)

    # --- x.view(-1, lstm_hidden_size * 160): row-major reshape ---
    flat = jnp.reshape(y2, (Bp, H * T))
    # Dropout: eval-mode identity.
    # TODO(synk): training-mode stochastic dropout not implemented.
    out = linear(flat, params["lin_w_t"], params["lin_b"])
    return out, (hT, cT)


# ----------------------------------------------------------------------------
# Pure-JAX f32 reference of the PyTorch forward (eval mode)
# ----------------------------------------------------------------------------
def reference_forward(raw, x, *, num_channel, lstm_num):
    C = num_channel
    H = 2 * C
    N, _, L = x.shape
    eps = 1e-5
    a = x.astype(jnp.float32)
    n_conv = len(raw["conv_w"])
    for i in range(n_conv):
        w, b = raw["conv_w"][i], raw["conv_b"][i]
        ap = jnp.concatenate([a[:, :, :1], a, a[:, :, -1:]], axis=2)  # replicate pad
        y = (jnp.einsum("ncl,oc->nol", ap[:, :, 0:L], w[:, :, 0], precision="highest")
             + jnp.einsum("ncl,oc->nol", ap[:, :, 1:L + 1], w[:, :, 1], precision="highest")
             + jnp.einsum("ncl,oc->nol", ap[:, :, 2:L + 2], w[:, :, 2], precision="highest")
             + b[None, :, None])
        if i < n_conv - 1:
            y = y / jnp.sqrt(1.0 + eps)                  # eval-mode BN, default stats
        a = jnp.maximum(y, 0.0)

    T = 160
    Bp = (N * L) // T
    layer_in = a.reshape(T, Bp, C)

    hTs, cTs = [], []
    for l in range(lstm_num):
        p = raw["lstm"][l]

        def step(carry, x_t, w_ih=p["w_ih"], w_hh=p["w_hh"],
                 bias=p["b_ih"] + p["b_hh"]):
            h_prev, c_prev = carry
            g = x_t @ w_ih.T + h_prev @ w_hh.T + bias
            i_g = jax.nn.sigmoid(g[:, 0:H])
            f_g = jax.nn.sigmoid(g[:, H:2 * H])
            g_g = jnp.tanh(g[:, 2 * H:3 * H])
            o_g = jax.nn.sigmoid(g[:, 3 * H:4 * H])
            c_new = f_g * c_prev + i_g * g_g
            h_new = o_g * jnp.tanh(c_new)
            return (h_new, c_new), h_new

        init = (jnp.zeros((Bp, H), jnp.float32), jnp.zeros((Bp, H), jnp.float32))
        (h_fin, c_fin), ys = lax.scan(step, init, layer_in)
        layer_in = ys
        hTs.append(h_fin)
        cTs.append(c_fin)

    flat = layer_in.reshape(-1, H * T)
    out = jnp.dot(flat, raw["lin_w"].T, precision="highest") + raw["lin_b"]
    return out, (jnp.stack(hTs), jnp.stack(cTs))


# ----------------------------------------------------------------------------
if __name__ == "__main__":
    num_channel = 4
    dropout = 0.1          # eval mode: unused
    lstm_num = 2
    N, L = 2, 160          # N * L must be a multiple of 160 (.view(160, ...) constraint)

    key = jax.random.PRNGKey(0)
    raw = init_raw_params(key, num_channel, lstm_num)
    params = to_kernel_params(raw, num_channel, lstm_num)
    x = jax.random.normal(jax.random.fold_in(key, 999), (N, num_channel, L),
                          jnp.float32)

    fwd = jax.jit(functools.partial(n_vcnn_lstm_forward,
                                    num_channel=num_channel, lstm_num=lstm_num))
    out, hidden = fwd(params, x)
    jax.block_until_ready(out)
    jax.block_until_ready(hidden)

    assert out.shape == (N * L // 160, 512), out.shape
    assert hidden[0].shape == (lstm_num, N * L // 160, 2 * num_channel)
    assert hidden[1].shape == (lstm_num, N * L // 160, 2 * num_channel)

    # Numerical check vs a pure-JAX f32 reference (bf16 MXU operands in the
    # kernels => loose tolerance).
    ref_out, (ref_h, ref_c) = jax.jit(functools.partial(
        reference_forward, num_channel=num_channel, lstm_num=lstm_num))(raw, x)
    assert jnp.allclose(out, ref_out, atol=5e-2, rtol=5e-2), \
        float(jnp.max(jnp.abs(out - ref_out)))
    assert jnp.allclose(hidden[0], ref_h, atol=5e-2, rtol=5e-2)
    assert jnp.allclose(hidden[1], ref_c, atol=5e-2, rtol=5e-2)

    print("KERNEL_OK")
</pallas_src>

<mosaic_0001>
module attributes {stable_mosaic.version = 11 : i64} {
  func.func @kernel(%arg0: memref<320x4xf32, #tpu.memory_space<vmem>>, %arg1: memref<4x32xbf16, #tpu.memory_space<vmem>>, %arg2: memref<8x32xbf16, #tpu.memory_space<vmem>>, %arg3: memref<1x32xf32, #tpu.memory_space<vmem>>, %arg4: memref<8x32xbf16, #tpu.memory_space<vmem>>, %arg5: memref<8x32xbf16, #tpu.memory_space<vmem>>, %arg6: memref<1x32xf32, #tpu.memory_space<vmem>>, %arg7: memref<2x2x8xf32, #tpu.memory_space<vmem>>, %arg8: memref<2x2x8xf32, #tpu.memory_space<vmem>>, %arg9: memref<320x8xf32, #tpu.memory_space<vmem>>, %arg10: memref<2x2x8xf32, #tpu.memory_space<vmem>>, %arg11: memref<2x2x8xf32, #tpu.memory_space<vmem>>, %arg12: memref<320x32xf32, #tpu.memory_space<vmem>>, %arg13: memref<320x8xf32, #tpu.memory_space<vmem>>) attributes {dimension_semantics = [], scalar_prefetch = 0 : i64, scratch_operands = 2 : i64, tpu.core_type = #tpu.core_type<tc>} {
    %c0 = arith.constant 0 : index
    %c0_0 = arith.constant 0 : index
    %0 = vector.load %arg0[%c0, %c0_0] : memref<320x4xf32, #tpu.memory_space<vmem>>, vector<320x4xf32>
    %1 = arith.truncf %0 : vector<320x4xf32> to vector<320x4xbf16>
    %c0_1 = arith.constant 0 : index
    %c0_2 = arith.constant 0 : index
    %2 = vector.load %arg1[%c0_1, %c0_2] : memref<4x32xbf16, #tpu.memory_space<vmem>>, vector<4x32xbf16>
    %cst = arith.constant dense<0.000000e+00> : vector<320x32xf32>
    %3 = tpu.matmul %1, %2, %cst {dimension_numbers = #tpu.dot_dimension_numbers<[1], [0], [0], [1], [0, 0, 1, 1], [], []>} : vector<320x4xbf16>, vector<4x32xbf16>, vector<320x32xf32> -> vector<320x32xf32>
    %c0_3 = arith.constant 0 : index
    %c0_4 = arith.constant 0 : index
    %4 = vector.load %arg3[%c0_3, %c0_4] : memref<1x32xf32, #tpu.memory_space<vmem>>, vector<1x32xf32>
    %5 = vector.broadcast %4 : vector<1x32xf32> to vector<320x32xf32>
    %6 = arith.addf %3, %5 : vector<320x32xf32>
    %c0_5 = arith.constant 0 : index
    %c0_6 = arith.constant 0 : index
    %7 = vector.load %arg12[%c0_5, %c0_6] : memref<320x32xf32, #tpu.memory_space<vmem>>, vector<320x32xf32>
    tpu.vector_store %arg12[%c0_5, %c0_6], %6 {strides = array<i32>} : memref<320x32xf32, #tpu.memory_space<vmem>>, vector<320x32xf32>,
    %c0_7 = arith.constant 0 : index
    %c0_8 = arith.constant 0 : index
    %8 = vector.load %arg2[%c0_7, %c0_8] : memref<8x32xbf16, #tpu.memory_space<vmem>>, vector<8x32xbf16>
    %c0_9 = arith.constant 0 : index
    %c0_10 = arith.constant 0 : index
    %c0_11 = arith.constant 0 : index
    %9 = vector.load %arg7[%c0_9, %c0_10, %c0_11] : memref<2x2x8xf32, #tpu.memory_space<vmem>>, vector<1x2x8xf32>
    %10 = vector.shape_cast %9 : vector<1x2x8xf32> to vector<2x8xf32>
    %c0_12 = arith.constant 0 : index
    %c0_13 = arith.constant 0 : index
    %c0_14 = arith.constant 0 : index
    %11 = vector.load %arg8[%c0_12, %c0_13, %c0_14] : memref<2x2x8xf32, #tpu.memory_space<vmem>>, vector<1x2x8xf32>
    %12 = vector.shape_cast %11 : vector<1x2x8xf32> to vector<2x8xf32>
    %c0_i32 = arith.constant 0 : i32
    %c20_i32 = arith.constant 20 : i32
    %13 = arith.addi %c0_i32, %c20_i32 : i32
    %c1_i32 = arith.constant 1 : i32
    %14:2 = scf.for %arg14 = %c0_i32 to %13 step %c1_i32 iter_args(%arg15 = %10, %arg16 = %12) -> (vector<2x8xf32>, vector<2x8xf32>)  : i32 {
      %c16_i32 = arith.constant 16 : i32
      %42 = arith.muli %arg14, %c16_i32 : i32
      %43 = tpu.assume_multiple %42, 16 : i32
      %44 = arith.index_cast %43 : i32 to index
      %c0_48 = arith.constant 0 : index
      %45 = vector.load %arg12[%44, %c0_48] : memref<320x32xf32, #tpu.memory_space<vmem>>, vector<16x32xf32>
      %46 = vector.extract_strided_slice %45 {offsets = [0, 0], sizes = [2, 32], strides = [1, 1]} : vector<16x32xf32> to vector<2x32xf32>
      %47 = arith.truncf %arg15 : vector<2x8xf32> to vector<2x8xbf16>
      %cst_49 = arith.constant dense<0.000000e+00> : vector<2x32xf32>
      %48 = tpu.matmul %47, %8, %cst_49 {dimension_numbers = #tpu.dot_dimension_numbers<[1], [0], [0], [1], [0, 0, 1, 1], [], []>} : vector<2x8xbf16>, vector<8x32xbf16>, vector<2x32xf32> -> vector<2x32xf32>
      %49 = arith.addf %46, %48 : vector<2x32xf32>
      %50 = vector.extract_strided_slice %49 {offsets = [0, 0], sizes = [2, 24], strides = [1, 1]} : vector<2x32xf32> to vector<2x24xf32>
      %51 = arith.negf %50 : vector<2x24xf32>
      %52 = math.exp %51 : vector<2x24xf32>
      %cst_50 = arith.constant 1.000000e+00 : f32
      %53 = vector.broadcast %cst_50 : f32 to vector<2x24xf32>
      %54 = arith.addf %53, %52 : vector<2x24xf32>
      %55 = arith.divf %53, %54 : vector<2x24xf32>
      %56 = vector.extract_strided_slice %49 {offsets = [0, 24], sizes = [2, 8], strides = [1, 1]} : vector<2x32xf32> to vector<2x8xf32>
      %57 = math.tanh %56 : vector<2x8xf32>
      %58 = vector.extract_strided_slice %55 {offsets = [0, 8], sizes = [2, 8], strides = [1, 1]} : vector<2x24xf32> to vector<2x8xf32>
      %59 = arith.mulf %58, %arg16 : vector<2x8xf32>
      %60 = vector.extract_strided_slice %55 {offsets = [0, 0], sizes = [2, 8], strides = [1, 1]} : vector<2x24xf32> to vector<2x8xf32>
      %61 = arith.mulf %60, %57 : vector<2x8xf32>
      %62 = arith.addf %59, %61 : vector<2x8xf32>
      %63 = vector.extract_strided_slice %55 {offsets = [0, 16], sizes = [2, 8], strides = [1, 1]} : vector<2x24xf32> to vector<2x8xf32>
      %64 = math.tanh %62 : vector<2x8xf32>
      %65 = arith.mulf %63, %64 : vector<2x8xf32>
      %66 = vector.extract_strided_slice %45 {offsets = [2, 0], sizes = [2, 32], strides = [1, 1]} : vector<16x32xf32> to vector<2x32xf32>
      %67 = arith.truncf %65 : vector<2x8xf32> to vector<2x8xbf16>
      %cst_51 = arith.constant dense<0.000000e+00> : vector<2x32xf32>
      %68 = tpu.matmul %67, %8, %cst_51 {dimension_numbers = #tpu.dot_dimension_numbers<[1], [0], [0], [1], [0, 0, 1, 1], [], []>} : vector<2x8xbf16>, vector<8x32xbf16>, vector<2x32xf32> -> vector<2x32xf32>
      %69 = arith.addf %66, %68 : vector<2x32xf32>
      %70 = vector.extract_strided_slice %69 {offsets = [0, 0], sizes = [2, 24], strides = [1, 1]} : vector<2x32xf32> to vector<2x24xf32>
      %71 = arith.negf %70 : vector<2x24xf32>
      %72 = math.exp %71 : vector<2x24xf32>
      %cst_52 = arith.constant 1.000000e+00 : f32
      %73 = vector.broadcast %cst_52 : f32 to vector<2x24xf32>
      %74 = arith.addf %73, %72 : vector<2x24xf32>
      %75 = arith.divf %73, %74 : vector<2x24xf32>
      %76 = vector.extract_strided_slice %69 {offsets = [0, 24], sizes = [2, 8], strides = [1, 1]} : vector<2x32xf32> to vector<2x8xf32>
      %77 = math.tanh %76 : vector<2x8xf32>
      %78 = vector.extract_strided_slice %75 {offsets = [0, 8], sizes = [2, 8], strides = [1, 1]} : vector<2x24xf32> to vector<2x8xf32>
      %79 = arith.mulf %78, %62 : vector<2x8xf32>
      %80 = vector.extract_strided_slice %75 {offsets = [0, 0], sizes = [2, 8], strides = [1, 1]} : vector<2x24xf32> to vector<2x8xf32>
      %81 = arith.mulf %80, %77 : vector<2x8xf32>
      %82 = arith.addf %79, %81 : vector<2x8xf32>
      %83 = vector.extract_strided_slice %75 {offsets = [0, 16], sizes = [2, 8], strides = [1, 1]} : vector<2x24xf32> to vector<2x8xf32>
      %84 = math.tanh %82 : vector<2x8xf32>
      %85 = arith.mulf %83, %84 : vector<2x8xf32>
      %86 = vector.extract_strided_slice %45 {offsets = [4, 0], sizes = [2, 32], strides = [1, 1]} : vector<16x32xf32> to vector<2x32xf32>
      %87 = arith.truncf %85 : vector<2x8xf32> to vector<2x8xbf16>
      %cst_53 = arith.constant dense<0.000000e+00> : vector<2x32xf32>
      %88 = tpu.matmul %87, %8, %cst_53 {dimension_numbers = #tpu.dot_dimension_numbers<[1], [0], [0], [1], [0, 0, 1, 1], [], []>} : vector<2x8xbf16>, vector<8x32xbf16>, vector<2x32xf32> -> vector<2x32xf32>
      %89 = arith.addf %86, %88 : vector<2x32xf32>
      %90 = vector.extract_strided_slice %89 {offsets = [0, 0], sizes = [2, 24], strides = [1, 1]} : vector<2x32xf32> to vector<2x24xf32>
      %91 = arith.negf %90 : vector<2x24xf32>
      %92 = math.exp %91 : vector<2x24xf32>
      %cst_54 = arith.constant 1.000000e+00 : f32
      %93 = vector.broadcast %cst_54 : f32 to vector<2x24xf32>
      %94 = arith.addf %93, %92 : vector<2x24xf32>
      %95 = arith.divf %93, %94 : vector<2x24xf32>
      %96 = vector.extract_strided_slice %89 {offsets = [0, 24], sizes = [2, 8], strides = [1, 1]} : vector<2x32xf32> to vector<2x8xf32>
      %97 = math.tanh %96 : vector<2x8xf32>
      %98 = vector.extract_strided_slice %95 {offsets = [0, 8], sizes = [2, 8], strides = [1, 1]} : vector<2x24xf32> to vector<2x8xf32>
      %99 = arith.mulf %98, %82 : vector<2x8xf32>
      %100 = vector.extract_strided_slice %95 {offsets = [0, 0], sizes = [2, 8], strides = [1, 1]} : vector<2x24xf32> to vector<2x8xf32>
      %101 = arith.mulf %100, %97 : vector<2x8xf32>
      %102 = arith.addf %99, %101 : vector<2x8xf32>
      %103 = vector.extract_strided_slice %95 {offsets = [0, 16], sizes = [2, 8], strides = [1, 1]} : vector<2x24xf32> to vector<2x8xf32>
      %104 = math.tanh %102 : vector<2x8xf32>
      %105 = arith.mulf %103, %104 : vector<2x8xf32>
      %106 = vector.extract_strided_slice %45 {offsets = [6, 0], sizes = [2, 32], strides = [1, 1]} : vector<16x32xf32> to vector<2x32xf32>
      %107 = arith.truncf %105 : vector<2x8xf32> to vector<2x8xbf16>
      %cst_55 = arith.constant dense<0.000000e+00> : vector<2x32xf32>
      %108 = tpu.matmul %107, %8, %cst_55 {dimension_numbers = #tpu.dot_dimension_numbers<[1], [0], [0], [1], [0, 0, 1, 1], [], []>} : vector<2x8xbf16>, vector<8x32xbf16>, vector<2x32xf32> -> vector<2x32xf32>
      %109 = arith.addf %106, %108 : vector<2x32xf32>
      %110 = vector.extract_strided_slice %109 {offsets = [0, 0], sizes = [2, 24], strides = [1, 1]} : vector<2x32xf32> to vector<2x24xf32>
      %111 = arith.negf %110 : vector<2x24xf32>
      %112 = math.exp %111 : vector<2x24xf32>
      %cst_56 = arith.constant 1.000000e+00 : f32
      %113 = vector.broadcast %cst_56 : f32 to vector<2x24xf32>
      %114 = arith.addf %113, %112 : vector<2x24xf32>
      %115 = arith.divf %113, %114 : vector<2x24xf32>
      %116 = vector.extract_strided_slice %109 {offsets = [0, 24], sizes = [2, 8], strides = [1, 1]} : vector<2x32xf32> to vector<2x8xf32>
      %117 = math.tanh %116 : vector<2x8xf32>
      %118 = vector.extract_strided_slice %115 {offsets = [0, 8], sizes = [2, 8], strides = [1, 1]} : vector<2x24xf32> to vector<2x8xf32>
      %119 = arith.mulf %118, %102 : vector<2x8xf32>
      %120 = vector.extract_strided_slice %115 {offsets = [0, 0], sizes = [2, 8], strides = [1, 1]} : vector<2x24xf32> to vector<2x8xf32>
      %121 = arith.mulf %120, %117 : vector<2x8xf32>
      %122 = arith.addf %119, %121 : vector<2x8xf32>
      %123 = vector.extract_strided_slice %115 {offsets = [0, 16], sizes = [2, 8], strides = [1, 1]} : vector<2x24xf32> to vector<2x8xf32>
      %124 = math.tanh %122 : vector<2x8xf32>
      %125 = arith.mulf %123, %124 : vector<2x8xf32>
      %126 = vector.extract_strided_slice %45 {offsets = [8, 0], sizes = [2, 32], strides = [1, 1]} : vector<16x32xf32> to vector<2x32xf32>
      %127 = arith.truncf %125 : vector<2x8xf32> to vector<2x8xbf16>
      %cst_57 = arith.constant dense<0.000000e+00> : vector<2x32xf32>
      %128 = tpu.matmul %127, %8, %cst_57 {dimension_numbers = #tpu.dot_dimension_numbers<[1], [0], [0], [1], [0, 0, 1, 1], [], []>} : vector<2x8xbf16>, vector<8x32xbf16>, vector<2x32xf32> -> vector<2x32xf32>
      %129 = arith.addf %126, %128 : vector<2x32xf32>
      %130 = vector.extract_strided_slice %129 {offsets = [0, 0], sizes = [2, 24], strides = [1, 1]} : vector<2x32xf32> to vector<2x24xf32>
      %131 = arith.negf %130 : vector<2x24xf32>
      %132 = math.exp %131 : vector<2x24xf32>
      %cst_58 = arith.constant 1.000000e+00 : f32
      %133 = vector.broadcast %cst_58 : f32 to vector<2x24xf32>
      %134 = arith.addf %133, %132 : vector<2x24xf32>
      %135 = arith.divf %133, %134 : vector<2x24xf32>
      %136 = vector.extract_strided_slice %129 {offsets = [0, 24], sizes = [2, 8], strides = [1, 1]} : vector<2x32xf32> to vector<2x8xf32>
      %137 = math.tanh %136 : vector<2x8xf32>
      %138 = vector.extract_strided_slice %135 {offsets = [0, 8], sizes = [2, 8], strides = [1, 1]} : vector<2x24xf32> to vector<2x8xf32>
      %139 = arith.mulf %138, %122 : vector<2x8xf32>
      %140 = vector.extract_strided_slice %135 {offsets = [0, 0], sizes = [2, 8], strides = [1, 1]} : vector<2x24xf32> to vector<2x8xf32>
      %141 = arith.mulf %140, %137 : vector<2x8xf32>
      %142 = arith.addf %139, %141 : vector<2x8xf32>
      %143 = vector.extract_strided_slice %135 {offsets = [0, 16], sizes = [2, 8], strides = [1, 1]} : vector<2x24xf32> to vector<2x8xf32>
      %144 = math.tanh %142 : vector<2x8xf32>
      %145 = arith.mulf %143, %144 : vector<2x8xf32>
      %146 = vector.extract_strided_slice %45 {offsets = [10, 0], sizes = [2, 32], strides = [1, 1]} : vector<16x32xf32> to vector<2x32xf32>
      %147 = arith.truncf %145 : vector<2x8xf32> to vector<2x8xbf16>
      %cst_59 = arith.constant dense<0.000000e+00> : vector<2x32xf32>
      %148 = tpu.matmul %147, %8, %cst_59 {dimension_numbers = #tpu.dot_dimension_numbers<[1], [0], [0], [1], [0, 0, 1, 1], [], []>} : vector<2x8xbf16>, vector<8x32xbf16>, vector<2x32xf32> -> vector<2x32xf32>
      %149 = arith.addf %146, %148 : vector<2x32xf32>
      %150 = vector.extract_strided_slice %149 {offsets = [0, 0], sizes = [2, 24], strides = [1, 1]} : vector<2x32xf32> to vector<2x24xf32>
      %151 = arith.negf %150 : vector<2x24xf32>
      %152 = math.exp %151 : vector<2x24xf32>
      %cst_60 = arith.constant 1.000000e+00 : f32
      %153 = vector.broadcast %cst_60 : f32 to vector<2x24xf32>
      %154 = arith.addf %153, %152 : vector<2x24xf32>
      %155 = arith.divf %153, %154 : vector<2x24xf32>
      %156 = vector.extract_strided_slice %149 {offsets = [0, 24], sizes = [2, 8], strides = [1, 1]} : vector<2x32xf32> to vector<2x8xf32>
      %157 = math.tanh %156 : vector<2x8xf32>
      %158 = vector.extract_strided_slice %155 {offsets = [0, 8], sizes = [2, 8], strides = [1, 1]} : vector<2x24xf32> to vector<2x8xf32>
      %159 = arith.mulf %158, %142 : vector<2x8xf32>
      %160 = vector.extract_strided_slice %155 {offsets = [0, 0], sizes = [2, 8], strides = [1, 1]} : vector<2x24xf32> to vector<2x8xf32>
      %161 = arith.mulf %160, %157 : vector<2x8xf32>
      %162 = arith.addf %159, %161 : vector<2x8xf32>
      %163 = vector.extract_strided_slice %155 {offsets = [0, 16], sizes = [2, 8], strides = [1, 1]} : vector<2x24xf32> to vector<2x8xf32>
      %164 = math.tanh %162 : vector<2x8xf32>
      %165 = arith.mulf %163, %164 : vector<2x8xf32>
      %166 = vector.extract_strided_slice %45 {offsets = [12, 0], sizes = [2, 32], strides = [1, 1]} : vector<16x32xf32> to vector<2x32xf32>
      %167 = arith.truncf %165 : vector<2x8xf32> to vector<2x8xbf16>
      %cst_61 = arith.constant dense<0.000000e+00> : vector<2x32xf32>
      %168 = tpu.matmul %167, %8, %cst_61 {dimension_numbers = #tpu.dot_dimension_numbers<[1], [0], [0], [1], [0, 0, 1, 1], [], []>} : vector<2x8xbf16>, vector<8x32xbf16>, vector<2x32xf32> -> vector<2x32xf32>
      %169 = arith.addf %166, %168 : vector<2x32xf32>
      %170 = vector.extract_strided_slice %169 {offsets = [0, 0], sizes = [2, 24], strides = [1, 1]} : vector<2x32xf32> to vector<2x24xf32>
      %171 = arith.negf %170 : vector<2x24xf32>
      %172 = math.exp %171 : vector<2x24xf32>
      %cst_62 = arith.constant 1.000000e+00 : f32
      %173 = vector.broadcast %cst_62 : f32 to vector<2x24xf32>
      %174 = arith.addf %173, %172 : vector<2x24xf32>
      %175 = arith.divf %173, %174 : vector<2x24xf32>
      %176 = vector.extract_strided_slice %169 {offsets = [0, 24], sizes = [2, 8], strides = [1, 1]} : vector<2x32xf32> to vector<2x8xf32>
      %177 = math.tanh %176 : vector<2x8xf32>
      %178 = vector.extract_strided_slice %175 {offsets = [0, 8], sizes = [2, 8], strides = [1, 1]} : vector<2x24xf32> to vector<2x8xf32>
      %179 = arith.mulf %178, %162 : vector<2x8xf32>
      %180 = vector.extract_strided_slice %175 {offsets = [0, 0], sizes = [2, 8], strides = [1, 1]} : vector<2x24xf32> to vector<2x8xf32>
      %181 = arith.mulf %180, %177 : vector<2x8xf32>
      %182 = arith.addf %179, %181 : vector<2x8xf32>
      %183 = vector.extract_strided_slice %175 {offsets = [0, 16], sizes = [2, 8], strides = [1, 1]} : vector<2x24xf32> to vector<2x8xf32>
      %184 = math.tanh %182 : vector<2x8xf32>
      %185 = arith.mulf %183, %184 : vector<2x8xf32>
      %186 = vector.extract_strided_slice %45 {offsets = [14, 0], sizes = [2, 32], strides = [1, 1]} : vector<16x32xf32> to vector<2x32xf32>
      %187 = arith.truncf %185 : vector<2x8xf32> to vector<2x8xbf16>
      %cst_63 = arith.constant dense<0.000000e+00> : vector<2x32xf32>
      %188 = tpu.matmul %187, %8, %cst_63 {dimension_numbers = #tpu.dot_dimension_numbers<[1], [0], [0], [1], [0, 0, 1, 1], [], []>} : vector<2x8xbf16>, vector<8x32xbf16>, vector<2x32xf32> -> vector<2x32xf32>
      %189 = arith.addf %186, %188 : vector<2x32xf32>
      %190 = vector.extract_strided_slice %189 {offsets = [0, 0], sizes = [2, 24], strides = [1, 1]} : vector<2x32xf32> to vector<2x24xf32>
      %191 = arith.negf %190 : vector<2x24xf32>
      %192 = math.exp %191 : vector<2x24xf32>
      %cst_64 = arith.constant 1.000000e+00 : f32
      %193 = vector.broadcast %cst_64 : f32 to vector<2x24xf32>
      %194 = arith.addf %193, %192 : vector<2x24xf32>
      %195 = arith.divf %193, %194 : vector<2x24xf32>
      %196 = vector.extract_strided_slice %189 {offsets = [0, 24], sizes = [2, 8], strides = [1, 1]} : vector<2x32xf32> to vector<2x8xf32>
      %197 = math.tanh %196 : vector<2x8xf32>
      %198 = vector.extract_strided_slice %195 {offsets = [0, 8], sizes = [2, 8], strides = [1, 1]} : vector<2x24xf32> to vector<2x8xf32>
      %199 = arith.mulf %198, %182 : vector<2x8xf32>
      %200 = vector.extract_strided_slice %195 {offsets = [0, 0], sizes = [2, 8], strides = [1, 1]} : vector<2x24xf32> to vector<2x8xf32>
      %201 = arith.mulf %200, %197 : vector<2x8xf32>
      %202 = arith.addf %199, %201 : vector<2x8xf32>
      %203 = vector.extract_strided_slice %195 {offsets = [0, 16], sizes = [2, 8], strides = [1, 1]} : vector<2x24xf32> to vector<2x8xf32>
      %204 = math.tanh %202 : vector<2x8xf32>
      %205 = arith.mulf %203, %204 : vector<2x8xf32>
      %206 = tpu.concatenate %65, %85, %105, %125, %145, %165, %185, %205 in 0 : vector<2x8xf32>, vector<2x8xf32>, vector<2x8xf32>, vector<2x8xf32>, vector<2x8xf32>, vector<2x8xf32>, vector<2x8xf32>, vector<2x8xf32> -> vector<16x8xf32>
      %207 = arith.index_cast %43 : i32 to index
      %c0_65 = arith.constant 0 : index
      %208 = vector.load %arg13[%207, %c0_65] : memref<320x8xf32, #tpu.memory_space<vmem>>, vector<16x8xf32>
      tpu.vector_store %arg13[%207, %c0_65], %206 {strides = array<i32>} : memref<320x8xf32, #tpu.memory_space<vmem>>, vector<16x8xf32>,
      scf.yield %205, %202 : vector<2x8xf32>, vector<2x8xf32>
    }
    %c20_i32_15 = arith.constant 20 : i32
    %c0_16 = arith.constant 0 : index
    %c0_17 = arith.constant 0 : index
    %c0_18 = arith.constant 0 : index
    %15 = vector.load %arg10[%c0_16, %c0_17, %c0_18] : memref<2x2x8xf32, #tpu.memory_space<vmem>>, vector<1x2x8xf32>
    %16 = vector.shape_cast %15 : vector<1x2x8xf32> to vector<2x8xf32>
    %17 = vector.shape_cast %14#0 : vector<2x8xf32> to vector<1x2x8xf32>
    tpu.vector_store %arg10[%c0_16, %c0_17, %c0_18], %17 {strides = array<i32>} : memref<2x2x8xf32, #tpu.memory_space<vmem>>, vector<1x2x8xf32>,
    %c0_19 = arith.constant 0 : index
    %c0_20 = arith.constant 0 : index
    %c0_21 = arith.constant 0 : index
    %18 = vector.load %arg11[%c0_19, %c0_20, %c0_21] : memref<2x2x8xf32, #tpu.memory_space<vmem>>, vector<1x2x8xf32>
    %19 = vector.shape_cast %18 : vector<1x2x8xf32> to vector<2x8xf32>
    %20 = vector.shape_cast %14#1 : vector<2x8xf32> to vector<1x2x8xf32>
    tpu.vector_store %arg11[%c0_19, %c0_20, %c0_21], %20 {strides = array<i32>} : memref<2x2x8xf32, #tpu.memory_space<vmem>>, vector<1x2x8xf32>,
    %c0_22 = arith.constant 0 : index
    %c0_23 = arith.constant 0 : index
    %21 = vector.load %arg13[%c0_22, %c0_23] : memref<320x8xf32, #tpu.memory_space<vmem>>, vector<320x8xf32>
    %22 = arith.truncf %21 : vector<320x8xf32> to vector<320x8xbf16>
    %c0_24 = arith.constant 0 : index
    %c0_25 = arith.constant 0 : index
    %23 = vector.load %arg4[%c0_24, %c0_25] : memref<8x32xbf16, #tpu.memory_space<vmem>>, vector<8x32xbf16>
    %cst_26 = arith.constant dense<0.000000e+00> : vector<320x32xf32>
    %24 = tpu.matmul %22, %23, %cst_26 {dimension_numbers = #tpu.dot_dimension_numbers<[1], [0], [0], [1], [0, 0, 1, 1], [], []>} : vector<320x8xbf16>, vector<8x32xbf16>, vector<320x32xf32> -> vector<320x32xf32>
    %c0_27 = arith.constant 0 : index
    %c0_28 = arith.constant 0 : index
    %25 = vector.load %arg6[%c0_27, %c0_28] : memref<1x32xf32, #tpu.memory_space<vmem>>, vector<1x32xf32>
    %26 = vector.broadcast %25 : vector<1x32xf32> to vector<320x32xf32>
    %27 = arith.addf %24, %26 : vector<320x32xf32>
    %c0_29 = arith.constant 0 : index
    %c0_30 = arith.constant 0 : index
    %28 = vector.load %arg12[%c0_29, %c0_30] : memref<320x32xf32, #tpu.memory_space<vmem>>, vector<320x32xf32>
    tpu.vector_store %arg12[%c0_29, %c0_30], %27 {strides = array<i32>} : memref<320x32xf32, #tpu.memory_space<vmem>>, vector<320x32xf32>,
    %c0_31 = arith.constant 0 : index
    %c0_32 = arith.constant 0 : index
    %29 = vector.load %arg5[%c0_31, %c0_32] : memref<8x32xbf16, #tpu.memory_space<vmem>>, vector<8x32xbf16>
    %c1 = arith.constant 1 : index
    %c0_33 = arith.constant 0 : index
    %c0_34 = arith.constant 0 : index
    %30 = vector.load %arg7[%c1, %c0_33, %c0_34] : memref<2x2x8xf32, #tpu.memory_space<vmem>>, vector<1x2x8xf32>
    %31 = vector.shape_cast %30 : vector<1x2x8xf32> to vector<2x8xf32>
    %c1_35 = arith.constant 1 : index
    %c0_36 = arith.constant 0 : index
    %c0_37 = arith.constant 0 : index
    %32 = vector.load %arg8[%c1_35, %c0_36, %c0_37] : memref<2x2x8xf32, #tpu.memory_space<vmem>>, vector<1x2x8xf32>
    %33 = vector.shape_cast %32 : vector<1x2x8xf32> to vector<2x8xf32>
    %c0_i32_38 = arith.constant 0 : i32
    %c20_i32_39 = arith.constant 20 : i32
    %34 = arith.addi %c0_i32_38, %c20_i32_39 : i32
    %c1_i32_40 = arith.constant 1 : i32
    %35:2 = scf.for %arg14 = %c0_i32_38 to %34 step %c1_i32_40 iter_args(%arg15 = %31, %arg16 = %33) -> (vector<2x8xf32>, vector<2x8xf32>)  : i32 {
      %c16_i32 = arith.constant 16 : i32
      %42 = arith.muli %arg14, %c16_i32 : i32
      %43 = tpu.assume_multiple %42, 16 : i32
      %44 = arith.index_cast %43 : i32 to index
      %c0_48 = arith.constant 0 : index
      %45 = vector.load %arg12[%44, %c0_48] : memref<320x32xf32, #tpu.memory_space<vmem>>, vector<16x32xf32>
      %46 = vector.extract_strided_slice %45 {offsets = [0, 0], sizes = [2, 32], strides = [1, 1]} : vector<16x32xf32> to vector<2x32xf32>
      %47 = arith.truncf %arg15 : vector<2x8xf32> to vector<2x8xbf16>
      %cst_49 = arith.constant dense<0.000000e+00> : vector<2x32xf32>
      %48 = tpu.matmul %47, %29, %cst_49 {dimension_numbers = #tpu.dot_dimension_numbers<[1], [0], [0], [1], [0, 0, 1, 1], [], []>} : vector<2x8xbf16>, vector<8x32xbf16>, vector<2x32xf32> -> vector<2x32xf32>
      %49 = arith.addf %46, %48 : vector<2x32xf32>
      %50 = vector.extract_strided_slice %49 {offsets = [0, 0], sizes = [2, 24], strides = [1, 1]} : vector<2x32xf32> to vector<2x24xf32>
      %51 = arith.negf %50 : vector<2x24xf32>
      %52 = math.exp %51 : vector<2x24xf32>
      %cst_50 = arith.constant 1.000000e+00 : f32
      %53 = vector.broadcast %cst_50 : f32 to vector<2x24xf32>
      %54 = arith.addf %53, %52 : vector<2x24xf32>
      %55 = arith.divf %53, %54 : vector<2x24xf32>
      %56 = vector.extract_strided_slice %49 {offsets = [0, 24], sizes = [2, 8], strides = [1, 1]} : vector<2x32xf32> to vector<2x8xf32>
      %57 = math.tanh %56 : vector<2x8xf32>
      %58 = vector.extract_strided_slice %55 {offsets = [0, 8], sizes = [2, 8], strides = [1, 1]} : vector<2x24xf32> to vector<2x8xf32>
      %59 = arith.mulf %58, %arg16 : vector<2x8xf32>
      %60 = vector.extract_strided_slice %55 {offsets = [0, 0], sizes = [2, 8], strides = [1, 1]} : vector<2x24xf32> to vector<2x8xf32>
      %61 = arith.mulf %60, %57 : vector<2x8xf32>
      %62 = arith.addf %59, %61 : vector<2x8xf32>
      %63 = vector.extract_strided_slice %55 {offsets = [0, 16], sizes = [2, 8], strides = [1, 1]} : vector<2x24xf32> to vector<2x8xf32>
      %64 = math.tanh %62 : vector<2x8xf32>
      %65 = arith.mulf %63, %64 : vector<2x8xf32>
      %66 = vector.extract_strided_slice %45 {offsets = [2, 0], sizes = [2, 32], strides = [1, 1]} : vector<16x32xf32> to vector<2x32xf32>
      %67 = arith.truncf %65 : vector<2x8xf32> to vector<2x8xbf16>
      %cst_51 = arith.constant dense<0.000000e+00> : vector<2x32xf32>
      %68 = tpu.matmul %67, %29, %cst_51 {dimension_numbers = #tpu.dot_dimension_numbers<[1], [0], [0], [1], [0, 0, 1, 1], [], []>} : vector<2x8xbf16>, vector<8x32xbf16>, vector<2x32xf32> -> vector<2x32xf32>
      %69 = arith.addf %66, %68 : vector<2x32xf32>
      %70 = vector.extract_strided_slice %69 {offsets = [0, 0], sizes = [2, 24], strides = [1, 1]} : vector<2x32xf32> to vector<2x24xf32>
      %71 = arith.negf %70 : vector<2x24xf32>
      %72 = math.exp %71 : vector<2x24xf32>
      %cst_52 = arith.constant 1.000000e+00 : f32
      %73 = vector.broadcast %cst_52 : f32 to vector<2x24xf32>
      %74 = arith.addf %73, %72 : vector<2x24xf32>
      %75 = arith.divf %73, %74 : vector<2x24xf32>
      %76 = vector.extract_strided_slice %69 {offsets = [0, 24], sizes = [2, 8], strides = [1, 1]} : vector<2x32xf32> to vector<2x8xf32>
      %77 = math.tanh %76 : vector<2x8xf32>
      %78 = vector.extract_strided_slice %75 {offsets = [0, 8], sizes = [2, 8], strides = [1, 1]} : vector<2x24xf32> to vector<2x8xf32>
      %79 = arith.mulf %78, %62 : vector<2x8xf32>
      %80 = vector.extract_strided_slice %75 {offsets = [0, 0], sizes = [2, 8], strides = [1, 1]} : vector<2x24xf32> to vector<2x8xf32>
      %81 = arith.mulf %80, %77 : vector<2x8xf32>
      %82 = arith.addf %79, %81 : vector<2x8xf32>
      %83 = vector.extract_strided_slice %75 {offsets = [0, 16], sizes = [2, 8], strides = [1, 1]} : vector<2x24xf32> to vector<2x8xf32>
      %84 = math.tanh %82 : vector<2x8xf32>
      %85 = arith.mulf %83, %84 : vector<2x8xf32>
      %86 = vector.extract_strided_slice %45 {offsets = [4, 0], sizes = [2, 32], strides = [1, 1]} : vector<16x32xf32> to vector<2x32xf32>
      %87 = arith.truncf %85 : vector<2x8xf32> to vector<2x8xbf16>
      %cst_53 = arith.constant dense<0.000000e+00> : vector<2x32xf32>
      %88 = tpu.matmul %87, %29, %cst_53 {dimension_numbers = #tpu.dot_dimension_numbers<[1], [0], [0], [1], [0, 0, 1, 1], [], []>} : vector<2x8xbf16>, vector<8x32xbf16>, vector<2x32xf32> -> vector<2x32xf32>
      %89 = arith.addf %86, %88 : vector<2x32xf32>
      %90 = vector.extract_strided_slice %89 {offsets = [0, 0], sizes = [2, 24], strides = [1, 1]} : vector<2x32xf32> to vector<2x24xf32>
      %91 = arith.negf %90 : vector<2x24xf32>
      %92 = math.exp %91 : vector<2x24xf32>
      %cst_54 = arith.constant 1.000000e+00 : f32
      %93 = vector.broadcast %cst_54 : f32 to vector<2x24xf32>
      %94 = arith.addf %93, %92 : vector<2x24xf32>
      %95 = arith.divf %93, %94 : vector<2x24xf32>
      %96 = vector.extract_strided_slice %89 {offsets = [0, 24], sizes = [2, 8], strides = [1, 1]} : vector<2x32xf32> to vector<2x8xf32>
      %97 = math.tanh %96 : vector<2x8xf32>
      %98 = vector.extract_strided_slice %95 {offsets = [0, 8], sizes = [2, 8], strides = [1, 1]} : vector<2x24xf32> to vector<2x8xf32>
      %99 = arith.mulf %98, %82 : vector<2x8xf32>
      %100 = vector.extract_strided_slice %95 {offsets = [0, 0], sizes = [2, 8], strides = [1, 1]} : vector<2x24xf32> to vector<2x8xf32>
      %101 = arith.mulf %100, %97 : vector<2x8xf32>
      %102 = arith.addf %99, %101 : vector<2x8xf32>
      %103 = vector.extract_strided_slice %95 {offsets = [0, 16], sizes = [2, 8], strides = [1, 1]} : vector<2x24xf32> to vector<2x8xf32>
      %104 = math.tanh %102 : vector<2x8xf32>
      %105 = arith.mulf %103, %104 : vector<2x8xf32>
      %106 = vector.extract_strided_slice %45 {offsets = [6, 0], sizes = [2, 32], strides = [1, 1]} : vector<16x32xf32> to vector<2x32xf32>
      %107 = arith.truncf %105 : vector<2x8xf32> to vector<2x8xbf16>
      %cst_55 = arith.constant dense<0.000000e+00> : vector<2x32xf32>
      %108 = tpu.matmul %107, %29, %cst_55 {dimension_numbers = #tpu.dot_dimension_numbers<[1], [0], [0], [1], [0, 0, 1, 1], [], []>} : vector<2x8xbf16>, vector<8x32xbf16>, vector<2x32xf32> -> vector<2x32xf32>
      %109 = arith.addf %106, %108 : vector<2x32xf32>
      %110 = vector.extract_strided_slice %109 {offsets = [0, 0], sizes = [2, 24], strides = [1, 1]} : vector<2x32xf32> to vector<2x24xf32>
      %111 = arith.negf %110 : vector<2x24xf32>
      %112 = math.exp %111 : vector<2x24xf32>
      %cst_56 = arith.constant 1.000000e+00 : f32
      %113 = vector.broadcast %cst_56 : f32 to vector<2x24xf32>
      %114 = arith.addf %113, %112 : vector<2x24xf32>
      %115 = arith.divf %113, %114 : vector<2x24xf32>
      %116 = vector.extract_strided_slice %109 {offsets = [0, 24], sizes = [2, 8], strides = [1, 1]} : vector<2x32xf32> to vector<2x8xf32>
      %117 = math.tanh %116 : vector<2x8xf32>
      %118 = vector.extract_strided_slice %115 {offsets = [0, 8], sizes = [2, 8], strides = [1, 1]} : vector<2x24xf32> to vector<2x8xf32>
      %119 = arith.mulf %118, %102 : vector<2x8xf32>
      %120 = vector.extract_strided_slice %115 {offsets = [0, 0], sizes = [2, 8], strides = [1, 1]} : vector<2x24xf32> to vector<2x8xf32>
      %121 = arith.mulf %120, %117 : vector<2x8xf32>
      %122 = arith.addf %119, %121 : vector<2x8xf32>
      %123 = vector.extract_strided_slice %115 {offsets = [0, 16], sizes = [2, 8], strides = [1, 1]} : vector<2x24xf32> to vector<2x8xf32>
      %124 = math.tanh %122 : vector<2x8xf32>
      %125 = arith.mulf %123, %124 : vector<2x8xf32>
      %126 = vector.extract_strided_slice %45 {offsets = [8, 0], sizes = [2, 32], strides = [1, 1]} : vector<16x32xf32> to vector<2x32xf32>
      %127 = arith.truncf %125 : vector<2x8xf32> to vector<2x8xbf16>
      %cst_57 = arith.constant dense<0.000000e+00> : vector<2x32xf32>
      %128 = tpu.matmul %127, %29, %cst_57 {dimension_numbers = #tpu.dot_dimension_numbers<[1], [0], [0], [1], [0, 0, 1, 1], [], []>} : vector<2x8xbf16>, vector<8x32xbf16>, vector<2x32xf32> -> vector<2x32xf32>
      %129 = arith.addf %126, %128 : vector<2x32xf32>
      %130 = vector.extract_strided_slice %129 {offsets = [0, 0], sizes = [2, 24], strides = [1, 1]} : vector<2x32xf32> to vector<2x24xf32>
      %131 = arith.negf %130 : vector<2x24xf32>
      %132 = math.exp %131 : vector<2x24xf32>
      %cst_58 = arith.constant 1.000000e+00 : f32
      %133 = vector.broadcast %cst_58 : f32 to vector<2x24xf32>
      %134 = arith.addf %133, %132 : vector<2x24xf32>
      %135 = arith.divf %133, %134 : vector<2x24xf32>
      %136 = vector.extract_strided_slice %129 {offsets = [0, 24], sizes = [2, 8], strides = [1, 1]} : vector<2x32xf32> to vector<2x8xf32>
      %137 = math.tanh %136 : vector<2x8xf32>
      %138 = vector.extract_strided_slice %135 {offsets = [0, 8], sizes = [2, 8], strides = [1, 1]} : vector<2x24xf32> to vector<2x8xf32>
      %139 = arith.mulf %138, %122 : vector<2x8xf32>
      %140 = vector.extract_strided_slice %135 {offsets = [0, 0], sizes = [2, 8], strides = [1, 1]} : vector<2x24xf32> to vector<2x8xf32>
      %141 = arith.mulf %140, %137 : vector<2x8xf32>
      %142 = arith.addf %139, %141 : vector<2x8xf32>
      %143 = vector.extract_strided_slice %135 {offsets = [0, 16], sizes = [2, 8], strides = [1, 1]} : vector<2x24xf32> to vector<2x8xf32>
      %144 = math.tanh %142 : vector<2x8xf32>
      %145 = arith.mulf %143, %144 : vector<2x8xf32>
      %146 = vector.extract_strided_slice %45 {offsets = [10, 0], sizes = [2, 32], strides = [1, 1]} : vector<16x32xf32> to vector<2x32xf32>
      %147 = arith.truncf %145 : vector<2x8xf32> to vector<2x8xbf16>
      %cst_59 = arith.constant dense<0.000000e+00> : vector<2x32xf32>
      %148 = tpu.matmul %147, %29, %cst_59 {dimension_numbers = #tpu.dot_dimension_numbers<[1], [0], [0], [1], [0, 0, 1, 1], [], []>} : vector<2x8xbf16>, vector<8x32xbf16>, vector<2x32xf32> -> vector<2x32xf32>
      %149 = arith.addf %146, %148 : vector<2x32xf32>
      %150 = vector.extract_strided_slice %149 {offsets = [0, 0], sizes = [2, 24], strides = [1, 1]} : vector<2x32xf32> to vector<2x24xf32>
      %151 = arith.negf %150 : vector<2x24xf32>
      %152 = math.exp %151 : vector<2x24xf32>
      %cst_60 = arith.constant 1.000000e+00 : f32
      %153 = vector.broadcast %cst_60 : f32 to vector<2x24xf32>
      %154 = arith.addf %153, %152 : vector<2x24xf32>
      %155 = arith.divf %153, %154 : vector<2x24xf32>
      %156 = vector.extract_strided_slice %149 {offsets = [0, 24], sizes = [2, 8], strides = [1, 1]} : vector<2x32xf32> to vector<2x8xf32>
      %157 = math.tanh %156 : vector<2x8xf32>
      %158 = vector.extract_strided_slice %155 {offsets = [0, 8], sizes = [2, 8], strides = [1, 1]} : vector<2x24xf32> to vector<2x8xf32>
      %159 = arith.mulf %158, %142 : vector<2x8xf32>
      %160 = vector.extract_strided_slice %155 {offsets = [0, 0], sizes = [2, 8], strides = [1, 1]} : vector<2x24xf32> to vector<2x8xf32>
      %161 = arith.mulf %160, %157 : vector<2x8xf32>
      %162 = arith.addf %159, %161 : vector<2x8xf32>
      %163 = vector.extract_strided_slice %155 {offsets = [0, 16], sizes = [2, 8], strides = [1, 1]} : vector<2x24xf32> to vector<2x8xf32>
      %164 = math.tanh %162 : vector<2x8xf32>
      %165 = arith.mulf %163, %164 : vector<2x8xf32>
      %166 = vector.extract_strided_slice %45 {offsets = [12, 0], sizes = [2, 32], strides = [1, 1]} : vector<16x32xf32> to vector<2x32xf32>
      %167 = arith.truncf %165 : vector<2x8xf32> to vector<2x8xbf16>
      %cst_61 = arith.constant dense<0.000000e+00> : vector<2x32xf32>
      %168 = tpu.matmul %167, %29, %cst_61 {dimension_numbers = #tpu.dot_dimension_numbers<[1], [0], [0], [1], [0, 0, 1, 1], [], []>} : vector<2x8xbf16>, vector<8x32xbf16>, vector<2x32xf32> -> vector<2x32xf32>
      %169 = arith.addf %166, %168 : vector<2x32xf32>
      %170 = vector.extract_strided_slice %169 {offsets = [0, 0], sizes = [2, 24], strides = [1, 1]} : vector<2x32xf32> to vector<2x24xf32>
      %171 = arith.negf %170 : vector<2x24xf32>
      %172 = math.exp %171 : vector<2x24xf32>
      %cst_62 = arith.constant 1.000000e+00 : f32
      %173 = vector.broadcast %cst_62 : f32 to vector<2x24xf32>
      %174 = arith.addf %173, %172 : vector<2x24xf32>
      %175 = arith.divf %173, %174 : vector<2x24xf32>
      %176 = vector.extract_strided_slice %169 {offsets = [0, 24], sizes = [2, 8], strides = [1, 1]} : vector<2x32xf32> to vector<2x8xf32>
      %177 = math.tanh %176 : vector<2x8xf32>
      %178 = vector.extract_strided_slice %175 {offsets = [0, 8], sizes = [2, 8], strides = [1, 1]} : vector<2x24xf32> to vector<2x8xf32>
      %179 = arith.mulf %178, %162 : vector<2x8xf32>
      %180 = vector.extract_strided_slice %175 {offsets = [0, 0], sizes = [2, 8], strides = [1, 1]} : vector<2x24xf32> to vector<2x8xf32>
      %181 = arith.mulf %180, %177 : vector<2x8xf32>
      %182 = arith.addf %179, %181 : vector<2x8xf32>
      %183 = vector.extract_strided_slice %175 {offsets = [0, 16], sizes = [2, 8], strides = [1, 1]} : vector<2x24xf32> to vector<2x8xf32>
      %184 = math.tanh %182 : vector<2x8xf32>
      %185 = arith.mulf %183, %184 : vector<2x8xf32>
      %186 = vector.extract_strided_slice %45 {offsets = [14, 0], sizes = [2, 32], strides = [1, 1]} : vector<16x32xf32> to vector<2x32xf32>
      %187 = arith.truncf %185 : vector<2x8xf32> to vector<2x8xbf16>
      %cst_63 = arith.constant dense<0.000000e+00> : vector<2x32xf32>
      %188 = tpu.matmul %187, %29, %cst_63 {dimension_numbers = #tpu.dot_dimension_numbers<[1], [0], [0], [1], [0, 0, 1, 1], [], []>} : vector<2x8xbf16>, vector<8x32xbf16>, vector<2x32xf32> -> vector<2x32xf32>
      %189 = arith.addf %186, %188 : vector<2x32xf32>
      %190 = vector.extract_strided_slice %189 {offsets = [0, 0], sizes = [2, 24], strides = [1, 1]} : vector<2x32xf32> to vector<2x24xf32>
      %191 = arith.negf %190 : vector<2x24xf32>
      %192 = math.exp %191 : vector<2x24xf32>
      %cst_64 = arith.constant 1.000000e+00 : f32
      %193 = vector.broadcast %cst_64 : f32 to vector<2x24xf32>
      %194 = arith.addf %193, %192 : vector<2x24xf32>
      %195 = arith.divf %193, %194 : vector<2x24xf32>
      %196 = vector.extract_strided_slice %189 {offsets = [0, 24], sizes = [2, 8], strides = [1, 1]} : vector<2x32xf32> to vector<2x8xf32>
      %197 = math.tanh %196 : vector<2x8xf32>
      %198 = vector.extract_strided_slice %195 {offsets = [0, 8], sizes = [2, 8], strides = [1, 1]} : vector<2x24xf32> to vector<2x8xf32>
      %199 = arith.mulf %198, %182 : vector<2x8xf32>
      %200 = vector.extract_strided_slice %195 {offsets = [0, 0], sizes = [2, 8], strides = [1, 1]} : vector<2x24xf32> to vector<2x8xf32>
      %201 = arith.mulf %200, %197 : vector<2x8xf32>
      %202 = arith.addf %199, %201 : vector<2x8xf32>
      %203 = vector.extract_strided_slice %195 {offsets = [0, 16], sizes = [2, 8], strides = [1, 1]} : vector<2x24xf32> to vector<2x8xf32>
      %204 = math.tanh %202 : vector<2x8xf32>
      %205 = arith.mulf %203, %204 : vector<2x8xf32>
      %206 = tpu.concatenate %65, %85, %105, %125, %145, %165, %185, %205 in 0 : vector<2x8xf32>, vector<2x8xf32>, vector<2x8xf32>, vector<2x8xf32>, vector<2x8xf32>, vector<2x8xf32>, vector<2x8xf32>, vector<2x8xf32> -> vector<16x8xf32>
      %207 = arith.index_cast %43 : i32 to index
      %c0_65 = arith.constant 0 : index
      %208 = vector.load %arg9[%207, %c0_65] : memref<320x8xf32, #tpu.memory_space<vmem>>, vector<16x8xf32>
      tpu.vector_store %arg9[%207, %c0_65], %206 {strides = array<i32>} : memref<320x8xf32, #tpu.memory_space<vmem>>, vector<16x8xf32>,
      scf.yield %205, %202 : vector<2x8xf32>, vector<2x8xf32>
    }
    %c20_i32_41 = arith.constant 20 : i32
    %c1_42 = arith.constant 1 : index
    %c0_43 = arith.constant 0 : index
    %c0_44 = arith.constant 0 : index
    %36 = vector.load %arg10[%c1_42, %c0_43, %c0_44] : memref<2x2x8xf32, #tpu.memory_space<vmem>>, vector<1x2x8xf32>
    %37 = vector.shape_cast %36 : vector<1x2x8xf32> to vector<2x8xf32>
    %38 = vector.shape_cast %35#0 : vector<2x8xf32> to vector<1x2x8xf32>
    tpu.vector_store %arg10[%c1_42, %c0_43, %c0_44], %38 {strides = array<i32>} : memref<2x2x8xf32, #tpu.memory_space<vmem>>, vector<1x2x8xf32>,
    %c1_45 = arith.constant 1 : index
    %c0_46 = arith.constant 0 : index
    %c0_47 = arith.constant 0 : index
    %39 = vector.load %arg11[%c1_45, %c0_46, %c0_47] : memref<2x2x8xf32, #tpu.memory_space<vmem>>, vector<1x2x8xf32>
    %40 = vector.shape_cast %39 : vector<1x2x8xf32> to vector<2x8xf32>
    %41 = vector.shape_cast %35#1 : vector<2x8xf32> to vector<1x2x8xf32>
    tpu.vector_store %arg11[%c1_45, %c0_46, %c0_47], %41 {strides = array<i32>} : memref<2x2x8xf32, #tpu.memory_space<vmem>>, vector<1x2x8xf32>,
    return
  }
}

module attributes {stable_mosaic.version = 11 : i64} {
  func.func @kernel(%arg0: i32, %arg1: memref<1x4x160xf32, #tpu.memory_space<vmem>>, %arg2: memref<3x64x4xbf16, #tpu.memory_space<vmem>>, %arg3: memref<64x1xf32, #tpu.memory_space<vmem>>, %arg4: memref<64x1xf32, #tpu.memory_space<vmem>>, %arg5: memref<3x32x64xbf16, #tpu.memory_space<vmem>>, %arg6: memref<32x1xf32, #tpu.memory_space<vmem>>, %arg7: memref<32x1xf32, #tpu.memory_space<vmem>>, %arg8: memref<3x16x32xbf16, #tpu.memory_space<vmem>>, %arg9: memref<16x1xf32, #tpu.memory_space<vmem>>, %arg10: memref<16x1xf32, #tpu.memory_space<vmem>>, %arg11: memref<3x8x16xbf16, #tpu.memory_space<vmem>>, %arg12: memref<8x1xf32, #tpu.memory_space<vmem>>, %arg13: memref<8x1xf32, #tpu.memory_space<vmem>>, %arg14: memref<3x4x8xbf16, #tpu.memory_space<vmem>>, %arg15: memref<4x1xf32, #tpu.memory_space<vmem>>, %arg16: memref<4x1xf32, #tpu.memory_space<vmem>>, %arg17: memref<1x4x160xf32, #tpu.memory_space<vmem>>) attributes {dimension_semantics = [#tpu.dimension_semantics<parallel>], iteration_bounds = array<i64: 2>, scalar_prefetch = 0 : i64, scratch_operands = 0 : i64, tpu.core_type = #tpu.core_type<tc>, window_params = [{transform_indices = @transform_0, window_bounds = array<i64: 1, 4, 160>}, {pipeline_mode = #tpu.pipeline_mode<synchronous>, transform_indices = @transform_1, window_bounds = array<i64: 3, 64, 4>}, {pipeline_mode = #tpu.pipeline_mode<synchronous>, transform_indices = @transform_2, window_bounds = array<i64: 64, 1>}, {pipeline_mode = #tpu.pipeline_mode<synchronous>, transform_indices = @transform_3, window_bounds = array<i64: 64, 1>}, {pipeline_mode = #tpu.pipeline_mode<synchronous>, transform_indices = @transform_4, window_bounds = array<i64: 3, 32, 64>}, {pipeline_mode = #tpu.pipeline_mode<synchronous>, transform_indices = @transform_5, window_bounds = array<i64: 32, 1>}, {pipeline_mode = #tpu.pipeline_mode<synchronous>, transform_indices = @transform_6, window_bounds = array<i64: 32, 1>}, {pipeline_mode = #tpu.pipeline_mode<synchronous>, transform_indices = @transform_7, window_bounds = array<i64: 3, 16, 32>}, {pipeline_mode = #tpu.pipeline_mode<synchronous>, transform_indices = @transform_8, window_bounds = array<i64: 16, 1>}, {pipeline_mode = #tpu.pipeline_mode<synchronous>, transform_indices = @transform_9, window_bounds = array<i64: 16, 1>}, {pipeline_mode = #tpu.pipeline_mode<synchronous>, transform_indices = @transform_10, window_bounds = array<i64: 3, 8, 16>}, {pipeline_mode = #tpu.pipeline_mode<synchronous>, transform_indices = @transform_11, window_bounds = array<i64: 8, 1>}, {pipeline_mode = #tpu.pipeline_mode<synchronous>, transform_indices = @transform_12, window_bounds = array<i64: 8, 1>}, {pipeline_mode = #tpu.pipeline_mode<synchronous>, transform_indices = @transform_13, window_bounds = array<i64: 3, 4, 8>}, {pipeline_mode = #tpu.pipeline_mode<synchronous>, transform_indices = @transform_14, window_bounds = array<i64: 4, 1>}, {pipeline_mode = #tpu.pipeline_mode<synchronous>, transform_indices = @transform_15, window_bounds = array<i64: 4, 1>}, {transform_indices = @transform_16, window_bounds = array<i64: 1, 4, 160>}]} {
    %c0 = arith.constant 0 : index
    %c0_0 = arith.constant 0 : index
    %c0_1 = arith.constant 0 : index
    %0 = vector.load %arg1[%c0, %c0_0, %c0_1] : memref<1x4x160xf32, #tpu.memory_space<vmem>>, vector<1x4x160xf32>
    %1 = vector.shape_cast %0 : vector<1x4x160xf32> to vector<4x160xf32>
    %2 = tpu.iota {dimensions = array<i32: 1>} : vector<1x160xi32>
    %c160_i32 = arith.constant 160 : i32
    %c0_i32 = arith.constant 0 : i32
    %3 = arith.cmpi eq, %c160_i32, %c0_i32 : i32
    %c1_i32 = arith.constant 1 : i32
    %4 = arith.select %3, %c1_i32, %c160_i32 : i32
    %5 = vector.broadcast %4 : i32 to vector<1x160xi32>
    %6 = arith.remsi %2, %5 : vector<1x160xi32>
    %c0_i32_2 = arith.constant 0 : i32
    %7 = vector.broadcast %c0_i32_2 : i32 to vector<1x160xi32>
    %8 = arith.cmpi ne, %6, %7 : vector<1x160xi32>
    %c0_i32_3 = arith.constant 0 : i32
    %9 = vector.broadcast %c0_i32_3 : i32 to vector<1x160xi32>
    %10 = arith.cmpi slt, %6, %9 : vector<1x160xi32>
    %c0_i32_4 = arith.constant 0 : i32
    %11 = arith.cmpi slt, %4, %c0_i32_4 : i32
    %12 = vector.broadcast %11 : i1 to vector<1x160xi1>
    %13 = vector.broadcast %12 : vector<1x160xi1> to vector<1x160xi1>
    %14 = arith.xori %10, %13 : vector<1x160xi1>
    %15 = arith.andi %14, %8 : vector<1x160xi1>
    %16 = vector.broadcast %4 : i32 to vector<1x160xi32>
    %17 = arith.addi %6, %16 : vector<1x160xi32>
    %18 = arith.select %15, %17, %6 : vector<1x160xi1>, vector<1x160xi32>
    %c0_i32_5 = arith.constant 0 : i32
    %19 = vector.broadcast %c0_i32_5 : i32 to vector<1x160xi32>
    %20 = arith.cmpi eq, %18, %19 : vector<1x160xi32>
    %c160_i32_6 = arith.constant 160 : i32
    %c0_i32_7 = arith.constant 0 : i32
    %21 = arith.cmpi eq, %c160_i32_6, %c0_i32_7 : i32
    %c1_i32_8 = arith.constant 1 : i32
    %22 = arith.select %21, %c1_i32_8, %c160_i32_6 : i32
    %23 = vector.broadcast %22 : i32 to vector<1x160xi32>
    %24 = arith.remsi %2, %23 : vector<1x160xi32>
    %c0_i32_9 = arith.constant 0 : i32
    %25 = vector.broadcast %c0_i32_9 : i32 to vector<1x160xi32>
    %26 = arith.cmpi ne, %24, %25 : vector<1x160xi32>
    %c0_i32_10 = arith.constant 0 : i32
    %27 = vector.broadcast %c0_i32_10 : i32 to vector<1x160xi32>
    %28 = arith.cmpi slt, %24, %27 : vector<1x160xi32>
    %c0_i32_11 = arith.constant 0 : i32
    %29 = arith.cmpi slt, %22, %c0_i32_11 : i32
    %30 = vector.broadcast %29 : i1 to vector<1x160xi1>
    %31 = vector.broadcast %30 : vector<1x160xi1> to vector<1x160xi1>
    %32 = arith.xori %28, %31 : vector<1x160xi1>
    %33 = arith.andi %32, %26 : vector<1x160xi1>
    %34 = vector.broadcast %22 : i32 to vector<1x160xi32>
    %35 = arith.addi %24, %34 : vector<1x160xi32>
    %36 = arith.select %33, %35, %24 : vector<1x160xi1>, vector<1x160xi32>
    %c159_i32 = arith.constant 159 : i32
    %37 = vector.broadcast %c159_i32 : i32 to vector<1x160xi32>
    %38 = arith.cmpi eq, %36, %37 : vector<1x160xi32>
    %c1_i32_12 = arith.constant 1 : i32
    %39 = tpu.dynamic_rotate %1 by %c1_i32_12 dim 1 : vector<4x160xf32>, i32 -> vector<4x160xf32>
    %40 = vector.shape_cast %20 : vector<1x160xi1> to vector<1x160xi1>
    %41 = vector.broadcast %40 : vector<1x160xi1> to vector<4x160xi1>
    %42 = arith.select %41, %1, %39 : vector<4x160xi1>, vector<4x160xf32>
    %c159_i32_13 = arith.constant 159 : i32
    %43 = tpu.dynamic_rotate %1 by %c159_i32_13 dim 1 : vector<4x160xf32>, i32 -> vector<4x160xf32>
    %44 = vector.shape_cast %38 : vector<1x160xi1> to vector<1x160xi1>
    %45 = vector.broadcast %44 : vector<1x160xi1> to vector<4x160xi1>
    %46 = arith.select %45, %1, %43 : vector<4x160xi1>, vector<4x160xf32>
    %47 = arith.truncf %1 : vector<4x160xf32> to vector<4x160xbf16>
    %c0_14 = arith.constant 0 : index
    %c0_15 = arith.constant 0 : index
    %c0_16 = arith.constant 0 : index
    %48 = vector.load %arg2[%c0_14, %c0_15, %c0_16] : memref<3x64x4xbf16, #tpu.memory_space<vmem>>, vector<1x64x4xbf16>
    %49 = vector.shape_cast %48 : vector<1x64x4xbf16> to vector<64x4xbf16>
    %50 = arith.truncf %42 : vector<4x160xf32> to vector<4x160xbf16>
    %cst = arith.constant dense<0.000000e+00> : vector<64x160xf32>
    %51 = tpu.matmul %49, %50, %cst {dimension_numbers = #tpu.dot_dimension_numbers<[1], [0], [0], [1], [0, 0, 1, 1], [], []>} : vector<64x4xbf16>, vector<4x160xbf16>, vector<64x160xf32> -> vector<64x160xf32>
    %c1 = arith.constant 1 : index
    %c0_17 = arith.constant 0 : index
    %c0_18 = arith.constant 0 : index
    %52 = vector.load %arg2[%c1, %c0_17, %c0_18] : memref<3x64x4xbf16, #tpu.memory_space<vmem>>, vector<1x64x4xbf16>
    %53 = vector.shape_cast %52 : vector<1x64x4xbf16> to vector<64x4xbf16>
    %cst_19 = arith.constant dense<0.000000e+00> : vector<64x160xf32>
    %54 = tpu.matmul %53, %47, %cst_19 {dimension_numbers = #tpu.dot_dimension_numbers<[1], [0], [0], [1], [0, 0, 1, 1], [], []>} : vector<64x4xbf16>, vector<4x160xbf16>, vector<64x160xf32> -> vector<64x160xf32>
    %55 = arith.addf %51, %54 : vector<64x160xf32>
    %c2 = arith.constant 2 : index
    %c0_20 = arith.constant 0 : index
    %c0_21 = arith.constant 0 : index
    %56 = vector.load %arg2[%c2, %c0_20, %c0_21] : memref<3x64x4xbf16, #tpu.memory_space<vmem>>, vector<1x64x4xbf16>
    %57 = vector.shape_cast %56 : vector<1x64x4xbf16> to vector<64x4xbf16>
    %58 = arith.truncf %46 : vector<4x160xf32> to vector<4x160xbf16>
    %cst_22 = arith.constant dense<0.000000e+00> : vector<64x160xf32>
    %59 = tpu.matmul %57, %58, %cst_22 {dimension_numbers = #tpu.dot_dimension_numbers<[1], [0], [0], [1], [0, 0, 1, 1], [], []>} : vector<64x4xbf16>, vector<4x160xbf16>, vector<64x160xf32> -> vector<64x160xf32>
    %60 = arith.addf %55, %59 : vector<64x160xf32>
    %c0_23 = arith.constant 0 : index
    %c0_24 = arith.constant 0 : index
    %61 = vector.load %arg3[%c0_23, %c0_24] : memref<64x1xf32, #tpu.memory_space<vmem>>, vector<64x1xf32>
    %62 = vector.broadcast %61 : vector<64x1xf32> to vector<64x160xf32>
    %63 = arith.mulf %60, %62 : vector<64x160xf32>
    %c0_25 = arith.constant 0 : index
    %c0_26 = arith.constant 0 : index
    %64 = vector.load %arg4[%c0_25, %c0_26] : memref<64x1xf32, #tpu.memory_space<vmem>>, vector<64x1xf32>
    %65 = vector.broadcast %64 : vector<64x1xf32> to vector<64x160xf32>
    %66 = arith.addf %63, %65 : vector<64x160xf32>
    %cst_27 = arith.constant 0.000000e+00 : f32
    %67 = vector.broadcast %cst_27 : f32 to vector<64x160xf32>
    %68 = arith.maximumf %66, %67 : vector<64x160xf32>
    %c1_i32_28 = arith.constant 1 : i32
    %69 = tpu.dynamic_rotate %68 by %c1_i32_28 dim 1 : vector<64x160xf32>, i32 -> vector<64x160xf32>
    %70 = vector.shape_cast %20 : vector<1x160xi1> to vector<1x160xi1>
    %71 = vector.broadcast %70 : vector<1x160xi1> to vector<64x160xi1>
    %72 = arith.select %71, %68, %69 : vector<64x160xi1>, vector<64x160xf32>
    %c159_i32_29 = arith.constant 159 : i32
    %73 = tpu.dynamic_rotate %68 by %c159_i32_29 dim 1 : vector<64x160xf32>, i32 -> vector<64x160xf32>
    %74 = vector.shape_cast %38 : vector<1x160xi1> to vector<1x160xi1>
    %75 = vector.broadcast %74 : vector<1x160xi1> to vector<64x160xi1>
    %76 = arith.select %75, %68, %73 : vector<64x160xi1>, vector<64x160xf32>
    %77 = arith.truncf %68 : vector<64x160xf32> to vector<64x160xbf16>
    %c0_30 = arith.constant 0 : index
    %c0_31 = arith.constant 0 : index
    %c0_32 = arith.constant 0 : index
    %78 = vector.load %arg5[%c0_30, %c0_31, %c0_32] : memref<3x32x64xbf16, #tpu.memory_space<vmem>>, vector<1x32x64xbf16>
    %79 = vector.shape_cast %78 : vector<1x32x64xbf16> to vector<32x64xbf16>
    %80 = arith.truncf %72 : vector<64x160xf32> to vector<64x160xbf16>
    %cst_33 = arith.constant dense<0.000000e+00> : vector<32x160xf32>
    %81 = tpu.matmul %79, %80, %cst_33 {dimension_numbers = #tpu.dot_dimension_numbers<[1], [0], [0], [1], [0, 0, 1, 1], [], []>} : vector<32x64xbf16>, vector<64x160xbf16>, vector<32x160xf32> -> vector<32x160xf32>
    %c1_34 = arith.constant 1 : index
    %c0_35 = arith.constant 0 : index
    %c0_36 = arith.constant 0 : index
    %82 = vector.load %arg5[%c1_34, %c0_35, %c0_36] : memref<3x32x64xbf16, #tpu.memory_space<vmem>>, vector<1x32x64xbf16>
    %83 = vector.shape_cast %82 : vector<1x32x64xbf16> to vector<32x64xbf16>
    %cst_37 = arith.constant dense<0.000000e+00> : vector<32x160xf32>
    %84 = tpu.matmul %83, %77, %cst_37 {dimension_numbers = #tpu.dot_dimension_numbers<[1], [0], [0], [1], [0, 0, 1, 1], [], []>} : vector<32x64xbf16>, vector<64x160xbf16>, vector<32x160xf32> -> vector<32x160xf32>
    %85 = arith.addf %81, %84 : vector<32x160xf32>
    %c2_38 = arith.constant 2 : index
    %c0_39 = arith.constant 0 : index
    %c0_40 = arith.constant 0 : index
    %86 = vector.load %arg5[%c2_38, %c0_39, %c0_40] : memref<3x32x64xbf16, #tpu.memory_space<vmem>>, vector<1x32x64xbf16>
    %87 = vector.shape_cast %86 : vector<1x32x64xbf16> to vector<32x64xbf16>
    %88 = arith.truncf %76 : vector<64x160xf32> to vector<64x160xbf16>
    %cst_41 = arith.constant dense<0.000000e+00> : vector<32x160xf32>
    %89 = tpu.matmul %87, %88, %cst_41 {dimension_numbers = #tpu.dot_dimension_numbers<[1], [0], [0], [1], [0, 0, 1, 1], [], []>} : vector<32x64xbf16>, vector<64x160xbf16>, vector<32x160xf32> -> vector<32x160xf32>
    %90 = arith.addf %85, %89 : vector<32x160xf32>
    %c0_42 = arith.constant 0 : index
    %c0_43 = arith.constant 0 : index
    %91 = vector.load %arg6[%c0_42, %c0_43] : memref<32x1xf32, #tpu.memory_space<vmem>>, vector<32x1xf32>
    %92 = vector.broadcast %91 : vector<32x1xf32> to vector<32x160xf32>
    %93 = arith.mulf %90, %92 : vector<32x160xf32>
    %c0_44 = arith.constant 0 : index
    %c0_45 = arith.constant 0 : index
    %94 = vector.load %arg7[%c0_44, %c0_45] : memref<32x1xf32, #tpu.memory_space<vmem>>, vector<32x1xf32>
    %95 = vector.broadcast %94 : vector<32x1xf32> to vector<32x160xf32>
    %96 = arith.addf %93, %95 : vector<32x160xf32>
    %cst_46 = arith.constant 0.000000e+00 : f32
    %97 = vector.broadcast %cst_46 : f32 to vector<32x160xf32>
    %98 = arith.maximumf %96, %97 : vector<32x160xf32>
    %c1_i32_47 = arith.constant 1 : i32
    %99 = tpu.dynamic_rotate %98 by %c1_i32_47 dim 1 : vector<32x160xf32>, i32 -> vector<32x160xf32>
    %100 = vector.shape_cast %20 : vector<1x160xi1> to vector<1x160xi1>
    %101 = vector.broadcast %100 : vector<1x160xi1> to vector<32x160xi1>
    %102 = arith.select %101, %98, %99 : vector<32x160xi1>, vector<32x160xf32>
    %c159_i32_48 = arith.constant 159 : i32
    %103 = tpu.dynamic_rotate %98 by %c159_i32_48 dim 1 : vector<32x160xf32>, i32 -> vector<32x160xf32>
    %104 = vector.shape_cast %38 : vector<1x160xi1> to vector<1x160xi1>
    %105 = vector.broadcast %104 : vector<1x160xi1> to vector<32x160xi1>
    %106 = arith.select %105, %98, %103 : vector<32x160xi1>, vector<32x160xf32>
    %107 = arith.truncf %98 : vector<32x160xf32> to vector<32x160xbf16>
    %c0_49 = arith.constant 0 : index
    %c0_50 = arith.constant 0 : index
    %c0_51 = arith.constant 0 : index
    %108 = vector.load %arg8[%c0_49, %c0_50, %c0_51] : memref<3x16x32xbf16, #tpu.memory_space<vmem>>, vector<1x16x32xbf16>
    %109 = vector.shape_cast %108 : vector<1x16x32xbf16> to vector<16x32xbf16>
    %110 = arith.truncf %102 : vector<32x160xf32> to vector<32x160xbf16>
    %cst_52 = arith.constant dense<0.000000e+00> : vector<16x160xf32>
    %111 = tpu.matmul %109, %110, %cst_52 {dimension_numbers = #tpu.dot_dimension_numbers<[1], [0], [0], [1], [0, 0, 1, 1], [], []>} : vector<16x32xbf16>, vector<32x160xbf16>, vector<16x160xf32> -> vector<16x160xf32>
    %c1_53 = arith.constant 1 : index
    %c0_54 = arith.constant 0 : index
    %c0_55 = arith.constant 0 : index
    %112 = vector.load %arg8[%c1_53, %c0_54, %c0_55] : memref<3x16x32xbf16, #tpu.memory_space<vmem>>, vector<1x16x32xbf16>
    %113 = vector.shape_cast %112 : vector<1x16x32xbf16> to vector<16x32xbf16>
    %cst_56 = arith.constant dense<0.000000e+00> : vector<16x160xf32>
    %114 = tpu.matmul %113, %107, %cst_56 {dimension_numbers = #tpu.dot_dimension_numbers<[1], [0], [0], [1], [0, 0, 1, 1], [], []>} : vector<16x32xbf16>, vector<32x160xbf16>, vector<16x160xf32> -> vector<16x160xf32>
    %115 = arith.addf %111, %114 : vector<16x160xf32>
    %c2_57 = arith.constant 2 : index
    %c0_58 = arith.constant 0 : index
    %c0_59 = arith.constant 0 : index
    %116 = vector.load %arg8[%c2_57, %c0_58, %c0_59] : memref<3x16x32xbf16, #tpu.memory_space<vmem>>, vector<1x16x32xbf16>
    %117 = vector.shape_cast %116 : vector<1x16x32xbf16> to vector<16x32xbf16>
    %118 = arith.truncf %106 : vector<32x160xf32> to vector<32x160xbf16>
    %cst_60 = arith.constant dense<0.000000e+00> : vector<16x160xf32>
    %119 = tpu.matmul %117, %118, %cst_60 {dimension_numbers = #tpu.dot_dimension_numbers<[1], [0], [0], [1], [0, 0, 1, 1], [], []>} : vector<16x32xbf16>, vector<32x160xbf16>, vector<16x160xf32> -> vector<16x160xf32>
    %120 = arith.addf %115, %119 : vector<16x160xf32>
    %c0_61 = arith.constant 0 : index
    %c0_62 = arith.constant 0 : index
    %121 = vector.load %arg9[%c0_61, %c0_62] : memref<16x1xf32, #tpu.memory_space<vmem>>, vector<16x1xf32>
    %122 = vector.broadcast %121 : vector<16x1xf32> to vector<16x160xf32>
    %123 = arith.mulf %120, %122 : vector<16x160xf32>
    %c0_63 = arith.constant 0 : index
    %c0_64 = arith.constant 0 : index
    %124 = vector.load %arg10[%c0_63, %c0_64] : memref<16x1xf32, #tpu.memory_space<vmem>>, vector<16x1xf32>
    %125 = vector.broadcast %124 : vector<16x1xf32> to vector<16x160xf32>
    %126 = arith.addf %123, %125 : vector<16x160xf32>
    %cst_65 = arith.constant 0.000000e+00 : f32
    %127 = vector.broadcast %cst_65 : f32 to vector<16x160xf32>
    %128 = arith.maximumf %126, %127 : vector<16x160xf32>
    %c1_i32_66 = arith.constant 1 : i32
    %129 = tpu.dynamic_rotate %128 by %c1_i32_66 dim 1 : vector<16x160xf32>, i32 -> vector<16x160xf32>
    %130 = vector.shape_cast %20 : vector<1x160xi1> to vector<1x160xi1>
    %131 = vector.broadcast %130 : vector<1x160xi1> to vector<16x160xi1>
    %132 = arith.select %131, %128, %129 : vector<16x160xi1>, vector<16x160xf32>
    %c159_i32_67 = arith.constant 159 : i32
    %133 = tpu.dynamic_rotate %128 by %c159_i32_67 dim 1 : vector<16x160xf32>, i32 -> vector<16x160xf32>
    %134 = vector.shape_cast %38 : vector<1x160xi1> to vector<1x160xi1>
    %135 = vector.broadcast %134 : vector<1x160xi1> to vector<16x160xi1>
    %136 = arith.select %135, %128, %133 : vector<16x160xi1>, vector<16x160xf32>
    %137 = arith.truncf %128 : vector<16x160xf32> to vector<16x160xbf16>
    %c0_68 = arith.constant 0 : index
    %c0_69 = arith.constant 0 : index
    %c0_70 = arith.constant 0 : index
    %138 = vector.load %arg11[%c0_68, %c0_69, %c0_70] : memref<3x8x16xbf16, #tpu.memory_space<vmem>>, vector<1x8x16xbf16>
    %139 = vector.shape_cast %138 : vector<1x8x16xbf16> to vector<8x16xbf16>
    %140 = arith.truncf %132 : vector<16x160xf32> to vector<16x160xbf16>
    %cst_71 = arith.constant dense<0.000000e+00> : vector<8x160xf32>
    %141 = tpu.matmul %139, %140, %cst_71 {dimension_numbers = #tpu.dot_dimension_numbers<[1], [0], [0], [1], [0, 0, 1, 1], [], []>} : vector<8x16xbf16>, vector<16x160xbf16>, vector<8x160xf32> -> vector<8x160xf32>
    %c1_72 = arith.constant 1 : index
    %c0_73 = arith.constant 0 : index
    %c0_74 = arith.constant 0 : index
    %142 = vector.load %arg11[%c1_72, %c0_73, %c0_74] : memref<3x8x16xbf16, #tpu.memory_space<vmem>>, vector<1x8x16xbf16>
    %143 = vector.shape_cast %142 : vector<1x8x16xbf16> to vector<8x16xbf16>
    %cst_75 = arith.constant dense<0.000000e+00> : vector<8x160xf32>
    %144 = tpu.matmul %143, %137, %cst_75 {dimension_numbers = #tpu.dot_dimension_numbers<[1], [0], [0], [1], [0, 0, 1, 1], [], []>} : vector<8x16xbf16>, vector<16x160xbf16>, vector<8x160xf32> -> vector<8x160xf32>
    %145 = arith.addf %141, %144 : vector<8x160xf32>
    %c2_76 = arith.constant 2 : index
    %c0_77 = arith.constant 0 : index
    %c0_78 = arith.constant 0 : index
    %146 = vector.load %arg11[%c2_76, %c0_77, %c0_78] : memref<3x8x16xbf16, #tpu.memory_space<vmem>>, vector<1x8x16xbf16>
    %147 = vector.shape_cast %146 : vector<1x8x16xbf16> to vector<8x16xbf16>
    %148 = arith.truncf %136 : vector<16x160xf32> to vector<16x160xbf16>
    %cst_79 = arith.constant dense<0.000000e+00> : vector<8x160xf32>
    %149 = tpu.matmul %147, %148, %cst_79 {dimension_numbers = #tpu.dot_dimension_numbers<[1], [0], [0], [1], [0, 0, 1, 1], [], []>} : vector<8x16xbf16>, vector<16x160xbf16>, vector<8x160xf32> -> vector<8x160xf32>
    %150 = arith.addf %145, %149 : vector<8x160xf32>
    %c0_80 = arith.constant 0 : index
    %c0_81 = arith.constant 0 : index
    %151 = vector.load %arg12[%c0_80, %c0_81] : memref<8x1xf32, #tpu.memory_space<vmem>>, vector<8x1xf32>
    %152 = vector.broadcast %151 : vector<8x1xf32> to vector<8x160xf32>
    %153 = arith.mulf %150, %152 : vector<8x160xf32>
    %c0_82 = arith.constant 0 : index
    %c0_83 = arith.constant 0 : index
    %154 = vector.load %arg13[%c0_82, %c0_83] : memref<8x1xf32, #tpu.memory_space<vmem>>, vector<8x1xf32>
    %155 = vector.broadcast %154 : vector<8x1xf32> to vector<8x160xf32>
    %156 = arith.addf %153, %155 : vector<8x160xf32>
    %cst_84 = arith.constant 0.000000e+00 : f32
    %157 = vector.broadcast %cst_84 : f32 to vector<8x160xf32>
    %158 = arith.maximumf %156, %157 : vector<8x160xf32>
    %c1_i32_85 = arith.constant 1 : i32
    %159 = tpu.dynamic_rotate %158 by %c1_i32_85 dim 1 : vector<8x160xf32>, i32 -> vector<8x160xf32>
    %160 = vector.shape_cast %20 : vector<1x160xi1> to vector<1x160xi1>
    %161 = vector.broadcast %160 : vector<1x160xi1> to vector<8x160xi1>
    %162 = arith.select %161, %158, %159 : vector<8x160xi1>, vector<8x160xf32>
    %c159_i32_86 = arith.constant 159 : i32
    %163 = tpu.dynamic_rotate %158 by %c159_i32_86 dim 1 : vector<8x160xf32>, i32 -> vector<8x160xf32>
    %164 = vector.shape_cast %38 : vector<1x160xi1> to vector<1x160xi1>
    %165 = vector.broadcast %164 : vector<1x160xi1> to vector<8x160xi1>
    %166 = arith.select %165, %158, %163 : vector<8x160xi1>, vector<8x160xf32>
    %167 = arith.truncf %158 : vector<8x160xf32> to vector<8x160xbf16>
    %c0_87 = arith.constant 0 : index
    %c0_88 = arith.constant 0 : index
    %c0_89 = arith.constant 0 : index
    %168 = vector.load %arg14[%c0_87, %c0_88, %c0_89] : memref<3x4x8xbf16, #tpu.memory_space<vmem>>, vector<1x4x8xbf16>
    %169 = vector.shape_cast %168 : vector<1x4x8xbf16> to vector<4x8xbf16>
    %170 = arith.truncf %162 : vector<8x160xf32> to vector<8x160xbf16>
    %cst_90 = arith.constant dense<0.000000e+00> : vector<4x160xf32>
    %171 = tpu.matmul %169, %170, %cst_90 {dimension_numbers = #tpu.dot_dimension_numbers<[1], [0], [0], [1], [0, 0, 1, 1], [], []>} : vector<4x8xbf16>, vector<8x160xbf16>, vector<4x160xf32> -> vector<4x160xf32>
    %c1_91 = arith.constant 1 : index
    %c0_92 = arith.constant 0 : index
    %c0_93 = arith.constant 0 : index
    %172 = vector.load %arg14[%c1_91, %c0_92, %c0_93] : memref<3x4x8xbf16, #tpu.memory_space<vmem>>, vector<1x4x8xbf16>
    %173 = vector.shape_cast %172 : vector<1x4x8xbf16> to vector<4x8xbf16>
    %cst_94 = arith.constant dense<0.000000e+00> : vector<4x160xf32>
    %174 = tpu.matmul %173, %167, %cst_94 {dimension_numbers = #tpu.dot_dimension_numbers<[1], [0], [0], [1], [0, 0, 1, 1], [], []>} : vector<4x8xbf16>, vector<8x160xbf16>, vector<4x160xf32> -> vector<4x160xf32>
    %175 = arith.addf %171, %174 : vector<4x160xf32>
    %c2_95 = arith.constant 2 : index
    %c0_96 = arith.constant 0 : index
    %c0_97 = arith.constant 0 : index
    %176 = vector.load %arg14[%c2_95, %c0_96, %c0_97] : memref<3x4x8xbf16, #tpu.memory_space<vmem>>, vector<1x4x8xbf16>
    %177 = vector.shape_cast %176 : vector<1x4x8xbf16> to vector<4x8xbf16>
    %178 = arith.truncf %166 : vector<8x160xf32> to vector<8x160xbf16>
    %cst_98 = arith.constant dense<0.000000e+00> : vector<4x160xf32>
    %179 = tpu.matmul %177, %178, %cst_98 {dimension_numbers = #tpu.dot_dimension_numbers<[1], [0], [0], [1], [0, 0, 1, 1], [], []>} : vector<4x8xbf16>, vector<8x160xbf16>, vector<4x160xf32> -> vector<4x160xf32>
    %180 = arith.addf %175, %179 : vector<4x160xf32>
    %c0_99 = arith.constant 0 : index
    %c0_100 = arith.constant 0 : index
    %181 = vector.load %arg15[%c0_99, %c0_100] : memref<4x1xf32, #tpu.memory_space<vmem>>, vector<4x1xf32>
    %182 = vector.broadcast %181 : vector<4x1xf32> to vector<4x160xf32>
    %183 = arith.mulf %180, %182 : vector<4x160xf32>
    %c0_101 = arith.constant 0 : index
    %c0_102 = arith.constant 0 : index
    %184 = vector.load %arg16[%c0_101, %c0_102] : memref<4x1xf32, #tpu.memory_space<vmem>>, vector<4x1xf32>
    %185 = vector.broadcast %184 : vector<4x1xf32> to vector<4x160xf32>
    %186 = arith.addf %183, %185 : vector<4x160xf32>
    %cst_103 = arith.constant 0.000000e+00 : f32
    %187 = vector.broadcast %cst_103 : f32 to vector<4x160xf32>
    %188 = arith.maximumf %186, %187 : vector<4x160xf32>
    %c0_104 = arith.constant 0 : index
    %c0_105 = arith.constant 0 : index
    %c0_106 = arith.constant 0 : index
    %189 = vector.load %arg17[%c0_104, %c0_105, %c0_106] : memref<1x4x160xf32, #tpu.memory_space<vmem>>, vector<1x4x160xf32>
    %190 = vector.shape_cast %189 : vector<1x4x160xf32> to vector<4x160xf32>
    %191 = vector.shape_cast %188 : vector<4x160xf32> to vector<1x4x160xf32>
    tpu.vector_store %arg17[%c0_104, %c0_105, %c0_106], %191 {strides = array<i32>} : memref<1x4x160xf32, #tpu.memory_space<vmem>>, vector<1x4x160xf32>,
    return
  }
  func.func @transform_0(%arg0: i32) -> (i32, i32, i32) {
    %c0_i32 = arith.constant 0 : i32
    %c0_i32_0 = arith.constant 0 : i32
    %c0_i32_1 = arith.constant 0 : i32
    return %arg0, %c0_i32, %c0_i32_0 : i32, i32, i32
  }
  func.func @transform_1(%arg0: i32) -> (i32, i32, i32) {
    %c0_i32 = arith.constant 0 : i32
    %c0_i32_0 = arith.constant 0 : i32
    %c0_i32_1 = arith.constant 0 : i32
    %c0_i32_2 = arith.constant 0 : i32
    return %c0_i32, %c0_i32_0, %c0_i32_1 : i32, i32, i32
  }
  func.func @transform_2(%arg0: i32) -> (i32, i32) {
    %c0_i32 = arith.constant 0 : i32
    %c0_i32_0 = arith.constant 0 : i32
    %c0_i32_1 = arith.constant 0 : i32
    return %c0_i32, %c0_i32_0 : i32, i32
  }
  func.func @transform_3(%arg0: i32) -> (i32, i32) {
    %c0_i32 = arith.constant 0 : i32
    %c0_i32_0 = arith.constant 0 : i32
    %c0_i32_1 = arith.constant 0 : i32
    return %c0_i32, %c0_i32_0 : i32, i32
  }
  func.func @transform_4(%arg0: i32) -> (i32, i32, i32) {
    %c0_i32 = arith.constant 0 : i32
    %c0_i32_0 = arith.constant 0 : i32
    %c0_i32_1 = arith.constant 0 : i32
    %c0_i32_2 = arith.constant 0 : i32
    return %c0_i32, %c0_i32_0, %c0_i32_1 : i32, i32, i32
  }
  func.func @transform_5(%arg0: i32) -> (i32, i32) {
    %c0_i32 = arith.constant 0 : i32
    %c0_i32_0 = arith.constant 0 : i32
    %c0_i32_1 = arith.constant 0 : i32
    return %c0_i32, %c0_i32_0 : i32, i32
  }
  func.func @transform_6(%arg0: i32) -> (i32, i32) {
    %c0_i32 = arith.constant 0 : i32
    %c0_i32_0 = arith.constant 0 : i32
    %c0_i32_1 = arith.constant 0 : i32
    return %c0_i32, %c0_i32_0 : i32, i32
  }
  func.func @transform_7(%arg0: i32) -> (i32, i32, i32) {
    %c0_i32 = arith.constant 0 : i32
    %c0_i32_0 = arith.constant 0 : i32
    %c0_i32_1 = arith.constant 0 : i32
    %c0_i32_2 = arith.constant 0 : i32
    return %c0_i32, %c0_i32_0, %c0_i32_1 : i32, i32, i32
  }
  func.func @transform_8(%arg0: i32) -> (i32, i32) {
    %c0_i32 = arith.constant 0 : i32
    %c0_i32_0 = arith.constant 0 : i32
    %c0_i32_1 = arith.constant 0 : i32
    return %c0_i32, %c0_i32_0 : i32, i32
  }
  func.func @transform_9(%arg0: i32) -> (i32, i32) {
    %c0_i32 = arith.constant 0 : i32
    %c0_i32_0 = arith.constant 0 : i32
    %c0_i32_1 = arith.constant 0 : i32
    return %c0_i32, %c0_i32_0 : i32, i32
  }
  func.func @transform_10(%arg0: i32) -> (i32, i32, i32) {
    %c0_i32 = arith.constant 0 : i32
    %c0_i32_0 = arith.constant 0 : i32
    %c0_i32_1 = arith.constant 0 : i32
    %c0_i32_2 = arith.constant 0 : i32
    return %c0_i32, %c0_i32_0, %c0_i32_1 : i32, i32, i32
  }
  func.func @transform_11(%arg0: i32) -> (i32, i32) {
    %c0_i32 = arith.constant 0 : i32
    %c0_i32_0 = arith.constant 0 : i32
    %c0_i32_1 = arith.constant 0 : i32
    return %c0_i32, %c0_i32_0 : i32, i32
  }
  func.func @transform_12(%arg0: i32) -> (i32, i32) {
    %c0_i32 = arith.constant 0 : i32
    %c0_i32_0 = arith.constant 0 : i32
    %c0_i32_1 = arith.constant 0 : i32
    return %c0_i32, %c0_i32_0 : i32, i32
  }
  func.func @transform_13(%arg0: i32) -> (i32, i32, i32) {
    %c0_i32 = arith.constant 0 : i32
    %c0_i32_0 = arith.constant 0 : i32
    %c0_i32_1 = arith.constant 0 : i32
    %c0_i32_2 = arith.constant 0 : i32
    return %c0_i32, %c0_i32_0, %c0_i32_1 : i32, i32, i32
  }
  func.func @transform_14(%arg0: i32) -> (i32, i32) {
    %c0_i32 = arith.constant 0 : i32
    %c0_i32_0 = arith.constant 0 : i32
    %c0_i32_1 = arith.constant 0 : i32
    return %c0_i32, %c0_i32_0 : i32, i32
  }
  func.func @transform_15(%arg0: i32) -> (i32, i32) {
    %c0_i32 = arith.constant 0 : i32
    %c0_i32_0 = arith.constant 0 : i32
    %c0_i32_1 = arith.constant 0 : i32
    return %c0_i32, %c0_i32_0 : i32, i32
  }
  func.func @transform_16(%arg0: i32) -> (i32, i32, i32) {
    %c0_i32 = arith.constant 0 : i32
    %c0_i32_0 = arith.constant 0 : i32
    %c0_i32_1 = arith.constant 0 : i32
    return %arg0, %c0_i32, %c0_i32_0 : i32, i32, i32
  }
}

module attributes {stable_mosaic.version = 11 : i64} {
  func.func @_linear_kernel(%arg0: memref<2x1280xf32, #tpu.memory_space<vmem>>, %arg1: memref<1280x512xbf16, #tpu.memory_space<vmem>>, %arg2: memref<1x512xf32, #tpu.memory_space<vmem>>, %arg3: memref<2x512xf32, #tpu.memory_space<vmem>>) attributes {dimension_semantics = [], scalar_prefetch = 0 : i64, scratch_operands = 0 : i64, tpu.core_type = #tpu.core_type<tc>} {
    %c0 = arith.constant 0 : index
    %c0_0 = arith.constant 0 : index
    %0 = vector.load %arg0[%c0, %c0_0] : memref<2x1280xf32, #tpu.memory_space<vmem>>, vector<2x1280xf32>
    %1 = arith.truncf %0 : vector<2x1280xf32> to vector<2x1280xbf16>
    %c0_1 = arith.constant 0 : index
    %c0_2 = arith.constant 0 : index
    %2 = vector.load %arg1[%c0_1, %c0_2] : memref<1280x512xbf16, #tpu.memory_space<vmem>>, vector<1280x512xbf16>
    %cst = arith.constant dense<0.000000e+00> : vector<2x512xf32>
    %3 = tpu.matmul %1, %2, %cst {dimension_numbers = #tpu.dot_dimension_numbers<[1], [0], [0], [1], [0, 0, 1, 1], [], []>} : vector<2x1280xbf16>, vector<1280x512xbf16>, vector<2x512xf32> -> vector<2x512xf32>
    %c0_3 = arith.constant 0 : index
    %c0_4 = arith.constant 0 : index
    %4 = vector.load %arg2[%c0_3, %c0_4] : memref<1x512xf32, #tpu.memory_space<vmem>>, vector<1x512xf32>
    %5 = vector.broadcast %4 : vector<1x512xf32> to vector<2x512xf32>
    %6 = arith.addf %3, %5 : vector<2x512xf32>
    %c0_5 = arith.constant 0 : index
    %c0_6 = arith.constant 0 : index
    %7 = vector.load %arg3[%c0_5, %c0_6] : memref<2x512xf32, #tpu.memory_space<vmem>>, vector<2x512xf32>
    tpu.vector_store %arg3[%c0_5, %c0_6], %6 {strides = array<i32>} : memref<2x512xf32, #tpu.memory_space<vmem>>, vector<2x512xf32>,
    return
  }
}

</mosaic_0001>

<llo_original>
// kernel: n_vcnn_lstm_forward.3
$region0: #{n_vcnn_lstm_forward.3}
  #allocation0 [shape = 'u32[]', space=smem, size = 0x4, offset = 0x4, fixed_abs, tag = 'smem constant byte address 0x4 - core index']
  #allocation1 [shape = 'u32[144,128]{1,0:T(1,128)}', space=vmem, size = 0x12000, scoped, tag = 'internal scratch']
  %s0 = inlined_call_operand.hbm [shape: f32[2,4,160], index: 0, kind: input, shape index: {}]
  %s1 = inlined_call_operand.vmem [shape: bf16[3,64,4], index: 1, kind: input, shape index: {}]
  %s2 = inlined_call_operand.vmem [shape: f32[64,1], index: 2, kind: input, shape index: {}]
  %s3 = inlined_call_operand.vmem [shape: f32[64,1], index: 3, kind: input, shape index: {}]
  %s4 = inlined_call_operand.hbm [shape: bf16[3,32,64], index: 4, kind: input, shape index: {}]
  %s5 = inlined_call_operand.vmem [shape: f32[32,1], index: 5, kind: input, shape index: {}]
  %s6 = inlined_call_operand.vmem [shape: f32[32,1], index: 6, kind: input, shape index: {}]
  %s7 = inlined_call_operand.hbm [shape: bf16[3,16,32], index: 7, kind: input, shape index: {}]
  %s8 = inlined_call_operand.vmem [shape: f32[16,1], index: 8, kind: input, shape index: {}]
  %s9 = inlined_call_operand.vmem [shape: f32[16,1], index: 9, kind: input, shape index: {}]
  %s10 = inlined_call_operand.hbm [shape: bf16[3,8,16], index: 10, kind: input, shape index: {}]
  %s11 = inlined_call_operand.vmem [shape: f32[8,1], index: 11, kind: input, shape index: {}]
  %s12 = inlined_call_operand.vmem [shape: f32[8,1], index: 12, kind: input, shape index: {}]
  %s13 = inlined_call_operand.hbm [shape: bf16[3,4,8], index: 13, kind: input, shape index: {}]
  %s14 = inlined_call_operand.vmem [shape: f32[4,1], index: 14, kind: input, shape index: {}]
  %s15 = inlined_call_operand.vmem [shape: f32[4,1], index: 15, kind: input, shape index: {}]
  %s16 = inlined_call_operand.vmem [shape: f32[2,4,160], index: 16, kind: output, shape index: {}]
  %s17 = sld [smem:[#allocation0]]
  $region117: #{n_vcnn_lstm_forward.3} parent=0
    _
  %s19 = ssub.s32 1, %s17
  %s20 = scalar_select 0, %s19, %s17
  $region1: #{n_vcnn_lstm_forward.3} parent=0
    #allocation2 [shape = 'u8[8192]{0}', space=vmem, size = 0x2000, scoped, tag = 'input window, operand 0']
    #allocation3 [shape = 's32[2]{0}', space=sflag, size = 0x8, scoped, tag = 'scoped memory for n_vcnn_lstm_forward.3']
    #allocation4 [shape = 'u8[24576]{0}', space=vmem, size = 0x6000, scoped, tag = 'input window, operand 4, single buffered']
    #allocation5 [shape = 's32[1]{0}', space=sflag, size = 0x4, scoped, tag = 'scoped memory for n_vcnn_lstm_forward.3']
    #allocation6 [shape = 'u8[12288]{0}', space=vmem, size = 0x3000, scoped, tag = 'input window, operand 7, single buffered']
    #allocation7 [shape = 'u8[6144]{0}', space=vmem, size = 0x1800, scoped, tag = 'input window, operand 10, single buffered']
    #allocation8 [shape = 's32[1]{0}', space=sflag, size = 0x4, scoped, tag = 'scoped memory for n_vcnn_lstm_forward.3']
    #allocation9 [shape = 'u8[3072]{0}', space=vmem, size = 0xc00, scoped, tag = 'input window, operand 13, single buffered']
    %21 = vsyncpa [#allocation3], 0
    %s22 = scalar_lea.sflag [#allocation3], 1
    %23 = vsyncpa %s22, 0
    %24 = vsyncpa [#allocation5], 0
    %25 = vsyncpa [#allocation8], 0
    loop: start=0, step=1, limit=4
    $region2: #{n_vcnn_lstm_forward.3} parent=1 // loop_pre_header
      _
    $region3: #{n_vcnn_lstm_forward.3} parent=1 // loop_header
      %s27 = sphi 0, %s31
      %p28 = scmp.ge.s32.totalorder %s27, 4
      %s37 = sphi 0, %s39
      %s40 = sphi 0, %s37
      %s41 = sphi 0, %s40
      %s57 = sphi 0, %s41
      %s61 = sphi 0, %s61
      %s63 = sphi 0, %s61
      %s64 = sphi 0, %s63
      %s78 = sphi 0, %s64
      %s82 = sphi 0, %s82
      %s84 = sphi 0, %s82
      %s85 = sphi 0, %s84
      %s99 = sphi 0, %s85
      %s103 = sphi 0, %s103
      %s105 = sphi 0, %s103
      %s106 = sphi 0, %s105
      %s120 = sphi 0, %s106
      %s124 = sphi 0, %s124
      %s126 = sphi 0, %s124
      %s127 = sphi 0, %s126
      %s141 = sphi 0, %s127
      %s145 = sphi 0, %s145
      %s147 = sphi 0, %s145
      %s148 = sphi 0, %s147
      %s162 = sphi 0, %s148
      %s166 = sphi 0, %s166
      %s168 = sphi 0, %s166
      %s169 = sphi 0, %s168
      %s183 = sphi 0, %s169
      %s187 = sphi 0, %s187
      %s189 = sphi 0, %s187
      %s190 = sphi 0, %s189
      %s204 = sphi 0, %s190
      %s208 = sphi 0, %s208
      %s210 = sphi 0, %s208
      %s211 = sphi 0, %s210
      %s225 = sphi 0, %s211
      %s229 = sphi 0, %s229
      %s231 = sphi 0, %s229
      %s232 = sphi 0, %s231
      %s246 = sphi 0, %s232
      %s250 = sphi 0, %s250
      %s252 = sphi 0, %s250
      %s253 = sphi 0, %s252
      %s267 = sphi 0, %s253
      %s271 = sphi 0, %s271
      %s273 = sphi 0, %s271
      %s274 = sphi 0, %s273
      %s288 = sphi 0, %s274
      %s292 = sphi 0, %s292
      %s294 = sphi 0, %s292
      %s295 = sphi 0, %s294
      %s309 = sphi 0, %s295
      %s313 = sphi 0, %s313
      %s315 = sphi 0, %s313
      %s316 = sphi 0, %s315
      %s330 = sphi 0, %s316
      %s334 = sphi 0, %s334
      %s336 = sphi 0, %s334
      %s337 = sphi 0, %s336
      %s351 = sphi 0, %s337
      %s355 = sphi 0, %s355
      %s357 = sphi 0, %s355
      %s358 = sphi 0, %s357
      %s372 = sphi 0, %s358
      %s378 = sphi 0, %s380
      %s381 = sphi 0, %s378
      %s382 = sphi 0, %s381
      %s398 = sphi 0, %s382
    $region4: #{n_vcnn_lstm_forward.3} parent=1 // loop_header_branch
      %30 = sbr.rel (%p28) target = $region8
    $region5: #{n_vcnn_lstm_forward.3} parent=1 // loop_body
      %s32 = ssub.s32 %s27, 1
      %s33 = ssub.s32 %s27, 2
      %s34 = sadd.s32 %s27, 1
      %s35 = ssub.s32 %s27, %s34
      %p36 = scmp.eq.s32.totalorder %s35, 0
      %s38 = sadd.s32 %s37, 1
      %s39 = scalar_select %p36, %s37, %s38
      %p42 = pneg %p36
      %p43 = scmp.eq.s32.totalorder %s27, 1
      %p44 = por %p42, %p43
      %p45 = scmp.ne.s32.totalorder %s37, %s40
      %p46 = scmp.eq.s32.totalorder %s27, 0
      %p47 = por %p45, %p46
      %p48 = scmp.ne.s32.totalorder %s37, %s40
      %p49 = scmp.eq.s32.totalorder %s32, 1
      %p50 = por %p48, %p49
      %p51 = scmp.ne.s32.totalorder %s40, %s41
      %p52 = scmp.eq.s32.totalorder %s32, 0
      %p53 = por %p51, %p52
      %p54 = scmp.ne.s32.totalorder %s40, %s41
      %p55 = scmp.eq.s32.totalorder %s33, 1
      %p56 = por %p54, %p55
      %p58 = scmp.ne.s32.totalorder %s41, %s57
      %p59 = scmp.eq.s32.totalorder %s33, 0
      %p60 = por %p58, %p59
      %s62 = sadd.s32 %s61, 1
      %p65 = scmp.eq.s32.totalorder %s27, 1
      %p66 = scmp.ne.s32.totalorder %s61, %s63
      %p67 = scmp.eq.s32.totalorder %s27, 0
      %p68 = por %p66, %p67
      %p69 = scmp.ne.s32.totalorder %s61, %s63
      %p70 = scmp.eq.s32.totalorder %s32, 1
      %p71 = por %p69, %p70
      %p72 = scmp.ne.s32.totalorder %s63, %s64
      %p73 = scmp.eq.s32.totalorder %s32, 0
      %p74 = por %p72, %p73
      %p75 = scmp.ne.s32.totalorder %s63, %s64
      %p76 = scmp.eq.s32.totalorder %s33, 1
      %p77 = por %p75, %p76
      %p79 = scmp.ne.s32.totalorder %s64, %s78
      %p80 = scmp.eq.s32.totalorder %s33, 0
      %p81 = por %p79, %p80
      %s83 = sadd.s32 %s82, 1
      %p86 = scmp.eq.s32.totalorder %s27, 1
      %p87 = scmp.ne.s32.totalorder %s82, %s84
      %p88 = scmp.eq.s32.totalorder %s27, 0
      %p89 = por %p87, %p88
      %p90 = scmp.ne.s32.totalorder %s82, %s84
      %p91 = scmp.eq.s32.totalorder %s32, 1
      %p92 = por %p90, %p91
      %p93 = scmp.ne.s32.totalorder %s84, %s85
      %p94 = scmp.eq.s32.totalorder %s32, 0
      %p95 = por %p93, %p94
      %p96 = scmp.ne.s32.totalorder %s84, %s85
      %p97 = scmp.eq.s32.totalorder %s33, 1
      %p98 = por %p96, %p97
      %p100 = scmp.ne.s32.totalorder %s85, %s99
      %p101 = scmp.eq.s32.totalorder %s33, 0
      %p102 = por %p100, %p101
      %s104 = sadd.s32 %s103, 1
      %p107 = scmp.eq.s32.totalorder %s27, 1
      %p108 = scmp.ne.s32.totalorder %s103, %s105
      %p109 = scmp.eq.s32.totalorder %s27, 0
      %p110 = por %p108, %p109
      %p111 = scmp.ne.s32.totalorder %s103, %s105
      %p112 = scmp.eq.s32.totalorder %s32, 1
      %p113 = por %p111, %p112
      %p114 = scmp.ne.s32.totalorder %s105, %s106
      %p115 = scmp.eq.s32.totalorder %s32, 0
      %p116 = por %p114, %p115
      %p117 = scmp.ne.s32.totalorder %s105, %s106
      %p118 = scmp.eq.s32.totalorder %s33, 1
      %p119 = por %p117, %p118
      %p121 = scmp.ne.s32.totalorder %s106, %s120
      %p122 = scmp.eq.s32.totalorder %s33, 0
      %p123 = por %p121, %p122
      %s125 = sadd.s32 %s124, 1
      %p128 = scmp.eq.s32.totalorder %s27, 1
      %p129 = scmp.ne.s32.totalorder %s124, %s126
      %p130 = scmp.eq.s32.totalorder %s27, 0
      %p131 = por %p129, %p130
      %p132 = scmp.ne.s32.totalorder %s124, %s126
      %p133 = scmp.eq.s32.totalorder %s32, 1
      %p134 = por %p132, %p133
      %p135 = scmp.ne.s32.totalorder %s126, %s127
      %p136 = scmp.eq.s32.totalorder %s32, 0
      %p137 = por %p135, %p136
      %p138 = scmp.ne.s32.totalorder %s126, %s127
      %p139 = scmp.eq.s32.totalorder %s33, 1
      %p140 = por %p138, %p139
      %p142 = scmp.ne.s32.totalorder %s127, %s141
      %p143 = scmp.eq.s32.totalorder %s33, 0
      %p144 = por %p142, %p143
      %s146 = sadd.s32 %s145, 1
      %p149 = scmp.eq.s32.totalorder %s27, 1
      %p150 = scmp.ne.s32.totalorder %s145, %s147
      %p151 = scmp.eq.s32.totalorder %s27, 0
      %p152 = por %p150, %p151
      %p153 = scmp.ne.s32.totalorder %s145, %s147
      %p154 = scmp.eq.s32.totalorder %s32, 1
      %p155 = por %p153, %p154
      %p156 = scmp.ne.s32.totalorder %s147, %s148
      %p157 = scmp.eq.s32.totalorder %s32, 0
      %p158 = por %p156, %p157
      %p159 = scmp.ne.s32.totalorder %s147, %s148
      %p160 = scmp.eq.s32.totalorder %s33, 1
      %p161 = por %p159, %p160
      %p163 = scmp.ne.s32.totalorder %s148, %s162
      %p164 = scmp.eq.s32.totalorder %s33, 0
      %p165 = por %p163, %p164
      %s167 = sadd.s32 %s166, 1
      %p170 = scmp.eq.s32.totalorder %s27, 1
      %p171 = scmp.ne.s32.totalorder %s166, %s168
      %p172 = scmp.eq.s32.totalorder %s27, 0
      %p173 = por %p171, %p172
      %p174 = scmp.ne.s32.totalorder %s166, %s168
      %p175 = scmp.eq.s32.totalorder %s32, 1
      %p176 = por %p174, %p175
      %p177 = scmp.ne.s32.totalorder %s168, %s169
      %p178 = scmp.eq.s32.totalorder %s32, 0
      %p179 = por %p177, %p178
      %p180 = scmp.ne.s32.totalorder %s168, %s169
      %p181 = scmp.eq.s32.totalorder %s33, 1
      %p182 = por %p180, %p181
      %p184 = scmp.ne.s32.totalorder %s169, %s183
      %p185 = scmp.eq.s32.totalorder %s33, 0
      %p186 = por %p184, %p185
      %s188 = sadd.s32 %s187, 1
      %p191 = scmp.eq.s32.totalorder %s27, 1
      %p192 = scmp.ne.s32.totalorder %s187, %s189
      %p193 = scmp.eq.s32.totalorder %s27, 0
      %p194 = por %p192, %p193
      %p195 = scmp.ne.s32.totalorder %s187, %s189
      %p196 = scmp.eq.s32.totalorder %s32, 1
      %p197 = por %p195, %p196
      %p198 = scmp.ne.s32.totalorder %s189, %s190
      %p199 = scmp.eq.s32.totalorder %s32, 0
      %p200 = por %p198, %p199
      %p201 = scmp.ne.s32.totalorder %s189, %s190
      %p202 = scmp.eq.s32.totalorder %s33, 1
      %p203 = por %p201, %p202
      %p205 = scmp.ne.s32.totalorder %s190, %s204
      %p206 = scmp.eq.s32.totalorder %s33, 0
      %p207 = por %p205, %p206
      %s209 = sadd.s32 %s208, 1
      %p212 = scmp.eq.s32.totalorder %s27, 1
      %p213 = scmp.ne.s32.totalorder %s208, %s210
      %p214 = scmp.eq.s32.totalorder %s27, 0
      %p215 = por %p213, %p214
      %p216 = scmp.ne.s32.totalorder %s208, %s210
      %p217 = scmp.eq.s32.totalorder %s32, 1
      %p218 = por %p216, %p217
      %p219 = scmp.ne.s32.totalorder %s210, %s211
      %p220 = scmp.eq.s32.totalorder %s32, 0
      %p221 = por %p219, %p220
      %p222 = scmp.ne.s32.totalorder %s210, %s211
      %p223 = scmp.eq.s32.totalorder %s33, 1
      %p224 = por %p222, %p223
      %p226 = scmp.ne.s32.totalorder %s211, %s225
      %p227 = scmp.eq.s32.totalorder %s33, 0
      %p228 = por %p226, %p227
      %s230 = sadd.s32 %s229, 1
      %p233 = scmp.eq.s32.totalorder %s27, 1
      %p234 = scmp.ne.s32.totalorder %s229, %s231
      %p235 = scmp.eq.s32.totalorder %s27, 0
      %p236 = por %p234, %p235
      %p237 = scmp.ne.s32.totalorder %s229, %s231
      %p238 = scmp.eq.s32.totalorder %s32, 1
      %p239 = por %p237, %p238
      %p240 = scmp.ne.s32.totalorder %s231, %s232
      %p241 = scmp.eq.s32.totalorder %s32, 0
      %p242 = por %p240, %p241
      %p243 = scmp.ne.s32.totalorder %s231, %s232
      %p244 = scmp.eq.s32.totalorder %s33, 1
      %p245 = por %p243, %p244
      %p247 = scmp.ne.s32.totalorder %s232, %s246
      %p248 = scmp.eq.s32.totalorder %s33, 0
      %p249 = por %p247, %p248
      %s251 = sadd.s32 %s250, 1
      %p254 = scmp.eq.s32.totalorder %s27, 1
      %p255 = scmp.ne.s32.totalorder %s250, %s252
      %p256 = scmp.eq.s32.totalorder %s27, 0
      %p257 = por %p255, %p256
      %p258 = scmp.ne.s32.totalorder %s250, %s252
      %p259 = scmp.eq.s32.totalorder %s32, 1
      %p260 = por %p258, %p259
      %p261 = scmp.ne.s32.totalorder %s252, %s253
      %p262 = scmp.eq.s32.totalorder %s32, 0
      %p263 = por %p261, %p262
      %p264 = scmp.ne.s32.totalorder %s252, %s253
      %p265 = scmp.eq.s32.totalorder %s33, 1
      %p266 = por %p264, %p265
      %p268 = scmp.ne.s32.totalorder %s253, %s267
      %p269 = scmp.eq.s32.totalorder %s33, 0
      %p270 = por %p268, %p269
      %s272 = sadd.s32 %s271, 1
      %p275 = scmp.eq.s32.totalorder %s27, 1
      %p276 = scmp.ne.s32.totalorder %s271, %s273
      %p277 = scmp.eq.s32.totalorder %s27, 0
      %p278 = por %p276, %p277
      %p279 = scmp.ne.s32.totalorder %s271, %s273
      %p280 = scmp.eq.s32.totalorder %s32, 1
      %p281 = por %p279, %p280
      %p282 = scmp.ne.s32.totalorder %s273, %s274
      %p283 = scmp.eq.s32.totalorder %s32, 0
      %p284 = por %p282, %p283
      %p285 = scmp.ne.s32.totalorder %s273, %s274
      %p286 = scmp.eq.s32.totalorder %s33, 1
      %p287 = por %p285, %p286
      %p289 = scmp.ne.s32.totalorder %s274, %s288
      %p290 = scmp.eq.s32.totalorder %s33, 0
      %p291 = por %p289, %p290
      %s293 = sadd.s32 %s292, 1
      %p296 = scmp.eq.s32.totalorder %s27, 1
      %p297 = scmp.ne.s32.totalorder %s292, %s294
      %p298 = scmp.eq.s32.totalorder %s27, 0
      %p299 = por %p297, %p298
      %p300 = scmp.ne.s32.totalorder %s292, %s294
      %p301 = scmp.eq.s32.totalorder %s32, 1
      %p302 = por %p300, %p301
      %p303 = scmp.ne.s32.totalorder %s294, %s295
      %p304 = scmp.eq.s32.totalorder %s32, 0
      %p305 = por %p303, %p304
      %p306 = scmp.ne.s32.totalorder %s294, %s295
      %p307 = scmp.eq.s32.totalorder %s33, 1
      %p308 = por %p306, %p307
      %p310 = scmp.ne.s32.totalorder %s295, %s309
      %p311 = scmp.eq.s32.totalorder %s33, 0
      %p312 = por %p310, %p311
      %s314 = sadd.s32 %s313, 1
      %p317 = scmp.eq.s32.totalorder %s27, 1
      %p318 = scmp.ne.s32.totalorder %s313, %s315
      %p319 = scmp.eq.s32.totalorder %s27, 0
      %p320 = por %p318, %p319
      %p321 = scmp.ne.s32.totalorder %s313, %s315
      %p322 = scmp.eq.s32.totalorder %s32, 1
      %p323 = por %p321, %p322
      %p324 = scmp.ne.s32.totalorder %s315, %s316
      %p325 = scmp.eq.s32.totalorder %s32, 0
      %p326 = por %p324, %p325
      %p327 = scmp.ne.s32.totalorder %s315, %s316
      %p328 = scmp.eq.s32.totalorder %s33, 1
      %p329 = por %p327, %p328
      %p331 = scmp.ne.s32.totalorder %s316, %s330
      %p332 = scmp.eq.s32.totalorder %s33, 0
      %p333 = por %p331, %p332
      %s335 = sadd.s32 %s334, 1
      %p338 = scmp.eq.s32.totalorder %s27, 1
      %p339 = scmp.ne.s32.totalorder %s334, %s336
      %p340 = scmp.eq.s32.totalorder %s27, 0
      %p341 = por %p339, %p340
      %p342 = scmp.ne.s32.totalorder %s334, %s336
      %p343 = scmp.eq.s32.totalorder %s32, 1
      %p344 = por %p342, %p343
      %p345 = scmp.ne.s32.totalorder %s336, %s337
      %p346 = scmp.eq.s32.totalorder %s32, 0
      %p347 = por %p345, %p346
      %p348 = scmp.ne.s32.totalorder %s336, %s337
      %p349 = scmp.eq.s32.totalorder %s33, 1
      %p350 = por %p348, %p349
      %p352 = scmp.ne.s32.totalorder %s337, %s351
      %p353 = scmp.eq.s32.totalorder %s33, 0
      %p354 = por %p352, %p353
      %s356 = sadd.s32 %s355, 1
      %p359 = scmp.eq.s32.totalorder %s27, 1
      %p360 = scmp.ne.s32.totalorder %s355, %s357
      %p361 = scmp.eq.s32.totalorder %s27, 0
      %p362 = por %p360, %p361
      %p363 = scmp.ne.s32.totalorder %s355, %s357
      %p364 = scmp.eq.s32.totalorder %s32, 1
      %p365 = por %p363, %p364
      %p366 = scmp.ne.s32.totalorder %s357, %s358
      %p367 = scmp.eq.s32.totalorder %s32, 0
      %p368 = por %p366, %p367
      %p369 = scmp.ne.s32.totalorder %s357, %s358
      %p370 = scmp.eq.s32.totalorder %s33, 1
      %p371 = por %p369, %p370
      %p373 = scmp.ne.s32.totalorder %s358, %s372
      %p374 = scmp.eq.s32.totalorder %s33, 0
      %p375 = por %p373, %p374
      %s376 = ssub.s32 %s27, %s34
      %p377 = scmp.eq.s32.totalorder %s376, 0
      %s379 = sadd.s32 %s378, 1
      %s380 = scalar_select %p377, %s378, %s379
      %p383 = pneg %p377
      %p384 = scmp.eq.s32.totalorder %s27, 1
      %p385 = por %p383, %p384
      %p386 = scmp.ne.s32.totalorder %s378, %s381
      %p387 = scmp.eq.s32.totalorder %s27, 0
      %p388 = por %p386, %p387
      %p389 = scmp.ne.s32.totalorder %s378, %s381
      %p390 = scmp.eq.s32.totalorder %s32, 1
      %p391 = por %p389, %p390
      %p392 = scmp.ne.s32.totalorder %s381, %s382
      %p393 = scmp.eq.s32.totalorder %s32, 0
      %p394 = por %p392, %p393
      %p395 = scmp.ne.s32.totalorder %s381, %s382
      %p396 = scmp.eq.s32.totalorder %s33, 1
      %p397 = por %p395, %p396
      %p399 = scmp.ne.s32.totalorder %s382, %s398
      %p400 = scmp.eq.s32.totalorder %s33, 0
      %p401 = por %p399, %p400
      %p402 = scmp.le.s32.totalorder 1, %s27
      %p403 = scmp.lt.s32.totalorder %s27, 3
      %p404 = pnand %p402, %p403
      %p405 = pneg %p404
      // Predicated region
      $region9: #{n_vcnn_lstm_forward.3} parent=5 // pred_check
        _
      $region10: #{n_vcnn_lstm_forward.3} parent=5 // pred_check_branch
        %407 = sbr.rel (%p404) target = $region12
      $region11: #{n_vcnn_lstm_forward.3} parent=5 // pred_region
        %s408 = ssub.s32 %s27, 1
        // Predicated region
        $region13: #{n_vcnn_lstm_forward.3} parent=11 // pred_check
          %p409 = pneg %p74
        $region14: #{n_vcnn_lstm_forward.3} parent=11 // pred_check_branch
          %411 = sbr.rel (%p409) target = $region16
        $region15: #{n_vcnn_lstm_forward.3} parent=11 // pred_region
          _
        $region16: #{n_vcnn_lstm_forward.3} parent=11 // pred_fallthru
          _
        // Predicated region
        $region17: #{n_vcnn_lstm_forward.3} parent=11 // pred_check
          %p412 = pneg %p95
        $region18: #{n_vcnn_lstm_forward.3} parent=11 // pred_check_branch
          %414 = sbr.rel (%p412) target = $region20
        $region19: #{n_vcnn_lstm_forward.3} parent=11 // pred_region
          _
        $region20: #{n_vcnn_lstm_forward.3} parent=11 // pred_fallthru
          _
        // Predicated region
        $region21: #{n_vcnn_lstm_forward.3} parent=11 // pred_check
          %p415 = pneg %p116
        $region22: #{n_vcnn_lstm_forward.3} parent=11 // pred_check_branch
          %417 = sbr.rel (%p415) target = $region24
        $region23: #{n_vcnn_lstm_forward.3} parent=11 // pred_region
          _
        $region24: #{n_vcnn_lstm_forward.3} parent=11 // pred_fallthru
          _
        // Predicated region
        $region25: #{n_vcnn_lstm_forward.3} parent=11 // pred_check
          %p418 = pneg %p137
        $region26: #{n_vcnn_lstm_forward.3} parent=11 // pred_check_branch
          %420 = sbr.rel (%p418) target = $region28
        $region27: #{n_vcnn_lstm_forward.3} parent=11 // pred_region
          %s422 = ssub.s32 768, 768
          %423 = vsyncadd [#allocation5], %s422
          %s424 = sshll.u32 [#allocation4], 4
          %s425 = int_to_ptr.vmem [resolvable:$true] %s424
          %430 = dma.hbm_to_vmem [thread:$0]  %s4, 768, %s425, [#allocation5], 64, 64, 4
        $region28: #{n_vcnn_lstm_forward.3} parent=11 // pred_fallthru
          _
        // Predicated region
        $region29: #{n_vcnn_lstm_forward.3} parent=11 // pred_check
          %p431 = pneg %p158
        $region30: #{n_vcnn_lstm_forward.3} parent=11 // pred_check_branch
          %433 = sbr.rel (%p431) target = $region32
        $region31: #{n_vcnn_lstm_forward.3} parent=11 // pred_region
          _
        $region32: #{n_vcnn_lstm_forward.3} parent=11 // pred_fallthru
          _
        // Predicated region
        $region33: #{n_vcnn_lstm_forward.3} parent=11 // pred_check
          %p434 = pneg %p179
        $region34: #{n_vcnn_lstm_forward.3} parent=11 // pred_check_branch
          %436 = sbr.rel (%p434) target = $region36
        $region35: #{n_vcnn_lstm_forward.3} parent=11 // pred_region
          _
        $region36: #{n_vcnn_lstm_forward.3} parent=11 // pred_fallthru
          _
        // Predicated region
        $region37: #{n_vcnn_lstm_forward.3} parent=11 // pred_check
          %p437 = pneg %p200
        $region38: #{n_vcnn_lstm_forward.3} parent=11 // pred_check_branch
          %439 = sbr.rel (%p437) target = $region40
        $region39: #{n_vcnn_lstm_forward.3} parent=11 // pred_region
          %s441 = ssub.s32 384, 384
          %442 = vsyncadd [#allocation5], %s441
          %s443 = sshll.u32 [#allocation6], 4
          %s444 = int_to_ptr.vmem [resolvable:$true] %s443
          %449 = dma.hbm_to_vmem [thread:$0]  %s7, 384, %s444, [#allocation5], 64, 64, 4
        $region40: #{n_vcnn_lstm_forward.3} parent=11 // pred_fallthru
          _
        // Predicated region
        $region41: #{n_vcnn_lstm_forward.3} parent=11 // pred_check
          %p450 = pneg %p221
        $region42: #{n_vcnn_lstm_forward.3} parent=11 // pred_check_branch
          %452 = sbr.rel (%p450) target = $region44
        $region43: #{n_vcnn_lstm_forward.3} parent=11 // pred_region
          _
        $region44: #{n_vcnn_lstm_forward.3} parent=11 // pred_fallthru
          _
        // Predicated region
        $region45: #{n_vcnn_lstm_forward.3} parent=11 // pred_check
          %p453 = pneg %p242
        $region46: #{n_vcnn_lstm_forward.3} parent=11 // pred_check_branch
          %455 = sbr.rel (%p453) target = $region48
        $region47: #{n_vcnn_lstm_forward.3} parent=11 // pred_region
          _
        $region48: #{n_vcnn_lstm_forward.3} parent=11 // pred_fallthru
          _
        // Predicated region
        $region49: #{n_vcnn_lstm_forward.3} parent=11 // pred_check
          %p456 = pneg %p263
        $region50: #{n_vcnn_lstm_forward.3} parent=11 // pred_check_branch
          %458 = sbr.rel (%p456) target = $region52
        $region51: #{n_vcnn_lstm_forward.3} parent=11 // pred_region
          %s460 = ssub.s32 192, 192
          %461 = vsyncadd [#allocation8], %s460
          %s462 = sshll.u32 [#allocation7], 4
          %s463 = int_to_ptr.vmem [resolvable:$true] %s462
          %468 = dma.hbm_to_vmem [thread:$0]  %s10, 192, %s463, [#allocation8], 64, 64, 4
        $region52: #{n_vcnn_lstm_forward.3} parent=11 // pred_fallthru
          _
        // Predicated region
        $region53: #{n_vcnn_lstm_forward.3} parent=11 // pred_check
          %p469 = pneg %p284
        $region54: #{n_vcnn_lstm_forward.3} parent=11 // pred_check_branch
          %471 = sbr.rel (%p469) target = $region56
        $region55: #{n_vcnn_lstm_forward.3} parent=11 // pred_region
          _
        $region56: #{n_vcnn_lstm_forward.3} parent=11 // pred_fallthru
          _
        // Predicated region
        $region57: #{n_vcnn_lstm_forward.3} parent=11 // pred_check
          %p472 = pneg %p305
        $region58: #{n_vcnn_lstm_forward.3} parent=11 // pred_check_branch
          %474 = sbr.rel (%p472) target = $region60
        $region59: #{n_vcnn_lstm_forward.3} parent=11 // pred_region
          _
        $region60: #{n_vcnn_lstm_forward.3} parent=11 // pred_fallthru
          _
        // Predicated region
        $region61: #{n_vcnn_lstm_forward.3} parent=11 // pred_check
          %p475 = pneg %p326
        $region62: #{n_vcnn_lstm_forward.3} parent=11 // pred_check_branch
          %477 = sbr.rel (%p475) target = $region64
        $region63: #{n_vcnn_lstm_forward.3} parent=11 // pred_region
          %s479 = ssub.s32 96, 96
          %480 = vsyncadd [#allocation8], %s479
          %s481 = sshll.u32 [#allocation9], 4
          %s482 = int_to_ptr.vmem [resolvable:$true] %s481
          %487 = dma.hbm_to_vmem [thread:$0]  %s13, 96, %s482, [#allocation8], 32, 32, 2
        $region64: #{n_vcnn_lstm_forward.3} parent=11 // pred_fallthru
          _
        // Predicated region
        $region65: #{n_vcnn_lstm_forward.3} parent=11 // pred_check
          %p488 = pneg %p347
        $region66: #{n_vcnn_lstm_forward.3} parent=11 // pred_check_branch
          %490 = sbr.rel (%p488) target = $region68
        $region67: #{n_vcnn_lstm_forward.3} parent=11 // pred_region
          _
        $region68: #{n_vcnn_lstm_forward.3} parent=11 // pred_fallthru
          _
        // Predicated region
        $region69: #{n_vcnn_lstm_forward.3} parent=11 // pred_check
          %p491 = pneg %p368
        $region70: #{n_vcnn_lstm_forward.3} parent=11 // pred_check_branch
          %493 = sbr.rel (%p491) target = $region72
        $region71: #{n_vcnn_lstm_forward.3} parent=11 // pred_region
          _
        $region72: #{n_vcnn_lstm_forward.3} parent=11 // pred_fallthru
          _
      $region12: #{n_vcnn_lstm_forward.3} parent=5 // pred_fallthru
        _
      %p494 = scmp.lt.s32.totalorder %s27, 2
      // Predicated region
      $region73: #{n_vcnn_lstm_forward.3} parent=5 // pred_check
        %p495 = pneg %p494
      $region74: #{n_vcnn_lstm_forward.3} parent=5 // pred_check_branch
        %497 = sbr.rel (%p495) target = $region76
      $region75: #{n_vcnn_lstm_forward.3} parent=5 // pred_region
        // Predicated region
        $region77: #{n_vcnn_lstm_forward.3} parent=75 // pred_check
          %p498 = pneg %p47
        $region78: #{n_vcnn_lstm_forward.3} parent=75 // pred_check_branch
          %500 = sbr.rel (%p498) target = $region80
        $region79: #{n_vcnn_lstm_forward.3} parent=75 // pred_region
          %s501 = sand.u32 %s37, 1
          %s502 = scalar_lea.sflag [#allocation3], %s501
          %s503 = sand.u32 %s37, 1
          %s504 = smul.addr %s503, 8
          %s505 = scalar_lea.vmem [#allocation2], %s504
          %s507 = ssub.s32 128, 128
          %508 = vsyncadd %s502, %s507
          %s509 = smul.addr %s27, 2
          %s510 = smul.addr %s509, 64
          %s511 = scalar_lea.hbm %s0, %s510
          %s513 = sshll.u32 %s505, 4
          %s514 = int_to_ptr.vmem [resolvable:$true] %s513
          %516 = dma.hbm_to_vmem [thread:$0]  %s511, 128, %s514, %s502
        $region80: #{n_vcnn_lstm_forward.3} parent=75 // pred_fallthru
          _
      $region76: #{n_vcnn_lstm_forward.3} parent=5 // pred_fallthru
        _
      %p517 = scmp.le.s32.totalorder 1, %s27
      %p518 = scmp.lt.s32.totalorder %s27, 3
      %p519 = pnand %p517, %p518
      %p520 = pneg %p519
      // Predicated region
      $region81: #{n_vcnn_lstm_forward.3} parent=5 // pred_check
        _
      $region82: #{n_vcnn_lstm_forward.3} parent=5 // pred_check_branch
        %522 = sbr.rel (%p519) target = $region84
      $region83: #{n_vcnn_lstm_forward.3} parent=5 // pred_region
        %s523 = ssub.s32 %s27, 1
        %s524 = sand.u32 %s40, 1
        %s525 = scalar_lea.sflag [#allocation3], %s524
        %s526 = sand.u32 %s40, 1
        %s527 = smul.addr %s526, 8
        %s528 = scalar_lea.vmem [#allocation2], %s527
        // Predicated region
        $region85: #{n_vcnn_lstm_forward.3} parent=83 // pred_check
          %p529 = pneg %p53
        $region86: #{n_vcnn_lstm_forward.3} parent=83 // pred_check_branch
          %531 = sbr.rel (%p529) target = $region88
        $region87: #{n_vcnn_lstm_forward.3} parent=83 // pred_region
          %532 = dma.done %s525, 128
        $region88: #{n_vcnn_lstm_forward.3} parent=83 // pred_fallthru
          _
        // Predicated region
        $region89: #{n_vcnn_lstm_forward.3} parent=83 // pred_check
          %p533 = pneg %p137
        $region90: #{n_vcnn_lstm_forward.3} parent=83 // pred_check_branch
          %535 = sbr.rel (%p533) target = $region92
        $region91: #{n_vcnn_lstm_forward.3} parent=83 // pred_region
          %536 = dma.done [#allocation5], 768
        $region92: #{n_vcnn_lstm_forward.3} parent=83 // pred_fallthru
          _
        // Predicated region
        $region93: #{n_vcnn_lstm_forward.3} parent=83 // pred_check
          %p537 = pneg %p200
        $region94: #{n_vcnn_lstm_forward.3} parent=83 // pred_check_branch
          %539 = sbr.rel (%p537) target = $region96
        $region95: #{n_vcnn_lstm_forward.3} parent=83 // pred_region
          %540 = dma.done [#allocation5], 384
        $region96: #{n_vcnn_lstm_forward.3} parent=83 // pred_fallthru
          _
        // Predicated region
        $region97: #{n_vcnn_lstm_forward.3} parent=83 // pred_check
          %p541 = pneg %p263
        $region98: #{n_vcnn_lstm_forward.3} parent=83 // pred_check_branch
          %543 = sbr.rel (%p541) target = $region100
        $region99: #{n_vcnn_lstm_forward.3} parent=83 // pred_region
          %544 = dma.done [#allocation8], 192
        $region100: #{n_vcnn_lstm_forward.3} parent=83 // pred_fallthru
          _
        // Predicated region
        $region101: #{n_vcnn_lstm_forward.3} parent=83 // pred_check
          %p545 = pneg %p326
        $region102: #{n_vcnn_lstm_forward.3} parent=83 // pred_check_branch
          %547 = sbr.rel (%p545) target = $region104
        $region103: #{n_vcnn_lstm_forward.3} parent=83 // pred_region
          %548 = dma.done [#allocation8], 96
        $region104: #{n_vcnn_lstm_forward.3} parent=83 // pred_fallthru
          _
        %s549 = sand.u32 %s40, 1
        %s550 = scalar_lea.sflag [#allocation3], %s549
        %s551 = sand.u32 %s40, 1
        %s552 = smul.addr %s551, 8
        %s553 = scalar_lea.vmem [#allocation2], %s552
        %p554 = pneg %p53
        %p555 = pneg %p50
        %p556 = pneg %p74
        %p557 = pneg %p71
        %p558 = pneg %p95
        %p559 = pneg %p92
        %p560 = pneg %p116
        %p561 = pneg %p113
        %p562 = pneg %p137
        %p563 = pneg %p134
        %p564 = pneg %p158
        %p565 = pneg %p155
        %p566 = pneg %p179
        %p567 = pneg %p176
        %p568 = pneg %p200
        %p569 = pneg %p197
        %p570 = pneg %p221
        %p571 = pneg %p218
        %p572 = pneg %p242
        %p573 = pneg %p239
        %p574 = pneg %p263
        %p575 = pneg %p260
        %p576 = pneg %p284
        %p577 = pneg %p281
        %p578 = pneg %p305
        %p579 = pneg %p302
        %p580 = pneg %p326
        %p581 = pneg %p323
        %p582 = pneg %p347
        %p583 = pneg %p344
        %p584 = pneg %p368
        %p585 = pneg %p365
        %p586 = pneg %p394
        %p587 = pneg %p391
        %p588 = scmp.lt.s32.totalorder %s32, 1
        %s589 = scalar_select %p588, %s32, 1
        %s590 = smul.addr %s589, 2
        %s591 = smul.addr %s590, 4
        %s592 = scalar_lea.vmem %s16, %s591
        %p593 = scmp.lt.s32.totalorder %s32, 1
        %s594 = scalar_select %p593, %s32, 1
        %s595 = smul.addr %s594, 2
        %s596 = smul.addr %s595, 4
        %s597 = scalar_lea.vmem %s16, %s596
        %v599 = vld [vmem:[%s528] sm:$0xff]
        %v600 = vlaneseq
        %v601 = vand.u32 %v600, 127
        %v602 = vadd.s32 %v601, 128
        %vm603 = vcmp.lt.s32.totalorder %v601, 0
        %v604 = vsub.s32 0, %v601
        %v605 = vsel %vm603, %v604, %v601
        %v606 = vmul.u32.u64.compose %v605, 3435973837
        %v607 = vextract.low.u32 %v606
        %v608 = vextract.high.u32 %v606
        %v609 = vshrl.u32 %v608, 7
        %v610 = vmul.u32 %v609, 160
        %v611 = vsub.s32 %v605, %v610
        %v612 = vsub.s32 0, %v611
        %v613 = vsel %vm603, %v612, %v611
        %vm614 = vcmp.lt.s32.totalorder %v602, 0
        %v615 = vsub.s32 0, %v602
        %v616 = vsel %vm614, %v615, %v602
        %v617 = vmul.u32.u64.compose %v616, 3435973837
        %v618 = vextract.low.u32 %v617
        %v619 = vextract.high.u32 %v617
        %v620 = vshrl.u32 %v619, 7
        %v621 = vmul.u32 %v620, 160
        %v622 = vsub.s32 %v616, %v621
        %v623 = vsub.s32 0, %v622
        %v624 = vsel %vm614, %v623, %v622
        %vm625 = vcmp.ne.s32.totalorder %v613, 0
        %vm626 = vcmp.ne.s32.totalorder %v624, 0
        %vm627 = vcmp.lt.s32.totalorder %v613, 0
        %vm628 = vcmp.lt.s32.totalorder %v624, 0
        %vm629 = vmand %vm627, %vm625
        %vm630 = vmand %vm628, %vm626
        %v631 = vadd.s32 %v613, 160
        %v632 = vadd.s32 %v624, 160
        %v633 = vsel %vm629, %v631, %v613
        %v634 = vsel %vm630, %v632, %v624
        %vm635 = vcmp.eq.s32.totalorder %v633, 0
        %vm636 = vcmp.eq.s32.totalorder %v634, 0
        %vm637 = vcmp.eq.s32.totalorder %v633, 159
        %vm638 = vcmp.eq.s32.totalorder %v634, 159
        %v640 = vcombine.high %v599, %v599
        %vm642 = vcmask 1047808
        %643 = vrot.lane.b32.xlu0 %v599, 32
        %v644 = vpop.permute.xlu0 %643
        %v645 = vsel %vm642, %v644, %v640
        %646 = vrot.lane.b32.xlu0 %v645, 32
        %v647 = vpop.permute.xlu0 %646
        %v648 = vsel %vm642, %v647, %v644
        %v649 = vsel %vm635, 1, 0
        %v650 = vsel %vm636, 1, 0
        %vm651 = vcmp.eq.s32.totalorder %v649, 1
        %vm652 = vcmp.eq.s32.totalorder %v650, 1
        %655 = vrot.lane.b32.xlu0 %v645, 97
        %v656 = vpop.permute.xlu0 %655
        %657 = vrot.lane.b32.xlu0 %v648, 97
        %v658 = vpop.permute.xlu0 %657
        %vm659 = vcmask 793600
        %v660 = vsel %vm659, %v656, %v658
        %v663 = vsel %vm651, %v599, %v660
        %v664 = vsel %vm652, %v640, %v658
        %v665 = vsel %vm637, 1, 0
        %v666 = vsel %vm638, 1, 0
        %vm667 = vcmp.eq.s32.totalorder %v665, 1
        %vm668 = vcmp.eq.s32.totalorder %v666, 1
        %669 = vrot.lane.b32.xlu0 %v599, 127
        %v670 = vpop.permute.xlu0 %669
        %671 = vrot.lane.b32.xlu0 %v645, 127
        %v672 = vpop.permute.xlu0 %671
        %vm673 = vcmask 1039360
        %v674 = vsel %vm673, %v670, %v672
        %v677 = vsel %vm667, %v599, %v674
        %v678 = vsel %vm668, %v640, %v672
        %v679 = vpack.c.bf16 %v599, %v599
        %v680 = vpack.c.bf16 %v640, %v640
        %v681 = vld [vmem:[%s1] sm:$0xf]
        %v682 = vld [vmem:[%s1 + $0x4] sm:$0xf]
        %v683 = vld [vmem:[%s1 + $0x8] sm:$0xf]
        %v684 = vld [vmem:[%s1 + $0xc] sm:$0xf]
        %v685 = vld [vmem:[%s1 + $0x10] sm:$0xf]
        %v686 = vld [vmem:[%s1 + $0x14] sm:$0xf]
        %v687 = vld [vmem:[%s1 + $0x18] sm:$0xf]
        %v688 = vld [vmem:[%s1 + $0x1c] sm:$0xf]
        %v689 = vpack.c.bf16 %v663, %v663
        %v690 = vpack.c.bf16 %v664, %v664
        %s691 = scalar_lea.vmem %s1, 32
        %v692 = vld [vmem:[%s691] sm:$0xf]
        %v693 = vld [vmem:[%s691 + $0x4] sm:$0xf]
        %v694 = vld [vmem:[%s691 + $0x8] sm:$0xf]
        %v695 = vld [vmem:[%s691 + $0xc] sm:$0xf]
        %v696 = vld [vmem:[%s691 + $0x10] sm:$0xf]
        %v697 = vld [vmem:[%s691 + $0x14] sm:$0xf]
        %v698 = vld [vmem:[%s691 + $0x18] sm:$0xf]
        %v699 = vld [vmem:[%s691 + $0x1c] sm:$0xf]
        %v708 = vunpack.c.l.b16 %v692
        %v709 = vunpack.c.l.b16 %v693
        %v710 = vunpack.c.l.b16 %v694
        %v711 = vunpack.c.l.b16 %v695
        %v712 = vunpack.c.l.b16 %v696
        %v713 = vunpack.c.l.b16 %v697
        %v714 = vunpack.c.l.b16 %v698
        %v715 = vunpack.c.l.b16 %v699
        %v716 = vpack.c.b16 %v709, %v708
        %v717 = vpack.c.b16 %v711, %v710
        %v718 = vpack.c.b16 %v713, %v712
        %v719 = vpack.c.b16 %v715, %v714
        %vm720 = vcmask 31744
        %v722 = vsel %vm720, %v716, 0
        %v725 = vsel %vm720, %v717, 0
        %v728 = vsel %vm720, %v718, 0
        %v731 = vsel %vm720, %v719, 0
        %vm733 = vcmask 1041408
        %v735 = vsel %vm733, %v679, 0
        %v738 = vsel %vm733, %v680, 0
        %740 = vmatprep.subr.bf16.mxu0 %v738
        %741 = vmatpush1.bf16.msra.mxu0 %v735
        %742 = vmatprep.subr.bf16.mxu0 0
        %743 = vmatpush1.bf16.msra.mxu0 0
        %744 = vmatprep.subr.bf16.mxu0 0
        %745 = vmatpush1.bf16.msra.mxu0 0
        %746 = vmatprep.subr.bf16.mxu0 0
        %747 = vmatpush1.bf16.msra.mxu0 0
        %748 = vmatprep.subr.bf16.mxu0 0
        %749 = vmatpush1.bf16.msra.mxu0 0
        %750 = vmatprep.subr.bf16.mxu0 0
        %751 = vmatpush1.bf16.msra.mxu0 0
        %752 = vmatprep.subr.bf16.mxu0 0
        %753 = vmatpush1.bf16.msra.mxu0 0
        %754 = vmatprep.subr.bf16.mxu0 0
        %755 = vmatpush1.bf16.msra.mxu0 0
        %756 = vmatprep.subr.bf16.mxu0 0
        %757 = vmatpush1.bf16.msra.mxu0 0
        %758 = vmatprep.subr.bf16.mxu0 0
        %759 = vmatpush1.bf16.msra.mxu0 0
        %760 = vmatprep.subr.bf16.mxu0 0
        %761 = vmatpush1.bf16.msra.mxu0 0
        %762 = vmatprep.subr.bf16.mxu0 0
        %763 = vmatpush1.bf16.msra.mxu0 0
        %764 = vmatprep.subr.bf16.mxu0 0
        %765 = vmatpush1.bf16.msra.mxu0 0
        %766 = vmatprep.subr.bf16.mxu0 0
        %767 = vmatpush1.bf16.msra.mxu0 0
        %768 = vmatprep.subr.bf16.mxu0 0
        %769 = vmatpush1.bf16.msra.mxu0 0
        %770 = vmatprep.subr.bf16.mxu0 0
        %771 = vmatpush1.bf16.msra.mxu0 0
        %772 = vmatprep.mubr.bf16.mxu0 0
        %773 = vmatmul.mubr.bf16.gmra.mrb[0].mxu0 %v722
        %v774 = vpop.f32.mrb[0].mxu0
        %v775 = vadd.f32 0.0, %v774
        %v776 = vpop.f32.mrb[0].mxu0
        %v777 = vadd.f32 0.0, %v776
        %v778 = vpop.f32.mrb[0].mxu0
        %v779 = vadd.f32 0.0, %v778
        %v780 = vpop.f32.mrb[0].mxu0
        %v781 = vadd.f32 0.0, %v780
        %782 = vmatprep.mubr.bf16.mxu0 0
        %783 = vmatmul.mubr.bf16.gmra.mrb[0].mxu0 %v725
        %v784 = vpop.f32.mrb[0].mxu0
        %v785 = vadd.f32 0.0, %v784
        %v786 = vpop.f32.mrb[0].mxu0
        %v787 = vadd.f32 0.0, %v786
        %v788 = vpop.f32.mrb[0].mxu0
        %v789 = vadd.f32 0.0, %v788
        %v790 = vpop.f32.mrb[0].mxu0
        %v791 = vadd.f32 0.0, %v790
        %792 = vmatprep.mubr.bf16.mxu0 0
        %793 = vmatmul.mubr.bf16.gmra.mrb[0].mxu0 %v728
        %v794 = vpop.f32.mrb[0].mxu0
        %v795 = vadd.f32 0.0, %v794
        %v796 = vpop.f32.mrb[0].mxu0
        %v797 = vadd.f32 0.0, %v796
        %v798 = vpop.f32.mrb[0].mxu0
        %v799 = vadd.f32 0.0, %v798
        %v800 = vpop.f32.mrb[0].mxu0
        %v801 = vadd.f32 0.0, %v800
        %802 = vmatprep.mubr.bf16.mxu0 0
        %803 = vmatmul.mubr.bf16.gmra.mrb[0].mxu0 %v731
        %v804 = vpop.f32.mrb[0].mxu0
        %v805 = vadd.f32 0.0, %v804
        %v806 = vpop.f32.mrb[0].mxu0
        %v807 = vadd.f32 0.0, %v806
        %v808 = vpop.f32.mrb[0].mxu0
        %v809 = vadd.f32 0.0, %v808
        %v810 = vpop.f32.mrb[0].mxu0
        %v811 = vadd.f32 0.0, %v810
        %812 = vdwg.mxu0
        %v821 = vunpack.c.l.b16 %v681
        %v822 = vunpack.c.l.b16 %v682
        %v823 = vunpack.c.l.b16 %v683
        %v824 = vunpack.c.l.b16 %v684
        %v825 = vunpack.c.l.b16 %v685
        %v826 = vunpack.c.l.b16 %v686
        %v827 = vunpack.c.l.b16 %v687
        %v828 = vunpack.c.l.b16 %v688
        %v829 = vpack.c.b16 %v822, %v821
        %v830 = vpack.c.b16 %v824, %v823
        %v831 = vpack.c.b16 %v826, %v825
        %v832 = vpack.c.b16 %v828, %v827
        %v834 = vsel %vm720, %v829, 0
        %v837 = vsel %vm720, %v830, 0
        %v840 = vsel %vm720, %v831, 0
        %v843 = vsel %vm720, %v832, 0
        %v846 = vsel %vm733, %v689, 0
        %v849 = vsel %vm733, %v690, 0
        %851 = vmatprep.subr.bf16.mxu0 %v849
        %852 = vmatpush1.bf16.msra.mxu0 %v846
        %853 = vmatprep.subr.bf16.mxu0 0
        %854 = vmatpush1.bf16.msra.mxu0 0
        %855 = vmatprep.subr.bf16.mxu0 0
        %856 = vmatpush1.bf16.msra.mxu0 0
        %857 = vmatprep.subr.bf16.mxu0 0
        %858 = vmatpush1.bf16.msra.mxu0 0
        %859 = vmatprep.subr.bf16.mxu0 0
        %860 = vmatpush1.bf16.msra.mxu0 0
        %861 = vmatprep.subr.bf16.mxu0 0
        %862 = vmatpush1.bf16.msra.mxu0 0
        %863 = vmatprep.subr.bf16.mxu0 0
        %864 = vmatpush1.bf16.msra.mxu0 0
        %865 = vmatprep.subr.bf16.mxu0 0
        %866 = vmatpush1.bf16.msra.mxu0 0
        %867 = vmatprep.subr.bf16.mxu0 0
        %868 = vmatpush1.bf16.msra.mxu0 0
        %869 = vmatprep.subr.bf16.mxu0 0
        %870 = vmatpush1.bf16.msra.mxu0 0
        %871 = vmatprep.subr.bf16.mxu0 0
        %872 = vmatpush1.bf16.msra.mxu0 0
        %873 = vmatprep.subr.bf16.mxu0 0
        %874 = vmatpush1.bf16.msra.mxu0 0
        %875 = vmatprep.subr.bf16.mxu0 0
        %876 = vmatpush1.bf16.msra.mxu0 0
        %877 = vmatprep.subr.bf16.mxu0 0
        %878 = vmatpush1.bf16.msra.mxu0 0
        %879 = vmatprep.subr.bf16.mxu0 0
        %880 = vmatpush1.bf16.msra.mxu0 0
        %881 = vmatprep.subr.bf16.mxu0 0
        %882 = vmatpush1.bf16.msra.mxu0 0
        %883 = vmatprep.mubr.bf16.mxu0 0
        %884 = vmatmul.mubr.bf16.gmra.mrb[0].mxu0 %v834
        %v885 = vpop.f32.mrb[0].mxu0
        %v886 = vadd.f32 %v775, %v885
        %v887 = vpop.f32.mrb[0].mxu0
        %v888 = vadd.f32 %v777, %v887
        %v889 = vpop.f32.mrb[0].mxu0
        %v890 = vadd.f32 %v779, %v889
        %v891 = vpop.f32.mrb[0].mxu0
        %v892 = vadd.f32 %v781, %v891
        %893 = vmatprep.mubr.bf16.mxu0 0
        %894 = vmatmul.mubr.bf16.gmra.mrb[0].mxu0 %v837
        %v895 = vpop.f32.mrb[0].mxu0
        %v896 = vadd.f32 %v785, %v895
        %v897 = vpop.f32.mrb[0].mxu0
        %v898 = vadd.f32 %v787, %v897
        %v899 = vpop.f32.mrb[0].mxu0
        %v900 = vadd.f32 %v789, %v899
        %v901 = vpop.f32.mrb[0].mxu0
        %v902 = vadd.f32 %v791, %v901
        %903 = vmatprep.mubr.bf16.mxu0 0
        %904 = vmatmul.mubr.bf16.gmra.mrb[0].mxu0 %v840
        %v905 = vpop.f32.mrb[0].mxu0
        %v906 = vadd.f32 %v795, %v905
        %v907 = vpop.f32.mrb[0].mxu0
        %v908 = vadd.f32 %v797, %v907
        %v909 = vpop.f32.mrb[0].mxu0
        %v910 = vadd.f32 %v799, %v909
        %v911 = vpop.f32.mrb[0].mxu0
        %v912 = vadd.f32 %v801, %v911
        %913 = vmatprep.mubr.bf16.mxu0 0
        %914 = vmatmul.mubr.bf16.gmra.mrb[0].mxu0 %v843
        %v915 = vpop.f32.mrb[0].mxu0
        %v916 = vadd.f32 %v805, %v915
        %v917 = vpop.f32.mrb[0].mxu0
        %v918 = vadd.f32 %v807, %v917
        %v919 = vpop.f32.mrb[0].mxu0
        %v920 = vadd.f32 %v809, %v919
        %v921 = vpop.f32.mrb[0].mxu0
        %v922 = vadd.f32 %v811, %v921
        %923 = vdwg.mxu0
        %s924 = scalar_lea.vmem %s1, 64
        %v925 = vld [vmem:[%s924] sm:$0xf]
        %v926 = vld [vmem:[%s924 + $0x4] sm:$0xf]
        %v927 = vld [vmem:[%s924 + $0x8] sm:$0xf]
        %v928 = vld [vmem:[%s924 + $0xc] sm:$0xf]
        %v929 = vld [vmem:[%s924 + $0x10] sm:$0xf]
        %v930 = vld [vmem:[%s924 + $0x14] sm:$0xf]
        %v931 = vld [vmem:[%s924 + $0x18] sm:$0xf]
        %v932 = vld [vmem:[%s924 + $0x1c] sm:$0xf]
        %v933 = vpack.c.bf16 %v677, %v677
        %v934 = vpack.c.bf16 %v678, %v678
        %v943 = vunpack.c.l.b16 %v925
        %v944 = vunpack.c.l.b16 %v926
        %v945 = vunpack.c.l.b16 %v927
        %v946 = vunpack.c.l.b16 %v928
        %v947 = vunpack.c.l.b16 %v929
        %v948 = vunpack.c.l.b16 %v930
        %v949 = vunpack.c.l.b16 %v931
        %v950 = vunpack.c.l.b16 %v932
        %v951 = vpack.c.b16 %v944, %v943
        %v952 = vpack.c.b16 %v946, %v945
        %v953 = vpack.c.b16 %v948, %v947
        %v954 = vpack.c.b16 %v950, %v949
        %v956 = vsel %vm720, %v951, 0
        %v959 = vsel %vm720, %v952, 0
        %v962 = vsel %vm720, %v953, 0
        %v965 = vsel %vm720, %v954, 0
        %v968 = vsel %vm733, %v933, 0
        %v971 = vsel %vm733, %v934, 0
        %973 = vmatprep.subr.bf16.mxu0 %v971
        %974 = vmatpush1.bf16.msra.mxu0 %v968
        %975 = vmatprep.subr.bf16.mxu0 0
        %976 = vmatpush1.bf16.msra.mxu0 0
        %977 = vmatprep.subr.bf16.mxu0 0
        %978 = vmatpush1.bf16.msra.mxu0 0
        %979 = vmatprep.subr.bf16.mxu0 0
        %980 = vmatpush1.bf16.msra.mxu0 0
        %981 = vmatprep.subr.bf16.mxu0 0
        %982 = vmatpush1.bf16.msra.mxu0 0
        %983 = vmatprep.subr.bf16.mxu0 0
        %984 = vmatpush1.bf16.msra.mxu0 0
        %985 = vmatprep.subr.bf16.mxu0 0
        %986 = vmatpush1.bf16.msra.mxu0 0
        %987 = vmatprep.subr.bf16.mxu0 0
        %988 = vmatpush1.bf16.msra.mxu0 0
        %989 = vmatprep.subr.bf16.mxu0 0
        %990 = vmatpush1.bf16.msra.mxu0 0
        %991 = vmatprep.subr.bf16.mxu0 0
        %992 = vmatpush1.bf16.msra.mxu0 0
        %993 = vmatprep.subr.bf16.mxu0 0
        %994 = vmatpush1.bf16.msra.mxu0 0
        %995 = vmatprep.subr.bf16.mxu0 0
        %996 = vmatpush1.bf16.msra.mxu0 0
        %997 = vmatprep.subr.bf16.mxu0 0
        %998 = vmatpush1.bf16.msra.mxu0 0
        %999 = vmatprep.subr.bf16.mxu0 0
        %1000 = vmatpush1.bf16.msra.mxu0 0
        %1001 = vmatprep.subr.bf16.mxu0 0
        %1002 = vmatpush1.bf16.msra.mxu0 0
        %1003 = vmatprep.subr.bf16.mxu0 0
        %1004 = vmatpush1.bf16.msra.mxu0 0
        %1005 = vmatprep.mubr.bf16.mxu0 0
        %1006 = vmatmul.mubr.bf16.gmra.mrb[0].mxu0 %v956
        %v1007 = vpop.f32.mrb[0].mxu0
        %v1008 = vadd.f32 0.0, %v1007
        %v1009 = vpop.f32.mrb[0].mxu0
        %v1010 = vadd.f32 0.0, %v1009
        %v1011 = vpop.f32.mrb[0].mxu0
        %v1012 = vadd.f32 0.0, %v1011
        %v1013 = vpop.f32.mrb[0].mxu0
        %v1014 = vadd.f32 0.0, %v1013
        %1015 = vmatprep.mubr.bf16.mxu0 0
        %1016 = vmatmul.mubr.bf16.gmra.mrb[0].mxu0 %v959
        %v1017 = vpop.f32.mrb[0].mxu0
        %v1018 = vadd.f32 0.0, %v1017
        %v1019 = vpop.f32.mrb[0].mxu0
        %v1020 = vadd.f32 0.0, %v1019
        %v1021 = vpop.f32.mrb[0].mxu0
        %v1022 = vadd.f32 0.0, %v1021
        %v1023 = vpop.f32.mrb[0].mxu0
        %v1024 = vadd.f32 0.0, %v1023
        %1025 = vmatprep.mubr.bf16.mxu0 0
        %1026 = vmatmul.mubr.bf16.gmra.mrb[0].mxu0 %v962
        %v1027 = vpop.f32.mrb[0].mxu0
        %v1028 = vadd.f32 0.0, %v1027
        %v1029 = vpop.f32.mrb[0].mxu0
        %v1030 = vadd.f32 0.0, %v1029
        %v1031 = vpop.f32.mrb[0].mxu0
        %v1032 = vadd.f32 0.0, %v1031
        %v1033 = vpop.f32.mrb[0].mxu0
        %v1034 = vadd.f32 0.0, %v1033
        %1035 = vmatprep.mubr.bf16.mxu0 0
        %1036 = vmatmul.mubr.bf16.gmra.mrb[0].mxu0 %v965
        %v1037 = vpop.f32.mrb[0].mxu0
        %v1038 = vadd.f32 0.0, %v1037
        %v1039 = vpop.f32.mrb[0].mxu0
        %v1040 = vadd.f32 0.0, %v1039
        %v1041 = vpop.f32.mrb[0].mxu0
        %v1042 = vadd.f32 0.0, %v1041
        %v1043 = vpop.f32.mrb[0].mxu0
        %v1044 = vadd.f32 0.0, %v1043
        %1045 = vdwg.mxu0
        %v1046 = vadd.f32 %v886, %v1008
        %v1047 = vadd.f32 %v888, %v1010
        %v1048 = vadd.f32 %v890, %v1012
        %v1049 = vadd.f32 %v892, %v1014
        %v1050 = vadd.f32 %v896, %v1018
        %v1051 = vadd.f32 %v898, %v1020
        %v1052 = vadd.f32 %v900, %v1022
        %v1053 = vadd.f32 %v902, %v1024
        %v1054 = vadd.f32 %v906, %v1028
        %v1055 = vadd.f32 %v908, %v1030
        %v1056 = vadd.f32 %v910, %v1032
        %v1057 = vadd.f32 %v912, %v1034
        %v1058 = vadd.f32 %v916, %v1038
        %v1059 = vadd.f32 %v918, %v1040
        %v1060 = vadd.f32 %v920, %v1042
        %v1061 = vadd.f32 %v922, %v1044
        %v1062 = vld [vmem:[%s2] sm:$0xff]
        %v1063 = vld [vmem:[%s2 + $0x8] sm:$0xff]
        %v1064 = vld [vmem:[%s2 + $0x10] sm:$0xff]
        %v1065 = vld [vmem:[%s2 + $0x18] sm:$0xff]
        %v1066 = vld [vmem:[%s2 + $0x20] sm:$0xff]
        %v1067 = vld [vmem:[%s2 + $0x28] sm:$0xff]
        %v1068 = vld [vmem:[%s2 + $0x30] sm:$0xff]
        %v1069 = vld [vmem:[%s2 + $0x38] sm:$0xff]
        %1071 = vset.pattern.permute.xlu0 0
        %1072 = vperm.xlu0 %1071, %v1062
        %v1073 = vpop.permute.xlu0 %1072
        %1076 = vset.pattern.permute.xlu0 0
        %1077 = vperm.xlu0 %1076, %v1063
        %v1078 = vpop.permute.xlu0 %1077
        %1081 = vset.pattern.permute.xlu0 0
        %1082 = vperm.xlu0 %1081, %v1064
        %v1083 = vpop.permute.xlu0 %1082
        %1086 = vset.pattern.permute.xlu0 0
        %1087 = vperm.xlu0 %1086, %v1065
        %v1088 = vpop.permute.xlu0 %1087
        %1091 = vset.pattern.permute.xlu0 0
        %1092 = vperm.xlu0 %1091, %v1066
        %v1093 = vpop.permute.xlu0 %1092
        %1096 = vset.pattern.permute.xlu0 0
        %1097 = vperm.xlu0 %1096, %v1067
        %v1098 = vpop.permute.xlu0 %1097
        %1101 = vset.pattern.permute.xlu0 0
        %1102 = vperm.xlu0 %1101, %v1068
        %v1103 = vpop.permute.xlu0 %1102
        %1106 = vset.pattern.permute.xlu0 0
        %1107 = vperm.xlu0 %1106, %v1069
        %v1108 = vpop.permute.xlu0 %1107
        %v1110 = vmul.f32 %v1046, %v1073
        %v1111 = vmul.f32 %v1047, %v1073
        %v1112 = vmul.f32 %v1048, %v1078
        %v1113 = vmul.f32 %v1049, %v1078
        %v1114 = vmul.f32 %v1050, %v1083
        %v1115 = vmul.f32 %v1051, %v1083
        %v1116 = vmul.f32 %v1052, %v1088
        %v1117 = vmul.f32 %v1053, %v1088
        %v1118 = vmul.f32 %v1054, %v1093
        %v1119 = vmul.f32 %v1055, %v1093
        %v1120 = vmul.f32 %v1056, %v1098
        %v1121 = vmul.f32 %v1057, %v1098
        %v1122 = vmul.f32 %v1058, %v1103
        %v1123 = vmul.f32 %v1059, %v1103
        %v1124 = vmul.f32 %v1060, %v1108
        %v1125 = vmul.f32 %v1061, %v1108
        %v1126 = vld [vmem:[%s3] sm:$0xff]
        %v1127 = vld [vmem:[%s3 + $0x8] sm:$0xff]
        %v1128 = vld [vmem:[%s3 + $0x10] sm:$0xff]
        %v1129 = vld [vmem:[%s3 + $0x18] sm:$0xff]
        %v1130 = vld [vmem:[%s3 + $0x20] sm:$0xff]
        %v1131 = vld [vmem:[%s3 + $0x28] sm:$0xff]
        %v1132 = vld [vmem:[%s3 + $0x30] sm:$0xff]
        %v1133 = vld [vmem:[%s3 + $0x38] sm:$0xff]
        %1135 = vset.pattern.permute.xlu0 0
        %1136 = vperm.xlu0 %1135, %v1126
        %v1137 = vpop.permute.xlu0 %1136
        %1140 = vset.pattern.permute.xlu0 0
        %1141 = vperm.xlu0 %1140, %v1127
        %v1142 = vpop.permute.xlu0 %1141
        %1145 = vset.pattern.permute.xlu0 0
        %1146 = vperm.xlu0 %1145, %v1128
        %v1147 = vpop.permute.xlu0 %1146
        %1150 = vset.pattern.permute.xlu0 0
        %1151 = vperm.xlu0 %1150, %v1129
        %v1152 = vpop.permute.xlu0 %1151
        %1155 = vset.pattern.permute.xlu0 0
        %1156 = vperm.xlu0 %1155, %v1130
        %v1157 = vpop.permute.xlu0 %1156
        %1160 = vset.pattern.permute.xlu0 0
        %1161 = vperm.xlu0 %1160, %v1131
        %v1162 = vpop.permute.xlu0 %1161
        %1165 = vset.pattern.permute.xlu0 0
        %1166 = vperm.xlu0 %1165, %v1132
        %v1167 = vpop.permute.xlu0 %1166
        %1170 = vset.pattern.permute.xlu0 0
        %1171 = vperm.xlu0 %1170, %v1133
        %v1172 = vpop.permute.xlu0 %1171
        %v1174 = vadd.f32 %v1110, %v1137
        %v1175 = vadd.f32 %v1111, %v1137
        %v1176 = vadd.f32 %v1112, %v1142
        %v1177 = vadd.f32 %v1113, %v1142
        %v1178 = vadd.f32 %v1114, %v1147
        %v1179 = vadd.f32 %v1115, %v1147
        %v1180 = vadd.f32 %v1116, %v1152
        %v1181 = vadd.f32 %v1117, %v1152
        %v1182 = vadd.f32 %v1118, %v1157
        %v1183 = vadd.f32 %v1119, %v1157
        %v1184 = vadd.f32 %v1120, %v1162
        %v1185 = vadd.f32 %v1121, %v1162
        %v1186 = vadd.f32 %v1122, %v1167
        %v1187 = vadd.f32 %v1123, %v1167
        %v1188 = vadd.f32 %v1124, %v1172
        %v1189 = vadd.f32 %v1125, %v1172
        %v1190 = vmax.f32 %v1174, 0.0
        %v1191 = vmax.f32 %v1175, 0.0
        %v1192 = vmax.f32 %v1176, 0.0
        %v1193 = vmax.f32 %v1177, 0.0
        %v1194 = vmax.f32 %v1178, 0.0
        %v1195 = vmax.f32 %v1179, 0.0
        %v1196 = vmax.f32 %v1180, 0.0
        %v1197 = vmax.f32 %v1181, 0.0
        %v1198 = vmax.f32 %v1182, 0.0
        %v1199 = vmax.f32 %v1183, 0.0
        %v1200 = vmax.f32 %v1184, 0.0
        %v1201 = vmax.f32 %v1185, 0.0
        %v1202 = vmax.f32 %v1186, 0.0
        %v1203 = vmax.f32 %v1187, 0.0
        %v1204 = vmax.f32 %v1188, 0.0
        %v1205 = vmax.f32 %v1189, 0.0
        %1206 = vrot.lane.b32.xlu0 %v1190, 32
        %v1207 = vpop.permute.xlu0 %1206
        %v1208 = vsel %vm642, %v1207, %v1191
        %1209 = vrot.lane.b32.xlu0 %v1192, 32
        %v1210 = vpop.permute.xlu0 %1209
        %v1211 = vsel %vm642, %v1210, %v1193
        %1212 = vrot.lane.b32.xlu0 %v1194, 32
        %v1213 = vpop.permute.xlu0 %1212
        %v1214 = vsel %vm642, %v1213, %v1195
        %1215 = vrot.lane.b32.xlu0 %v1196, 32
        %v1216 = vpop.permute.xlu0 %1215
        %v1217 = vsel %vm642, %v1216, %v1197
        %1218 = vrot.lane.b32.xlu0 %v1198, 32
        %v1219 = vpop.permute.xlu0 %1218
        %v1220 = vsel %vm642, %v1219, %v1199
        %1221 = vrot.lane.b32.xlu0 %v1200, 32
        %v1222 = vpop.permute.xlu0 %1221
        %v1223 = vsel %vm642, %v1222, %v1201
        %1224 = vrot.lane.b32.xlu0 %v1202, 32
        %v1225 = vpop.permute.xlu0 %1224
        %v1226 = vsel %vm642, %v1225, %v1203
        %1227 = vrot.lane.b32.xlu0 %v1204, 32
        %v1228 = vpop.permute.xlu0 %1227
        %v1229 = vsel %vm642, %v1228, %v1205
        %1230 = vrot.lane.b32.xlu0 %v1208, 32
        %v1231 = vpop.permute.xlu0 %1230
        %1232 = vrot.lane.b32.xlu0 %v1211, 32
        %v1233 = vpop.permute.xlu0 %1232
        %1234 = vrot.lane.b32.xlu0 %v1214, 32
        %v1235 = vpop.permute.xlu0 %1234
        %1236 = vrot.lane.b32.xlu0 %v1217, 32
        %v1237 = vpop.permute.xlu0 %1236
        %1238 = vrot.lane.b32.xlu0 %v1220, 32
        %v1239 = vpop.permute.xlu0 %1238
        %1240 = vrot.lane.b32.xlu0 %v1223, 32
        %v1241 = vpop.permute.xlu0 %1240
        %1242 = vrot.lane.b32.xlu0 %v1226, 32
        %v1243 = vpop.permute.xlu0 %1242
        %1244 = vrot.lane.b32.xlu0 %v1229, 32
        %v1245 = vpop.permute.xlu0 %1244
        %v1246 = vsel %vm642, %v1231, %v1207
        %v1247 = vsel %vm642, %v1233, %v1210
        %v1248 = vsel %vm642, %v1235, %v1213
        %v1249 = vsel %vm642, %v1237, %v1216
        %v1250 = vsel %vm642, %v1239, %v1219
        %v1251 = vsel %vm642, %v1241, %v1222
        %v1252 = vsel %vm642, %v1243, %v1225
        %v1253 = vsel %vm642, %v1245, %v1228
        %1270 = vrot.lane.b32.xlu0 %v1208, 97
        %v1271 = vpop.permute.xlu0 %1270
        %1272 = vrot.lane.b32.xlu0 %v1246, 97
        %v1273 = vpop.permute.xlu0 %1272
        %1274 = vrot.lane.b32.xlu0 %v1211, 97
        %v1275 = vpop.permute.xlu0 %1274
        %1276 = vrot.lane.b32.xlu0 %v1247, 97
        %v1277 = vpop.permute.xlu0 %1276
        %1278 = vrot.lane.b32.xlu0 %v1214, 97
        %v1279 = vpop.permute.xlu0 %1278
        %1280 = vrot.lane.b32.xlu0 %v1248, 97
        %v1281 = vpop.permute.xlu0 %1280
        %1282 = vrot.lane.b32.xlu0 %v1217, 97
        %v1283 = vpop.permute.xlu0 %1282
        %1284 = vrot.lane.b32.xlu0 %v1249, 97
        %v1285 = vpop.permute.xlu0 %1284
        %1286 = vrot.lane.b32.xlu0 %v1220, 97
        %v1287 = vpop.permute.xlu0 %1286
        %1288 = vrot.lane.b32.xlu0 %v1250, 97
        %v1289 = vpop.permute.xlu0 %1288
        %1290 = vrot.lane.b32.xlu0 %v1223, 97
        %v1291 = vpop.permute.xlu0 %1290
        %1292 = vrot.lane.b32.xlu0 %v1251, 97
        %v1293 = vpop.permute.xlu0 %1292
        %1294 = vrot.lane.b32.xlu0 %v1226, 97
        %v1295 = vpop.permute.xlu0 %1294
        %1296 = vrot.lane.b32.xlu0 %v1252, 97
        %v1297 = vpop.permute.xlu0 %1296
        %1298 = vrot.lane.b32.xlu0 %v1229, 97
        %v1299 = vpop.permute.xlu0 %1298
        %1300 = vrot.lane.b32.xlu0 %v1253, 97
        %v1301 = vpop.permute.xlu0 %1300
        %v1302 = vsel %vm659, %v1271, %v1273
        %v1303 = vsel %vm659, %v1275, %v1277
        %v1304 = vsel %vm659, %v1279, %v1281
        %v1305 = vsel %vm659, %v1283, %v1285
        %v1306 = vsel %vm659, %v1287, %v1289
        %v1307 = vsel %vm659, %v1291, %v1293
        %v1308 = vsel %vm659, %v1295, %v1297
        %v1309 = vsel %vm659, %v1299, %v1301
        %v1326 = vsel %vm651, %v1190, %v1302
        %v1327 = vsel %vm652, %v1191, %v1273
        %v1328 = vsel %vm651, %v1192, %v1303
        %v1329 = vsel %vm652, %v1193, %v1277
        %v1330 = vsel %vm651, %v1194, %v1304
        %v1331 = vsel %vm652, %v1195, %v1281
        %v1332 = vsel %vm651, %v1196, %v1305
        %v1333 = vsel %vm652, %v1197, %v1285
        %v1334 = vsel %vm651, %v1198, %v1306
        %v1335 = vsel %vm652, %v1199, %v1289
        %v1336 = vsel %vm651, %v1200, %v1307
        %v1337 = vsel %vm652, %v1201, %v1293
        %v1338 = vsel %vm651, %v1202, %v1308
        %v1339 = vsel %vm652, %v1203, %v1297
        %v1340 = vsel %vm651, %v1204, %v1309
        %v1341 = vsel %vm652, %v1205, %v1301
        %1350 = vrot.lane.b32.xlu0 %v1190, 127
        %v1351 = vpop.permute.xlu0 %1350
        %1352 = vrot.lane.b32.xlu0 %v1208, 127
        %v1353 = vpop.permute.xlu0 %1352
        %1354 = vrot.lane.b32.xlu0 %v1192, 127
        %v1355 = vpop.permute.xlu0 %1354
        %1356 = vrot.lane.b32.xlu0 %v1211, 127
        %v1357 = vpop.permute.xlu0 %1356
        %1358 = vrot.lane.b32.xlu0 %v1194, 127
        %v1359 = vpop.permute.xlu0 %1358
        %1360 = vrot.lane.b32.xlu0 %v1214, 127
        %v1361 = vpop.permute.xlu0 %1360
        %1362 = vrot.lane.b32.xlu0 %v1196, 127
        %v1363 = vpop.permute.xlu0 %1362
        %1364 = vrot.lane.b32.xlu0 %v1217, 127
        %v1365 = vpop.permute.xlu0 %1364
        %1366 = vrot.lane.b32.xlu0 %v1198, 127
        %v1367 = vpop.permute.xlu0 %1366
        %1368 = vrot.lane.b32.xlu0 %v1220, 127
        %v1369 = vpop.permute.xlu0 %1368
        %1370 = vrot.lane.b32.xlu0 %v1200, 127
        %v1371 = vpop.permute.xlu0 %1370
        %1372 = vrot.lane.b32.xlu0 %v1223, 127
        %v1373 = vpop.permute.xlu0 %1372
        %1374 = vrot.lane.b32.xlu0 %v1202, 127
        %v1375 = vpop.permute.xlu0 %1374
        %1376 = vrot.lane.b32.xlu0 %v1226, 127
        %v1377 = vpop.permute.xlu0 %1376
        %1378 = vrot.lane.b32.xlu0 %v1204, 127
        %v1379 = vpop.permute.xlu0 %1378
        %1380 = vrot.lane.b32.xlu0 %v1229, 127
        %v1381 = vpop.permute.xlu0 %1380
        %v1382 = vsel %vm673, %v1351, %v1353
        %v1383 = vsel %vm673, %v1355, %v1357
        %v1384 = vsel %vm673, %v1359, %v1361
        %v1385 = vsel %vm673, %v1363, %v1365
        %v1386 = vsel %vm673, %v1367, %v1369
        %v1387 = vsel %vm673, %v1371, %v1373
        %v1388 = vsel %vm673, %v1375, %v1377
        %v1389 = vsel %vm673, %v1379, %v1381
        %v1406 = vsel %vm667, %v1190, %v1382
        %v1407 = vsel %vm668, %v1191, %v1353
        %v1408 = vsel %vm667, %v1192, %v1383
        %v1409 = vsel %vm668, %v1193, %v1357
        %v1410 = vsel %vm667, %v1194, %v1384
        %v1411 = vsel %vm668, %v1195, %v1361
        %v1412 = vsel %vm667, %v1196, %v1385
        %v1413 = vsel %vm668, %v1197, %v1365
        %v1414 = vsel %vm667, %v1198, %v1386
        %v1415 = vsel %vm668, %v1199, %v1369
        %v1416 = vsel %vm667, %v1200, %v1387
        %v1417 = vsel %vm668, %v1201, %v1373
        %v1418 = vsel %vm667, %v1202, %v1388
        %v1419 = vsel %vm668, %v1203, %v1377
        %v1420 = vsel %vm667, %v1204, %v1389
        %v1421 = vsel %vm668, %v1205, %v1381
        %v1422 = vpack.c.bf16 %v1192, %v1190
        %v1423 = vpack.c.bf16 %v1193, %v1191
        %v1424 = vpack.c.bf16 %v1196, %v1194
        %v1425 = vpack.c.bf16 %v1197, %v1195
        %v1426 = vpack.c.bf16 %v1200, %v1198
        %v1427 = vpack.c.bf16 %v1201, %v1199
        %v1428 = vpack.c.bf16 %v1204, %v1202
        %v1429 = vpack.c.bf16 %v1205, %v1203
        %v1430 = vld [vmem:[#allocation4] sm:$0xf]
        %v1431 = vld [vmem:[#allocation4 + $0x4] sm:$0xf]
        %v1432 = vld [vmem:[#allocation4 + $0x8] sm:$0xf]
        %v1433 = vld [vmem:[#allocation4 + $0xc] sm:$0xf]
        %v1434 = vpack.c.bf16 %v1328, %v1326
        %v1435 = vpack.c.bf16 %v1329, %v1327
        %v1436 = vpack.c.bf16 %v1332, %v1330
        %v1437 = vpack.c.bf16 %v1333, %v1331
        %v1438 = vpack.c.bf16 %v1336, %v1334
        %v1439 = vpack.c.bf16 %v1337, %v1335
        %v1440 = vpack.c.bf16 %v1340, %v1338
        %v1441 = vpack.c.bf16 %v1341, %v1339
        %s1442 = scalar_lea.vmem [#allocation4], 16
        %v1443 = vld [vmem:[%s1442] sm:$0xf]
        %v1444 = vld [vmem:[%s1442 + $0x4] sm:$0xf]
        %v1445 = vld [vmem:[%s1442 + $0x8] sm:$0xf]
        %v1446 = vld [vmem:[%s1442 + $0xc] sm:$0xf]
        %v1451 = vunpack.c.l.b16 %v1443
        %v1452 = vunpack.c.l.b16 %v1444
        %v1453 = vunpack.c.l.b16 %v1445
        %v1454 = vunpack.c.l.b16 %v1446
        %v1455 = vpack.c.b16 %v1452, %v1451
        %v1456 = vpack.c.b16 %v1454, %v1453
        %vm1457 = vcmask 523264
        %v1459 = vsel %vm1457, %v1455, 0
        %v1462 = vsel %vm1457, %v1456, 0
        %1464 = vmatprep.subr.bf16.mxu0 %v1423
        %1465 = vmatpush1.bf16.msra.mxu0 %v1422
        %1466 = vmatprep.subr.bf16.mxu0 %v1425
        %1467 = vmatpush1.bf16.msra.mxu0 %v1424
        %1468 = vmatprep.subr.bf16.mxu0 %v1427
        %1469 = vmatpush1.bf16.msra.mxu0 %v1426
        %1470 = vmatprep.subr.bf16.mxu0 %v1429
        %1471 = vmatpush1.bf16.msra.mxu0 %v1428
        %1472 = vmatprep.subr.bf16.mxu0 0
        %1473 = vmatpush1.bf16.msra.mxu0 0
        %1474 = vmatprep.subr.bf16.mxu0 0
        %1475 = vmatpush1.bf16.msra.mxu0 0
        %1476 = vmatprep.subr.bf16.mxu0 0
        %1477 = vmatpush1.bf16.msra.mxu0 0
        %1478 = vmatprep.subr.bf16.mxu0 0
        %1479 = vmatpush1.bf16.msra.mxu0 0
        %1480 = vmatprep.subr.bf16.mxu0 0
        %1481 = vmatpush1.bf16.msra.mxu0 0
        %1482 = vmatprep.subr.bf16.mxu0 0
        %1483 = vmatpush1.bf16.msra.mxu0 0
        %1484 = vmatprep.subr.bf16.mxu0 0
        %1485 = vmatpush1.bf16.msra.mxu0 0
        %1486 = vmatprep.subr.bf16.mxu0 0
        %1487 = vmatpush1.bf16.msra.mxu0 0
        %1488 = vmatprep.subr.bf16.mxu0 0
        %1489 = vmatpush1.bf16.msra.mxu0 0
        %1490 = vmatprep.subr.bf16.mxu0 0
        %1491 = vmatpush1.bf16.msra.mxu0 0
        %1492 = vmatprep.subr.bf16.mxu0 0
        %1493 = vmatpush1.bf16.msra.mxu0 0
        %1494 = vmatprep.subr.bf16.mxu0 0
        %1495 = vmatpush1.bf16.msra.mxu0 0
        %1496 = vmatprep.mubr.bf16.mxu0 0
        %1497 = vmatmul.mubr.bf16.gmra.mrb[0].mxu0 %v1459
        %v1498 = vpop.f32.mrb[0].mxu0
        %v1499 = vadd.f32 0.0, %v1498
        %v1500 = vpop.f32.mrb[0].mxu0
        %v1501 = vadd.f32 0.0, %v1500
        %v1502 = vpop.f32.mrb[0].mxu0
        %v1503 = vadd.f32 0.0, %v1502
        %v1504 = vpop.f32.mrb[0].mxu0
        %v1505 = vadd.f32 0.0, %v1504
        %1506 = vmatprep.mubr.bf16.mxu0 0
        %1507 = vmatmul.mubr.bf16.gmra.mrb[0].mxu0 %v1462
        %v1508 = vpop.f32.mrb[0].mxu0
        %v1509 = vadd.f32 0.0, %v1508
        %v1510 = vpop.f32.mrb[0].mxu0
        %v1511 = vadd.f32 0.0, %v1510
        %v1512 = vpop.f32.mrb[0].mxu0
        %v1513 = vadd.f32 0.0, %v1512
        %v1514 = vpop.f32.mrb[0].mxu0
        %v1515 = vadd.f32 0.0, %v1514
        %1516 = vdwg.mxu0
        %v1521 = vunpack.c.l.b16 %v1430
        %v1522 = vunpack.c.l.b16 %v1431
        %v1523 = vunpack.c.l.b16 %v1432
        %v1524 = vunpack.c.l.b16 %v1433
        %v1525 = vpack.c.b16 %v1522, %v1521
        %v1526 = vpack.c.b16 %v1524, %v1523
        %v1528 = vsel %vm1457, %v1525, 0
        %v1531 = vsel %vm1457, %v1526, 0
        %1533 = vmatprep.subr.bf16.mxu0 %v1435
        %1534 = vmatpush1.bf16.msra.mxu0 %v1434
        %1535 = vmatprep.subr.bf16.mxu0 %v1437
        %1536 = vmatpush1.bf16.msra.mxu0 %v1436
        %1537 = vmatprep.subr.bf16.mxu0 %v1439
        %1538 = vmatpush1.bf16.msra.mxu0 %v1438
        %1539 = vmatprep.subr.bf16.mxu0 %v1441
        %1540 = vmatpush1.bf16.msra.mxu0 %v1440
        %1541 = vmatprep.subr.bf16.mxu0 0
        %1542 = vmatpush1.bf16.msra.mxu0 0
        %1543 = vmatprep.subr.bf16.mxu0 0
        %1544 = vmatpush1.bf16.msra.mxu0 0
        %1545 = vmatprep.subr.bf16.mxu0 0
        %1546 = vmatpush1.bf16.msra.mxu0 0
        %1547 = vmatprep.subr.bf16.mxu0 0
        %1548 = vmatpush1.bf16.msra.mxu0 0
        %1549 = vmatprep.subr.bf16.mxu0 0
        %1550 = vmatpush1.bf16.msra.mxu0 0
        %1551 = vmatprep.subr.bf16.mxu0 0
        %1552 = vmatpush1.bf16.msra.mxu0 0
        %1553 = vmatprep.subr.bf16.mxu0 0
        %1554 = vmatpush1.bf16.msra.mxu0 0
        %1555 = vmatprep.subr.bf16.mxu0 0
        %1556 = vmatpush1.bf16.msra.mxu0 0
        %1557 = vmatprep.subr.bf16.mxu0 0
        %1558 = vmatpush1.bf16.msra.mxu0 0
        %1559 = vmatprep.subr.bf16.mxu0 0
        %1560 = vmatpush1.bf16.msra.mxu0 0
        %1561 = vmatprep.subr.bf16.mxu0 0
        %1562 = vmatpush1.bf16.msra.mxu0 0
        %1563 = vmatprep.subr.bf16.mxu0 0
        %1564 = vmatpush1.bf16.msra.mxu0 0
        %1565 = vmatprep.mubr.bf16.mxu0 0
        %1566 = vmatmul.mubr.bf16.gmra.mrb[0].mxu0 %v1528
        %v1567 = vpop.f32.mrb[0].mxu0
        %v1568 = vadd.f32 %v1499, %v1567
        %v1569 = vpop.f32.mrb[0].mxu0
        %v1570 = vadd.f32 %v1501, %v1569
        %v1571 = vpop.f32.mrb[0].mxu0
        %v1572 = vadd.f32 %v1503, %v1571
        %v1573 = vpop.f32.mrb[0].mxu0
        %v1574 = vadd.f32 %v1505, %v1573
        %1575 = vmatprep.mubr.bf16.mxu0 0
        %1576 = vmatmul.mubr.bf16.gmra.mrb[0].mxu0 %v1531
        %v1577 = vpop.f32.mrb[0].mxu0
        %v1578 = vadd.f32 %v1509, %v1577
        %v1579 = vpop.f32.mrb[0].mxu0
        %v1580 = vadd.f32 %v1511, %v1579
        %v1581 = vpop.f32.mrb[0].mxu0
        %v1582 = vadd.f32 %v1513, %v1581
        %v1583 = vpop.f32.mrb[0].mxu0
        %v1584 = vadd.f32 %v1515, %v1583
        %1585 = vdwg.mxu0
        %s1586 = scalar_lea.vmem [#allocation4], 32
        %v1587 = vld [vmem:[%s1586] sm:$0xf]
        %v1588 = vld [vmem:[%s1586 + $0x4] sm:$0xf]
        %v1589 = vld [vmem:[%s1586 + $0x8] sm:$0xf]
        %v1590 = vld [vmem:[%s1586 + $0xc] sm:$0xf]
        %v1591 = vpack.c.bf16 %v1408, %v1406
        %v1592 = vpack.c.bf16 %v1409, %v1407
        %v1593 = vpack.c.bf16 %v1412, %v1410
        %v1594 = vpack.c.bf16 %v1413, %v1411
        %v1595 = vpack.c.bf16 %v1416, %v1414
        %v1596 = vpack.c.bf16 %v1417, %v1415
        %v1597 = vpack.c.bf16 %v1420, %v1418
        %v1598 = vpack.c.bf16 %v1421, %v1419
        %v1603 = vunpack.c.l.b16 %v1587
        %v1604 = vunpack.c.l.b16 %v1588
        %v1605 = vunpack.c.l.b16 %v1589
        %v1606 = vunpack.c.l.b16 %v1590
        %v1607 = vpack.c.b16 %v1604, %v1603
        %v1608 = vpack.c.b16 %v1606, %v1605
        %v1610 = vsel %vm1457, %v1607, 0
        %v1613 = vsel %vm1457, %v1608, 0
        %1615 = vmatprep.subr.bf16.mxu0 %v1592
        %1616 = vmatpush1.bf16.msra.mxu0 %v1591
        %1617 = vmatprep.subr.bf16.mxu0 %v1594
        %1618 = vmatpush1.bf16.msra.mxu0 %v1593
        %1619 = vmatprep.subr.bf16.mxu0 %v1596
        %1620 = vmatpush1.bf16.msra.mxu0 %v1595
        %1621 = vmatprep.subr.bf16.mxu0 %v1598
        %1622 = vmatpush1.bf16.msra.mxu0 %v1597
        %1623 = vmatprep.subr.bf16.mxu0 0
        %1624 = vmatpush1.bf16.msra.mxu0 0
        %1625 = vmatprep.subr.bf16.mxu0 0
        %1626 = vmatpush1.bf16.msra.mxu0 0
        %1627 = vmatprep.subr.bf16.mxu0 0
        %1628 = vmatpush1.bf16.msra.mxu0 0
        %1629 = vmatprep.subr.bf16.mxu0 0
        %1630 = vmatpush1.bf16.msra.mxu0 0
        %1631 = vmatprep.subr.bf16.mxu0 0
        %1632 = vmatpush1.bf16.msra.mxu0 0
        %1633 = vmatprep.subr.bf16.mxu0 0
        %1634 = vmatpush1.bf16.msra.mxu0 0
        %1635 = vmatprep.subr.bf16.mxu0 0
        %1636 = vmatpush1.bf16.msra.mxu0 0
        %1637 = vmatprep.subr.bf16.mxu0 0
        %1638 = vmatpush1.bf16.msra.mxu0 0
        %1639 = vmatprep.subr.bf16.mxu0 0
        %1640 = vmatpush1.bf16.msra.mxu0 0
        %1641 = vmatprep.subr.bf16.mxu0 0
        %1642 = vmatpush1.bf16.msra.mxu0 0
        %1643 = vmatprep.subr.bf16.mxu0 0
        %1644 = vmatpush1.bf16.msra.mxu0 0
        %1645 = vmatprep.subr.bf16.mxu0 0
        %1646 = vmatpush1.bf16.msra.mxu0 0
        %1647 = vmatprep.mubr.bf16.mxu0 0
        %1648 = vmatmul.mubr.bf16.gmra.mrb[0].mxu0 %v1610
        %v1649 = vpop.f32.mrb[0].mxu0
        %v1650 = vadd.f32 0.0, %v1649
        %v1651 = vpop.f32.mrb[0].mxu0
        %v1652 = vadd.f32 0.0, %v1651
        %v1653 = vpop.f32.mrb[0].mxu0
        %v1654 = vadd.f32 0.0, %v1653
        %v1655 = vpop.f32.mrb[0].mxu0
        %v1656 = vadd.f32 0.0, %v1655
        %1657 = vmatprep.mubr.bf16.mxu0 0
        %1658 = vmatmul.mubr.bf16.gmra.mrb[0].mxu0 %v1613
        %v1659 = vpop.f32.mrb[0].mxu0
        %v1660 = vadd.f32 0.0, %v1659
        %v1661 = vpop.f32.mrb[0].mxu0
        %v1662 = vadd.f32 0.0, %v1661
        %v1663 = vpop.f32.mrb[0].mxu0
        %v1664 = vadd.f32 0.0, %v1663
        %v1665 = vpop.f32.mrb[0].mxu0
        %v1666 = vadd.f32 0.0, %v1665
        %1667 = vdwg.mxu0
        %v1668 = vadd.f32 %v1568, %v1650
        %v1669 = vadd.f32 %v1570, %v1652
        %v1670 = vadd.f32 %v1572, %v1654
        %v1671 = vadd.f32 %v1574, %v1656
        %v1672 = vadd.f32 %v1578, %v1660
        %v1673 = vadd.f32 %v1580, %v1662
        %v1674 = vadd.f32 %v1582, %v1664
        %v1675 = vadd.f32 %v1584, %v1666
        %v1676 = vld [vmem:[%s5] sm:$0xff]
        %v1677 = vld [vmem:[%s5 + $0x8] sm:$0xff]
        %v1678 = vld [vmem:[%s5 + $0x10] sm:$0xff]
        %v1679 = vld [vmem:[%s5 + $0x18] sm:$0xff]
        %1681 = vset.pattern.permute.xlu0 0
        %1682 = vperm.xlu0 %1681, %v1676
        %v1683 = vpop.permute.xlu0 %1682
        %1686 = vset.pattern.permute.xlu0 0
        %1687 = vperm.xlu0 %1686, %v1677
        %v1688 = vpop.permute.xlu0 %1687
        %1691 = vset.pattern.permute.xlu0 0
        %1692 = vperm.xlu0 %1691, %v1678
        %v1693 = vpop.permute.xlu0 %1692
        %1696 = vset.pattern.permute.xlu0 0
        %1697 = vperm.xlu0 %1696, %v1679
        %v1698 = vpop.permute.xlu0 %1697
        %v1700 = vmul.f32 %v1668, %v1683
        %v1701 = vmul.f32 %v1669, %v1683
        %v1702 = vmul.f32 %v1670, %v1688
        %v1703 = vmul.f32 %v1671, %v1688
        %v1704 = vmul.f32 %v1672, %v1693
        %v1705 = vmul.f32 %v1673, %v1693
        %v1706 = vmul.f32 %v1674, %v1698
        %v1707 = vmul.f32 %v1675, %v1698
        %v1708 = vld [vmem:[%s6] sm:$0xff]
        %v1709 = vld [vmem:[%s6 + $0x8] sm:$0xff]
        %v1710 = vld [vmem:[%s6 + $0x10] sm:$0xff]
        %v1711 = vld [vmem:[%s6 + $0x18] sm:$0xff]
        %1713 = vset.pattern.permute.xlu0 0
        %1714 = vperm.xlu0 %1713, %v1708
        %v1715 = vpop.permute.xlu0 %1714
        %1718 = vset.pattern.permute.xlu0 0
        %1719 = vperm.xlu0 %1718, %v1709
        %v1720 = vpop.permute.xlu0 %1719
        %1723 = vset.pattern.permute.xlu0 0
        %1724 = vperm.xlu0 %1723, %v1710
        %v1725 = vpop.permute.xlu0 %1724
        %1728 = vset.pattern.permute.xlu0 0
        %1729 = vperm.xlu0 %1728, %v1711
        %v1730 = vpop.permute.xlu0 %1729
        %v1732 = vadd.f32 %v1700, %v1715
        %v1733 = vadd.f32 %v1701, %v1715
        %v1734 = vadd.f32 %v1702, %v1720
        %v1735 = vadd.f32 %v1703, %v1720
        %v1736 = vadd.f32 %v1704, %v1725
        %v1737 = vadd.f32 %v1705, %v1725
        %v1738 = vadd.f32 %v1706, %v1730
        %v1739 = vadd.f32 %v1707, %v1730
        %v1740 = vmax.f32 %v1732, 0.0
        %v1741 = vmax.f32 %v1733, 0.0
        %v1742 = vmax.f32 %v1734, 0.0
        %v1743 = vmax.f32 %v1735, 0.0
        %v1744 = vmax.f32 %v1736, 0.0
        %v1745 = vmax.f32 %v1737, 0.0
        %v1746 = vmax.f32 %v1738, 0.0
        %v1747 = vmax.f32 %v1739, 0.0
        %1748 = vrot.lane.b32.xlu0 %v1740, 32
        %v1749 = vpop.permute.xlu0 %1748
        %v1750 = vsel %vm642, %v1749, %v1741
        %1751 = vrot.lane.b32.xlu0 %v1742, 32
        %v1752 = vpop.permute.xlu0 %1751
        %v1753 = vsel %vm642, %v1752, %v1743
        %1754 = vrot.lane.b32.xlu0 %v1744, 32
        %v1755 = vpop.permute.xlu0 %1754
        %v1756 = vsel %vm642, %v1755, %v1745
        %1757 = vrot.lane.b32.xlu0 %v1746, 32
        %v1758 = vpop.permute.xlu0 %1757
        %v1759 = vsel %vm642, %v1758, %v1747
        %1760 = vrot.lane.b32.xlu0 %v1750, 32
        %v1761 = vpop.permute.xlu0 %1760
        %1762 = vrot.lane.b32.xlu0 %v1753, 32
        %v1763 = vpop.permute.xlu0 %1762
        %1764 = vrot.lane.b32.xlu0 %v1756, 32
        %v1765 = vpop.permute.xlu0 %1764
        %1766 = vrot.lane.b32.xlu0 %v1759, 32
        %v1767 = vpop.permute.xlu0 %1766
        %v1768 = vsel %vm642, %v1761, %v1749
        %v1769 = vsel %vm642, %v1763, %v1752
        %v1770 = vsel %vm642, %v1765, %v1755
        %v1771 = vsel %vm642, %v1767, %v1758
        %1780 = vrot.lane.b32.xlu0 %v1750, 97
        %v1781 = vpop.permute.xlu0 %1780
        %1782 = vrot.lane.b32.xlu0 %v1768, 97
        %v1783 = vpop.permute.xlu0 %1782
        %1784 = vrot.lane.b32.xlu0 %v1753, 97
        %v1785 = vpop.permute.xlu0 %1784
        %1786 = vrot.lane.b32.xlu0 %v1769, 97
        %v1787 = vpop.permute.xlu0 %1786
        %1788 = vrot.lane.b32.xlu0 %v1756, 97
        %v1789 = vpop.permute.xlu0 %1788
        %1790 = vrot.lane.b32.xlu0 %v1770, 97
        %v1791 = vpop.permute.xlu0 %1790
        %1792 = vrot.lane.b32.xlu0 %v1759, 97
        %v1793 = vpop.permute.xlu0 %1792
        %1794 = vrot.lane.b32.xlu0 %v1771, 97
        %v1795 = vpop.permute.xlu0 %1794
        %v1796 = vsel %vm659, %v1781, %v1783
        %v1797 = vsel %vm659, %v1785, %v1787
        %v1798 = vsel %vm659, %v1789, %v1791
        %v1799 = vsel %vm659, %v1793, %v1795
        %v1808 = vsel %vm651, %v1740, %v1796
        %v1809 = vsel %vm652, %v1741, %v1783
        %v1810 = vsel %vm651, %v1742, %v1797
        %v1811 = vsel %vm652, %v1743, %v1787
        %v1812 = vsel %vm651, %v1744, %v1798
        %v1813 = vsel %vm652, %v1745, %v1791
        %v1814 = vsel %vm651, %v1746, %v1799
        %v1815 = vsel %vm652, %v1747, %v1795
        %1820 = vrot.lane.b32.xlu0 %v1740, 127
        %v1821 = vpop.permute.xlu0 %1820
        %1822 = vrot.lane.b32.xlu0 %v1750, 127
        %v1823 = vpop.permute.xlu0 %1822
        %1824 = vrot.lane.b32.xlu0 %v1742, 127
        %v1825 = vpop.permute.xlu0 %1824
        %1826 = vrot.lane.b32.xlu0 %v1753, 127
        %v1827 = vpop.permute.xlu0 %1826
        %1828 = vrot.lane.b32.xlu0 %v1744, 127
        %v1829 = vpop.permute.xlu0 %1828
        %1830 = vrot.lane.b32.xlu0 %v1756, 127
        %v1831 = vpop.permute.xlu0 %1830
        %1832 = vrot.lane.b32.xlu0 %v1746, 127
        %v1833 = vpop.permute.xlu0 %1832
        %1834 = vrot.lane.b32.xlu0 %v1759, 127
        %v1835 = vpop.permute.xlu0 %1834
        %v1836 = vsel %vm673, %v1821, %v1823
        %v1837 = vsel %vm673, %v1825, %v1827
        %v1838 = vsel %vm673, %v1829, %v1831
        %v1839 = vsel %vm673, %v1833, %v1835
        %v1848 = vsel %vm667, %v1740, %v1836
        %v1849 = vsel %vm668, %v1741, %v1823
        %v1850 = vsel %vm667, %v1742, %v1837
        %v1851 = vsel %vm668, %v1743, %v1827
        %v1852 = vsel %vm667, %v1744, %v1838
        %v1853 = vsel %vm668, %v1745, %v1831
        %v1854 = vsel %vm667, %v1746, %v1839
        %v1855 = vsel %vm668, %v1747, %v1835
        %v1856 = vpack.c.bf16 %v1742, %v1740
        %v1857 = vpack.c.bf16 %v1743, %v1741
        %v1858 = vpack.c.bf16 %v1746, %v1744
        %v1859 = vpack.c.bf16 %v1747, %v1745
        %v1860 = vld [vmem:[#allocation6] sm:$0xf]
        %v1861 = vld [vmem:[#allocation6 + $0x4] sm:$0xf]
        %v1862 = vpack.c.bf16 %v1810, %v1808
        %v1863 = vpack.c.bf16 %v1811, %v1809
        %v1864 = vpack.c.bf16 %v1814, %v1812
        %v1865 = vpack.c.bf16 %v1815, %v1813
        %s1866 = scalar_lea.vmem [#allocation6], 8
        %v1867 = vld [vmem:[%s1866] sm:$0xf]
        %v1868 = vld [vmem:[%s1866 + $0x4] sm:$0xf]
        %v1871 = vunpack.c.l.b16 %v1867
        %v1872 = vunpack.c.l.b16 %v1868
        %v1873 = vpack.c.b16 %v1872, %v1871
        %vm1874 = vcmask 261120
        %v1876 = vsel %vm1874, %v1873, 0
        %1878 = vmatprep.subr.bf16.mxu0 %v1857
        %1879 = vmatpush1.bf16.msra.mxu0 %v1856
        %1880 = vmatprep.subr.bf16.mxu0 %v1859
        %1881 = vmatpush1.bf16.msra.mxu0 %v1858
        %1882 = vmatprep.subr.bf16.mxu0 0
        %1883 = vmatpush1.bf16.msra.mxu0 0
        %1884 = vmatprep.subr.bf16.mxu0 0
        %1885 = vmatpush1.bf16.msra.mxu0 0
        %1886 = vmatprep.subr.bf16.mxu0 0
        %1887 = vmatpush1.bf16.msra.mxu0 0
        %1888 = vmatprep.subr.bf16.mxu0 0
        %1889 = vmatpush1.bf16.msra.mxu0 0
        %1890 = vmatprep.subr.bf16.mxu0 0
        %1891 = vmatpush1.bf16.msra.mxu0 0
        %1892 = vmatprep.subr.bf16.mxu0 0
        %1893 = vmatpush1.bf16.msra.mxu0 0
        %1894 = vmatprep.subr.bf16.mxu0 0
        %1895 = vmatpush1.bf16.msra.mxu0 0
        %1896 = vmatprep.subr.bf16.mxu0 0
        %1897 = vmatpush1.bf16.msra.mxu0 0
        %1898 = vmatprep.subr.bf16.mxu0 0
        %1899 = vmatpush1.bf16.msra.mxu0 0
        %1900 = vmatprep.subr.bf16.mxu0 0
        %1901 = vmatpush1.bf16.msra.mxu0 0
        %1902 = vmatprep.subr.bf16.mxu0 0
        %1903 = vmatpush1.bf16.msra.mxu0 0
        %1904 = vmatprep.subr.bf16.mxu0 0
        %1905 = vmatpush1.bf16.msra.mxu0 0
        %1906 = vmatprep.subr.bf16.mxu0 0
        %1907 = vmatpush1.bf16.msra.mxu0 0
        %1908 = vmatprep.subr.bf16.mxu0 0
        %1909 = vmatpush1.bf16.msra.mxu0 0
        %1910 = vmatprep.mubr.bf16.mxu0 0
        %1911 = vmatmul.mubr.bf16.gmra.mrb[0].mxu0 %v1876
        %v1912 = vpop.f32.mrb[0].mxu0
        %v1913 = vadd.f32 0.0, %v1912
        %v1914 = vpop.f32.mrb[0].mxu0
        %v1915 = vadd.f32 0.0, %v1914
        %v1916 = vpop.f32.mrb[0].mxu0
        %v1917 = vadd.f32 0.0, %v1916
        %v1918 = vpop.f32.mrb[0].mxu0
        %v1919 = vadd.f32 0.0, %v1918
        %1920 = vdwg.mxu0
        %v1923 = vunpack.c.l.b16 %v1860
        %v1924 = vunpack.c.l.b16 %v1861
        %v1925 = vpack.c.b16 %v1924, %v1923
        %v1927 = vsel %vm1874, %v1925, 0
        %1929 = vmatprep.subr.bf16.mxu0 %v1863
        %1930 = vmatpush1.bf16.msra.mxu0 %v1862
        %1931 = vmatprep.subr.bf16.mxu0 %v1865
        %1932 = vmatpush1.bf16.msra.mxu0 %v1864
        %1933 = vmatprep.subr.bf16.mxu0 0
        %1934 = vmatpush1.bf16.msra.mxu0 0
        %1935 = vmatprep.subr.bf16.mxu0 0
        %1936 = vmatpush1.bf16.msra.mxu0 0
        %1937 = vmatprep.subr.bf16.mxu0 0
        %1938 = vmatpush1.bf16.msra.mxu0 0
        %1939 = vmatprep.subr.bf16.mxu0 0
        %1940 = vmatpush1.bf16.msra.mxu0 0
        %1941 = vmatprep.subr.bf16.mxu0 0
        %1942 = vmatpush1.bf16.msra.mxu0 0
        %1943 = vmatprep.subr.bf16.mxu0 0
        %1944 = vmatpush1.bf16.msra.mxu0 0
        %1945 = vmatprep.subr.bf16.mxu0 0
        %1946 = vmatpush1.bf16.msra.mxu0 0
        %1947 = vmatprep.subr.bf16.mxu0 0
        %1948 = vmatpush1.bf16.msra.mxu0 0
        %1949 = vmatprep.subr.bf16.mxu0 0
        %1950 = vmatpush1.bf16.msra.mxu0 0
        %1951 = vmatprep.subr.bf16.mxu0 0
        %1952 = vmatpush1.bf16.msra.mxu0 0
        %1953 = vmatprep.subr.bf16.mxu0 0
        %1954 = vmatpush1.bf16.msra.mxu0 0
        %1955 = vmatprep.subr.bf16.mxu0 0
        %1956 = vmatpush1.bf16.msra.mxu0 0
        %1957 = vmatprep.subr.bf16.mxu0 0
        %1958 = vmatpush1.bf16.msra.mxu0 0
        %1959 = vmatprep.subr.bf16.mxu0 0
        %1960 = vmatpush1.bf16.msra.mxu0 0
        %1961 = vmatprep.mubr.bf16.mxu0 0
        %1962 = vmatmul.mubr.bf16.gmra.mrb[0].mxu0 %v1927
        %v1963 = vpop.f32.mrb[0].mxu0
        %v1964 = vadd.f32 %v1913, %v1963
        %v1965 = vpop.f32.mrb[0].mxu0
        %v1966 = vadd.f32 %v1915, %v1965
        %v1967 = vpop.f32.mrb[0].mxu0
        %v1968 = vadd.f32 %v1917, %v1967
        %v1969 = vpop.f32.mrb[0].mxu0
        %v1970 = vadd.f32 %v1919, %v1969
        %1971 = vdwg.mxu0
        %s1972 = scalar_lea.vmem [#allocation6], 16
        %v1973 = vld [vmem:[%s1972] sm:$0xf]
        %v1974 = vld [vmem:[%s1972 + $0x4] sm:$0xf]
        %v1975 = vpack.c.bf16 %v1850, %v1848
        %v1976 = vpack.c.bf16 %v1851, %v1849
        %v1977 = vpack.c.bf16 %v1854, %v1852
        %v1978 = vpack.c.bf16 %v1855, %v1853
        %v1981 = vunpack.c.l.b16 %v1973
        %v1982 = vunpack.c.l.b16 %v1974
        %v1983 = vpack.c.b16 %v1982, %v1981
        %v1985 = vsel %vm1874, %v1983, 0
        %1987 = vmatprep.subr.bf16.mxu0 %v1976
        %1988 = vmatpush1.bf16.msra.mxu0 %v1975
        %1989 = vmatprep.subr.bf16.mxu0 %v1978
        %1990 = vmatpush1.bf16.msra.mxu0 %v1977
        %1991 = vmatprep.subr.bf16.mxu0 0
        %1992 = vmatpush1.bf16.msra.mxu0 0
        %1993 = vmatprep.subr.bf16.mxu0 0
        %1994 = vmatpush1.bf16.msra.mxu0 0
        %1995 = vmatprep.subr.bf16.mxu0 0
        %1996 = vmatpush1.bf16.msra.mxu0 0
        %1997 = vmatprep.subr.bf16.mxu0 0
        %1998 = vmatpush1.bf16.msra.mxu0 0
        %1999 = vmatprep.subr.bf16.mxu0 0
        %2000 = vmatpush1.bf16.msra.mxu0 0
        %2001 = vmatprep.subr.bf16.mxu0 0
        %2002 = vmatpush1.bf16.msra.mxu0 0
        %2003 = vmatprep.subr.bf16.mxu0 0
        %2004 = vmatpush1.bf16.msra.mxu0 0
        %2005 = vmatprep.subr.bf16.mxu0 0
        %2006 = vmatpush1.bf16.msra.mxu0 0
        %2007 = vmatprep.subr.bf16.mxu0 0
        %2008 = vmatpush1.bf16.msra.mxu0 0
        %2009 = vmatprep.subr.bf16.mxu0 0
        %2010 = vmatpush1.bf16.msra.mxu0 0
        %2011 = vmatprep.subr.bf16.mxu0 0
        %2012 = vmatpush1.bf16.msra.mxu0 0
        %2013 = vmatprep.subr.bf16.mxu0 0
        %2014 = vmatpush1.bf16.msra.mxu0 0
        %2015 = vmatprep.subr.bf16.mxu0 0
        %2016 = vmatpush1.bf16.msra.mxu0 0
        %2017 = vmatprep.subr.bf16.mxu0 0
        %2018 = vmatpush1.bf16.msra.mxu0 0
        %2019 = vmatprep.mubr.bf16.mxu0 0
        %2020 = vmatmul.mubr.bf16.gmra.mrb[0].mxu0 %v1985
        %v2021 = vpop.f32.mrb[0].mxu0
        %v2022 = vadd.f32 0.0, %v2021
        %v2023 = vpop.f32.mrb[0].mxu0
        %v2024 = vadd.f32 0.0, %v2023
        %v2025 = vpop.f32.mrb[0].mxu0
        %v2026 = vadd.f32 0.0, %v2025
        %v2027 = vpop.f32.mrb[0].mxu0
        %v2028 = vadd.f32 0.0, %v2027
        %2029 = vdwg.mxu0
        %v2030 = vadd.f32 %v1964, %v2022
        %v2031 = vadd.f32 %v1966, %v2024
        %v2032 = vadd.f32 %v1968, %v2026
        %v2033 = vadd.f32 %v1970, %v2028
        %v2034 = vld [vmem:[%s8] sm:$0xff]
        %v2035 = vld [vmem:[%s8 + $0x8] sm:$0xff]
        %2037 = vset.pattern.permute.xlu0 0
        %2038 = vperm.xlu0 %2037, %v2034
        %v2039 = vpop.permute.xlu0 %2038
        %2042 = vset.pattern.permute.xlu0 0
        %2043 = vperm.xlu0 %2042, %v2035
        %v2044 = vpop.permute.xlu0 %2043
        %v2046 = vmul.f32 %v2030, %v2039
        %v2047 = vmul.f32 %v2031, %v2039
        %v2048 = vmul.f32 %v2032, %v2044
        %v2049 = vmul.f32 %v2033, %v2044
        %v2050 = vld [vmem:[%s9] sm:$0xff]
        %v2051 = vld [vmem:[%s9 + $0x8] sm:$0xff]
        %2053 = vset.pattern.permute.xlu0 0
        %2054 = vperm.xlu0 %2053, %v2050
        %v2055 = vpop.permute.xlu0 %2054
        %2058 = vset.pattern.permute.xlu0 0
        %2059 = vperm.xlu0 %2058, %v2051
        %v2060 = vpop.permute.xlu0 %2059
        %v2062 = vadd.f32 %v2046, %v2055
        %v2063 = vadd.f32 %v2047, %v2055
        %v2064 = vadd.f32 %v2048, %v2060
        %v2065 = vadd.f32 %v2049, %v2060
        %v2066 = vmax.f32 %v2062, 0.0
        %v2067 = vmax.f32 %v2063, 0.0
        %v2068 = vmax.f32 %v2064, 0.0
        %v2069 = vmax.f32 %v2065, 0.0
        %2070 = vrot.lane.b32.xlu0 %v2066, 32
        %v2071 = vpop.permute.xlu0 %2070
        %v2072 = vsel %vm642, %v2071, %v2067
        %2073 = vrot.lane.b32.xlu0 %v2068, 32
        %v2074 = vpop.permute.xlu0 %2073
        %v2075 = vsel %vm642, %v2074, %v2069
        %2076 = vrot.lane.b32.xlu0 %v2072, 32
        %v2077 = vpop.permute.xlu0 %2076
        %2078 = vrot.lane.b32.xlu0 %v2075, 32
        %v2079 = vpop.permute.xlu0 %2078
        %v2080 = vsel %vm642, %v2077, %v2071
        %v2081 = vsel %vm642, %v2079, %v2074
        %2086 = vrot.lane.b32.xlu0 %v2072, 97
        %v2087 = vpop.permute.xlu0 %2086
        %2088 = vrot.lane.b32.xlu0 %v2080, 97
        %v2089 = vpop.permute.xlu0 %2088
        %2090 = vrot.lane.b32.xlu0 %v2075, 97
        %v2091 = vpop.permute.xlu0 %2090
        %2092 = vrot.lane.b32.xlu0 %v2081, 97
        %v2093 = vpop.permute.xlu0 %2092
        %v2094 = vsel %vm659, %v2087, %v2089
        %v2095 = vsel %vm659, %v2091, %v2093
        %v2100 = vsel %vm651, %v2066, %v2094
        %v2101 = vsel %vm652, %v2067, %v2089
        %v2102 = vsel %vm651, %v2068, %v2095
        %v2103 = vsel %vm652, %v2069, %v2093
        %2106 = vrot.lane.b32.xlu0 %v2066, 127
        %v2107 = vpop.permute.xlu0 %2106
        %2108 = vrot.lane.b32.xlu0 %v2072, 127
        %v2109 = vpop.permute.xlu0 %2108
        %2110 = vrot.lane.b32.xlu0 %v2068, 127
        %v2111 = vpop.permute.xlu0 %2110
        %2112 = vrot.lane.b32.xlu0 %v2075, 127
        %v2113 = vpop.permute.xlu0 %2112
        %v2114 = vsel %vm673, %v2107, %v2109
        %v2115 = vsel %vm673, %v2111, %v2113
        %v2120 = vsel %vm667, %v2066, %v2114
        %v2121 = vsel %vm668, %v2067, %v2109
        %v2122 = vsel %vm667, %v2068, %v2115
        %v2123 = vsel %vm668, %v2069, %v2113
        %v2124 = vpack.c.bf16 %v2068, %v2066
        %v2125 = vpack.c.bf16 %v2069, %v2067
        %v2126 = vld [vmem:[#allocation7] sm:$0xf]
        %v2127 = vpack.c.bf16 %v2102, %v2100
        %v2128 = vpack.c.bf16 %v2103, %v2101
        %s2129 = scalar_lea.vmem [#allocation7], 4
        %v2130 = vld [vmem:[%s2129] sm:$0xf]
        %vm2131 = vcmask 130048
        %v2133 = vsel %vm2131, %v2130, 0
        %2135 = vmatprep.subr.bf16.mxu0 %v2125
        %2136 = vmatpush1.bf16.msra.mxu0 %v2124
        %2137 = vmatprep.subr.bf16.mxu0 0
        %2138 = vmatpush1.bf16.msra.mxu0 0
        %2139 = vmatprep.subr.bf16.mxu0 0
        %2140 = vmatpush1.bf16.msra.mxu0 0
        %2141 = vmatprep.subr.bf16.mxu0 0
        %2142 = vmatpush1.bf16.msra.mxu0 0
        %2143 = vmatprep.subr.bf16.mxu0 0
        %2144 = vmatpush1.bf16.msra.mxu0 0
        %2145 = vmatprep.subr.bf16.mxu0 0
        %2146 = vmatpush1.bf16.msra.mxu0 0
        %2147 = vmatprep.subr.bf16.mxu0 0
        %2148 = vmatpush1.bf16.msra.mxu0 0
        %2149 = vmatprep.subr.bf16.mxu0 0
        %2150 = vmatpush1.bf16.msra.mxu0 0
        %2151 = vmatprep.subr.bf16.mxu0 0
        %2152 = vmatpush1.bf16.msra.mxu0 0
        %2153 = vmatprep.subr.bf16.mxu0 0
        %2154 = vmatpush1.bf16.msra.mxu0 0
        %2155 = vmatprep.subr.bf16.mxu0 0
        %2156 = vmatpush1.bf16.msra.mxu0 0
        %2157 = vmatprep.subr.bf16.mxu0 0
        %2158 = vmatpush1.bf16.msra.mxu0 0
        %2159 = vmatprep.subr.bf16.mxu0 0
        %2160 = vmatpush1.bf16.msra.mxu0 0
        %2161 = vmatprep.subr.bf16.mxu0 0
        %2162 = vmatpush1.bf16.msra.mxu0 0
        %2163 = vmatprep.subr.bf16.mxu0 0
        %2164 = vmatpush1.bf16.msra.mxu0 0
        %2165 = vmatprep.subr.bf16.mxu0 0
        %2166 = vmatpush1.bf16.msra.mxu0 0
        %2167 = vmatprep.mubr.bf16.mxu0 0
        %2168 = vmatmul.mubr.bf16.gmra.mrb[0].mxu0 %v2133
        %v2169 = vpop.f32.mrb[0].mxu0
        %v2170 = vadd.f32 0.0, %v2169
        %v2171 = vpop.f32.mrb[0].mxu0
        %v2172 = vadd.f32 0.0, %v2171
        %v2173 = vpop.f32.mrb[0].mxu0
        %v2174 = vpop.f32.mrb[0].mxu0
        %2175 = vdwg.mxu0
        %v2177 = vsel %vm2131, %v2126, 0
        %2179 = vmatprep.subr.bf16.mxu0 %v2128
        %2180 = vmatpush1.bf16.msra.mxu0 %v2127
        %2181 = vmatprep.subr.bf16.mxu0 0
        %2182 = vmatpush1.bf16.msra.mxu0 0
        %2183 = vmatprep.subr.bf16.mxu0 0
        %2184 = vmatpush1.bf16.msra.mxu0 0
        %2185 = vmatprep.subr.bf16.mxu0 0
        %2186 = vmatpush1.bf16.msra.mxu0 0
        %2187 = vmatprep.subr.bf16.mxu0 0
        %2188 = vmatpush1.bf16.msra.mxu0 0
        %2189 = vmatprep.subr.bf16.mxu0 0
        %2190 = vmatpush1.bf16.msra.mxu0 0
        %2191 = vmatprep.subr.bf16.mxu0 0
        %2192 = vmatpush1.bf16.msra.mxu0 0
        %2193 = vmatprep.subr.bf16.mxu0 0
        %2194 = vmatpush1.bf16.msra.mxu0 0
        %2195 = vmatprep.subr.bf16.mxu0 0
        %2196 = vmatpush1.bf16.msra.mxu0 0
        %2197 = vmatprep.subr.bf16.mxu0 0
        %2198 = vmatpush1.bf16.msra.mxu0 0
        %2199 = vmatprep.subr.bf16.mxu0 0
        %2200 = vmatpush1.bf16.msra.mxu0 0
        %2201 = vmatprep.subr.bf16.mxu0 0
        %2202 = vmatpush1.bf16.msra.mxu0 0
        %2203 = vmatprep.subr.bf16.mxu0 0
        %2204 = vmatpush1.bf16.msra.mxu0 0
        %2205 = vmatprep.subr.bf16.mxu0 0
        %2206 = vmatpush1.bf16.msra.mxu0 0
        %2207 = vmatprep.subr.bf16.mxu0 0
        %2208 = vmatpush1.bf16.msra.mxu0 0
        %2209 = vmatprep.subr.bf16.mxu0 0
        %2210 = vmatpush1.bf16.msra.mxu0 0
        %2211 = vmatprep.mubr.bf16.mxu0 0
        %2212 = vmatmul.mubr.bf16.gmra.mrb[0].mxu0 %v2177
        %v2213 = vpop.f32.mrb[0].mxu0
        %v2214 = vadd.f32 %v2170, %v2213
        %v2215 = vpop.f32.mrb[0].mxu0
        %v2216 = vadd.f32 %v2172, %v2215
        %v2217 = vpop.f32.mrb[0].mxu0
        %v2218 = vpop.f32.mrb[0].mxu0
        %2219 = vdwg.mxu0
        %s2220 = scalar_lea.vmem [#allocation7], 8
        %v2221 = vld [vmem:[%s2220] sm:$0xf]
        %v2222 = vpack.c.bf16 %v2122, %v2120
        %v2223 = vpack.c.bf16 %v2123, %v2121
        %v2225 = vsel %vm2131, %v2221, 0
        %2227 = vmatprep.subr.bf16.mxu0 %v2223
        %2228 = vmatpush1.bf16.msra.mxu0 %v2222
        %2229 = vmatprep.subr.bf16.mxu0 0
        %2230 = vmatpush1.bf16.msra.mxu0 0
        %2231 = vmatprep.subr.bf16.mxu0 0
        %2232 = vmatpush1.bf16.msra.mxu0 0
        %2233 = vmatprep.subr.bf16.mxu0 0
        %2234 = vmatpush1.bf16.msra.mxu0 0
        %2235 = vmatprep.subr.bf16.mxu0 0
        %2236 = vmatpush1.bf16.msra.mxu0 0
        %2237 = vmatprep.subr.bf16.mxu0 0
        %2238 = vmatpush1.bf16.msra.mxu0 0
        %2239 = vmatprep.subr.bf16.mxu0 0
        %2240 = vmatpush1.bf16.msra.mxu0 0
        %2241 = vmatprep.subr.bf16.mxu0 0
        %2242 = vmatpush1.bf16.msra.mxu0 0
        %2243 = vmatprep.subr.bf16.mxu0 0
        %2244 = vmatpush1.bf16.msra.mxu0 0
        %2245 = vmatprep.subr.bf16.mxu0 0
        %2246 = vmatpush1.bf16.msra.mxu0 0
        %2247 = vmatprep.subr.bf16.mxu0 0
        %2248 = vmatpush1.bf16.msra.mxu0 0
        %2249 = vmatprep.subr.bf16.mxu0 0
        %2250 = vmatpush1.bf16.msra.mxu0 0
        %2251 = vmatprep.subr.bf16.mxu0 0
        %2252 = vmatpush1.bf16.msra.mxu0 0
        %2253 = vmatprep.subr.bf16.mxu0 0
        %2254 = vmatpush1.bf16.msra.mxu0 0
        %2255 = vmatprep.subr.bf16.mxu0 0
        %2256 = vmatpush1.bf16.msra.mxu0 0
        %2257 = vmatprep.subr.bf16.mxu0 0
        %2258 = vmatpush1.bf16.msra.mxu0 0
        %2259 = vmatprep.mubr.bf16.mxu0 0
        %2260 = vmatmul.mubr.bf16.gmra.mrb[0].mxu0 %v2225
        %v2261 = vpop.f32.mrb[0].mxu0
        %v2262 = vadd.f32 0.0, %v2261
        %v2263 = vpop.f32.mrb[0].mxu0
        %v2264 = vadd.f32 0.0, %v2263
        %v2265 = vpop.f32.mrb[0].mxu0
        %v2266 = vpop.f32.mrb[0].mxu0
        %2267 = vdwg.mxu0
        %v2268 = vadd.f32 %v2214, %v2262
        %v2269 = vadd.f32 %v2216, %v2264
        %v2270 = vld [vmem:[%s11] sm:$0xff]
        %2272 = vset.pattern.permute.xlu0 0
        %2273 = vperm.xlu0 %2272, %v2270
        %v2274 = vpop.permute.xlu0 %2273
        %v2276 = vmul.f32 %v2268, %v2274
        %v2277 = vmul.f32 %v2269, %v2274
        %v2278 = vld [vmem:[%s12] sm:$0xff]
        %2280 = vset.pattern.permute.xlu0 0
        %2281 = vperm.xlu0 %2280, %v2278
        %v2282 = vpop.permute.xlu0 %2281
        %v2284 = vadd.f32 %v2276, %v2282
        %v2285 = vadd.f32 %v2277, %v2282
        %v2286 = vmax.f32 %v2284, 0.0
        %v2287 = vmax.f32 %v2285, 0.0
        %2288 = vrot.lane.b32.xlu0 %v2286, 32
        %v2289 = vpop.permute.xlu0 %2288
        %v2290 = vsel %vm642, %v2289, %v2287
        %2291 = vrot.lane.b32.xlu0 %v2290, 32
        %v2292 = vpop.permute.xlu0 %2291
        %v2293 = vsel %vm642, %v2292, %v2289
        %2296 = vrot.lane.b32.xlu0 %v2290, 97
        %v2297 = vpop.permute.xlu0 %2296
        %2298 = vrot.lane.b32.xlu0 %v2293, 97
        %v2299 = vpop.permute.xlu0 %2298
        %v2300 = vsel %vm659, %v2297, %v2299
        %v2303 = vsel %vm651, %v2286, %v2300
        %v2304 = vsel %vm652, %v2287, %v2299
        %2306 = vrot.lane.b32.xlu0 %v2286, 127
        %v2307 = vpop.permute.xlu0 %2306
        %2308 = vrot.lane.b32.xlu0 %v2290, 127
        %v2309 = vpop.permute.xlu0 %2308
        %v2310 = vsel %vm673, %v2307, %v2309
        %v2313 = vsel %vm667, %v2286, %v2310
        %v2314 = vsel %vm668, %v2287, %v2309
        %v2315 = vpack.c.bf16 %v2286, %v2286
        %v2316 = vpack.c.bf16 %v2287, %v2287
        %v2317 = vld [vmem:[#allocation9] sm:$0x3]
        %v2318 = vpack.c.bf16 %v2303, %v2303
        %v2319 = vpack.c.bf16 %v2304, %v2304
        %s2320 = scalar_lea.vmem [#allocation9], 2
        %v2321 = vld [vmem:[%s2320] sm:$0x3]
        %vm2322 = vcmask 64512
        %v2324 = vsel %vm2322, %v2321, 0
        %vm2326 = vcmask 1043456
        %v2328 = vsel %vm2326, %v2315, 0
        %v2331 = vsel %vm2326, %v2316, 0
        %2333 = vmatprep.subr.bf16.mxu0 %v2331
        %2334 = vmatpush1.bf16.msra.mxu0 %v2328
        %2335 = vmatprep.subr.bf16.mxu0 0
        %2336 = vmatpush1.bf16.msra.mxu0 0
        %2337 = vmatprep.subr.bf16.mxu0 0
        %2338 = vmatpush1.bf16.msra.mxu0 0
        %2339 = vmatprep.subr.bf16.mxu0 0
        %2340 = vmatpush1.bf16.msra.mxu0 0
        %2341 = vmatprep.subr.bf16.mxu0 0
        %2342 = vmatpush1.bf16.msra.mxu0 0
        %2343 = vmatprep.subr.bf16.mxu0 0
        %2344 = vmatpush1.bf16.msra.mxu0 0
        %2345 = vmatprep.subr.bf16.mxu0 0
        %2346 = vmatpush1.bf16.msra.mxu0 0
        %2347 = vmatprep.subr.bf16.mxu0 0
        %2348 = vmatpush1.bf16.msra.mxu0 0
        %2349 = vmatprep.subr.bf16.mxu0 0
        %2350 = vmatpush1.bf16.msra.mxu0 0
        %2351 = vmatprep.subr.bf16.mxu0 0
        %2352 = vmatpush1.bf16.msra.mxu0 0
        %2353 = vmatprep.subr.bf16.mxu0 0
        %2354 = vmatpush1.bf16.msra.mxu0 0
        %2355 = vmatprep.subr.bf16.mxu0 0
        %2356 = vmatpush1.bf16.msra.mxu0 0
        %2357 = vmatprep.subr.bf16.mxu0 0
        %2358 = vmatpush1.bf16.msra.mxu0 0
        %2359 = vmatprep.subr.bf16.mxu0 0
        %2360 = vmatpush1.bf16.msra.mxu0 0
        %2361 = vmatprep.subr.bf16.mxu0 0
        %2362 = vmatpush1.bf16.msra.mxu0 0
        %2363 = vmatprep.subr.bf16.mxu0 0
        %2364 = vmatpush1.bf16.msra.mxu0 0
        %2365 = vmatprep.mubr.bf16.mxu0 0
        %2366 = vmatmul.mubr.bf16.gmra.mrb[0].mxu0 %v2324
        %v2367 = vpop.f32.mrb[0].mxu0
        %v2368 = vadd.f32 0.0, %v2367
        %v2369 = vpop.f32.mrb[0].mxu0
        %v2370 = vadd.f32 0.0, %v2369
        %v2371 = vpop.f32.mrb[0].mxu0
        %v2372 = vpop.f32.mrb[0].mxu0
        %2373 = vdwg.mxu0
        %v2375 = vsel %vm2322, %v2317, 0
        %v2378 = vsel %vm2326, %v2318, 0
        %v2381 = vsel %vm2326, %v2319, 0
        %2383 = vmatprep.subr.bf16.mxu0 %v2381
        %2384 = vmatpush1.bf16.msra.mxu0 %v2378
        %2385 = vmatprep.subr.bf16.mxu0 0
        %2386 = vmatpush1.bf16.msra.mxu0 0
        %2387 = vmatprep.subr.bf16.mxu0 0
        %2388 = vmatpush1.bf16.msra.mxu0 0
        %2389 = vmatprep.subr.bf16.mxu0 0
        %2390 = vmatpush1.bf16.msra.mxu0 0
        %2391 = vmatprep.subr.bf16.mxu0 0
        %2392 = vmatpush1.bf16.msra.mxu0 0
        %2393 = vmatprep.subr.bf16.mxu0 0
        %2394 = vmatpush1.bf16.msra.mxu0 0
        %2395 = vmatprep.subr.bf16.mxu0 0
        %2396 = vmatpush1.bf16.msra.mxu0 0
        %2397 = vmatprep.subr.bf16.mxu0 0
        %2398 = vmatpush1.bf16.msra.mxu0 0
        %2399 = vmatprep.subr.bf16.mxu0 0
        %2400 = vmatpush1.bf16.msra.mxu0 0
        %2401 = vmatprep.subr.bf16.mxu0 0
        %2402 = vmatpush1.bf16.msra.mxu0 0
        %2403 = vmatprep.subr.bf16.mxu0 0
        %2404 = vmatpush1.bf16.msra.mxu0 0
        %2405 = vmatprep.subr.bf16.mxu0 0
        %2406 = vmatpush1.bf16.msra.mxu0 0
        %2407 = vmatprep.subr.bf16.mxu0 0
        %2408 = vmatpush1.bf16.msra.mxu0 0
        %2409 = vmatprep.subr.bf16.mxu0 0
        %2410 = vmatpush1.bf16.msra.mxu0 0
        %2411 = vmatprep.subr.bf16.mxu0 0
        %2412 = vmatpush1.bf16.msra.mxu0 0
        %2413 = vmatprep.subr.bf16.mxu0 0
        %2414 = vmatpush1.bf16.msra.mxu0 0
        %2415 = vmatprep.mubr.bf16.mxu0 0
        %2416 = vmatmul.mubr.bf16.gmra.mrb[0].mxu0 %v2375
        %v2417 = vpop.f32.mrb[0].mxu0
        %v2418 = vadd.f32 %v2368, %v2417
        %v2419 = vpop.f32.mrb[0].mxu0
        %v2420 = vadd.f32 %v2370, %v2419
        %v2421 = vpop.f32.mrb[0].mxu0
        %v2422 = vpop.f32.mrb[0].mxu0
        %2423 = vdwg.mxu0
        %s2424 = scalar_lea.vmem [#allocation9], 4
        %v2425 = vld [vmem:[%s2424] sm:$0x3]
        %v2426 = vpack.c.bf16 %v2313, %v2313
        %v2427 = vpack.c.bf16 %v2314, %v2314
        %v2429 = vsel %vm2322, %v2425, 0
        %v2432 = vsel %vm2326, %v2426, 0
        %v2435 = vsel %vm2326, %v2427, 0
        %2437 = vmatprep.subr.bf16.mxu0 %v2435
        %2438 = vmatpush1.bf16.msra.mxu0 %v2432
        %2439 = vmatprep.subr.bf16.mxu0 0
        %2440 = vmatpush1.bf16.msra.mxu0 0
        %2441 = vmatprep.subr.bf16.mxu0 0
        %2442 = vmatpush1.bf16.msra.mxu0 0
        %2443 = vmatprep.subr.bf16.mxu0 0
        %2444 = vmatpush1.bf16.msra.mxu0 0
        %2445 = vmatprep.subr.bf16.mxu0 0
        %2446 = vmatpush1.bf16.msra.mxu0 0
        %2447 = vmatprep.subr.bf16.mxu0 0
        %2448 = vmatpush1.bf16.msra.mxu0 0
        %2449 = vmatprep.subr.bf16.mxu0 0
        %2450 = vmatpush1.bf16.msra.mxu0 0
        %2451 = vmatprep.subr.bf16.mxu0 0
        %2452 = vmatpush1.bf16.msra.mxu0 0
        %2453 = vmatprep.subr.bf16.mxu0 0
        %2454 = vmatpush1.bf16.msra.mxu0 0
        %2455 = vmatprep.subr.bf16.mxu0 0
        %2456 = vmatpush1.bf16.msra.mxu0 0
        %2457 = vmatprep.subr.bf16.mxu0 0
        %2458 = vmatpush1.bf16.msra.mxu0 0
        %2459 = vmatprep.subr.bf16.mxu0 0
        %2460 = vmatpush1.bf16.msra.mxu0 0
        %2461 = vmatprep.subr.bf16.mxu0 0
        %2462 = vmatpush1.bf16.msra.mxu0 0
        %2463 = vmatprep.subr.bf16.mxu0 0
        %2464 = vmatpush1.bf16.msra.mxu0 0
        %2465 = vmatprep.subr.bf16.mxu0 0
        %2466 = vmatpush1.bf16.msra.mxu0 0
        %2467 = vmatprep.subr.bf16.mxu0 0
        %2468 = vmatpush1.bf16.msra.mxu0 0
        %2469 = vmatprep.mubr.bf16.mxu0 0
        %2470 = vmatmul.mubr.bf16.gmra.mrb[0].mxu0 %v2429
        %v2471 = vpop.f32.mrb[0].mxu0
        %v2472 = vadd.f32 0.0, %v2471
        %v2473 = vpop.f32.mrb[0].mxu0
        %v2474 = vadd.f32 0.0, %v2473
        %v2475 = vpop.f32.mrb[0].mxu0
        %v2476 = vpop.f32.mrb[0].mxu0
        %2477 = vdwg.mxu0
        %v2478 = vadd.f32 %v2418, %v2472
        %v2479 = vadd.f32 %v2420, %v2474
        %v2480 = vld [vmem:[%s14] sm:$0xf]
        %2482 = vset.pattern.permute.xlu0 0
        %2483 = vperm.xlu0 %2482, %v2480
        %v2484 = vpop.permute.xlu0 %2483
        %v2486 = vmul.f32 %v2478, %v2484
        %v2487 = vmul.f32 %v2479, %v2484
        %v2488 = vld [vmem:[%s15] sm:$0xf]
        %2490 = vset.pattern.permute.xlu0 0
        %2491 = vperm.xlu0 %2490, %v2488
        %v2492 = vpop.permute.xlu0 %2491
        %v2494 = vadd.f32 %v2486, %v2492
        %v2495 = vadd.f32 %v2487, %v2492
        %v2496 = vmax.f32 %v2494, 0.0
        %v2497 = vmax.f32 %v2495, 0.0
        %v2500 = vcombine.low %v2496, %v2497
        %vm2502 = vcmask 261124
        %vm2503 = vmor %vm2502, %vm2326
        %2504 = vst.msk [vmem:[%s597] sm:$0xff] %vm2503, %v2500
        %p2505 = scmp.lt.s32.totalorder %s32, 1
        %s2506 = scalar_select %p2505, %s32, 1
        %s2507 = smul.addr %s2506, 2
        %s2508 = smul.addr %s2507, 4
        %s2509 = scalar_lea.vmem %s16, %s2508
        // Predicated region
        $region105: #{n_vcnn_lstm_forward.3} parent=83 // pred_check
          %p2510 = pneg %p391
        $region106: #{n_vcnn_lstm_forward.3} parent=83 // pred_check_branch
          %2512 = sbr.rel (%p2510) target = $region108
        $region107: #{n_vcnn_lstm_forward.3} parent=83 // pred_region
          _
        $region108: #{n_vcnn_lstm_forward.3} parent=83 // pred_fallthru
          _
      $region84: #{n_vcnn_lstm_forward.3} parent=5 // pred_fallthru
        _
      %p2513 = scmp.le.s32.totalorder 2, %s27
      // Predicated region
      $region109: #{n_vcnn_lstm_forward.3} parent=5 // pred_check
        %p2514 = pneg %p2513
      $region110: #{n_vcnn_lstm_forward.3} parent=5 // pred_check_branch
        %2516 = sbr.rel (%p2514) target = $region112
      $region111: #{n_vcnn_lstm_forward.3} parent=5 // pred_region
        %s2517 = ssub.s32 %s27, 2
        // Predicated region
        $region113: #{n_vcnn_lstm_forward.3} parent=111 // pred_check
          %p2518 = pneg %p397
        $region114: #{n_vcnn_lstm_forward.3} parent=111 // pred_check_branch
          %2520 = sbr.rel (%p2518) target = $region116
        $region115: #{n_vcnn_lstm_forward.3} parent=111 // pred_region
          %p2521 = scmp.lt.s32.totalorder %s33, 1
          %s2522 = scalar_select %p2521, %s33, 1
          %s2523 = smul.addr %s2522, 2
          %s2524 = smul.addr %s2523, 4
          %s2525 = scalar_lea.vmem %s16, %s2524
        $region116: #{n_vcnn_lstm_forward.3} parent=111 // pred_fallthru
          _
      $region112: #{n_vcnn_lstm_forward.3} parent=5 // pred_fallthru
        _
    $region6: #{n_vcnn_lstm_forward.3} parent=1 // loop_footer
      %s31 = sadd.s32 1, %s27
    $region7: #{n_vcnn_lstm_forward.3} parent=1 // loop_footer_branch
      %26 = sbr.rel target = $region3
    $region8: #{n_vcnn_lstm_forward.3} parent=1 // loop_exit
      _
    %2526 = vsyncpa [#allocation3], 1
    %s2527 = scalar_lea.sflag [#allocation3], 1
    %2528 = vsyncpa %s2527, 1
    %2529 = vsyncpa [#allocation5], 1
    %2530 = vsyncpa [#allocation8], 1

// kernel: n_vcnn_lstm_forward.4
$region0: #{n_vcnn_lstm_forward.4}
  #allocation0 [shape = 'u32[]', space=smem, size = 0x4, offset = 0x4, fixed_abs, tag = 'smem constant byte address 0x4 - core index']
  #allocation1 [shape = 'u32[144,128]{1,0:T(1,128)}', space=vmem, size = 0x12000, scoped, tag = 'internal scratch']
  #allocation2 [shape = 'f32[320,32]{1,0:T(8,128)}', space=vmem, size = 0x28000, scoped, tag = 'scratch operand']
  #allocation3 [shape = 'f32[320,8]{1,0:T(8,128)}', space=vmem, size = 0x28000, scoped, tag = 'scratch operand']
  %s0 = inlined_call_operand.vmem [shape: f32[320,4], index: 0, kind: input, shape index: {}]
  %s1 = inlined_call_operand.hbm [shape: bf16[4,32], index: 1, kind: input, shape index: {}]
  %s2 = inlined_call_operand.hbm [shape: bf16[8,32], index: 2, kind: input, shape index: {}]
  %s3 = inlined_call_operand.hbm [shape: f32[1,32], index: 3, kind: input, shape index: {}]
  %s4 = inlined_call_operand.hbm [shape: bf16[8,32], index: 4, kind: input, shape index: {}]
  %s5 = inlined_call_operand.hbm [shape: bf16[8,32], index: 5, kind: input, shape index: {}]
  %s6 = inlined_call_operand.hbm [shape: f32[1,32], index: 6, kind: input, shape index: {}]
  %s7 = inlined_call_operand.vmem [shape: f32[2,2,8], index: 7, kind: input, shape index: {}, may-alias: {7,8}]
  %s8 = inlined_call_operand.vmem [shape: f32[2,2,8], index: 8, kind: input, shape index: {}, may-alias: {7,8}]
  %s9 = inlined_call_operand.vmem [shape: f32[320,8], index: 9, kind: output, shape index: {0}]
  %s10 = inlined_call_operand.hbm [shape: f32[2,2,8], index: 10, kind: output, shape index: {1}]
  %s11 = inlined_call_operand.hbm [shape: f32[2,2,8], index: 11, kind: output, shape index: {2}]
  %12 = xla_tuple %s9, %s10, %s11
  %s13 = sld [smem:[#allocation0]]
  $region100: #{n_vcnn_lstm_forward.4} parent=0
    _
  %s15 = ssub.s32 1, %s13
  %s16 = scalar_select 0, %s15, %s13
  $region1: #{n_vcnn_lstm_forward.4} parent=0
    #allocation4 [shape = 'u8[1024]{0}', space=vmem, size = 0x400, scoped, tag = 'input window, operand 1, single buffered']
    #allocation5 [shape = 's32[1]{0}', space=sflag, size = 0x4, scoped, tag = 'scoped memory for n_vcnn_lstm_forward.4']
    #allocation6 [shape = 's32[1]{0}', space=sflag, size = 0x4, scoped, tag = 'scoped memory for n_vcnn_lstm_forward.4']
    #allocation7 [shape = 'u8[2048]{0}', space=vmem, size = 0x800, scoped, tag = 'input window, operand 2, single buffered']
    #allocation8 [shape = 's32[1]{0}', space=sflag, size = 0x4, scoped, tag = 'scoped memory for n_vcnn_lstm_forward.4']
    #allocation9 [shape = 'u8[512]{0}', space=vmem, size = 0x400, scoped, tag = 'input window, operand 3, single buffered']
    #allocation10 [shape = 'u8[2048]{0}', space=vmem, size = 0x800, scoped, tag = 'input window, operand 4, single buffered']
    #allocation11 [shape = 's32[1]{0}', space=sflag, size = 0x4, scoped, tag = 'scoped memory for n_vcnn_lstm_forward.4']
    #allocation12 [shape = 'u8[2048]{0}', space=vmem, size = 0x800, scoped, tag = 'input window, operand 5, single buffered']
    #allocation13 [shape = 'u8[512]{0}', space=vmem, size = 0x400, scoped, tag = 'input window, operand 6, single buffered']
    #allocation14 [shape = 's32[1]{0}', space=sflag, size = 0x4, scoped, tag = 'scoped memory for n_vcnn_lstm_forward.4']
    #allocation15 [shape = 'u8[2048]{0}', space=vmem, size = 0x800, scoped, tag = 'output window, operand 1, single buffered']
    #allocation16 [shape = 'u8[2048]{0}', space=vmem, size = 0x800, scoped, tag = 'output window, operand 2, single buffered']
    #allocation17 [shape = 's32[1]{0}', space=sflag, size = 0x4, scoped, tag = 'scoped memory for n_vcnn_lstm_forward.4']
    %17 = vsyncpa [#allocation5], 0
    %18 = vsyncpa [#allocation8], 0
    %19 = vsyncpa [#allocation11], 0
    %20 = vsyncpa [#allocation14], 0
    %21 = vsyncpa [#allocation6], 0
    %22 = vsyncpa [#allocation17], 0
    // Predicated region
    $region2: #{n_vcnn_lstm_forward.4} parent=1 // pred_check
      _
    $region3: #{n_vcnn_lstm_forward.4} parent=1 // pred_check_branch
      %24 = sbr.rel (0) target = $region5
    $region4: #{n_vcnn_lstm_forward.4} parent=1 // pred_region
      _
    $region5: #{n_vcnn_lstm_forward.4} parent=1 // pred_fallthru
      _
    // Predicated region
    $region6: #{n_vcnn_lstm_forward.4} parent=1 // pred_check
      _
    $region7: #{n_vcnn_lstm_forward.4} parent=1 // pred_check_branch
      %26 = sbr.rel (0) target = $region9
    $region8: #{n_vcnn_lstm_forward.4} parent=1 // pred_region
      %s28 = ssub.s32 32, 32
      %29 = vsyncadd [#allocation5], %s28
      %s31 = sshll.u32 [#allocation4], 4
      %s32 = int_to_ptr.vmem [resolvable:$true] %s31
      %34 = dma.hbm_to_vmem [thread:$0]  %s1, 32, %s32, [#allocation5]
    $region9: #{n_vcnn_lstm_forward.4} parent=1 // pred_fallthru
      _
    // Predicated region
    $region10: #{n_vcnn_lstm_forward.4} parent=1 // pred_check
      _
    $region11: #{n_vcnn_lstm_forward.4} parent=1 // pred_check_branch
      %36 = sbr.rel (0) target = $region13
    $region12: #{n_vcnn_lstm_forward.4} parent=1 // pred_region
      %s38 = ssub.s32 64, 64
      %39 = vsyncadd [#allocation8], %s38
      %s41 = sshll.u32 [#allocation7], 4
      %s42 = int_to_ptr.vmem [resolvable:$true] %s41
      %44 = dma.hbm_to_vmem [thread:$0]  %s2, 64, %s42, [#allocation8]
    $region13: #{n_vcnn_lstm_forward.4} parent=1 // pred_fallthru
      _
    // Predicated region
    $region14: #{n_vcnn_lstm_forward.4} parent=1 // pred_check
      _
    $region15: #{n_vcnn_lstm_forward.4} parent=1 // pred_check_branch
      %46 = sbr.rel (0) target = $region17
    $region16: #{n_vcnn_lstm_forward.4} parent=1 // pred_region
      %s48 = ssub.s32 16, 16
      %49 = vsyncadd [#allocation8], %s48
      %s51 = sshll.u32 [#allocation9], 4
      %s52 = int_to_ptr.vmem [resolvable:$true] %s51
      %54 = dma.hbm_to_vmem [thread:$0]  %s3, 16, %s52, [#allocation8]
    $region17: #{n_vcnn_lstm_forward.4} parent=1 // pred_fallthru
      _
    // Predicated region
    $region18: #{n_vcnn_lstm_forward.4} parent=1 // pred_check
      _
    $region19: #{n_vcnn_lstm_forward.4} parent=1 // pred_check_branch
      %56 = sbr.rel (0) target = $region21
    $region20: #{n_vcnn_lstm_forward.4} parent=1 // pred_region
      %s58 = ssub.s32 64, 64
      %59 = vsyncadd [#allocation11], %s58
      %s61 = sshll.u32 [#allocation10], 4
      %s62 = int_to_ptr.vmem [resolvable:$true] %s61
      %64 = dma.hbm_to_vmem [thread:$0]  %s4, 64, %s62, [#allocation11]
    $region21: #{n_vcnn_lstm_forward.4} parent=1 // pred_fallthru
      _
    // Predicated region
    $region22: #{n_vcnn_lstm_forward.4} parent=1 // pred_check
      _
    $region23: #{n_vcnn_lstm_forward.4} parent=1 // pred_check_branch
      %66 = sbr.rel (0) target = $region25
    $region24: #{n_vcnn_lstm_forward.4} parent=1 // pred_region
      %s68 = ssub.s32 64, 64
      %69 = vsyncadd [#allocation11], %s68
      %s71 = sshll.u32 [#allocation12], 4
      %s72 = int_to_ptr.vmem [resolvable:$true] %s71
      %74 = dma.hbm_to_vmem [thread:$0]  %s5, 64, %s72, [#allocation11]
    $region25: #{n_vcnn_lstm_forward.4} parent=1 // pred_fallthru
      _
    // Predicated region
    $region26: #{n_vcnn_lstm_forward.4} parent=1 // pred_check
      _
    $region27: #{n_vcnn_lstm_forward.4} parent=1 // pred_check_branch
      %76 = sbr.rel (0) target = $region29
    $region28: #{n_vcnn_lstm_forward.4} parent=1 // pred_region
      %s78 = ssub.s32 16, 16
      %79 = vsyncadd [#allocation14], %s78
      %s81 = sshll.u32 [#allocation13], 4
      %s82 = int_to_ptr.vmem [resolvable:$true] %s81
      %84 = dma.hbm_to_vmem [thread:$0]  %s6, 16, %s82, [#allocation14]
    $region29: #{n_vcnn_lstm_forward.4} parent=1 // pred_fallthru
      _
    // Predicated region
    $region30: #{n_vcnn_lstm_forward.4} parent=1 // pred_check
      _
    $region31: #{n_vcnn_lstm_forward.4} parent=1 // pred_check_branch
      %86 = sbr.rel (0) target = $region33
    $region32: #{n_vcnn_lstm_forward.4} parent=1 // pred_region
      _
    $region33: #{n_vcnn_lstm_forward.4} parent=1 // pred_fallthru
      _
    // Predicated region
    $region34: #{n_vcnn_lstm_forward.4} parent=1 // pred_check
      _
    $region35: #{n_vcnn_lstm_forward.4} parent=1 // pred_check_branch
      %88 = sbr.rel (0) target = $region37
    $region36: #{n_vcnn_lstm_forward.4} parent=1 // pred_region
      _
    $region37: #{n_vcnn_lstm_forward.4} parent=1 // pred_fallthru
      _
    // Predicated region
    $region38: #{n_vcnn_lstm_forward.4} parent=1 // pred_check
      _
    $region39: #{n_vcnn_lstm_forward.4} parent=1 // pred_check_branch
      %90 = sbr.rel (0) target = $region41
    $region40: #{n_vcnn_lstm_forward.4} parent=1 // pred_region
      %91 = dma.done [#allocation5], 32
    $region41: #{n_vcnn_lstm_forward.4} parent=1 // pred_fallthru
      _
    // Predicated region
    $region42: #{n_vcnn_lstm_forward.4} parent=1 // pred_check
      _
    $region43: #{n_vcnn_lstm_forward.4} parent=1 // pred_check_branch
      %93 = sbr.rel (0) target = $region45
    $region44: #{n_vcnn_lstm_forward.4} parent=1 // pred_region
      %94 = dma.done [#allocation8], 64
    $region45: #{n_vcnn_lstm_forward.4} parent=1 // pred_fallthru
      _
    // Predicated region
    $region46: #{n_vcnn_lstm_forward.4} parent=1 // pred_check
      _
    $region47: #{n_vcnn_lstm_forward.4} parent=1 // pred_check_branch
      %96 = sbr.rel (0) target = $region49
    $region48: #{n_vcnn_lstm_forward.4} parent=1 // pred_region
      %97 = dma.done [#allocation8], 16
    $region49: #{n_vcnn_lstm_forward.4} parent=1 // pred_fallthru
      _
    // Predicated region
    $region50: #{n_vcnn_lstm_forward.4} parent=1 // pred_check
      _
    $region51: #{n_vcnn_lstm_forward.4} parent=1 // pred_check_branch
      %99 = sbr.rel (0) target = $region53
    $region52: #{n_vcnn_lstm_forward.4} parent=1 // pred_region
      %100 = dma.done [#allocation11], 64
    $region53: #{n_vcnn_lstm_forward.4} parent=1 // pred_fallthru
      _
    // Predicated region
    $region54: #{n_vcnn_lstm_forward.4} parent=1 // pred_check
      _
    $region55: #{n_vcnn_lstm_forward.4} parent=1 // pred_check_branch
      %102 = sbr.rel (0) target = $region57
    $region56: #{n_vcnn_lstm_forward.4} parent=1 // pred_region
      %103 = dma.done [#allocation11], 64
    $region57: #{n_vcnn_lstm_forward.4} parent=1 // pred_fallthru
      _
    // Predicated region
    $region58: #{n_vcnn_lstm_forward.4} parent=1 // pred_check
      _
    $region59: #{n_vcnn_lstm_forward.4} parent=1 // pred_check_branch
      %105 = sbr.rel (0) target = $region61
    $region60: #{n_vcnn_lstm_forward.4} parent=1 // pred_region
      %106 = dma.done [#allocation14], 16
    $region61: #{n_vcnn_lstm_forward.4} parent=1 // pred_fallthru
      _
    %v108 = vld [vmem:[%s0] sm:$0xff]
    %v109 = vld [vmem:[%s0 + $0x8] sm:$0xff]
    %v110 = vld [vmem:[%s0 + $0x10] sm:$0xff]
    %v111 = vld [vmem:[%s0 + $0x18] sm:$0xff]
    %v112 = vld [vmem:[%s0 + $0x20] sm:$0xff]
    %v113 = vld [vmem:[%s0 + $0x28] sm:$0xff]
    %v114 = vld [vmem:[%s0 + $0x30] sm:$0xff]
    %v115 = vld [vmem:[%s0 + $0x38] sm:$0xff]
    %v116 = vld [vmem:[%s0 + $0x40] sm:$0xff]
    %v117 = vld [vmem:[%s0 + $0x48] sm:$0xff]
    %v118 = vld [vmem:[%s0 + $0x50] sm:$0xff]
    %v119 = vld [vmem:[%s0 + $0x58] sm:$0xff]
    %v120 = vld [vmem:[%s0 + $0x60] sm:$0xff]
    %v121 = vld [vmem:[%s0 + $0x68] sm:$0xff]
    %v122 = vld [vmem:[%s0 + $0x70] sm:$0xff]
    %v123 = vld [vmem:[%s0 + $0x78] sm:$0xff]
    %v124 = vld [vmem:[%s0 + $0x80] sm:$0xff]
    %v125 = vld [vmem:[%s0 + $0x88] sm:$0xff]
    %v126 = vld [vmem:[%s0 + $0x90] sm:$0xff]
    %v127 = vld [vmem:[%s0 + $0x98] sm:$0xff]
    %v128 = vld [vmem:[%s0 + $0xa0] sm:$0xff]
    %v129 = vld [vmem:[%s0 + $0xa8] sm:$0xff]
    %v130 = vld [vmem:[%s0 + $0xb0] sm:$0xff]
    %v131 = vld [vmem:[%s0 + $0xb8] sm:$0xff]
    %v132 = vld [vmem:[%s0 + $0xc0] sm:$0xff]
    %v133 = vld [vmem:[%s0 + $0xc8] sm:$0xff]
    %v134 = vld [vmem:[%s0 + $0xd0] sm:$0xff]
    %v135 = vld [vmem:[%s0 + $0xd8] sm:$0xff]
    %v136 = vld [vmem:[%s0 + $0xe0] sm:$0xff]
    %v137 = vld [vmem:[%s0 + $0xe8] sm:$0xff]
    %v138 = vld [vmem:[%s0 + $0xf0] sm:$0xff]
    %v139 = vld [vmem:[%s0 + $0xf8] sm:$0xff]
    %v140 = vld [vmem:[%s0 + $0x100] sm:$0xff]
    %v141 = vld [vmem:[%s0 + $0x108] sm:$0xff]
    %v142 = vld [vmem:[%s0 + $0x110] sm:$0xff]
    %v143 = vld [vmem:[%s0 + $0x118] sm:$0xff]
    %v144 = vld [vmem:[%s0 + $0x120] sm:$0xff]
    %v145 = vld [vmem:[%s0 + $0x128] sm:$0xff]
    %v146 = vld [vmem:[%s0 + $0x130] sm:$0xff]
    %v147 = vld [vmem:[%s0 + $0x138] sm:$0xff]
    %v148 = vpack.c.bf16 %v109, %v108
    %v149 = vpack.c.bf16 %v111, %v110
    %v150 = vpack.c.bf16 %v113, %v112
    %v151 = vpack.c.bf16 %v115, %v114
    %v152 = vpack.c.bf16 %v117, %v116
    %v153 = vpack.c.bf16 %v119, %v118
    %v154 = vpack.c.bf16 %v121, %v120
    %v155 = vpack.c.bf16 %v123, %v122
    %v156 = vpack.c.bf16 %v125, %v124
    %v157 = vpack.c.bf16 %v127, %v126
    %v158 = vpack.c.bf16 %v129, %v128
    %v159 = vpack.c.bf16 %v131, %v130
    %v160 = vpack.c.bf16 %v133, %v132
    %v161 = vpack.c.bf16 %v135, %v134
    %v162 = vpack.c.bf16 %v137, %v136
    %v163 = vpack.c.bf16 %v139, %v138
    %v164 = vpack.c.bf16 %v141, %v140
    %v165 = vpack.c.bf16 %v143, %v142
    %v166 = vpack.c.bf16 %v145, %v144
    %v167 = vpack.c.bf16 %v147, %v146
    %v168 = vld [vmem:[#allocation4] sm:$0x3]
    %v169 = vld [vmem:[#allocation9] sm:$0x1]
    %v171 = vlaneseq
    %v172 = vshrl.u32 %v171, 7
    %v173 = vsub.s32 0, %v172
    %v174 = vrot.slane %v169, %v173
    %vm176 = vcmask 31744
    %v178 = vsel %vm176, %v148, 0
    %v181 = vsel %vm176, %v149, 0
    %v184 = vsel %vm176, %v150, 0
    %v187 = vsel %vm176, %v151, 0
    %v190 = vsel %vm176, %v152, 0
    %v193 = vsel %vm176, %v153, 0
    %v196 = vsel %vm176, %v154, 0
    %v199 = vsel %vm176, %v155, 0
    %v202 = vsel %vm176, %v156, 0
    %v205 = vsel %vm176, %v157, 0
    %v208 = vsel %vm176, %v158, 0
    %v211 = vsel %vm176, %v159, 0
    %v214 = vsel %vm176, %v160, 0
    %v217 = vsel %vm176, %v161, 0
    %v220 = vsel %vm176, %v162, 0
    %v223 = vsel %vm176, %v163, 0
    %v226 = vsel %vm176, %v164, 0
    %v229 = vsel %vm176, %v165, 0
    %v232 = vsel %vm176, %v166, 0
    %v235 = vsel %vm176, %v167, 0
    %vm237 = vcmask 1041408
    %v239 = vsel %vm237, %v168, 0
    %241 = vmatprep.subr.bf16.mxu0 0
    %242 = vmatpush1.bf16.msra.mxu0 %v239
    %243 = vmatprep.subr.bf16.mxu0 0
    %244 = vmatpush1.bf16.msra.mxu0 0
    %245 = vmatprep.subr.bf16.mxu0 0
    %246 = vmatpush1.bf16.msra.mxu0 0
    %247 = vmatprep.subr.bf16.mxu0 0
    %248 = vmatpush1.bf16.msra.mxu0 0
    %249 = vmatprep.subr.bf16.mxu0 0
    %250 = vmatpush1.bf16.msra.mxu0 0
    %251 = vmatprep.subr.bf16.mxu0 0
    %252 = vmatpush1.bf16.msra.mxu0 0
    %253 = vmatprep.subr.bf16.mxu0 0
    %254 = vmatpush1.bf16.msra.mxu0 0
    %255 = vmatprep.subr.bf16.mxu0 0
    %256 = vmatpush1.bf16.msra.mxu0 0
    %257 = vmatprep.subr.bf16.mxu0 0
    %258 = vmatpush1.bf16.msra.mxu0 0
    %259 = vmatprep.subr.bf16.mxu0 0
    %260 = vmatpush1.bf16.msra.mxu0 0
    %261 = vmatprep.subr.bf16.mxu0 0
    %262 = vmatpush1.bf16.msra.mxu0 0
    %263 = vmatprep.subr.bf16.mxu0 0
    %264 = vmatpush1.bf16.msra.mxu0 0
    %265 = vmatprep.subr.bf16.mxu0 0
    %266 = vmatpush1.bf16.msra.mxu0 0
    %267 = vmatprep.subr.bf16.mxu0 0
    %268 = vmatpush1.bf16.msra.mxu0 0
    %269 = vmatprep.subr.bf16.mxu0 0
    %270 = vmatpush1.bf16.msra.mxu0 0
    %271 = vmatprep.subr.bf16.mxu0 0
    %272 = vmatpush1.bf16.msra.mxu0 0
    %273 = vmatprep.mubr.bf16.mxu0 0
    %274 = vmatmul.mubr.bf16.gmra.mrb[0].mxu0 %v178
    %v275 = vpop.f32.mrb[0].mxu0
    %v276 = vadd.f32 %v174, %v275
    %v277 = vpop.f32.mrb[0].mxu0
    %v278 = vpop.f32.mrb[0].mxu0
    %v279 = vadd.f32 %v174, %v278
    %v280 = vpop.f32.mrb[0].mxu0
    %281 = vmatprep.mubr.bf16.mxu0 0
    %282 = vmatmul.mubr.bf16.gmra.mrb[0].mxu0 %v181
    %v283 = vpop.f32.mrb[0].mxu0
    %v284 = vadd.f32 %v174, %v283
    %v285 = vpop.f32.mrb[0].mxu0
    %v286 = vpop.f32.mrb[0].mxu0
    %v287 = vadd.f32 %v174, %v286
    %v288 = vpop.f32.mrb[0].mxu0
    %289 = vmatprep.mubr.bf16.mxu0 0
    %290 = vmatmul.mubr.bf16.gmra.mrb[0].mxu0 %v184
    %v291 = vpop.f32.mrb[0].mxu0
    %v292 = vadd.f32 %v174, %v291
    %v293 = vpop.f32.mrb[0].mxu0
    %v294 = vpop.f32.mrb[0].mxu0
    %v295 = vadd.f32 %v174, %v294
    %v296 = vpop.f32.mrb[0].mxu0
    %297 = vmatprep.mubr.bf16.mxu0 0
    %298 = vmatmul.mubr.bf16.gmra.mrb[0].mxu0 %v187
    %v299 = vpop.f32.mrb[0].mxu0
    %v300 = vadd.f32 %v174, %v299
    %v301 = vpop.f32.mrb[0].mxu0
    %v302 = vpop.f32.mrb[0].mxu0
    %v303 = vadd.f32 %v174, %v302
    %v304 = vpop.f32.mrb[0].mxu0
    %305 = vmatprep.mubr.bf16.mxu0 0
    %306 = vmatmul.mubr.bf16.gmra.mrb[0].mxu0 %v190
    %v307 = vpop.f32.mrb[0].mxu0
    %v308 = vadd.f32 %v174, %v307
    %v309 = vpop.f32.mrb[0].mxu0
    %v310 = vpop.f32.mrb[0].mxu0
    %v311 = vadd.f32 %v174, %v310
    %v312 = vpop.f32.mrb[0].mxu0
    %313 = vmatprep.mubr.bf16.mxu0 0
    %314 = vmatmul.mubr.bf16.gmra.mrb[0].mxu0 %v193
    %v315 = vpop.f32.mrb[0].mxu0
    %v316 = vadd.f32 %v174, %v315
    %v317 = vpop.f32.mrb[0].mxu0
    %v318 = vpop.f32.mrb[0].mxu0
    %v319 = vadd.f32 %v174, %v318
    %v320 = vpop.f32.mrb[0].mxu0
    %321 = vmatprep.mubr.bf16.mxu0 0
    %322 = vmatmul.mubr.bf16.gmra.mrb[0].mxu0 %v196
    %v323 = vpop.f32.mrb[0].mxu0
    %v324 = vadd.f32 %v174, %v323
    %v325 = vpop.f32.mrb[0].mxu0
    %v326 = vpop.f32.mrb[0].mxu0
    %v327 = vadd.f32 %v174, %v326
    %v328 = vpop.f32.mrb[0].mxu0
    %329 = vmatprep.mubr.bf16.mxu0 0
    %330 = vmatmul.mubr.bf16.gmra.mrb[0].mxu0 %v199
    %v331 = vpop.f32.mrb[0].mxu0
    %v332 = vadd.f32 %v174, %v331
    %v333 = vpop.f32.mrb[0].mxu0
    %v334 = vpop.f32.mrb[0].mxu0
    %v335 = vadd.f32 %v174, %v334
    %v336 = vpop.f32.mrb[0].mxu0
    %337 = vmatprep.mubr.bf16.mxu0 0
    %338 = vmatmul.mubr.bf16.gmra.mrb[0].mxu0 %v202
    %v339 = vpop.f32.mrb[0].mxu0
    %v340 = vadd.f32 %v174, %v339
    %v341 = vpop.f32.mrb[0].mxu0
    %v342 = vpop.f32.mrb[0].mxu0
    %v343 = vadd.f32 %v174, %v342
    %v344 = vpop.f32.mrb[0].mxu0
    %345 = vmatprep.mubr.bf16.mxu0 0
    %346 = vmatmul.mubr.bf16.gmra.mrb[0].mxu0 %v205
    %v347 = vpop.f32.mrb[0].mxu0
    %v348 = vadd.f32 %v174, %v347
    %v349 = vpop.f32.mrb[0].mxu0
    %v350 = vpop.f32.mrb[0].mxu0
    %v351 = vadd.f32 %v174, %v350
    %v352 = vpop.f32.mrb[0].mxu0
    %353 = vmatprep.mubr.bf16.mxu0 0
    %354 = vmatmul.mubr.bf16.gmra.mrb[0].mxu0 %v208
    %v355 = vpop.f32.mrb[0].mxu0
    %v356 = vadd.f32 %v174, %v355
    %v357 = vpop.f32.mrb[0].mxu0
    %v358 = vpop.f32.mrb[0].mxu0
    %v359 = vadd.f32 %v174, %v358
    %v360 = vpop.f32.mrb[0].mxu0
    %361 = vmatprep.mubr.bf16.mxu0 0
    %362 = vmatmul.mubr.bf16.gmra.mrb[0].mxu0 %v211
    %v363 = vpop.f32.mrb[0].mxu0
    %v364 = vadd.f32 %v174, %v363
    %v365 = vpop.f32.mrb[0].mxu0
    %v366 = vpop.f32.mrb[0].mxu0
    %v367 = vadd.f32 %v174, %v366
    %v368 = vpop.f32.mrb[0].mxu0
    %369 = vmatprep.mubr.bf16.mxu0 0
    %370 = vmatmul.mubr.bf16.gmra.mrb[0].mxu0 %v214
    %v371 = vpop.f32.mrb[0].mxu0
    %v372 = vadd.f32 %v174, %v371
    %v373 = vpop.f32.mrb[0].mxu0
    %v374 = vpop.f32.mrb[0].mxu0
    %v375 = vadd.f32 %v174, %v374
    %v376 = vpop.f32.mrb[0].mxu0
    %377 = vmatprep.mubr.bf16.mxu0 0
    %378 = vmatmul.mubr.bf16.gmra.mrb[0].mxu0 %v217
    %v379 = vpop.f32.mrb[0].mxu0
    %v380 = vadd.f32 %v174, %v379
    %v381 = vpop.f32.mrb[0].mxu0
    %v382 = vpop.f32.mrb[0].mxu0
    %v383 = vadd.f32 %v174, %v382
    %v384 = vpop.f32.mrb[0].mxu0
    %385 = vmatprep.mubr.bf16.mxu0 0
    %386 = vmatmul.mubr.bf16.gmra.mrb[0].mxu0 %v220
    %v387 = vpop.f32.mrb[0].mxu0
    %v388 = vadd.f32 %v174, %v387
    %v389 = vpop.f32.mrb[0].mxu0
    %v390 = vpop.f32.mrb[0].mxu0
    %v391 = vadd.f32 %v174, %v390
    %v392 = vpop.f32.mrb[0].mxu0
    %393 = vmatprep.mubr.bf16.mxu0 0
    %394 = vmatmul.mubr.bf16.gmra.mrb[0].mxu0 %v223
    %v395 = vpop.f32.mrb[0].mxu0
    %v396 = vadd.f32 %v174, %v395
    %v397 = vpop.f32.mrb[0].mxu0
    %v398 = vpop.f32.mrb[0].mxu0
    %v399 = vadd.f32 %v174, %v398
    %v400 = vpop.f32.mrb[0].mxu0
    %401 = vmatprep.mubr.bf16.mxu0 0
    %402 = vmatmul.mubr.bf16.gmra.mrb[0].mxu0 %v226
    %v403 = vpop.f32.mrb[0].mxu0
    %v404 = vadd.f32 %v174, %v403
    %v405 = vpop.f32.mrb[0].mxu0
    %v406 = vpop.f32.mrb[0].mxu0
    %v407 = vadd.f32 %v174, %v406
    %v408 = vpop.f32.mrb[0].mxu0
    %409 = vmatprep.mubr.bf16.mxu0 0
    %410 = vmatmul.mubr.bf16.gmra.mrb[0].mxu0 %v229
    %v411 = vpop.f32.mrb[0].mxu0
    %v412 = vadd.f32 %v174, %v411
    %v413 = vpop.f32.mrb[0].mxu0
    %v414 = vpop.f32.mrb[0].mxu0
    %v415 = vadd.f32 %v174, %v414
    %v416 = vpop.f32.mrb[0].mxu0
    %417 = vmatprep.mubr.bf16.mxu0 0
    %418 = vmatmul.mubr.bf16.gmra.mrb[0].mxu0 %v232
    %v419 = vpop.f32.mrb[0].mxu0
    %v420 = vadd.f32 %v174, %v419
    %v421 = vpop.f32.mrb[0].mxu0
    %v422 = vpop.f32.mrb[0].mxu0
    %v423 = vadd.f32 %v174, %v422
    %v424 = vpop.f32.mrb[0].mxu0
    %425 = vmatprep.mubr.bf16.mxu0 0
    %426 = vmatmul.mubr.bf16.gmra.mrb[0].mxu0 %v235
    %v427 = vpop.f32.mrb[0].mxu0
    %v428 = vadd.f32 %v174, %v427
    %v429 = vpop.f32.mrb[0].mxu0
    %v430 = vpop.f32.mrb[0].mxu0
    %v431 = vadd.f32 %v174, %v430
    %v432 = vpop.f32.mrb[0].mxu0
    %433 = vdwg.mxu0
    %vm434 = vcmask 261120
    %435 = vst.msk [vmem:[#allocation2] sm:$0xff] %vm434, %v276
    %436 = vst.msk [vmem:[#allocation2 + $0x8] sm:$0xff] %vm434, %v279
    %437 = vst.msk [vmem:[#allocation2 + $0x10] sm:$0xff] %vm434, %v284
    %438 = vst.msk [vmem:[#allocation2 + $0x18] sm:$0xff] %vm434, %v287
    %439 = vst.msk [vmem:[#allocation2 + $0x20] sm:$0xff] %vm434, %v292
    %440 = vst.msk [vmem:[#allocation2 + $0x28] sm:$0xff] %vm434, %v295
    %441 = vst.msk [vmem:[#allocation2 + $0x30] sm:$0xff] %vm434, %v300
    %442 = vst.msk [vmem:[#allocation2 + $0x38] sm:$0xff] %vm434, %v303
    %443 = vst.msk [vmem:[#allocation2 + $0x40] sm:$0xff] %vm434, %v308
    %444 = vst.msk [vmem:[#allocation2 + $0x48] sm:$0xff] %vm434, %v311
    %445 = vst.msk [vmem:[#allocation2 + $0x50] sm:$0xff] %vm434, %v316
    %446 = vst.msk [vmem:[#allocation2 + $0x58] sm:$0xff] %vm434, %v319
    %447 = vst.msk [vmem:[#allocation2 + $0x60] sm:$0xff] %vm434, %v324
    %448 = vst.msk [vmem:[#allocation2 + $0x68] sm:$0xff] %vm434, %v327
    %449 = vst.msk [vmem:[#allocation2 + $0x70] sm:$0xff] %vm434, %v332
    %450 = vst.msk [vmem:[#allocation2 + $0x78] sm:$0xff] %vm434, %v335
    %451 = vst.msk [vmem:[#allocation2 + $0x80] sm:$0xff] %vm434, %v340
    %452 = vst.msk [vmem:[#allocation2 + $0x88] sm:$0xff] %vm434, %v343
    %453 = vst.msk [vmem:[#allocation2 + $0x90] sm:$0xff] %vm434, %v348
    %454 = vst.msk [vmem:[#allocation2 + $0x98] sm:$0xff] %vm434, %v351
    %455 = vst.msk [vmem:[#allocation2 + $0xa0] sm:$0xff] %vm434, %v356
    %456 = vst.msk [vmem:[#allocation2 + $0xa8] sm:$0xff] %vm434, %v359
    %457 = vst.msk [vmem:[#allocation2 + $0xb0] sm:$0xff] %vm434, %v364
    %458 = vst.msk [vmem:[#allocation2 + $0xb8] sm:$0xff] %vm434, %v367
    %459 = vst.msk [vmem:[#allocation2 + $0xc0] sm:$0xff] %vm434, %v372
    %460 = vst.msk [vmem:[#allocation2 + $0xc8] sm:$0xff] %vm434, %v375
    %461 = vst.msk [vmem:[#allocation2 + $0xd0] sm:$0xff] %vm434, %v380
    %462 = vst.msk [vmem:[#allocation2 + $0xd8] sm:$0xff] %vm434, %v383
    %463 = vst.msk [vmem:[#allocation2 + $0xe0] sm:$0xff] %vm434, %v388
    %464 = vst.msk [vmem:[#allocation2 + $0xe8] sm:$0xff] %vm434, %v391
    %465 = vst.msk [vmem:[#allocation2 + $0xf0] sm:$0xff] %vm434, %v396
    %466 = vst.msk [vmem:[#allocation2 + $0xf8] sm:$0xff] %vm434, %v399
    %467 = vst.msk [vmem:[#allocation2 + $0x100] sm:$0xff] %vm434, %v404
    %468 = vst.msk [vmem:[#allocation2 + $0x108] sm:$0xff] %vm434, %v407
    %469 = vst.msk [vmem:[#allocation2 + $0x110] sm:$0xff] %vm434, %v412
    %470 = vst.msk [vmem:[#allocation2 + $0x118] sm:$0xff] %vm434, %v415
    %471 = vst.msk [vmem:[#allocation2 + $0x120] sm:$0xff] %vm434, %v420
    %472 = vst.msk [vmem:[#allocation2 + $0x128] sm:$0xff] %vm434, %v423
    %473 = vst.msk [vmem:[#allocation2 + $0x130] sm:$0xff] %vm434, %v428
    %474 = vst.msk [vmem:[#allocation2 + $0x138] sm:$0xff] %vm434, %v431
    %v475 = vld [vmem:[#allocation7] sm:$0xf]
    %v476 = vld [vmem:[%s7] sm:$0x3]
    %v477 = vld [vmem:[%s8] sm:$0x3]
    loop: start=0, step=1, limit=20
    $region62: #{n_vcnn_lstm_forward.4} parent=1 // loop_pre_header
      _
    $region63: #{n_vcnn_lstm_forward.4} parent=1 // loop_header
      %s479 = sphi 0, %s483
      %p480 = scmp.ge.s32.totalorder %s479, 20
      %v484 = vphi %v476, %v1137
      %v485 = vphi %v477, %v1142
    $region64: #{n_vcnn_lstm_forward.4} parent=1 // loop_header_branch
      %482 = sbr.rel (%p480) target = $region68
    $region65: #{n_vcnn_lstm_forward.4} parent=1 // loop_body
      %s486 = smul.u32 %s479, 16
      %s487 = scalar_lea.vmem [#allocation2], %s486
      %v488 = vld [vmem:[%s487] sm:$0xff]
      %v489 = vld [vmem:[%s487 + $0x8] sm:$0xff]
      %v490 = vpack.c.bf16 %v484, %v484
      %vm491 = vcmask 64512
      %v493 = vsel %vm491, %v490, 0
      %vm495 = vcmask 1043456
      %v497 = vsel %vm495, %v475, 0
      %499 = vmatprep.subr.bf16.mxu0 0
      %500 = vmatpush1.bf16.msra.mxu0 %v497
      %501 = vmatprep.subr.bf16.mxu0 0
      %502 = vmatpush1.bf16.msra.mxu0 0
      %503 = vmatprep.subr.bf16.mxu0 0
      %504 = vmatpush1.bf16.msra.mxu0 0
      %505 = vmatprep.subr.bf16.mxu0 0
      %506 = vmatpush1.bf16.msra.mxu0 0
      %507 = vmatprep.subr.bf16.mxu0 0
      %508 = vmatpush1.bf16.msra.mxu0 0
      %509 = vmatprep.subr.bf16.mxu0 0
      %510 = vmatpush1.bf16.msra.mxu0 0
      %511 = vmatprep.subr.bf16.mxu0 0
      %512 = vmatpush1.bf16.msra.mxu0 0
      %513 = vmatprep.subr.bf16.mxu0 0
      %514 = vmatpush1.bf16.msra.mxu0 0
      %515 = vmatprep.subr.bf16.mxu0 0
      %516 = vmatpush1.bf16.msra.mxu0 0
      %517 = vmatprep.subr.bf16.mxu0 0
      %518 = vmatpush1.bf16.msra.mxu0 0
      %519 = vmatprep.subr.bf16.mxu0 0
      %520 = vmatpush1.bf16.msra.mxu0 0
      %521 = vmatprep.subr.bf16.mxu0 0
      %522 = vmatpush1.bf16.msra.mxu0 0
      %523 = vmatprep.subr.bf16.mxu0 0
      %524 = vmatpush1.bf16.msra.mxu0 0
      %525 = vmatprep.subr.bf16.mxu0 0
      %526 = vmatpush1.bf16.msra.mxu0 0
      %527 = vmatprep.subr.bf16.mxu0 0
      %528 = vmatpush1.bf16.msra.mxu0 0
      %529 = vmatprep.subr.bf16.mxu0 0
      %530 = vmatpush1.bf16.msra.mxu0 0
      %531 = vmatprep.mubr.bf16.mxu0 0
      %532 = vmatmul.mubr.bf16.gmra.mrb[0].mxu0 %v493
      %v533 = vpop.f32.mrb[0].mxu0
      %v534 = vadd.f32 0.0, %v533
      %v535 = vpop.f32.mrb[0].mxu0
      %v536 = vpop.f32.mrb[0].mxu0
      %v537 = vpop.f32.mrb[0].mxu0
      %538 = vdwg.mxu0
      %v539 = vadd.f32 %v488, %v534
      %v540 = vxor.u32 %v539, 2147483648
      %v541 = vmul.f32 %v540, 1.442695
      %v542 = vpow.pop %v541
      %v543 = vadd.f32 %v542, 1.0
      %v544 = vrcp.pop %v543
      %v545 = vmul.f32 1.0, %v544
      %v546 = vtanh.pop %v539
      %548 = vrot.lane.b32.xlu0 %v485, 8
      %v549 = vpop.permute.xlu0 %548
      %v551 = vmul.f32 %v545, %v549
      %553 = vrot.lane.b32.xlu0 %v546, 104
      %v554 = vpop.permute.xlu0 %553
      %v556 = vmul.f32 %v545, %v554
      %558 = vrot.lane.b32.xlu0 %v556, 8
      %v559 = vpop.permute.xlu0 %558
      %v561 = vadd.f32 %v551, %v559
      %v562 = vtanh.pop %v561
      %564 = vrot.lane.b32.xlu0 %v562, 8
      %v565 = vpop.permute.xlu0 %564
      %v567 = vmul.f32 %v545, %v565
      %v568 = vpack.c.bf16 %v567, %v567
      %570 = vrot.lane.b32.xlu0 %v568, 112
      %v571 = vpop.permute.xlu0 %570
      %v573 = vsel %vm491, %v571, 0
      %575 = vmatprep.subr.bf16.mxu0 0
      %576 = vmatpush1.bf16.msra.mxu0 %v497
      %577 = vmatprep.subr.bf16.mxu0 0
      %578 = vmatpush1.bf16.msra.mxu0 0
      %579 = vmatprep.subr.bf16.mxu0 0
      %580 = vmatpush1.bf16.msra.mxu0 0
      %581 = vmatprep.subr.bf16.mxu0 0
      %582 = vmatpush1.bf16.msra.mxu0 0
      %583 = vmatprep.subr.bf16.mxu0 0
      %584 = vmatpush1.bf16.msra.mxu0 0
      %585 = vmatprep.subr.bf16.mxu0 0
      %586 = vmatpush1.bf16.msra.mxu0 0
      %587 = vmatprep.subr.bf16.mxu0 0
      %588 = vmatpush1.bf16.msra.mxu0 0
      %589 = vmatprep.subr.bf16.mxu0 0
      %590 = vmatpush1.bf16.msra.mxu0 0
      %591 = vmatprep.subr.bf16.mxu0 0
      %592 = vmatpush1.bf16.msra.mxu0 0
      %593 = vmatprep.subr.bf16.mxu0 0
      %594 = vmatpush1.bf16.msra.mxu0 0
      %595 = vmatprep.subr.bf16.mxu0 0
      %596 = vmatpush1.bf16.msra.mxu0 0
      %597 = vmatprep.subr.bf16.mxu0 0
      %598 = vmatpush1.bf16.msra.mxu0 0
      %599 = vmatprep.subr.bf16.mxu0 0
      %600 = vmatpush1.bf16.msra.mxu0 0
      %601 = vmatprep.subr.bf16.mxu0 0
      %602 = vmatpush1.bf16.msra.mxu0 0
      %603 = vmatprep.subr.bf16.mxu0 0
      %604 = vmatpush1.bf16.msra.mxu0 0
      %605 = vmatprep.subr.bf16.mxu0 0
      %606 = vmatpush1.bf16.msra.mxu0 0
      %607 = vmatprep.mubr.bf16.mxu0 0
      %608 = vmatmul.mubr.bf16.gmra.mrb[0].mxu0 %v573
      %v609 = vpop.f32.mrb[0].mxu0
      %v610 = vadd.f32 0.0, %v609
      %v611 = vpop.f32.mrb[0].mxu0
      %v612 = vpop.f32.mrb[0].mxu0
      %v613 = vpop.f32.mrb[0].mxu0
      %614 = vdwg.mxu0
      %v616 = vrot.slane %v610, 6
      %v618 = vadd.f32 %v488, %v616
      %v619 = vxor.u32 %v618, 2147483648
      %v620 = vmul.f32 %v619, 1.442695
      %v621 = vpow.pop %v620
      %v622 = vadd.f32 %v621, 1.0
      %v623 = vrcp.pop %v622
      %v624 = vmul.f32 1.0, %v623
      %v625 = vtanh.pop %v618
      %v627 = vrot.slane %v561, 6
      %v629 = vmul.f32 %v624, %v627
      %631 = vrot.lane.b32.xlu0 %v625, 104
      %v632 = vpop.permute.xlu0 %631
      %v634 = vmul.f32 %v624, %v632
      %636 = vrot.lane.b32.xlu0 %v634, 8
      %v637 = vpop.permute.xlu0 %636
      %v639 = vadd.f32 %v629, %v637
      %v640 = vtanh.pop %v639
      %642 = vrot.lane.b32.xlu0 %v640, 8
      %v643 = vpop.permute.xlu0 %642
      %v645 = vmul.f32 %v624, %v643
      %v646 = vpack.c.bf16 %v645, %v645
      %v648 = vrot.slane %v646, 1
      %649 = vrot.lane.b32.xlu0 %v648, 112
      %v650 = vpop.permute.xlu0 %649
      %v652 = vsel %vm491, %v650, 0
      %654 = vmatprep.subr.bf16.mxu0 0
      %655 = vmatpush1.bf16.msra.mxu0 %v497
      %656 = vmatprep.subr.bf16.mxu0 0
      %657 = vmatpush1.bf16.msra.mxu0 0
      %658 = vmatprep.subr.bf16.mxu0 0
      %659 = vmatpush1.bf16.msra.mxu0 0
      %660 = vmatprep.subr.bf16.mxu0 0
      %661 = vmatpush1.bf16.msra.mxu0 0
      %662 = vmatprep.subr.bf16.mxu0 0
      %663 = vmatpush1.bf16.msra.mxu0 0
      %664 = vmatprep.subr.bf16.mxu0 0
      %665 = vmatpush1.bf16.msra.mxu0 0
      %666 = vmatprep.subr.bf16.mxu0 0
      %667 = vmatpush1.bf16.msra.mxu0 0
      %668 = vmatprep.subr.bf16.mxu0 0
      %669 = vmatpush1.bf16.msra.mxu0 0
      %670 = vmatprep.subr.bf16.mxu0 0
      %671 = vmatpush1.bf16.msra.mxu0 0
      %672 = vmatprep.subr.bf16.mxu0 0
      %673 = vmatpush1.bf16.msra.mxu0 0
      %674 = vmatprep.subr.bf16.mxu0 0
      %675 = vmatpush1.bf16.msra.mxu0 0
      %676 = vmatprep.subr.bf16.mxu0 0
      %677 = vmatpush1.bf16.msra.mxu0 0
      %678 = vmatprep.subr.bf16.mxu0 0
      %679 = vmatpush1.bf16.msra.mxu0 0
      %680 = vmatprep.subr.bf16.mxu0 0
      %681 = vmatpush1.bf16.msra.mxu0 0
      %682 = vmatprep.subr.bf16.mxu0 0
      %683 = vmatpush1.bf16.msra.mxu0 0
      %684 = vmatprep.subr.bf16.mxu0 0
      %685 = vmatpush1.bf16.msra.mxu0 0
      %686 = vmatprep.mubr.bf16.mxu0 0
      %687 = vmatmul.mubr.bf16.gmra.mrb[0].mxu0 %v652
      %v688 = vpop.f32.mrb[0].mxu0
      %v689 = vadd.f32 0.0, %v688
      %v690 = vpop.f32.mrb[0].mxu0
      %v691 = vpop.f32.mrb[0].mxu0
      %v692 = vpop.f32.mrb[0].mxu0
      %693 = vdwg.mxu0
      %v695 = vrot.slane %v689, 4
      %v697 = vadd.f32 %v488, %v695
      %v698 = vxor.u32 %v697, 2147483648
      %v699 = vmul.f32 %v698, 1.442695
      %v700 = vpow.pop %v699
      %v701 = vadd.f32 %v700, 1.0
      %v702 = vrcp.pop %v701
      %v703 = vmul.f32 1.0, %v702
      %v704 = vtanh.pop %v697
      %v706 = vrot.slane %v639, 6
      %v708 = vmul.f32 %v703, %v706
      %710 = vrot.lane.b32.xlu0 %v704, 104
      %v711 = vpop.permute.xlu0 %710
      %v713 = vmul.f32 %v703, %v711
      %715 = vrot.lane.b32.xlu0 %v713, 8
      %v716 = vpop.permute.xlu0 %715
      %v718 = vadd.f32 %v708, %v716
      %v719 = vtanh.pop %v718
      %721 = vrot.lane.b32.xlu0 %v719, 8
      %v722 = vpop.permute.xlu0 %721
      %v724 = vmul.f32 %v703, %v722
      %v725 = vpack.c.bf16 %v724, %v724
      %v727 = vrot.slane %v725, 2
      %728 = vrot.lane.b32.xlu0 %v727, 112
      %v729 = vpop.permute.xlu0 %728
      %v731 = vsel %vm491, %v729, 0
      %733 = vmatprep.subr.bf16.mxu0 0
      %734 = vmatpush1.bf16.msra.mxu0 %v497
      %735 = vmatprep.subr.bf16.mxu0 0
      %736 = vmatpush1.bf16.msra.mxu0 0
      %737 = vmatprep.subr.bf16.mxu0 0
      %738 = vmatpush1.bf16.msra.mxu0 0
      %739 = vmatprep.subr.bf16.mxu0 0
      %740 = vmatpush1.bf16.msra.mxu0 0
      %741 = vmatprep.subr.bf16.mxu0 0
      %742 = vmatpush1.bf16.msra.mxu0 0
      %743 = vmatprep.subr.bf16.mxu0 0
      %744 = vmatpush1.bf16.msra.mxu0 0
      %745 = vmatprep.subr.bf16.mxu0 0
      %746 = vmatpush1.bf16.msra.mxu0 0
      %747 = vmatprep.subr.bf16.mxu0 0
      %748 = vmatpush1.bf16.msra.mxu0 0
      %749 = vmatprep.subr.bf16.mxu0 0
      %750 = vmatpush1.bf16.msra.mxu0 0
      %751 = vmatprep.subr.bf16.mxu0 0
      %752 = vmatpush1.bf16.msra.mxu0 0
      %753 = vmatprep.subr.bf16.mxu0 0
      %754 = vmatpush1.bf16.msra.mxu0 0
      %755 = vmatprep.subr.bf16.mxu0 0
      %756 = vmatpush1.bf16.msra.mxu0 0
      %757 = vmatprep.subr.bf16.mxu0 0
      %758 = vmatpush1.bf16.msra.mxu0 0
      %759 = vmatprep.subr.bf16.mxu0 0
      %760 = vmatpush1.bf16.msra.mxu0 0
      %761 = vmatprep.subr.bf16.mxu0 0
      %762 = vmatpush1.bf16.msra.mxu0 0
      %763 = vmatprep.subr.bf16.mxu0 0
      %764 = vmatpush1.bf16.msra.mxu0 0
      %765 = vmatprep.mubr.bf16.mxu0 0
      %766 = vmatmul.mubr.bf16.gmra.mrb[0].mxu0 %v731
      %v767 = vpop.f32.mrb[0].mxu0
      %v768 = vadd.f32 0.0, %v767
      %v769 = vpop.f32.mrb[0].mxu0
      %v770 = vpop.f32.mrb[0].mxu0
      %v771 = vpop.f32.mrb[0].mxu0
      %772 = vdwg.mxu0
      %v774 = vrot.slane %v768, 2
      %v776 = vadd.f32 %v488, %v774
      %v777 = vxor.u32 %v776, 2147483648
      %v778 = vmul.f32 %v777, 1.442695
      %v779 = vpow.pop %v778
      %v780 = vadd.f32 %v779, 1.0
      %v781 = vrcp.pop %v780
      %v782 = vmul.f32 1.0, %v781
      %v783 = vtanh.pop %v776
      %v785 = vrot.slane %v718, 6
      %v787 = vmul.f32 %v782, %v785
      %789 = vrot.lane.b32.xlu0 %v783, 104
      %v790 = vpop.permute.xlu0 %789
      %v792 = vmul.f32 %v782, %v790
      %794 = vrot.lane.b32.xlu0 %v792, 8
      %v795 = vpop.permute.xlu0 %794
      %v797 = vadd.f32 %v787, %v795
      %v798 = vtanh.pop %v797
      %800 = vrot.lane.b32.xlu0 %v798, 8
      %v801 = vpop.permute.xlu0 %800
      %v803 = vmul.f32 %v782, %v801
      %v804 = vpack.c.bf16 %v803, %v803
      %v806 = vrot.slane %v804, 3
      %807 = vrot.lane.b32.xlu0 %v806, 112
      %v808 = vpop.permute.xlu0 %807
      %v810 = vsel %vm491, %v808, 0
      %812 = vmatprep.subr.bf16.mxu0 0
      %813 = vmatpush1.bf16.msra.mxu0 %v497
      %814 = vmatprep.subr.bf16.mxu0 0
      %815 = vmatpush1.bf16.msra.mxu0 0
      %816 = vmatprep.subr.bf16.mxu0 0
      %817 = vmatpush1.bf16.msra.mxu0 0
      %818 = vmatprep.subr.bf16.mxu0 0
      %819 = vmatpush1.bf16.msra.mxu0 0
      %820 = vmatprep.subr.bf16.mxu0 0
      %821 = vmatpush1.bf16.msra.mxu0 0
      %822 = vmatprep.subr.bf16.mxu0 0
      %823 = vmatpush1.bf16.msra.mxu0 0
      %824 = vmatprep.subr.bf16.mxu0 0
      %825 = vmatpush1.bf16.msra.mxu0 0
      %826 = vmatprep.subr.bf16.mxu0 0
      %827 = vmatpush1.bf16.msra.mxu0 0
      %828 = vmatprep.subr.bf16.mxu0 0
      %829 = vmatpush1.bf16.msra.mxu0 0
      %830 = vmatprep.subr.bf16.mxu0 0
      %831 = vmatpush1.bf16.msra.mxu0 0
      %832 = vmatprep.subr.bf16.mxu0 0
      %833 = vmatpush1.bf16.msra.mxu0 0
      %834 = vmatprep.subr.bf16.mxu0 0
      %835 = vmatpush1.bf16.msra.mxu0 0
      %836 = vmatprep.subr.bf16.mxu0 0
      %837 = vmatpush1.bf16.msra.mxu0 0
      %838 = vmatprep.subr.bf16.mxu0 0
      %839 = vmatpush1.bf16.msra.mxu0 0
      %840 = vmatprep.subr.bf16.mxu0 0
      %841 = vmatpush1.bf16.msra.mxu0 0
      %842 = vmatprep.subr.bf16.mxu0 0
      %843 = vmatpush1.bf16.msra.mxu0 0
      %844 = vmatprep.mubr.bf16.mxu0 0
      %845 = vmatmul.mubr.bf16.gmra.mrb[0].mxu0 %v810
      %v846 = vpop.f32.mrb[0].mxu0
      %v847 = vadd.f32 0.0, %v846
      %v848 = vpop.f32.mrb[0].mxu0
      %v849 = vpop.f32.mrb[0].mxu0
      %v850 = vpop.f32.mrb[0].mxu0
      %851 = vdwg.mxu0
      %v852 = vadd.f32 %v489, %v847
      %v853 = vxor.u32 %v852, 2147483648
      %v854 = vmul.f32 %v853, 1.442695
      %v855 = vpow.pop %v854
      %v856 = vadd.f32 %v855, 1.0
      %v857 = vrcp.pop %v856
      %v858 = vmul.f32 1.0, %v857
      %v859 = vtanh.pop %v852
      %v861 = vrot.slane %v797, 6
      %v863 = vmul.f32 %v858, %v861
      %865 = vrot.lane.b32.xlu0 %v859, 104
      %v866 = vpop.permute.xlu0 %865
      %v868 = vmul.f32 %v858, %v866
      %870 = vrot.lane.b32.xlu0 %v868, 8
      %v871 = vpop.permute.xlu0 %870
      %v873 = vadd.f32 %v863, %v871
      %v874 = vtanh.pop %v873
      %876 = vrot.lane.b32.xlu0 %v874, 8
      %v877 = vpop.permute.xlu0 %876
      %v879 = vmul.f32 %v858, %v877
      %v880 = vpack.c.bf16 %v879, %v879
      %882 = vrot.lane.b32.xlu0 %v880, 112
      %v883 = vpop.permute.xlu0 %882
      %v885 = vsel %vm491, %v883, 0
      %887 = vmatprep.subr.bf16.mxu0 0
      %888 = vmatpush1.bf16.msra.mxu0 %v497
      %889 = vmatprep.subr.bf16.mxu0 0
      %890 = vmatpush1.bf16.msra.mxu0 0
      %891 = vmatprep.subr.bf16.mxu0 0
      %892 = vmatpush1.bf16.msra.mxu0 0
      %893 = vmatprep.subr.bf16.mxu0 0
      %894 = vmatpush1.bf16.msra.mxu0 0
      %895 = vmatprep.subr.bf16.mxu0 0
      %896 = vmatpush1.bf16.msra.mxu0 0
      %897 = vmatprep.subr.bf16.mxu0 0
      %898 = vmatpush1.bf16.msra.mxu0 0
      %899 = vmatprep.subr.bf16.mxu0 0
      %900 = vmatpush1.bf16.msra.mxu0 0
      %901 = vmatprep.subr.bf16.mxu0 0
      %902 = vmatpush1.bf16.msra.mxu0 0
      %903 = vmatprep.subr.bf16.mxu0 0
      %904 = vmatpush1.bf16.msra.mxu0 0
      %905 = vmatprep.subr.bf16.mxu0 0
      %906 = vmatpush1.bf16.msra.mxu0 0
      %907 = vmatprep.subr.bf16.mxu0 0
      %908 = vmatpush1.bf16.msra.mxu0 0
      %909 = vmatprep.subr.bf16.mxu0 0
      %910 = vmatpush1.bf16.msra.mxu0 0
      %911 = vmatprep.subr.bf16.mxu0 0
      %912 = vmatpush1.bf16.msra.mxu0 0
      %913 = vmatprep.subr.bf16.mxu0 0
      %914 = vmatpush1.bf16.msra.mxu0 0
      %915 = vmatprep.subr.bf16.mxu0 0
      %916 = vmatpush1.bf16.msra.mxu0 0
      %917 = vmatprep.subr.bf16.mxu0 0
      %918 = vmatpush1.bf16.msra.mxu0 0
      %919 = vmatprep.mubr.bf16.mxu0 0
      %920 = vmatmul.mubr.bf16.gmra.mrb[0].mxu0 %v885
      %v921 = vpop.f32.mrb[0].mxu0
      %v922 = vadd.f32 0.0, %v921
      %v923 = vpop.f32.mrb[0].mxu0
      %v924 = vpop.f32.mrb[0].mxu0
      %v925 = vpop.f32.mrb[0].mxu0
      %926 = vdwg.mxu0
      %v928 = vrot.slane %v922, 6
      %v930 = vadd.f32 %v489, %v928
      %v931 = vxor.u32 %v930, 2147483648
      %v932 = vmul.f32 %v931, 1.442695
      %v933 = vpow.pop %v932
      %v934 = vadd.f32 %v933, 1.0
      %v935 = vrcp.pop %v934
      %v936 = vmul.f32 1.0, %v935
      %v937 = vtanh.pop %v930
      %v939 = vrot.slane %v873, 6
      %v941 = vmul.f32 %v936, %v939
      %943 = vrot.lane.b32.xlu0 %v937, 104
      %v944 = vpop.permute.xlu0 %943
      %v946 = vmul.f32 %v936, %v944
      %948 = vrot.lane.b32.xlu0 %v946, 8
      %v949 = vpop.permute.xlu0 %948
      %v951 = vadd.f32 %v941, %v949
      %v952 = vtanh.pop %v951
      %954 = vrot.lane.b32.xlu0 %v952, 8
      %v955 = vpop.permute.xlu0 %954
      %v957 = vmul.f32 %v936, %v955
      %v958 = vpack.c.bf16 %v957, %v957
      %v960 = vrot.slane %v958, 1
      %961 = vrot.lane.b32.xlu0 %v960, 112
      %v962 = vpop.permute.xlu0 %961
      %v964 = vsel %vm491, %v962, 0
      %966 = vmatprep.subr.bf16.mxu0 0
      %967 = vmatpush1.bf16.msra.mxu0 %v497
      %968 = vmatprep.subr.bf16.mxu0 0
      %969 = vmatpush1.bf16.msra.mxu0 0
      %970 = vmatprep.subr.bf16.mxu0 0
      %971 = vmatpush1.bf16.msra.mxu0 0
      %972 = vmatprep.subr.bf16.mxu0 0
      %973 = vmatpush1.bf16.msra.mxu0 0
      %974 = vmatprep.subr.bf16.mxu0 0
      %975 = vmatpush1.bf16.msra.mxu0 0
      %976 = vmatprep.subr.bf16.mxu0 0
      %977 = vmatpush1.bf16.msra.mxu0 0
      %978 = vmatprep.subr.bf16.mxu0 0
      %979 = vmatpush1.bf16.msra.mxu0 0
      %980 = vmatprep.subr.bf16.mxu0 0
      %981 = vmatpush1.bf16.msra.mxu0 0
      %982 = vmatprep.subr.bf16.mxu0 0
      %983 = vmatpush1.bf16.msra.mxu0 0
      %984 = vmatprep.subr.bf16.mxu0 0
      %985 = vmatpush1.bf16.msra.mxu0 0
      %986 = vmatprep.subr.bf16.mxu0 0
      %987 = vmatpush1.bf16.msra.mxu0 0
      %988 = vmatprep.subr.bf16.mxu0 0
      %989 = vmatpush1.bf16.msra.mxu0 0
      %990 = vmatprep.subr.bf16.mxu0 0
      %991 = vmatpush1.bf16.msra.mxu0 0
      %992 = vmatprep.subr.bf16.mxu0 0
      %993 = vmatpush1.bf16.msra.mxu0 0
      %994 = vmatprep.subr.bf16.mxu0 0
      %995 = vmatpush1.bf16.msra.mxu0 0
      %996 = vmatprep.subr.bf16.mxu0 0
      %997 = vmatpush1.bf16.msra.mxu0 0
      %998 = vmatprep.mubr.bf16.mxu0 0
      %999 = vmatmul.mubr.bf16.gmra.mrb[0].mxu0 %v964
      %v1000 = vpop.f32.mrb[0].mxu0
      %v1001 = vadd.f32 0.0, %v1000
      %v1002 = vpop.f32.mrb[0].mxu0
      %v1003 = vpop.f32.mrb[0].mxu0
      %v1004 = vpop.f32.mrb[0].mxu0
      %1005 = vdwg.mxu0
      %v1007 = vrot.slane %v1001, 4
      %v1009 = vadd.f32 %v489, %v1007
      %v1010 = vxor.u32 %v1009, 2147483648
      %v1011 = vmul.f32 %v1010, 1.442695
      %v1012 = vpow.pop %v1011
      %v1013 = vadd.f32 %v1012, 1.0
      %v1014 = vrcp.pop %v1013
      %v1015 = vmul.f32 1.0, %v1014
      %v1016 = vtanh.pop %v1009
      %v1018 = vrot.slane %v951, 6
      %v1020 = vmul.f32 %v1015, %v1018
      %1022 = vrot.lane.b32.xlu0 %v1016, 104
      %v1023 = vpop.permute.xlu0 %1022
      %v1025 = vmul.f32 %v1015, %v1023
      %1027 = vrot.lane.b32.xlu0 %v1025, 8
      %v1028 = vpop.permute.xlu0 %1027
      %v1030 = vadd.f32 %v1020, %v1028
      %v1031 = vtanh.pop %v1030
      %1033 = vrot.lane.b32.xlu0 %v1031, 8
      %v1034 = vpop.permute.xlu0 %1033
      %v1036 = vmul.f32 %v1015, %v1034
      %v1037 = vpack.c.bf16 %v1036, %v1036
      %v1039 = vrot.slane %v1037, 2
      %1040 = vrot.lane.b32.xlu0 %v1039, 112
      %v1041 = vpop.permute.xlu0 %1040
      %v1043 = vsel %vm491, %v1041, 0
      %1045 = vmatprep.subr.bf16.mxu0 0
      %1046 = vmatpush1.bf16.msra.mxu0 %v497
      %1047 = vmatprep.subr.bf16.mxu0 0
      %1048 = vmatpush1.bf16.msra.mxu0 0
      %1049 = vmatprep.subr.bf16.mxu0 0
      %1050 = vmatpush1.bf16.msra.mxu0 0
      %1051 = vmatprep.subr.bf16.mxu0 0
      %1052 = vmatpush1.bf16.msra.mxu0 0
      %1053 = vmatprep.subr.bf16.mxu0 0
      %1054 = vmatpush1.bf16.msra.mxu0 0
      %1055 = vmatprep.subr.bf16.mxu0 0
      %1056 = vmatpush1.bf16.msra.mxu0 0
      %1057 = vmatprep.subr.bf16.mxu0 0
      %1058 = vmatpush1.bf16.msra.mxu0 0
      %1059 = vmatprep.subr.bf16.mxu0 0
      %1060 = vmatpush1.bf16.msra.mxu0 0
      %1061 = vmatprep.subr.bf16.mxu0 0
      %1062 = vmatpush1.bf16.msra.mxu0 0
      %1063 = vmatprep.subr.bf16.mxu0 0
      %1064 = vmatpush1.bf16.msra.mxu0 0
      %1065 = vmatprep.subr.bf16.mxu0 0
      %1066 = vmatpush1.bf16.msra.mxu0 0
      %1067 = vmatprep.subr.bf16.mxu0 0
      %1068 = vmatpush1.bf16.msra.mxu0 0
      %1069 = vmatprep.subr.bf16.mxu0 0
      %1070 = vmatpush1.bf16.msra.mxu0 0
      %1071 = vmatprep.subr.bf16.mxu0 0
      %1072 = vmatpush1.bf16.msra.mxu0 0
      %1073 = vmatprep.subr.bf16.mxu0 0
      %1074 = vmatpush1.bf16.msra.mxu0 0
      %1075 = vmatprep.subr.bf16.mxu0 0
      %1076 = vmatpush1.bf16.msra.mxu0 0
      %1077 = vmatprep.mubr.bf16.mxu0 0
      %1078 = vmatmul.mubr.bf16.gmra.mrb[0].mxu0 %v1043
      %v1079 = vpop.f32.mrb[0].mxu0
      %v1080 = vadd.f32 0.0, %v1079
      %v1081 = vpop.f32.mrb[0].mxu0
      %v1082 = vpop.f32.mrb[0].mxu0
      %v1083 = vpop.f32.mrb[0].mxu0
      %1084 = vdwg.mxu0
      %v1086 = vrot.slane %v1080, 2
      %v1088 = vadd.f32 %v489, %v1086
      %v1089 = vxor.u32 %v1088, 2147483648
      %v1090 = vmul.f32 %v1089, 1.442695
      %v1091 = vpow.pop %v1090
      %v1092 = vadd.f32 %v1091, 1.0
      %v1093 = vrcp.pop %v1092
      %v1094 = vmul.f32 1.0, %v1093
      %v1095 = vtanh.pop %v1088
      %v1097 = vrot.slane %v1030, 6
      %v1099 = vmul.f32 %v1094, %v1097
      %1101 = vrot.lane.b32.xlu0 %v1095, 104
      %v1102 = vpop.permute.xlu0 %1101
      %v1104 = vmul.f32 %v1094, %v1102
      %1106 = vrot.lane.b32.xlu0 %v1104, 8
      %v1107 = vpop.permute.xlu0 %1106
      %v1109 = vadd.f32 %v1099, %v1107
      %v1110 = vtanh.pop %v1109
      %1112 = vrot.lane.b32.xlu0 %v1110, 8
      %v1113 = vpop.permute.xlu0 %1112
      %v1115 = vmul.f32 %v1094, %v1113
      %v1116 = vsel %vm237, %v567, %v645
      %v1117 = vsel %vm495, %v1116, %v724
      %vm1118 = vcmask 1045504
      %v1119 = vsel %vm1118, %v1117, %v803
      %v1120 = vsel %vm237, %v879, %v957
      %v1121 = vsel %vm495, %v1120, %v1036
      %v1122 = vsel %vm1118, %v1121, %v1115
      %1125 = vrot.lane.b32.xlu0 %v1119, 112
      %v1126 = vpop.permute.xlu0 %1125
      %1127 = vrot.lane.b32.xlu0 %v1122, 112
      %v1128 = vpop.permute.xlu0 %1127
      %s1131 = scalar_lea.vmem [#allocation3], %s486
      %1132 = vst.msk [vmem:[%s1131] sm:$0xff] %vm491, %v1126
      %1133 = vst.msk [vmem:[%s1131 + $0x8] sm:$0xff] %vm491, %v1128
      %v1135 = vrot.slane %v1115, 6
      %1136 = vrot.lane.b32.xlu0 %v1135, 112
      %v1137 = vpop.permute.xlu0 %1136
      %v1140 = vrot.slane %v1109, 6
      %1141 = vrot.lane.b32.xlu0 %v1140, 120
      %v1142 = vpop.permute.xlu0 %1141
    $region66: #{n_vcnn_lstm_forward.4} parent=1 // loop_footer
      %s483 = sadd.s32 1, %s479
    $region67: #{n_vcnn_lstm_forward.4} parent=1 // loop_footer_branch
      %478 = sbr.rel target = $region63
    $region68: #{n_vcnn_lstm_forward.4} parent=1 // loop_exit
      _
    %vm1144 = vcmask 58368
    %1145 = vst.msk [vmem:[#allocation15] sm:$0x3] %vm1144, %v484
    %1146 = vst.msk [vmem:[#allocation16] sm:$0x3] %vm1144, %v485
    %v1147 = vld [vmem:[#allocation3] sm:$0xff]
    %v1148 = vld [vmem:[#allocation3 + $0x8] sm:$0xff]
    %v1149 = vld [vmem:[#allocation3 + $0x10] sm:$0xff]
    %v1150 = vld [vmem:[#allocation3 + $0x18] sm:$0xff]
    %v1151 = vld [vmem:[#allocation3 + $0x20] sm:$0xff]
    %v1152 = vld [vmem:[#allocation3 + $0x28] sm:$0xff]
    %v1153 = vld [vmem:[#allocation3 + $0x30] sm:$0xff]
    %v1154 = vld [vmem:[#allocation3 + $0x38] sm:$0xff]
    %v1155 = vld [vmem:[#allocation3 + $0x40] sm:$0xff]
    %v1156 = vld [vmem:[#allocation3 + $0x48] sm:$0xff]
    %v1157 = vld [vmem:[#allocation3 + $0x50] sm:$0xff]
    %v1158 = vld [vmem:[#allocation3 + $0x58] sm:$0xff]
    %v1159 = vld [vmem:[#allocation3 + $0x60] sm:$0xff]
    %v1160 = vld [vmem:[#allocation3 + $0x68] sm:$0xff]
    %v1161 = vld [vmem:[#allocation3 + $0x70] sm:$0xff]
    %v1162 = vld [vmem:[#allocation3 + $0x78] sm:$0xff]
    %v1163 = vld [vmem:[#allocation3 + $0x80] sm:$0xff]
    %v1164 = vld [vmem:[#allocation3 + $0x88] sm:$0xff]
    %v1165 = vld [vmem:[#allocation3 + $0x90] sm:$0xff]
    %v1166 = vld [vmem:[#allocation3 + $0x98] sm:$0xff]
    %v1167 = vld [vmem:[#allocation3 + $0xa0] sm:$0xff]
    %v1168 = vld [vmem:[#allocation3 + $0xa8] sm:$0xff]
    %v1169 = vld [vmem:[#allocation3 + $0xb0] sm:$0xff]
    %v1170 = vld [vmem:[#allocation3 + $0xb8] sm:$0xff]
    %v1171 = vld [vmem:[#allocation3 + $0xc0] sm:$0xff]
    %v1172 = vld [vmem:[#allocation3 + $0xc8] sm:$0xff]
    %v1173 = vld [vmem:[#allocation3 + $0xd0] sm:$0xff]
    %v1174 = vld [vmem:[#allocation3 + $0xd8] sm:$0xff]
    %v1175 = vld [vmem:[#allocation3 + $0xe0] sm:$0xff]
    %v1176 = vld [vmem:[#allocation3 + $0xe8] sm:$0xff]
    %v1177 = vld [vmem:[#allocation3 + $0xf0] sm:$0xff]
    %v1178 = vld [vmem:[#allocation3 + $0xf8] sm:$0xff]
    %v1179 = vld [vmem:[#allocation3 + $0x100] sm:$0xff]
    %v1180 = vld [vmem:[#allocation3 + $0x108] sm:$0xff]
    %v1181 = vld [vmem:[#allocation3 + $0x110] sm:$0xff]
    %v1182 = vld [vmem:[#allocation3 + $0x118] sm:$0xff]
    %v1183 = vld [vmem:[#allocation3 + $0x120] sm:$0xff]
    %v1184 = vld [vmem:[#allocation3 + $0x128] sm:$0xff]
    %v1185 = vld [vmem:[#allocation3 + $0x130] sm:$0xff]
    %v1186 = vld [vmem:[#allocation3 + $0x138] sm:$0xff]
    %v1187 = vpack.c.bf16 %v1148, %v1147
    %v1188 = vpack.c.bf16 %v1150, %v1149
    %v1189 = vpack.c.bf16 %v1152, %v1151
    %v1190 = vpack.c.bf16 %v1154, %v1153
    %v1191 = vpack.c.bf16 %v1156, %v1155
    %v1192 = vpack.c.bf16 %v1158, %v1157
    %v1193 = vpack.c.bf16 %v1160, %v1159
    %v1194 = vpack.c.bf16 %v1162, %v1161
    %v1195 = vpack.c.bf16 %v1164, %v1163
    %v1196 = vpack.c.bf16 %v1166, %v1165
    %v1197 = vpack.c.bf16 %v1168, %v1167
    %v1198 = vpack.c.bf16 %v1170, %v1169
    %v1199 = vpack.c.bf16 %v1172, %v1171
    %v1200 = vpack.c.bf16 %v1174, %v1173
    %v1201 = vpack.c.bf16 %v1176, %v1175
    %v1202 = vpack.c.bf16 %v1178, %v1177
    %v1203 = vpack.c.bf16 %v1180, %v1179
    %v1204 = vpack.c.bf16 %v1182, %v1181
    %v1205 = vpack.c.bf16 %v1184, %v1183
    %v1206 = vpack.c.bf16 %v1186, %v1185
    %v1207 = vld [vmem:[#allocation10] sm:$0xf]
    %v1208 = vld [vmem:[#allocation13] sm:$0x1]
    %v1210 = vlaneseq
    %v1211 = vshrl.u32 %v1210, 7
    %v1212 = vsub.s32 0, %v1211
    %v1213 = vrot.slane %v1208, %v1212
    %vm1215 = vcmask 64512
    %v1217 = vsel %vm1215, %v1187, 0
    %v1220 = vsel %vm1215, %v1188, 0
    %v1223 = vsel %vm1215, %v1189, 0
    %v1226 = vsel %vm1215, %v1190, 0
    %v1229 = vsel %vm1215, %v1191, 0
    %v1232 = vsel %vm1215, %v1192, 0
    %v1235 = vsel %vm1215, %v1193, 0
    %v1238 = vsel %vm1215, %v1194, 0
    %v1241 = vsel %vm1215, %v1195, 0
    %v1244 = vsel %vm1215, %v1196, 0
    %v1247 = vsel %vm1215, %v1197, 0
    %v1250 = vsel %vm1215, %v1198, 0
    %v1253 = vsel %vm1215, %v1199, 0
    %v1256 = vsel %vm1215, %v1200, 0
    %v1259 = vsel %vm1215, %v1201, 0
    %v1262 = vsel %vm1215, %v1202, 0
    %v1265 = vsel %vm1215, %v1203, 0
    %v1268 = vsel %vm1215, %v1204, 0
    %v1271 = vsel %vm1215, %v1205, 0
    %v1274 = vsel %vm1215, %v1206, 0
    %vm1276 = vcmask 1043456
    %v1278 = vsel %vm1276, %v1207, 0
    %1280 = vmatprep.subr.bf16.mxu0 0
    %1281 = vmatpush1.bf16.msra.mxu0 %v1278
    %1282 = vmatprep.subr.bf16.mxu0 0
    %1283 = vmatpush1.bf16.msra.mxu0 0
    %1284 = vmatprep.subr.bf16.mxu0 0
    %1285 = vmatpush1.bf16.msra.mxu0 0
    %1286 = vmatprep.subr.bf16.mxu0 0
    %1287 = vmatpush1.bf16.msra.mxu0 0
    %1288 = vmatprep.subr.bf16.mxu0 0
    %1289 = vmatpush1.bf16.msra.mxu0 0
    %1290 = vmatprep.subr.bf16.mxu0 0
    %1291 = vmatpush1.bf16.msra.mxu0 0
    %1292 = vmatprep.subr.bf16.mxu0 0
    %1293 = vmatpush1.bf16.msra.mxu0 0
    %1294 = vmatprep.subr.bf16.mxu0 0
    %1295 = vmatpush1.bf16.msra.mxu0 0
    %1296 = vmatprep.subr.bf16.mxu0 0
    %1297 = vmatpush1.bf16.msra.mxu0 0
    %1298 = vmatprep.subr.bf16.mxu0 0
    %1299 = vmatpush1.bf16.msra.mxu0 0
    %1300 = vmatprep.subr.bf16.mxu0 0
    %1301 = vmatpush1.bf16.msra.mxu0 0
    %1302 = vmatprep.subr.bf16.mxu0 0
    %1303 = vmatpush1.bf16.msra.mxu0 0
    %1304 = vmatprep.subr.bf16.mxu0 0
    %1305 = vmatpush1.bf16.msra.mxu0 0
    %1306 = vmatprep.subr.bf16.mxu0 0
    %1307 = vmatpush1.bf16.msra.mxu0 0
    %1308 = vmatprep.subr.bf16.mxu0 0
    %1309 = vmatpush1.bf16.msra.mxu0 0
    %1310 = vmatprep.subr.bf16.mxu0 0
    %1311 = vmatpush1.bf16.msra.mxu0 0
    %1312 = vmatprep.mubr.bf16.mxu0 0
    %1313 = vmatmul.mubr.bf16.gmra.mrb[0].mxu0 %v1217
    %v1314 = vpop.f32.mrb[0].mxu0
    %v1315 = vadd.f32 %v1213, %v1314
    %v1316 = vpop.f32.mrb[0].mxu0
    %v1317 = vpop.f32.mrb[0].mxu0
    %v1318 = vadd.f32 %v1213, %v1317
    %v1319 = vpop.f32.mrb[0].mxu0
    %1320 = vmatprep.mubr.bf16.mxu0 0
    %1321 = vmatmul.mubr.bf16.gmra.mrb[0].mxu0 %v1220
    %v1322 = vpop.f32.mrb[0].mxu0
    %v1323 = vadd.f32 %v1213, %v1322
    %v1324 = vpop.f32.mrb[0].mxu0
    %v1325 = vpop.f32.mrb[0].mxu0
    %v1326 = vadd.f32 %v1213, %v1325
    %v1327 = vpop.f32.mrb[0].mxu0
    %1328 = vmatprep.mubr.bf16.mxu0 0
    %1329 = vmatmul.mubr.bf16.gmra.mrb[0].mxu0 %v1223
    %v1330 = vpop.f32.mrb[0].mxu0
    %v1331 = vadd.f32 %v1213, %v1330
    %v1332 = vpop.f32.mrb[0].mxu0
    %v1333 = vpop.f32.mrb[0].mxu0
    %v1334 = vadd.f32 %v1213, %v1333
    %v1335 = vpop.f32.mrb[0].mxu0
    %1336 = vmatprep.mubr.bf16.mxu0 0
    %1337 = vmatmul.mubr.bf16.gmra.mrb[0].mxu0 %v1226
    %v1338 = vpop.f32.mrb[0].mxu0
    %v1339 = vadd.f32 %v1213, %v1338
    %v1340 = vpop.f32.mrb[0].mxu0
    %v1341 = vpop.f32.mrb[0].mxu0
    %v1342 = vadd.f32 %v1213, %v1341
    %v1343 = vpop.f32.mrb[0].mxu0
    %1344 = vmatprep.mubr.bf16.mxu0 0
    %1345 = vmatmul.mubr.bf16.gmra.mrb[0].mxu0 %v1229
    %v1346 = vpop.f32.mrb[0].mxu0
    %v1347 = vadd.f32 %v1213, %v1346
    %v1348 = vpop.f32.mrb[0].mxu0
    %v1349 = vpop.f32.mrb[0].mxu0
    %v1350 = vadd.f32 %v1213, %v1349
    %v1351 = vpop.f32.mrb[0].mxu0
    %1352 = vmatprep.mubr.bf16.mxu0 0
    %1353 = vmatmul.mubr.bf16.gmra.mrb[0].mxu0 %v1232
    %v1354 = vpop.f32.mrb[0].mxu0
    %v1355 = vadd.f32 %v1213, %v1354
    %v1356 = vpop.f32.mrb[0].mxu0
    %v1357 = vpop.f32.mrb[0].mxu0
    %v1358 = vadd.f32 %v1213, %v1357
    %v1359 = vpop.f32.mrb[0].mxu0
    %1360 = vmatprep.mubr.bf16.mxu0 0
    %1361 = vmatmul.mubr.bf16.gmra.mrb[0].mxu0 %v1235
    %v1362 = vpop.f32.mrb[0].mxu0
    %v1363 = vadd.f32 %v1213, %v1362
    %v1364 = vpop.f32.mrb[0].mxu0
    %v1365 = vpop.f32.mrb[0].mxu0
    %v1366 = vadd.f32 %v1213, %v1365
    %v1367 = vpop.f32.mrb[0].mxu0
    %1368 = vmatprep.mubr.bf16.mxu0 0
    %1369 = vmatmul.mubr.bf16.gmra.mrb[0].mxu0 %v1238
    %v1370 = vpop.f32.mrb[0].mxu0
    %v1371 = vadd.f32 %v1213, %v1370
    %v1372 = vpop.f32.mrb[0].mxu0
    %v1373 = vpop.f32.mrb[0].mxu0
    %v1374 = vadd.f32 %v1213, %v1373
    %v1375 = vpop.f32.mrb[0].mxu0
    %1376 = vmatprep.mubr.bf16.mxu0 0
    %1377 = vmatmul.mubr.bf16.gmra.mrb[0].mxu0 %v1241
    %v1378 = vpop.f32.mrb[0].mxu0
    %v1379 = vadd.f32 %v1213, %v1378
    %v1380 = vpop.f32.mrb[0].mxu0
    %v1381 = vpop.f32.mrb[0].mxu0
    %v1382 = vadd.f32 %v1213, %v1381
    %v1383 = vpop.f32.mrb[0].mxu0
    %1384 = vmatprep.mubr.bf16.mxu0 0
    %1385 = vmatmul.mubr.bf16.gmra.mrb[0].mxu0 %v1244
    %v1386 = vpop.f32.mrb[0].mxu0
    %v1387 = vadd.f32 %v1213, %v1386
    %v1388 = vpop.f32.mrb[0].mxu0
    %v1389 = vpop.f32.mrb[0].mxu0
    %v1390 = vadd.f32 %v1213, %v1389
    %v1391 = vpop.f32.mrb[0].mxu0
    %1392 = vmatprep.mubr.bf16.mxu0 0
    %1393 = vmatmul.mubr.bf16.gmra.mrb[0].mxu0 %v1247
    %v1394 = vpop.f32.mrb[0].mxu0
    %v1395 = vadd.f32 %v1213, %v1394
    %v1396 = vpop.f32.mrb[0].mxu0
    %v1397 = vpop.f32.mrb[0].mxu0
    %v1398 = vadd.f32 %v1213, %v1397
    %v1399 = vpop.f32.mrb[0].mxu0
    %1400 = vmatprep.mubr.bf16.mxu0 0
    %1401 = vmatmul.mubr.bf16.gmra.mrb[0].mxu0 %v1250
    %v1402 = vpop.f32.mrb[0].mxu0
    %v1403 = vadd.f32 %v1213, %v1402
    %v1404 = vpop.f32.mrb[0].mxu0
    %v1405 = vpop.f32.mrb[0].mxu0
    %v1406 = vadd.f32 %v1213, %v1405
    %v1407 = vpop.f32.mrb[0].mxu0
    %1408 = vmatprep.mubr.bf16.mxu0 0
    %1409 = vmatmul.mubr.bf16.gmra.mrb[0].mxu0 %v1253
    %v1410 = vpop.f32.mrb[0].mxu0
    %v1411 = vadd.f32 %v1213, %v1410
    %v1412 = vpop.f32.mrb[0].mxu0
    %v1413 = vpop.f32.mrb[0].mxu0
    %v1414 = vadd.f32 %v1213, %v1413
    %v1415 = vpop.f32.mrb[0].mxu0
    %1416 = vmatprep.mubr.bf16.mxu0 0
    %1417 = vmatmul.mubr.bf16.gmra.mrb[0].mxu0 %v1256
    %v1418 = vpop.f32.mrb[0].mxu0
    %v1419 = vadd.f32 %v1213, %v1418
    %v1420 = vpop.f32.mrb[0].mxu0
    %v1421 = vpop.f32.mrb[0].mxu0
    %v1422 = vadd.f32 %v1213, %v1421
    %v1423 = vpop.f32.mrb[0].mxu0
    %1424 = vmatprep.mubr.bf16.mxu0 0
    %1425 = vmatmul.mubr.bf16.gmra.mrb[0].mxu0 %v1259
    %v1426 = vpop.f32.mrb[0].mxu0
    %v1427 = vadd.f32 %v1213, %v1426
    %v1428 = vpop.f32.mrb[0].mxu0
    %v1429 = vpop.f32.mrb[0].mxu0
    %v1430 = vadd.f32 %v1213, %v1429
    %v1431 = vpop.f32.mrb[0].mxu0
    %1432 = vmatprep.mubr.bf16.mxu0 0
    %1433 = vmatmul.mubr.bf16.gmra.mrb[0].mxu0 %v1262
    %v1434 = vpop.f32.mrb[0].mxu0
    %v1435 = vadd.f32 %v1213, %v1434
    %v1436 = vpop.f32.mrb[0].mxu0
    %v1437 = vpop.f32.mrb[0].mxu0
    %v1438 = vadd.f32 %v1213, %v1437
    %v1439 = vpop.f32.mrb[0].mxu0
    %1440 = vmatprep.mubr.bf16.mxu0 0
    %1441 = vmatmul.mubr.bf16.gmra.mrb[0].mxu0 %v1265
    %v1442 = vpop.f32.mrb[0].mxu0
    %v1443 = vadd.f32 %v1213, %v1442
    %v1444 = vpop.f32.mrb[0].mxu0
    %v1445 = vpop.f32.mrb[0].mxu0
    %v1446 = vadd.f32 %v1213, %v1445
    %v1447 = vpop.f32.mrb[0].mxu0
    %1448 = vmatprep.mubr.bf16.mxu0 0
    %1449 = vmatmul.mubr.bf16.gmra.mrb[0].mxu0 %v1268
    %v1450 = vpop.f32.mrb[0].mxu0
    %v1451 = vadd.f32 %v1213, %v1450
    %v1452 = vpop.f32.mrb[0].mxu0
    %v1453 = vpop.f32.mrb[0].mxu0
    %v1454 = vadd.f32 %v1213, %v1453
    %v1455 = vpop.f32.mrb[0].mxu0
    %1456 = vmatprep.mubr.bf16.mxu0 0
    %1457 = vmatmul.mubr.bf16.gmra.mrb[0].mxu0 %v1271
    %v1458 = vpop.f32.mrb[0].mxu0
    %v1459 = vadd.f32 %v1213, %v1458
    %v1460 = vpop.f32.mrb[0].mxu0
    %v1461 = vpop.f32.mrb[0].mxu0
    %v1462 = vadd.f32 %v1213, %v1461
    %v1463 = vpop.f32.mrb[0].mxu0
    %1464 = vmatprep.mubr.bf16.mxu0 0
    %1465 = vmatmul.mubr.bf16.gmra.mrb[0].mxu0 %v1274
    %v1466 = vpop.f32.mrb[0].mxu0
    %v1467 = vadd.f32 %v1213, %v1466
    %v1468 = vpop.f32.mrb[0].mxu0
    %v1469 = vpop.f32.mrb[0].mxu0
    %v1470 = vadd.f32 %v1213, %v1469
    %v1471 = vpop.f32.mrb[0].mxu0
    %1472 = vdwg.mxu0
    %1473 = vst.msk [vmem:[#allocation2] sm:$0xff] %vm434, %v1315
    %1474 = vst.msk [vmem:[#allocation2 + $0x8] sm:$0xff] %vm434, %v1318
    %1475 = vst.msk [vmem:[#allocation2 + $0x10] sm:$0xff] %vm434, %v1323
    %1476 = vst.msk [vmem:[#allocation2 + $0x18] sm:$0xff] %vm434, %v1326
    %1477 = vst.msk [vmem:[#allocation2 + $0x20] sm:$0xff] %vm434, %v1331
    %1478 = vst.msk [vmem:[#allocation2 + $0x28] sm:$0xff] %vm434, %v1334
    %1479 = vst.msk [vmem:[#allocation2 + $0x30] sm:$0xff] %vm434, %v1339
    %1480 = vst.msk [vmem:[#allocation2 + $0x38] sm:$0xff] %vm434, %v1342
    %1481 = vst.msk [vmem:[#allocation2 + $0x40] sm:$0xff] %vm434, %v1347
    %1482 = vst.msk [vmem:[#allocation2 + $0x48] sm:$0xff] %vm434, %v1350
    %1483 = vst.msk [vmem:[#allocation2 + $0x50] sm:$0xff] %vm434, %v1355
    %1484 = vst.msk [vmem:[#allocation2 + $0x58] sm:$0xff] %vm434, %v1358
    %1485 = vst.msk [vmem:[#allocation2 + $0x60] sm:$0xff] %vm434, %v1363
    %1486 = vst.msk [vmem:[#allocation2 + $0x68] sm:$0xff] %vm434, %v1366
    %1487 = vst.msk [vmem:[#allocation2 + $0x70] sm:$0xff] %vm434, %v1371
    %1488 = vst.msk [vmem:[#allocation2 + $0x78] sm:$0xff] %vm434, %v1374
    %1489 = vst.msk [vmem:[#allocation2 + $0x80] sm:$0xff] %vm434, %v1379
    %1490 = vst.msk [vmem:[#allocation2 + $0x88] sm:$0xff] %vm434, %v1382
    %1491 = vst.msk [vmem:[#allocation2 + $0x90] sm:$0xff] %vm434, %v1387
    %1492 = vst.msk [vmem:[#allocation2 + $0x98] sm:$0xff] %vm434, %v1390
    %1493 = vst.msk [vmem:[#allocation2 + $0xa0] sm:$0xff] %vm434, %v1395
    %1494 = vst.msk [vmem:[#allocation2 + $0xa8] sm:$0xff] %vm434, %v1398
    %1495 = vst.msk [vmem:[#allocation2 + $0xb0] sm:$0xff] %vm434, %v1403
    %1496 = vst.msk [vmem:[#allocation2 + $0xb8] sm:$0xff] %vm434, %v1406
    %1497 = vst.msk [vmem:[#allocation2 + $0xc0] sm:$0xff] %vm434, %v1411
    %1498 = vst.msk [vmem:[#allocation2 + $0xc8] sm:$0xff] %vm434, %v1414
    %1499 = vst.msk [vmem:[#allocation2 + $0xd0] sm:$0xff] %vm434, %v1419
    %1500 = vst.msk [vmem:[#allocation2 + $0xd8] sm:$0xff] %vm434, %v1422
    %1501 = vst.msk [vmem:[#allocation2 + $0xe0] sm:$0xff] %vm434, %v1427
    %1502 = vst.msk [vmem:[#allocation2 + $0xe8] sm:$0xff] %vm434, %v1430
    %1503 = vst.msk [vmem:[#allocation2 + $0xf0] sm:$0xff] %vm434, %v1435
    %1504 = vst.msk [vmem:[#allocation2 + $0xf8] sm:$0xff] %vm434, %v1438
    %1505 = vst.msk [vmem:[#allocation2 + $0x100] sm:$0xff] %vm434, %v1443
    %1506 = vst.msk [vmem:[#allocation2 + $0x108] sm:$0xff] %vm434, %v1446
    %1507 = vst.msk [vmem:[#allocation2 + $0x110] sm:$0xff] %vm434, %v1451
    %1508 = vst.msk [vmem:[#allocation2 + $0x118] sm:$0xff] %vm434, %v1454
    %1509 = vst.msk [vmem:[#allocation2 + $0x120] sm:$0xff] %vm434, %v1459
    %1510 = vst.msk [vmem:[#allocation2 + $0x128] sm:$0xff] %vm434, %v1462
    %1511 = vst.msk [vmem:[#allocation2 + $0x130] sm:$0xff] %vm434, %v1467
    %1512 = vst.msk [vmem:[#allocation2 + $0x138] sm:$0xff] %vm434, %v1470
    %v1513 = vld [vmem:[#allocation12] sm:$0xf]
    %s1514 = scalar_lea.vmem %s7, 2
    %v1515 = vld [vmem:[%s1514] sm:$0x3]
    %s1516 = scalar_lea.vmem %s8, 2
    %v1517 = vld [vmem:[%s1516] sm:$0x3]
    loop: start=0, step=1, limit=20
    $region69: #{n_vcnn_lstm_forward.4} parent=1 // loop_pre_header
      _
    $region70: #{n_vcnn_lstm_forward.4} parent=1 // loop_header
      %s1519 = sphi 0, %s1523
      %p1520 = scmp.ge.s32.totalorder %s1519, 20
      %v1524 = vphi %v1515, %v2175
      %v1525 = vphi %v1517, %v2180
    $region71: #{n_vcnn_lstm_forward.4} parent=1 // loop_header_branch
      %1522 = sbr.rel (%p1520) target = $region75
    $region72: #{n_vcnn_lstm_forward.4} parent=1 // loop_body
      %s1526 = smul.u32 %s1519, 16
      %s1527 = scalar_lea.vmem [#allocation2], %s1526
      %v1528 = vld [vmem:[%s1527] sm:$0xff]
      %v1529 = vld [vmem:[%s1527 + $0x8] sm:$0xff]
      %v1530 = vpack.c.bf16 %v1524, %v1524
      %v1532 = vsel %vm1215, %v1530, 0
      %v1535 = vsel %vm1276, %v1513, 0
      %1537 = vmatprep.subr.bf16.mxu0 0
      %1538 = vmatpush1.bf16.msra.mxu0 %v1535
      %1539 = vmatprep.subr.bf16.mxu0 0
      %1540 = vmatpush1.bf16.msra.mxu0 0
      %1541 = vmatprep.subr.bf16.mxu0 0
      %1542 = vmatpush1.bf16.msra.mxu0 0
      %1543 = vmatprep.subr.bf16.mxu0 0
      %1544 = vmatpush1.bf16.msra.mxu0 0
      %1545 = vmatprep.subr.bf16.mxu0 0
      %1546 = vmatpush1.bf16.msra.mxu0 0
      %1547 = vmatprep.subr.bf16.mxu0 0
      %1548 = vmatpush1.bf16.msra.mxu0 0
      %1549 = vmatprep.subr.bf16.mxu0 0
      %1550 = vmatpush1.bf16.msra.mxu0 0
      %1551 = vmatprep.subr.bf16.mxu0 0
      %1552 = vmatpush1.bf16.msra.mxu0 0
      %1553 = vmatprep.subr.bf16.mxu0 0
      %1554 = vmatpush1.bf16.msra.mxu0 0
      %1555 = vmatprep.subr.bf16.mxu0 0
      %1556 = vmatpush1.bf16.msra.mxu0 0
      %1557 = vmatprep.subr.bf16.mxu0 0
      %1558 = vmatpush1.bf16.msra.mxu0 0
      %1559 = vmatprep.subr.bf16.mxu0 0
      %1560 = vmatpush1.bf16.msra.mxu0 0
      %1561 = vmatprep.subr.bf16.mxu0 0
      %1562 = vmatpush1.bf16.msra.mxu0 0
      %1563 = vmatprep.subr.bf16.mxu0 0
      %1564 = vmatpush1.bf16.msra.mxu0 0
      %1565 = vmatprep.subr.bf16.mxu0 0
      %1566 = vmatpush1.bf16.msra.mxu0 0
      %1567 = vmatprep.subr.bf16.mxu0 0
      %1568 = vmatpush1.bf16.msra.mxu0 0
      %1569 = vmatprep.mubr.bf16.mxu0 0
      %1570 = vmatmul.mubr.bf16.gmra.mrb[0].mxu0 %v1532
      %v1571 = vpop.f32.mrb[0].mxu0
      %v1572 = vadd.f32 0.0, %v1571
      %v1573 = vpop.f32.mrb[0].mxu0
      %v1574 = vpop.f32.mrb[0].mxu0
      %v1575 = vpop.f32.mrb[0].mxu0
      %1576 = vdwg.mxu0
      %v1577 = vadd.f32 %v1528, %v1572
      %v1578 = vxor.u32 %v1577, 2147483648
      %v1579 = vmul.f32 %v1578, 1.442695
      %v1580 = vpow.pop %v1579
      %v1581 = vadd.f32 %v1580, 1.0
      %v1582 = vrcp.pop %v1581
      %v1583 = vmul.f32 1.0, %v1582
      %v1584 = vtanh.pop %v1577
      %1586 = vrot.lane.b32.xlu0 %v1525, 8
      %v1587 = vpop.permute.xlu0 %1586
      %v1589 = vmul.f32 %v1583, %v1587
      %1591 = vrot.lane.b32.xlu0 %v1584, 104
      %v1592 = vpop.permute.xlu0 %1591
      %v1594 = vmul.f32 %v1583, %v1592
      %1596 = vrot.lane.b32.xlu0 %v1594, 8
      %v1597 = vpop.permute.xlu0 %1596
      %v1599 = vadd.f32 %v1589, %v1597
      %v1600 = vtanh.pop %v1599
      %1602 = vrot.lane.b32.xlu0 %v1600, 8
      %v1603 = vpop.permute.xlu0 %1602
      %v1605 = vmul.f32 %v1583, %v1603
      %v1606 = vpack.c.bf16 %v1605, %v1605
      %1608 = vrot.lane.b32.xlu0 %v1606, 112
      %v1609 = vpop.permute.xlu0 %1608
      %v1611 = vsel %vm1215, %v1609, 0
      %1613 = vmatprep.subr.bf16.mxu0 0
      %1614 = vmatpush1.bf16.msra.mxu0 %v1535
      %1615 = vmatprep.subr.bf16.mxu0 0
      %1616 = vmatpush1.bf16.msra.mxu0 0
      %1617 = vmatprep.subr.bf16.mxu0 0
      %1618 = vmatpush1.bf16.msra.mxu0 0
      %1619 = vmatprep.subr.bf16.mxu0 0
      %1620 = vmatpush1.bf16.msra.mxu0 0
      %1621 = vmatprep.subr.bf16.mxu0 0
      %1622 = vmatpush1.bf16.msra.mxu0 0
      %1623 = vmatprep.subr.bf16.mxu0 0
      %1624 = vmatpush1.bf16.msra.mxu0 0
      %1625 = vmatprep.subr.bf16.mxu0 0
      %1626 = vmatpush1.bf16.msra.mxu0 0
      %1627 = vmatprep.subr.bf16.mxu0 0
      %1628 = vmatpush1.bf16.msra.mxu0 0
      %1629 = vmatprep.subr.bf16.mxu0 0
      %1630 = vmatpush1.bf16.msra.mxu0 0
      %1631 = vmatprep.subr.bf16.mxu0 0
      %1632 = vmatpush1.bf16.msra.mxu0 0
      %1633 = vmatprep.subr.bf16.mxu0 0
      %1634 = vmatpush1.bf16.msra.mxu0 0
      %1635 = vmatprep.subr.bf16.mxu0 0
      %1636 = vmatpush1.bf16.msra.mxu0 0
      %1637 = vmatprep.subr.bf16.mxu0 0
      %1638 = vmatpush1.bf16.msra.mxu0 0
      %1639 = vmatprep.subr.bf16.mxu0 0
      %1640 = vmatpush1.bf16.msra.mxu0 0
      %1641 = vmatprep.subr.bf16.mxu0 0
      %1642 = vmatpush1.bf16.msra.mxu0 0
      %1643 = vmatprep.subr.bf16.mxu0 0
      %1644 = vmatpush1.bf16.msra.mxu0 0
      %1645 = vmatprep.mubr.bf16.mxu0 0
      %1646 = vmatmul.mubr.bf16.gmra.mrb[0].mxu0 %v1611
      %v1647 = vpop.f32.mrb[0].mxu0
      %v1648 = vadd.f32 0.0, %v1647
      %v1649 = vpop.f32.mrb[0].mxu0
      %v1650 = vpop.f32.mrb[0].mxu0
      %v1651 = vpop.f32.mrb[0].mxu0
      %1652 = vdwg.mxu0
      %v1654 = vrot.slane %v1648, 6
      %v1656 = vadd.f32 %v1528, %v1654
      %v1657 = vxor.u32 %v1656, 2147483648
      %v1658 = vmul.f32 %v1657, 1.442695
      %v1659 = vpow.pop %v1658
      %v1660 = vadd.f32 %v1659, 1.0
      %v1661 = vrcp.pop %v1660
      %v1662 = vmul.f32 1.0, %v1661
      %v1663 = vtanh.pop %v1656
      %v1665 = vrot.slane %v1599, 6
      %v1667 = vmul.f32 %v1662, %v1665
      %1669 = vrot.lane.b32.xlu0 %v1663, 104
      %v1670 = vpop.permute.xlu0 %1669
      %v1672 = vmul.f32 %v1662, %v1670
      %1674 = vrot.lane.b32.xlu0 %v1672, 8
      %v1675 = vpop.permute.xlu0 %1674
      %v1677 = vadd.f32 %v1667, %v1675
      %v1678 = vtanh.pop %v1677
      %1680 = vrot.lane.b32.xlu0 %v1678, 8
      %v1681 = vpop.permute.xlu0 %1680
      %v1683 = vmul.f32 %v1662, %v1681
      %v1684 = vpack.c.bf16 %v1683, %v1683
      %v1686 = vrot.slane %v1684, 1
      %1687 = vrot.lane.b32.xlu0 %v1686, 112
      %v1688 = vpop.permute.xlu0 %1687
      %v1690 = vsel %vm1215, %v1688, 0
      %1692 = vmatprep.subr.bf16.mxu0 0
      %1693 = vmatpush1.bf16.msra.mxu0 %v1535
      %1694 = vmatprep.subr.bf16.mxu0 0
      %1695 = vmatpush1.bf16.msra.mxu0 0
      %1696 = vmatprep.subr.bf16.mxu0 0
      %1697 = vmatpush1.bf16.msra.mxu0 0
      %1698 = vmatprep.subr.bf16.mxu0 0
      %1699 = vmatpush1.bf16.msra.mxu0 0
      %1700 = vmatprep.subr.bf16.mxu0 0
      %1701 = vmatpush1.bf16.msra.mxu0 0
      %1702 = vmatprep.subr.bf16.mxu0 0
      %1703 = vmatpush1.bf16.msra.mxu0 0
      %1704 = vmatprep.subr.bf16.mxu0 0
      %1705 = vmatpush1.bf16.msra.mxu0 0
      %1706 = vmatprep.subr.bf16.mxu0 0
      %1707 = vmatpush1.bf16.msra.mxu0 0
      %1708 = vmatprep.subr.bf16.mxu0 0
      %1709 = vmatpush1.bf16.msra.mxu0 0
      %1710 = vmatprep.subr.bf16.mxu0 0
      %1711 = vmatpush1.bf16.msra.mxu0 0
      %1712 = vmatprep.subr.bf16.mxu0 0
      %1713 = vmatpush1.bf16.msra.mxu0 0
      %1714 = vmatprep.subr.bf16.mxu0 0
      %1715 = vmatpush1.bf16.msra.mxu0 0
      %1716 = vmatprep.subr.bf16.mxu0 0
      %1717 = vmatpush1.bf16.msra.mxu0 0
      %1718 = vmatprep.subr.bf16.mxu0 0
      %1719 = vmatpush1.bf16.msra.mxu0 0
      %1720 = vmatprep.subr.bf16.mxu0 0
      %1721 = vmatpush1.bf16.msra.mxu0 0
      %1722 = vmatprep.subr.bf16.mxu0 0
      %1723 = vmatpush1.bf16.msra.mxu0 0
      %1724 = vmatprep.mubr.bf16.mxu0 0
      %1725 = vmatmul.mubr.bf16.gmra.mrb[0].mxu0 %v1690
      %v1726 = vpop.f32.mrb[0].mxu0
      %v1727 = vadd.f32 0.0, %v1726
      %v1728 = vpop.f32.mrb[0].mxu0
      %v1729 = vpop.f32.mrb[0].mxu0
      %v1730 = vpop.f32.mrb[0].mxu0
      %1731 = vdwg.mxu0
      %v1733 = vrot.slane %v1727, 4
      %v1735 = vadd.f32 %v1528, %v1733
      %v1736 = vxor.u32 %v1735, 2147483648
      %v1737 = vmul.f32 %v1736, 1.442695
      %v1738 = vpow.pop %v1737
      %v1739 = vadd.f32 %v1738, 1.0
      %v1740 = vrcp.pop %v1739
      %v1741 = vmul.f32 1.0, %v1740
      %v1742 = vtanh.pop %v1735
      %v1744 = vrot.slane %v1677, 6
      %v1746 = vmul.f32 %v1741, %v1744
      %1748 = vrot.lane.b32.xlu0 %v1742, 104
      %v1749 = vpop.permute.xlu0 %1748
      %v1751 = vmul.f32 %v1741, %v1749
      %1753 = vrot.lane.b32.xlu0 %v1751, 8
      %v1754 = vpop.permute.xlu0 %1753
      %v1756 = vadd.f32 %v1746, %v1754
      %v1757 = vtanh.pop %v1756
      %1759 = vrot.lane.b32.xlu0 %v1757, 8
      %v1760 = vpop.permute.xlu0 %1759
      %v1762 = vmul.f32 %v1741, %v1760
      %v1763 = vpack.c.bf16 %v1762, %v1762
      %v1765 = vrot.slane %v1763, 2
      %1766 = vrot.lane.b32.xlu0 %v1765, 112
      %v1767 = vpop.permute.xlu0 %1766
      %v1769 = vsel %vm1215, %v1767, 0
      %1771 = vmatprep.subr.bf16.mxu0 0
      %1772 = vmatpush1.bf16.msra.mxu0 %v1535
      %1773 = vmatprep.subr.bf16.mxu0 0
      %1774 = vmatpush1.bf16.msra.mxu0 0
      %1775 = vmatprep.subr.bf16.mxu0 0
      %1776 = vmatpush1.bf16.msra.mxu0 0
      %1777 = vmatprep.subr.bf16.mxu0 0
      %1778 = vmatpush1.bf16.msra.mxu0 0
      %1779 = vmatprep.subr.bf16.mxu0 0
      %1780 = vmatpush1.bf16.msra.mxu0 0
      %1781 = vmatprep.subr.bf16.mxu0 0
      %1782 = vmatpush1.bf16.msra.mxu0 0
      %1783 = vmatprep.subr.bf16.mxu0 0
      %1784 = vmatpush1.bf16.msra.mxu0 0
      %1785 = vmatprep.subr.bf16.mxu0 0
      %1786 = vmatpush1.bf16.msra.mxu0 0
      %1787 = vmatprep.subr.bf16.mxu0 0
      %1788 = vmatpush1.bf16.msra.mxu0 0
      %1789 = vmatprep.subr.bf16.mxu0 0
      %1790 = vmatpush1.bf16.msra.mxu0 0
      %1791 = vmatprep.subr.bf16.mxu0 0
      %1792 = vmatpush1.bf16.msra.mxu0 0
      %1793 = vmatprep.subr.bf16.mxu0 0
      %1794 = vmatpush1.bf16.msra.mxu0 0
      %1795 = vmatprep.subr.bf16.mxu0 0
      %1796 = vmatpush1.bf16.msra.mxu0 0
      %1797 = vmatprep.subr.bf16.mxu0 0
      %1798 = vmatpush1.bf16.msra.mxu0 0
      %1799 = vmatprep.subr.bf16.mxu0 0
      %1800 = vmatpush1.bf16.msra.mxu0 0
      %1801 = vmatprep.subr.bf16.mxu0 0
      %1802 = vmatpush1.bf16.msra.mxu0 0
      %1803 = vmatprep.mubr.bf16.mxu0 0
      %1804 = vmatmul.mubr.bf16.gmra.mrb[0].mxu0 %v1769
      %v1805 = vpop.f32.mrb[0].mxu0
      %v1806 = vadd.f32 0.0, %v1805
      %v1807 = vpop.f32.mrb[0].mxu0
      %v1808 = vpop.f32.mrb[0].mxu0
      %v1809 = vpop.f32.mrb[0].mxu0
      %1810 = vdwg.mxu0
      %v1812 = vrot.slane %v1806, 2
      %v1814 = vadd.f32 %v1528, %v1812
      %v1815 = vxor.u32 %v1814, 2147483648
      %v1816 = vmul.f32 %v1815, 1.442695
      %v1817 = vpow.pop %v1816
      %v1818 = vadd.f32 %v1817, 1.0
      %v1819 = vrcp.pop %v1818
      %v1820 = vmul.f32 1.0, %v1819
      %v1821 = vtanh.pop %v1814
      %v1823 = vrot.slane %v1756, 6
      %v1825 = vmul.f32 %v1820, %v1823
      %1827 = vrot.lane.b32.xlu0 %v1821, 104
      %v1828 = vpop.permute.xlu0 %1827
      %v1830 = vmul.f32 %v1820, %v1828
      %1832 = vrot.lane.b32.xlu0 %v1830, 8
      %v1833 = vpop.permute.xlu0 %1832
      %v1835 = vadd.f32 %v1825, %v1833
      %v1836 = vtanh.pop %v1835
      %1838 = vrot.lane.b32.xlu0 %v1836, 8
      %v1839 = vpop.permute.xlu0 %1838
      %v1841 = vmul.f32 %v1820, %v1839
      %v1842 = vpack.c.bf16 %v1841, %v1841
      %v1844 = vrot.slane %v1842, 3
      %1845 = vrot.lane.b32.xlu0 %v1844, 112
      %v1846 = vpop.permute.xlu0 %1845
      %v1848 = vsel %vm1215, %v1846, 0
      %1850 = vmatprep.subr.bf16.mxu0 0
      %1851 = vmatpush1.bf16.msra.mxu0 %v1535
      %1852 = vmatprep.subr.bf16.mxu0 0
      %1853 = vmatpush1.bf16.msra.mxu0 0
      %1854 = vmatprep.subr.bf16.mxu0 0
      %1855 = vmatpush1.bf16.msra.mxu0 0
      %1856 = vmatprep.subr.bf16.mxu0 0
      %1857 = vmatpush1.bf16.msra.mxu0 0
      %1858 = vmatprep.subr.bf16.mxu0 0
      %1859 = vmatpush1.bf16.msra.mxu0 0
      %1860 = vmatprep.subr.bf16.mxu0 0
      %1861 = vmatpush1.bf16.msra.mxu0 0
      %1862 = vmatprep.subr.bf16.mxu0 0
      %1863 = vmatpush1.bf16.msra.mxu0 0
      %1864 = vmatprep.subr.bf16.mxu0 0
      %1865 = vmatpush1.bf16.msra.mxu0 0
      %1866 = vmatprep.subr.bf16.mxu0 0
      %1867 = vmatpush1.bf16.msra.mxu0 0
      %1868 = vmatprep.subr.bf16.mxu0 0
      %1869 = vmatpush1.bf16.msra.mxu0 0
      %1870 = vmatprep.subr.bf16.mxu0 0
      %1871 = vmatpush1.bf16.msra.mxu0 0
      %1872 = vmatprep.subr.bf16.mxu0 0
      %1873 = vmatpush1.bf16.msra.mxu0 0
      %1874 = vmatprep.subr.bf16.mxu0 0
      %1875 = vmatpush1.bf16.msra.mxu0 0
      %1876 = vmatprep.subr.bf16.mxu0 0
      %1877 = vmatpush1.bf16.msra.mxu0 0
      %1878 = vmatprep.subr.bf16.mxu0 0
      %1879 = vmatpush1.bf16.msra.mxu0 0
      %1880 = vmatprep.subr.bf16.mxu0 0
      %1881 = vmatpush1.bf16.msra.mxu0 0
      %1882 = vmatprep.mubr.bf16.mxu0 0
      %1883 = vmatmul.mubr.bf16.gmra.mrb[0].mxu0 %v1848
      %v1884 = vpop.f32.mrb[0].mxu0
      %v1885 = vadd.f32 0.0, %v1884
      %v1886 = vpop.f32.mrb[0].mxu0
      %v1887 = vpop.f32.mrb[0].mxu0
      %v1888 = vpop.f32.mrb[0].mxu0
      %1889 = vdwg.mxu0
      %v1890 = vadd.f32 %v1529, %v1885
      %v1891 = vxor.u32 %v1890, 2147483648
      %v1892 = vmul.f32 %v1891, 1.442695
      %v1893 = vpow.pop %v1892
      %v1894 = vadd.f32 %v1893, 1.0
      %v1895 = vrcp.pop %v1894
      %v1896 = vmul.f32 1.0, %v1895
      %v1897 = vtanh.pop %v1890
      %v1899 = vrot.slane %v1835, 6
      %v1901 = vmul.f32 %v1896, %v1899
      %1903 = vrot.lane.b32.xlu0 %v1897, 104
      %v1904 = vpop.permute.xlu0 %1903
      %v1906 = vmul.f32 %v1896, %v1904
      %1908 = vrot.lane.b32.xlu0 %v1906, 8
      %v1909 = vpop.permute.xlu0 %1908
      %v1911 = vadd.f32 %v1901, %v1909
      %v1912 = vtanh.pop %v1911
      %1914 = vrot.lane.b32.xlu0 %v1912, 8
      %v1915 = vpop.permute.xlu0 %1914
      %v1917 = vmul.f32 %v1896, %v1915
      %v1918 = vpack.c.bf16 %v1917, %v1917
      %1920 = vrot.lane.b32.xlu0 %v1918, 112
      %v1921 = vpop.permute.xlu0 %1920
      %v1923 = vsel %vm1215, %v1921, 0
      %1925 = vmatprep.subr.bf16.mxu0 0
      %1926 = vmatpush1.bf16.msra.mxu0 %v1535
      %1927 = vmatprep.subr.bf16.mxu0 0
      %1928 = vmatpush1.bf16.msra.mxu0 0
      %1929 = vmatprep.subr.bf16.mxu0 0
      %1930 = vmatpush1.bf16.msra.mxu0 0
      %1931 = vmatprep.subr.bf16.mxu0 0
      %1932 = vmatpush1.bf16.msra.mxu0 0
      %1933 = vmatprep.subr.bf16.mxu0 0
      %1934 = vmatpush1.bf16.msra.mxu0 0
      %1935 = vmatprep.subr.bf16.mxu0 0
      %1936 = vmatpush1.bf16.msra.mxu0 0
      %1937 = vmatprep.subr.bf16.mxu0 0
      %1938 = vmatpush1.bf16.msra.mxu0 0
      %1939 = vmatprep.subr.bf16.mxu0 0
      %1940 = vmatpush1.bf16.msra.mxu0 0
      %1941 = vmatprep.subr.bf16.mxu0 0
      %1942 = vmatpush1.bf16.msra.mxu0 0
      %1943 = vmatprep.subr.bf16.mxu0 0
      %1944 = vmatpush1.bf16.msra.mxu0 0
      %1945 = vmatprep.subr.bf16.mxu0 0
      %1946 = vmatpush1.bf16.msra.mxu0 0
      %1947 = vmatprep.subr.bf16.mxu0 0
      %1948 = vmatpush1.bf16.msra.mxu0 0
      %1949 = vmatprep.subr.bf16.mxu0 0
      %1950 = vmatpush1.bf16.msra.mxu0 0
      %1951 = vmatprep.subr.bf16.mxu0 0
      %1952 = vmatpush1.bf16.msra.mxu0 0
      %1953 = vmatprep.subr.bf16.mxu0 0
      %1954 = vmatpush1.bf16.msra.mxu0 0
      %1955 = vmatprep.subr.bf16.mxu0 0
      %1956 = vmatpush1.bf16.msra.mxu0 0
      %1957 = vmatprep.mubr.bf16.mxu0 0
      %1958 = vmatmul.mubr.bf16.gmra.mrb[0].mxu0 %v1923
      %v1959 = vpop.f32.mrb[0].mxu0
      %v1960 = vadd.f32 0.0, %v1959
      %v1961 = vpop.f32.mrb[0].mxu0
      %v1962 = vpop.f32.mrb[0].mxu0
      %v1963 = vpop.f32.mrb[0].mxu0
      %1964 = vdwg.mxu0
      %v1966 = vrot.slane %v1960, 6
      %v1968 = vadd.f32 %v1529, %v1966
      %v1969 = vxor.u32 %v1968, 2147483648
      %v1970 = vmul.f32 %v1969, 1.442695
      %v1971 = vpow.pop %v1970
      %v1972 = vadd.f32 %v1971, 1.0
      %v1973 = vrcp.pop %v1972
      %v1974 = vmul.f32 1.0, %v1973
      %v1975 = vtanh.pop %v1968
      %v1977 = vrot.slane %v1911, 6
      %v1979 = vmul.f32 %v1974, %v1977
      %1981 = vrot.lane.b32.xlu0 %v1975, 104
      %v1982 = vpop.permute.xlu0 %1981
      %v1984 = vmul.f32 %v1974, %v1982
      %1986 = vrot.lane.b32.xlu0 %v1984, 8
      %v1987 = vpop.permute.xlu0 %1986
      %v1989 = vadd.f32 %v1979, %v1987
      %v1990 = vtanh.pop %v1989
      %1992 = vrot.lane.b32.xlu0 %v1990, 8
      %v1993 = vpop.permute.xlu0 %1992
      %v1995 = vmul.f32 %v1974, %v1993
      %v1996 = vpack.c.bf16 %v1995, %v1995
      %v1998 = vrot.slane %v1996, 1
      %1999 = vrot.lane.b32.xlu0 %v1998, 112
      %v2000 = vpop.permute.xlu0 %1999
      %v2002 = vsel %vm1215, %v2000, 0
      %2004 = vmatprep.subr.bf16.mxu0 0
      %2005 = vmatpush1.bf16.msra.mxu0 %v1535
      %2006 = vmatprep.subr.bf16.mxu0 0
      %2007 = vmatpush1.bf16.msra.mxu0 0
      %2008 = vmatprep.subr.bf16.mxu0 0
      %2009 = vmatpush1.bf16.msra.mxu0 0
      %2010 = vmatprep.subr.bf16.mxu0 0
      %2011 = vmatpush1.bf16.msra.mxu0 0
      %2012 = vmatprep.subr.bf16.mxu0 0
      %2013 = vmatpush1.bf16.msra.mxu0 0
      %2014 = vmatprep.subr.bf16.mxu0 0
      %2015 = vmatpush1.bf16.msra.mxu0 0
      %2016 = vmatprep.subr.bf16.mxu0 0
      %2017 = vmatpush1.bf16.msra.mxu0 0
      %2018 = vmatprep.subr.bf16.mxu0 0
      %2019 = vmatpush1.bf16.msra.mxu0 0
      %2020 = vmatprep.subr.bf16.mxu0 0
      %2021 = vmatpush1.bf16.msra.mxu0 0
      %2022 = vmatprep.subr.bf16.mxu0 0
      %2023 = vmatpush1.bf16.msra.mxu0 0
      %2024 = vmatprep.subr.bf16.mxu0 0
      %2025 = vmatpush1.bf16.msra.mxu0 0
      %2026 = vmatprep.subr.bf16.mxu0 0
      %2027 = vmatpush1.bf16.msra.mxu0 0
      %2028 = vmatprep.subr.bf16.mxu0 0
      %2029 = vmatpush1.bf16.msra.mxu0 0
      %2030 = vmatprep.subr.bf16.mxu0 0
      %2031 = vmatpush1.bf16.msra.mxu0 0
      %2032 = vmatprep.subr.bf16.mxu0 0
      %2033 = vmatpush1.bf16.msra.mxu0 0
      %2034 = vmatprep.subr.bf16.mxu0 0
      %2035 = vmatpush1.bf16.msra.mxu0 0
      %2036 = vmatprep.mubr.bf16.mxu0 0
      %2037 = vmatmul.mubr.bf16.gmra.mrb[0].mxu0 %v2002
      %v2038 = vpop.f32.mrb[0].mxu0
      %v2039 = vadd.f32 0.0, %v2038
      %v2040 = vpop.f32.mrb[0].mxu0
      %v2041 = vpop.f32.mrb[0].mxu0
      %v2042 = vpop.f32.mrb[0].mxu0
      %2043 = vdwg.mxu0
      %v2045 = vrot.slane %v2039, 4
      %v2047 = vadd.f32 %v1529, %v2045
      %v2048 = vxor.u32 %v2047, 2147483648
      %v2049 = vmul.f32 %v2048, 1.442695
      %v2050 = vpow.pop %v2049
      %v2051 = vadd.f32 %v2050, 1.0
      %v2052 = vrcp.pop %v2051
      %v2053 = vmul.f32 1.0, %v2052
      %v2054 = vtanh.pop %v2047
      %v2056 = vrot.slane %v1989, 6
      %v2058 = vmul.f32 %v2053, %v2056
      %2060 = vrot.lane.b32.xlu0 %v2054, 104
      %v2061 = vpop.permute.xlu0 %2060
      %v2063 = vmul.f32 %v2053, %v2061
      %2065 = vrot.lane.b32.xlu0 %v2063, 8
      %v2066 = vpop.permute.xlu0 %2065
      %v2068 = vadd.f32 %v2058, %v2066
      %v2069 = vtanh.pop %v2068
      %2071 = vrot.lane.b32.xlu0 %v2069, 8
      %v2072 = vpop.permute.xlu0 %2071
      %v2074 = vmul.f32 %v2053, %v2072
      %v2075 = vpack.c.bf16 %v2074, %v2074
      %v2077 = vrot.slane %v2075, 2
      %2078 = vrot.lane.b32.xlu0 %v2077, 112
      %v2079 = vpop.permute.xlu0 %2078
      %v2081 = vsel %vm1215, %v2079, 0
      %2083 = vmatprep.subr.bf16.mxu0 0
      %2084 = vmatpush1.bf16.msra.mxu0 %v1535
      %2085 = vmatprep.subr.bf16.mxu0 0
      %2086 = vmatpush1.bf16.msra.mxu0 0
      %2087 = vmatprep.subr.bf16.mxu0 0
      %2088 = vmatpush1.bf16.msra.mxu0 0
      %2089 = vmatprep.subr.bf16.mxu0 0
      %2090 = vmatpush1.bf16.msra.mxu0 0
      %2091 = vmatprep.subr.bf16.mxu0 0
      %2092 = vmatpush1.bf16.msra.mxu0 0
      %2093 = vmatprep.subr.bf16.mxu0 0
      %2094 = vmatpush1.bf16.msra.mxu0 0
      %2095 = vmatprep.subr.bf16.mxu0 0
      %2096 = vmatpush1.bf16.msra.mxu0 0
      %2097 = vmatprep.subr.bf16.mxu0 0
      %2098 = vmatpush1.bf16.msra.mxu0 0
      %2099 = vmatprep.subr.bf16.mxu0 0
      %2100 = vmatpush1.bf16.msra.mxu0 0
      %2101 = vmatprep.subr.bf16.mxu0 0
      %2102 = vmatpush1.bf16.msra.mxu0 0
      %2103 = vmatprep.subr.bf16.mxu0 0
      %2104 = vmatpush1.bf16.msra.mxu0 0
      %2105 = vmatprep.subr.bf16.mxu0 0
      %2106 = vmatpush1.bf16.msra.mxu0 0
      %2107 = vmatprep.subr.bf16.mxu0 0
      %2108 = vmatpush1.bf16.msra.mxu0 0
      %2109 = vmatprep.subr.bf16.mxu0 0
      %2110 = vmatpush1.bf16.msra.mxu0 0
      %2111 = vmatprep.subr.bf16.mxu0 0
      %2112 = vmatpush1.bf16.msra.mxu0 0
      %2113 = vmatprep.subr.bf16.mxu0 0
      %2114 = vmatpush1.bf16.msra.mxu0 0
      %2115 = vmatprep.mubr.bf16.mxu0 0
      %2116 = vmatmul.mubr.bf16.gmra.mrb[0].mxu0 %v2081
      %v2117 = vpop.f32.mrb[0].mxu0
      %v2118 = vadd.f32 0.0, %v2117
      %v2119 = vpop.f32.mrb[0].mxu0
      %v2120 = vpop.f32.mrb[0].mxu0
      %v2121 = vpop.f32.mrb[0].mxu0
      %2122 = vdwg.mxu0
      %v2124 = vrot.slane %v2118, 2
      %v2126 = vadd.f32 %v1529, %v2124
      %v2127 = vxor.u32 %v2126, 2147483648
      %v2128 = vmul.f32 %v2127, 1.442695
      %v2129 = vpow.pop %v2128
      %v2130 = vadd.f32 %v2129, 1.0
      %v2131 = vrcp.pop %v2130
      %v2132 = vmul.f32 1.0, %v2131
      %v2133 = vtanh.pop %v2126
      %v2135 = vrot.slane %v2068, 6
      %v2137 = vmul.f32 %v2132, %v2135
      %2139 = vrot.lane.b32.xlu0 %v2133, 104
      %v2140 = vpop.permute.xlu0 %2139
      %v2142 = vmul.f32 %v2132, %v2140
      %2144 = vrot.lane.b32.xlu0 %v2142, 8
      %v2145 = vpop.permute.xlu0 %2144
      %v2147 = vadd.f32 %v2137, %v2145
      %v2148 = vtanh.pop %v2147
      %2150 = vrot.lane.b32.xlu0 %v2148, 8
      %v2151 = vpop.permute.xlu0 %2150
      %v2153 = vmul.f32 %v2132, %v2151
      %v2154 = vsel %vm237, %v1605, %v1683
      %v2155 = vsel %vm1276, %v2154, %v1762
      %vm2156 = vcmask 1045504
      %v2157 = vsel %vm2156, %v2155, %v1841
      %v2158 = vsel %vm237, %v1917, %v1995
      %v2159 = vsel %vm1276, %v2158, %v2074
      %v2160 = vsel %vm2156, %v2159, %v2153
      %2163 = vrot.lane.b32.xlu0 %v2157, 112
      %v2164 = vpop.permute.xlu0 %2163
      %2165 = vrot.lane.b32.xlu0 %v2160, 112
      %v2166 = vpop.permute.xlu0 %2165
      %s2169 = scalar_lea.vmem %s9, %s1526
      %2170 = vst.msk [vmem:[%s2169] sm:$0xff] %vm1215, %v2164
      %2171 = vst.msk [vmem:[%s2169 + $0x8] sm:$0xff] %vm1215, %v2166
      %v2173 = vrot.slane %v2153, 6
      %2174 = vrot.lane.b32.xlu0 %v2173, 112
      %v2175 = vpop.permute.xlu0 %2174
      %v2178 = vrot.slane %v2147, 6
      %2179 = vrot.lane.b32.xlu0 %v2178, 120
      %v2180 = vpop.permute.xlu0 %2179
    $region73: #{n_vcnn_lstm_forward.4} parent=1 // loop_footer
      %s1523 = sadd.s32 1, %s1519
    $region74: #{n_vcnn_lstm_forward.4} parent=1 // loop_footer_branch
      %1518 = sbr.rel target = $region70
    $region75: #{n_vcnn_lstm_forward.4} parent=1 // loop_exit
      _
    %s2182 = scalar_lea.vmem [#allocation15], 2
    %2183 = vst.msk [vmem:[%s2182] sm:$0x3] %vm1144, %v1524
    %s2184 = scalar_lea.vmem [#allocation16], 2
    %2185 = vst.msk [vmem:[%s2184] sm:$0x3] %vm1144, %v1525
    // Predicated region
    $region76: #{n_vcnn_lstm_forward.4} parent=1 // pred_check
      _
    $region77: #{n_vcnn_lstm_forward.4} parent=1 // pred_check_branch
      %2187 = sbr.rel (0) target = $region79
    $region78: #{n_vcnn_lstm_forward.4} parent=1 // pred_region
      _
    $region79: #{n_vcnn_lstm_forward.4} parent=1 // pred_fallthru
      _
    // Predicated region
    $region80: #{n_vcnn_lstm_forward.4} parent=1 // pred_check
      _
    $region81: #{n_vcnn_lstm_forward.4} parent=1 // pred_check_branch
      %2189 = sbr.rel (0) target = $region83
    $region82: #{n_vcnn_lstm_forward.4} parent=1 // pred_region
      %s2191 = ssub.s32 64, 64
      %2192 = vsyncadd [#allocation6], %s2191
      %s2193 = sshll.u32 [#allocation15], 4
      %s2194 = int_to_ptr.vmem [resolvable:$true] %s2193
      %2199 = dma.vmem_to_hbm [thread:$0]  %s2194, 64, %s10, [#allocation6], 32, 32, 2
    $region83: #{n_vcnn_lstm_forward.4} parent=1 // pred_fallthru
      _
    // Predicated region
    $region84: #{n_vcnn_lstm_forward.4} parent=1 // pred_check
      _
    $region85: #{n_vcnn_lstm_forward.4} parent=1 // pred_check_branch
      %2201 = sbr.rel (0) target = $region87
    $region86: #{n_vcnn_lstm_forward.4} parent=1 // pred_region
      %s2203 = ssub.s32 64, 64
      %2204 = vsyncadd [#allocation17], %s2203
      %s2205 = sshll.u32 [#allocation16], 4
      %s2206 = int_to_ptr.vmem [resolvable:$true] %s2205
      %2211 = dma.vmem_to_hbm [thread:$0]  %s2206, 64, %s11, [#allocation17], 32, 32, 2
    $region87: #{n_vcnn_lstm_forward.4} parent=1 // pred_fallthru
      _
    // Predicated region
    $region88: #{n_vcnn_lstm_forward.4} parent=1 // pred_check
      _
    $region89: #{n_vcnn_lstm_forward.4} parent=1 // pred_check_branch
      %2213 = sbr.rel (0) target = $region91
    $region90: #{n_vcnn_lstm_forward.4} parent=1 // pred_region
      _
    $region91: #{n_vcnn_lstm_forward.4} parent=1 // pred_fallthru
      _
    // Predicated region
    $region92: #{n_vcnn_lstm_forward.4} parent=1 // pred_check
      _
    $region93: #{n_vcnn_lstm_forward.4} parent=1 // pred_check_branch
      %2215 = sbr.rel (0) target = $region95
    $region94: #{n_vcnn_lstm_forward.4} parent=1 // pred_region
      %2216 = dma.done [#allocation6], 64
    $region95: #{n_vcnn_lstm_forward.4} parent=1 // pred_fallthru
      _
    // Predicated region
    $region96: #{n_vcnn_lstm_forward.4} parent=1 // pred_check
      _
    $region97: #{n_vcnn_lstm_forward.4} parent=1 // pred_check_branch
      %2218 = sbr.rel (0) target = $region99
    $region98: #{n_vcnn_lstm_forward.4} parent=1 // pred_region
      %2219 = dma.done [#allocation17], 64
    $region99: #{n_vcnn_lstm_forward.4} parent=1 // pred_fallthru
      _
    %2220 = vsyncpa [#allocation5], 1
    %2221 = vsyncpa [#allocation8], 1
    %2222 = vsyncpa [#allocation11], 1
    %2223 = vsyncpa [#allocation14], 1
    %2224 = vsyncpa [#allocation6], 1
    %2225 = vsyncpa [#allocation17], 1

// kernel: n_vcnn_lstm_forward.5
$region0: #{n_vcnn_lstm_forward.5}
  #allocation0 [shape = 'u32[]', space=smem, size = 0x4, offset = 0x4, fixed_abs, tag = 'smem constant byte address 0x4 - core index']
  #allocation1 [shape = 'u32[144,128]{1,0:T(1,128)}', space=vmem, size = 0x12000, scoped, tag = 'internal scratch']
  %s0 = inlined_call_operand.vmem [shape: f32[2,1280], index: 0, kind: input, shape index: {}]
  %s1 = inlined_call_operand.hbm [shape: bf16[1280,512], index: 1, kind: input, shape index: {}]
  %s2 = inlined_call_operand.hbm [shape: f32[1,512], index: 2, kind: input, shape index: {}]
  %s3 = inlined_call_operand.hbm [shape: f32[2,512], index: 3, kind: output, shape index: {}]
  %s4 = sld [smem:[#allocation0]]
  $region30: #{n_vcnn_lstm_forward.5} parent=0
    _
  %s6 = ssub.s32 1, %s4
  %s7 = scalar_select 0, %s6, %s4
  $region1: #{n_vcnn_lstm_forward.5} parent=0
    #allocation2 [shape = 'u8[1310720]{0}', space=vmem, size = 0x140000, scoped, tag = 'input window, operand 1, single buffered']
    #allocation3 [shape = 's32[1]{0}', space=sflag, size = 0x4, scoped, tag = 'scoped memory for n_vcnn_lstm_forward.5']
    #allocation4 [shape = 's32[1]{0}', space=sflag, size = 0x4, scoped, tag = 'scoped memory for n_vcnn_lstm_forward.5']
    #allocation5 [shape = 'u8[2048]{0}', space=vmem, size = 0x800, scoped, tag = 'input window, operand 2, single buffered']
    #allocation6 [shape = 's32[1]{0}', space=sflag, size = 0x4, scoped, tag = 'scoped memory for n_vcnn_lstm_forward.5']
    #allocation7 [shape = 'u8[4096]{0}', space=vmem, size = 0x1000, scoped, tag = 'output window, operand 0, single buffered']
    %8 = vsyncpa [#allocation3], 0
    %9 = vsyncpa [#allocation6], 0
    %10 = vsyncpa [#allocation4], 0
    // Predicated region
    $region2: #{n_vcnn_lstm_forward.5} parent=1 // pred_check
      _
    $region3: #{n_vcnn_lstm_forward.5} parent=1 // pred_check_branch
      %12 = sbr.rel (0) target = $region5
    $region4: #{n_vcnn_lstm_forward.5} parent=1 // pred_region
      _
    $region5: #{n_vcnn_lstm_forward.5} parent=1 // pred_fallthru
      _
    // Predicated region
    $region6: #{n_vcnn_lstm_forward.5} parent=1 // pred_check
      _
    $region7: #{n_vcnn_lstm_forward.5} parent=1 // pred_check_branch
      %14 = sbr.rel (0) target = $region9
    $region8: #{n_vcnn_lstm_forward.5} parent=1 // pred_region
      %s16 = ssub.s32 40960, 40960
      %17 = vsyncadd [#allocation3], %s16
      %s18 = sshll.u32 [#allocation2], 4
      %s19 = int_to_ptr.vmem [resolvable:$true] %s18
      %24 = dma.hbm_to_vmem [thread:$0]  %s1, 40960, %s19, [#allocation3], 256, 256, 16
    $region9: #{n_vcnn_lstm_forward.5} parent=1 // pred_fallthru
      _
    // Predicated region
    $region10: #{n_vcnn_lstm_forward.5} parent=1 // pred_check
      _
    $region11: #{n_vcnn_lstm_forward.5} parent=1 // pred_check_branch
      %26 = sbr.rel (0) target = $region13
    $region12: #{n_vcnn_lstm_forward.5} parent=1 // pred_region
      %s28 = ssub.s32 64, 64
      %29 = vsyncadd [#allocation6], %s28
      %s31 = sshll.u32 [#allocation5], 4
      %s32 = int_to_ptr.vmem [resolvable:$true] %s31
      %34 = dma.hbm_to_vmem [thread:$0]  %s2, 64, %s32, [#allocation6]
    $region13: #{n_vcnn_lstm_forward.5} parent=1 // pred_fallthru
      _
    // Predicated region
    $region14: #{n_vcnn_lstm_forward.5} parent=1 // pred_check
      _
    $region15: #{n_vcnn_lstm_forward.5} parent=1 // pred_check_branch
      %36 = sbr.rel (0) target = $region17
    $region16: #{n_vcnn_lstm_forward.5} parent=1 // pred_region
      %37 = dma.done [#allocation3], 40960
    $region17: #{n_vcnn_lstm_forward.5} parent=1 // pred_fallthru
      _
    // Predicated region
    $region18: #{n_vcnn_lstm_forward.5} parent=1 // pred_check
      _
    $region19: #{n_vcnn_lstm_forward.5} parent=1 // pred_check_branch
      %39 = sbr.rel (0) target = $region21
    $region20: #{n_vcnn_lstm_forward.5} parent=1 // pred_region
      %40 = dma.done [#allocation6], 64
    $region21: #{n_vcnn_lstm_forward.5} parent=1 // pred_fallthru
      _
    %v41 = vld [vmem:[%s0] sm:$0xff]
    %v42 = vld [vmem:[%s0 + $0x8] sm:$0xff]
    %v43 = vld [vmem:[%s0 + $0x10] sm:$0xf]
    %v47 = vcombine.high %v41, %v41
    %v49 = vunpack.c.l.s4 1983009808
    %v50 = vunpack.c.0.s8 %v49
    %v51 = vlaneseq
    %v52 = vshrl.u32 %v51, 7
    %v53 = vsub.s32 %v50, %v52
    %v54 = vrot.slane %v41, %v53
    %v56 = vunpack.c.l.s4 1983009808
    %v57 = vunpack.c.0.s8 %v56
    %v58 = vlaneseq
    %v59 = vshrl.u32 %v58, 7
    %v60 = vsub.s32 %v57, %v59
    %v61 = vrot.slane %v47, %v60
    %v62 = vcombine.high %v54, %v54
    %v63 = vcombine.high %v61, %v61
    %v64 = vcombine.high %v42, %v42
    %v66 = vunpack.c.l.s4 1983009808
    %v67 = vunpack.c.0.s8 %v66
    %v68 = vlaneseq
    %v69 = vshrl.u32 %v68, 7
    %v70 = vsub.s32 %v67, %v69
    %v71 = vrot.slane %v42, %v70
    %v73 = vunpack.c.l.s4 1983009808
    %v74 = vunpack.c.0.s8 %v73
    %v75 = vlaneseq
    %v76 = vshrl.u32 %v75, 7
    %v77 = vsub.s32 %v74, %v76
    %v78 = vrot.slane %v64, %v77
    %v79 = vcombine.high %v71, %v71
    %v80 = vcombine.high %v78, %v78
    %v82 = vunpack.c.l.s4 1983009808
    %v83 = vunpack.c.0.s8 %v82
    %v84 = vlaneseq
    %v85 = vshrl.u32 %v84, 7
    %v86 = vsub.s32 %v83, %v85
    %v87 = vrot.slane %v43, %v86
    %v88 = vcombine.high %v87, %v87
    %v99 = vpack.c.bf16 %v54, %v54
    %v100 = vpack.c.bf16 %v62, %v62
    %v101 = vpack.c.bf16 %v61, %v61
    %v102 = vpack.c.bf16 %v63, %v63
    %v103 = vpack.c.bf16 %v71, %v71
    %v104 = vpack.c.bf16 %v79, %v79
    %v105 = vpack.c.bf16 %v78, %v78
    %v106 = vpack.c.bf16 %v80, %v80
    %v107 = vpack.c.bf16 %v87, %v87
    %v108 = vpack.c.bf16 %v88, %v88
    %v109 = vld [vmem:[#allocation2] sm:$0xff]
    %v110 = vld [vmem:[#allocation2 + $0x8] sm:$0xff]
    %v111 = vld [vmem:[#allocation2 + $0x10] sm:$0xff]
    %v112 = vld [vmem:[#allocation2 + $0x18] sm:$0xff]
    %v113 = vld [vmem:[#allocation2 + $0x20] sm:$0xff]
    %v114 = vld [vmem:[#allocation2 + $0x28] sm:$0xff]
    %v115 = vld [vmem:[#allocation2 + $0x30] sm:$0xff]
    %v116 = vld [vmem:[#allocation2 + $0x38] sm:$0xff]
    %v117 = vld [vmem:[#allocation2 + $0x40] sm:$0xff]
    %v118 = vld [vmem:[#allocation2 + $0x48] sm:$0xff]
    %v119 = vld [vmem:[#allocation2 + $0x50] sm:$0xff]
    %v120 = vld [vmem:[#allocation2 + $0x58] sm:$0xff]
    %v121 = vld [vmem:[#allocation2 + $0x60] sm:$0xff]
    %v122 = vld [vmem:[#allocation2 + $0x68] sm:$0xff]
    %v123 = vld [vmem:[#allocation2 + $0x70] sm:$0xff]
    %v124 = vld [vmem:[#allocation2 + $0x78] sm:$0xff]
    %v125 = vld [vmem:[#allocation2 + $0x80] sm:$0xff]
    %v126 = vld [vmem:[#allocation2 + $0x88] sm:$0xff]
    %v127 = vld [vmem:[#allocation2 + $0x90] sm:$0xff]
    %v128 = vld [vmem:[#allocation2 + $0x98] sm:$0xff]
    %v129 = vld [vmem:[#allocation2 + $0xa0] sm:$0xff]
    %v130 = vld [vmem:[#allocation2 + $0xa8] sm:$0xff]
    %v131 = vld [vmem:[#allocation2 + $0xb0] sm:$0xff]
    %v132 = vld [vmem:[#allocation2 + $0xb8] sm:$0xff]
    %v133 = vld [vmem:[#allocation2 + $0xc0] sm:$0xff]
    %v134 = vld [vmem:[#allocation2 + $0xc8] sm:$0xff]
    %v135 = vld [vmem:[#allocation2 + $0xd0] sm:$0xff]
    %v136 = vld [vmem:[#allocation2 + $0xd8] sm:$0xff]
    %v137 = vld [vmem:[#allocation2 + $0xe0] sm:$0xff]
    %v138 = vld [vmem:[#allocation2 + $0xe8] sm:$0xff]
    %v139 = vld [vmem:[#allocation2 + $0xf0] sm:$0xff]
    %v140 = vld [vmem:[#allocation2 + $0xf8] sm:$0xff]
    %v141 = vld [vmem:[#allocation2 + $0x100] sm:$0xff]
    %v142 = vld [vmem:[#allocation2 + $0x108] sm:$0xff]
    %v143 = vld [vmem:[#allocation2 + $0x110] sm:$0xff]
    %v144 = vld [vmem:[#allocation2 + $0x118] sm:$0xff]
    %v145 = vld [vmem:[#allocation2 + $0x120] sm:$0xff]
    %v146 = vld [vmem:[#allocation2 + $0x128] sm:$0xff]
    %v147 = vld [vmem:[#allocation2 + $0x130] sm:$0xff]
    %v148 = vld [vmem:[#allocation2 + $0x138] sm:$0xff]
    %v149 = vld [vmem:[#allocation2 + $0x140] sm:$0xff]
    %v150 = vld [vmem:[#allocation2 + $0x148] sm:$0xff]
    %v151 = vld [vmem:[#allocation2 + $0x150] sm:$0xff]
    %v152 = vld [vmem:[#allocation2 + $0x158] sm:$0xff]
    %v153 = vld [vmem:[#allocation2 + $0x160] sm:$0xff]
    %v154 = vld [vmem:[#allocation2 + $0x168] sm:$0xff]
    %v155 = vld [vmem:[#allocation2 + $0x170] sm:$0xff]
    %v156 = vld [vmem:[#allocation2 + $0x178] sm:$0xff]
    %v157 = vld [vmem:[#allocation2 + $0x180] sm:$0xff]
    %v158 = vld [vmem:[#allocation2 + $0x188] sm:$0xff]
    %v159 = vld [vmem:[#allocation2 + $0x190] sm:$0xff]
    %v160 = vld [vmem:[#allocation2 + $0x198] sm:$0xff]
    %v161 = vld [vmem:[#allocation2 + $0x1a0] sm:$0xff]
    %v162 = vld [vmem:[#allocation2 + $0x1a8] sm:$0xff]
    %v163 = vld [vmem:[#allocation2 + $0x1b0] sm:$0xff]
    %v164 = vld [vmem:[#allocation2 + $0x1b8] sm:$0xff]
    %v165 = vld [vmem:[#allocation2 + $0x1c0] sm:$0xff]
    %v166 = vld [vmem:[#allocation2 + $0x1c8] sm:$0xff]
    %v167 = vld [vmem:[#allocation2 + $0x1d0] sm:$0xff]
    %v168 = vld [vmem:[#allocation2 + $0x1d8] sm:$0xff]
    %v169 = vld [vmem:[#allocation2 + $0x1e0] sm:$0xff]
    %v170 = vld [vmem:[#allocation2 + $0x1e8] sm:$0xff]
    %v171 = vld [vmem:[#allocation2 + $0x1f0] sm:$0xff]
    %v172 = vld [vmem:[#allocation2 + $0x1f8] sm:$0xff]
    %v173 = vld [vmem:[#allocation2 + $0x200] sm:$0xff]
    %v174 = vld [vmem:[#allocation2 + $0x208] sm:$0xff]
    %v175 = vld [vmem:[#allocation2 + $0x210] sm:$0xff]
    %v176 = vld [vmem:[#allocation2 + $0x218] sm:$0xff]
    %v177 = vld [vmem:[#allocation2 + $0x220] sm:$0xff]
    %v178 = vld [vmem:[#allocation2 + $0x228] sm:$0xff]
    %v179 = vld [vmem:[#allocation2 + $0x230] sm:$0xff]
    %v180 = vld [vmem:[#allocation2 + $0x238] sm:$0xff]
    %v181 = vld [vmem:[#allocation2 + $0x240] sm:$0xff]
    %v182 = vld [vmem:[#allocation2 + $0x248] sm:$0xff]
    %v183 = vld [vmem:[#allocation2 + $0x250] sm:$0xff]
    %v184 = vld [vmem:[#allocation2 + $0x258] sm:$0xff]
    %v185 = vld [vmem:[#allocation2 + $0x260] sm:$0xff]
    %v186 = vld [vmem:[#allocation2 + $0x268] sm:$0xff]
    %v187 = vld [vmem:[#allocation2 + $0x270] sm:$0xff]
    %v188 = vld [vmem:[#allocation2 + $0x278] sm:$0xff]
    %v189 = vld [vmem:[#allocation2 + $0x280] sm:$0xff]
    %v190 = vld [vmem:[#allocation2 + $0x288] sm:$0xff]
    %v191 = vld [vmem:[#allocation2 + $0x290] sm:$0xff]
    %v192 = vld [vmem:[#allocation2 + $0x298] sm:$0xff]
    %v193 = vld [vmem:[#allocation2 + $0x2a0] sm:$0xff]
    %v194 = vld [vmem:[#allocation2 + $0x2a8] sm:$0xff]
    %v195 = vld [vmem:[#allocation2 + $0x2b0] sm:$0xff]
    %v196 = vld [vmem:[#allocation2 + $0x2b8] sm:$0xff]
    %v197 = vld [vmem:[#allocation2 + $0x2c0] sm:$0xff]
    %v198 = vld [vmem:[#allocation2 + $0x2c8] sm:$0xff]
    %v199 = vld [vmem:[#allocation2 + $0x2d0] sm:$0xff]
    %v200 = vld [vmem:[#allocation2 + $0x2d8] sm:$0xff]
    %v201 = vld [vmem:[#allocation2 + $0x2e0] sm:$0xff]
    %v202 = vld [vmem:[#allocation2 + $0x2e8] sm:$0xff]
    %v203 = vld [vmem:[#allocation2 + $0x2f0] sm:$0xff]
    %v204 = vld [vmem:[#allocation2 + $0x2f8] sm:$0xff]
    %v205 = vld [vmem:[#allocation2 + $0x300] sm:$0xff]
    %v206 = vld [vmem:[#allocation2 + $0x308] sm:$0xff]
    %v207 = vld [vmem:[#allocation2 + $0x310] sm:$0xff]
    %v208 = vld [vmem:[#allocation2 + $0x318] sm:$0xff]
    %v209 = vld [vmem:[#allocation2 + $0x320] sm:$0xff]
    %v210 = vld [vmem:[#allocation2 + $0x328] sm:$0xff]
    %v211 = vld [vmem:[#allocation2 + $0x330] sm:$0xff]
    %v212 = vld [vmem:[#allocation2 + $0x338] sm:$0xff]
    %v213 = vld [vmem:[#allocation2 + $0x340] sm:$0xff]
    %v214 = vld [vmem:[#allocation2 + $0x348] sm:$0xff]
    %v215 = vld [vmem:[#allocation2 + $0x350] sm:$0xff]
    %v216 = vld [vmem:[#allocation2 + $0x358] sm:$0xff]
    %v217 = vld [vmem:[#allocation2 + $0x360] sm:$0xff]
    %v218 = vld [vmem:[#allocation2 + $0x368] sm:$0xff]
    %v219 = vld [vmem:[#allocation2 + $0x370] sm:$0xff]
    %v220 = vld [vmem:[#allocation2 + $0x378] sm:$0xff]
    %v221 = vld [vmem:[#allocation2 + $0x380] sm:$0xff]
    %v222 = vld [vmem:[#allocation2 + $0x388] sm:$0xff]
    %v223 = vld [vmem:[#allocation2 + $0x390] sm:$0xff]
    %v224 = vld [vmem:[#allocation2 + $0x398] sm:$0xff]
    %v225 = vld [vmem:[#allocation2 + $0x3a0] sm:$0xff]
    %v226 = vld [vmem:[#allocation2 + $0x3a8] sm:$0xff]
    %v227 = vld [vmem:[#allocation2 + $0x3b0] sm:$0xff]
    %v228 = vld [vmem:[#allocation2 + $0x3b8] sm:$0xff]
    %v229 = vld [vmem:[#allocation2 + $0x3c0] sm:$0xff]
    %v230 = vld [vmem:[#allocation2 + $0x3c8] sm:$0xff]
    %v231 = vld [vmem:[#allocation2 + $0x3d0] sm:$0xff]
    %v232 = vld [vmem:[#allocation2 + $0x3d8] sm:$0xff]
    %v233 = vld [vmem:[#allocation2 + $0x3e0] sm:$0xff]
    %v234 = vld [vmem:[#allocation2 + $0x3e8] sm:$0xff]
    %v235 = vld [vmem:[#allocation2 + $0x3f0] sm:$0xff]
    %v236 = vld [vmem:[#allocation2 + $0x3f8] sm:$0xff]
    %v237 = vld [vmem:[#allocation2 + $0x400] sm:$0xff]
    %v238 = vld [vmem:[#allocation2 + $0x408] sm:$0xff]
    %v239 = vld [vmem:[#allocation2 + $0x410] sm:$0xff]
    %v240 = vld [vmem:[#allocation2 + $0x418] sm:$0xff]
    %v241 = vld [vmem:[#allocation2 + $0x420] sm:$0xff]
    %v242 = vld [vmem:[#allocation2 + $0x428] sm:$0xff]
    %v243 = vld [vmem:[#allocation2 + $0x430] sm:$0xff]
    %v244 = vld [vmem:[#allocation2 + $0x438] sm:$0xff]
    %v245 = vld [vmem:[#allocation2 + $0x440] sm:$0xff]
    %v246 = vld [vmem:[#allocation2 + $0x448] sm:$0xff]
    %v247 = vld [vmem:[#allocation2 + $0x450] sm:$0xff]
    %v248 = vld [vmem:[#allocation2 + $0x458] sm:$0xff]
    %v249 = vld [vmem:[#allocation2 + $0x460] sm:$0xff]
    %v250 = vld [vmem:[#allocation2 + $0x468] sm:$0xff]
    %v251 = vld [vmem:[#allocation2 + $0x470] sm:$0xff]
    %v252 = vld [vmem:[#allocation2 + $0x478] sm:$0xff]
    %v253 = vld [vmem:[#allocation2 + $0x480] sm:$0xff]
    %v254 = vld [vmem:[#allocation2 + $0x488] sm:$0xff]
    %v255 = vld [vmem:[#allocation2 + $0x490] sm:$0xff]
    %v256 = vld [vmem:[#allocation2 + $0x498] sm:$0xff]
    %v257 = vld [vmem:[#allocation2 + $0x4a0] sm:$0xff]
    %v258 = vld [vmem:[#allocation2 + $0x4a8] sm:$0xff]
    %v259 = vld [vmem:[#allocation2 + $0x4b0] sm:$0xff]
    %v260 = vld [vmem:[#allocation2 + $0x4b8] sm:$0xff]
    %v261 = vld [vmem:[#allocation2 + $0x4c0] sm:$0xff]
    %v262 = vld [vmem:[#allocation2 + $0x4c8] sm:$0xff]
    %v263 = vld [vmem:[#allocation2 + $0x4d0] sm:$0xff]
    %v264 = vld [vmem:[#allocation2 + $0x4d8] sm:$0xff]
    %v265 = vld [vmem:[#allocation2 + $0x4e0] sm:$0xff]
    %v266 = vld [vmem:[#allocation2 + $0x4e8] sm:$0xff]
    %v267 = vld [vmem:[#allocation2 + $0x4f0] sm:$0xff]
    %v268 = vld [vmem:[#allocation2 + $0x4f8] sm:$0xff]
    %v269 = vld [vmem:[#allocation2 + $0x500] sm:$0xff]
    %v270 = vld [vmem:[#allocation2 + $0x508] sm:$0xff]
    %v271 = vld [vmem:[#allocation2 + $0x510] sm:$0xff]
    %v272 = vld [vmem:[#allocation2 + $0x518] sm:$0xff]
    %v273 = vld [vmem:[#allocation2 + $0x520] sm:$0xff]
    %v274 = vld [vmem:[#allocation2 + $0x528] sm:$0xff]
    %v275 = vld [vmem:[#allocation2 + $0x530] sm:$0xff]
    %v276 = vld [vmem:[#allocation2 + $0x538] sm:$0xff]
    %v277 = vld [vmem:[#allocation2 + $0x540] sm:$0xff]
    %v278 = vld [vmem:[#allocation2 + $0x548] sm:$0xff]
    %v279 = vld [vmem:[#allocation2 + $0x550] sm:$0xff]
    %v280 = vld [vmem:[#allocation2 + $0x558] sm:$0xff]
    %v281 = vld [vmem:[#allocation2 + $0x560] sm:$0xff]
    %v282 = vld [vmem:[#allocation2 + $0x568] sm:$0xff]
    %v283 = vld [vmem:[#allocation2 + $0x570] sm:$0xff]
    %v284 = vld [vmem:[#allocation2 + $0x578] sm:$0xff]
    %v285 = vld [vmem:[#allocation2 + $0x580] sm:$0xff]
    %v286 = vld [vmem:[#allocation2 + $0x588] sm:$0xff]
    %v287 = vld [vmem:[#allocation2 + $0x590] sm:$0xff]
    %v288 = vld [vmem:[#allocation2 + $0x598] sm:$0xff]
    %v289 = vld [vmem:[#allocation2 + $0x5a0] sm:$0xff]
    %v290 = vld [vmem:[#allocation2 + $0x5a8] sm:$0xff]
    %v291 = vld [vmem:[#allocation2 + $0x5b0] sm:$0xff]
    %v292 = vld [vmem:[#allocation2 + $0x5b8] sm:$0xff]
    %v293 = vld [vmem:[#allocation2 + $0x5c0] sm:$0xff]
    %v294 = vld [vmem:[#allocation2 + $0x5c8] sm:$0xff]
    %v295 = vld [vmem:[#allocation2 + $0x5d0] sm:$0xff]
    %v296 = vld [vmem:[#allocation2 + $0x5d8] sm:$0xff]
    %v297 = vld [vmem:[#allocation2 + $0x5e0] sm:$0xff]
    %v298 = vld [vmem:[#allocation2 + $0x5e8] sm:$0xff]
    %v299 = vld [vmem:[#allocation2 + $0x5f0] sm:$0xff]
    %v300 = vld [vmem:[#allocation2 + $0x5f8] sm:$0xff]
    %v301 = vld [vmem:[#allocation2 + $0x600] sm:$0xff]
    %v302 = vld [vmem:[#allocation2 + $0x608] sm:$0xff]
    %v303 = vld [vmem:[#allocation2 + $0x610] sm:$0xff]
    %v304 = vld [vmem:[#allocation2 + $0x618] sm:$0xff]
    %v305 = vld [vmem:[#allocation2 + $0x620] sm:$0xff]
    %v306 = vld [vmem:[#allocation2 + $0x628] sm:$0xff]
    %v307 = vld [vmem:[#allocation2 + $0x630] sm:$0xff]
    %v308 = vld [vmem:[#allocation2 + $0x638] sm:$0xff]
    %v309 = vld [vmem:[#allocation2 + $0x640] sm:$0xff]
    %v310 = vld [vmem:[#allocation2 + $0x648] sm:$0xff]
    %v311 = vld [vmem:[#allocation2 + $0x650] sm:$0xff]
    %v312 = vld [vmem:[#allocation2 + $0x658] sm:$0xff]
    %v313 = vld [vmem:[#allocation2 + $0x660] sm:$0xff]
    %v314 = vld [vmem:[#allocation2 + $0x668] sm:$0xff]
    %v315 = vld [vmem:[#allocation2 + $0x670] sm:$0xff]
    %v316 = vld [vmem:[#allocation2 + $0x678] sm:$0xff]
    %v317 = vld [vmem:[#allocation2 + $0x680] sm:$0xff]
    %v318 = vld [vmem:[#allocation2 + $0x688] sm:$0xff]
    %v319 = vld [vmem:[#allocation2 + $0x690] sm:$0xff]
    %v320 = vld [vmem:[#allocation2 + $0x698] sm:$0xff]
    %v321 = vld [vmem:[#allocation2 + $0x6a0] sm:$0xff]
    %v322 = vld [vmem:[#allocation2 + $0x6a8] sm:$0xff]
    %v323 = vld [vmem:[#allocation2 + $0x6b0] sm:$0xff]
    %v324 = vld [vmem:[#allocation2 + $0x6b8] sm:$0xff]
    %v325 = vld [vmem:[#allocation2 + $0x6c0] sm:$0xff]
    %v326 = vld [vmem:[#allocation2 + $0x6c8] sm:$0xff]
    %v327 = vld [vmem:[#allocation2 + $0x6d0] sm:$0xff]
    %v328 = vld [vmem:[#allocation2 + $0x6d8] sm:$0xff]
    %v329 = vld [vmem:[#allocation2 + $0x6e0] sm:$0xff]
    %v330 = vld [vmem:[#allocation2 + $0x6e8] sm:$0xff]
    %v331 = vld [vmem:[#allocation2 + $0x6f0] sm:$0xff]
    %v332 = vld [vmem:[#allocation2 + $0x6f8] sm:$0xff]
    %v333 = vld [vmem:[#allocation2 + $0x700] sm:$0xff]
    %v334 = vld [vmem:[#allocation2 + $0x708] sm:$0xff]
    %v335 = vld [vmem:[#allocation2 + $0x710] sm:$0xff]
    %v336 = vld [vmem:[#allocation2 + $0x718] sm:$0xff]
    %v337 = vld [vmem:[#allocation2 + $0x720] sm:$0xff]
    %v338 = vld [vmem:[#allocation2 + $0x728] sm:$0xff]
    %v339 = vld [vmem:[#allocation2 + $0x730] sm:$0xff]
    %v340 = vld [vmem:[#allocation2 + $0x738] sm:$0xff]
    %v341 = vld [vmem:[#allocation2 + $0x740] sm:$0xff]
    %v342 = vld [vmem:[#allocation2 + $0x748] sm:$0xff]
    %v343 = vld [vmem:[#allocation2 + $0x750] sm:$0xff]
    %v344 = vld [vmem:[#allocation2 + $0x758] sm:$0xff]
    %v345 = vld [vmem:[#allocation2 + $0x760] sm:$0xff]
    %v346 = vld [vmem:[#allocation2 + $0x768] sm:$0xff]
    %v347 = vld [vmem:[#allocation2 + $0x770] sm:$0xff]
    %v348 = vld [vmem:[#allocation2 + $0x778] sm:$0xff]
    %v349 = vld [vmem:[#allocation2 + $0x780] sm:$0xff]
    %v350 = vld [vmem:[#allocation2 + $0x788] sm:$0xff]
    %v351 = vld [vmem:[#allocation2 + $0x790] sm:$0xff]
    %v352 = vld [vmem:[#allocation2 + $0x798] sm:$0xff]
    %v353 = vld [vmem:[#allocation2 + $0x7a0] sm:$0xff]
    %v354 = vld [vmem:[#allocation2 + $0x7a8] sm:$0xff]
    %v355 = vld [vmem:[#allocation2 + $0x7b0] sm:$0xff]
    %v356 = vld [vmem:[#allocation2 + $0x7b8] sm:$0xff]
    %v357 = vld [vmem:[#allocation2 + $0x7c0] sm:$0xff]
    %v358 = vld [vmem:[#allocation2 + $0x7c8] sm:$0xff]
    %v359 = vld [vmem:[#allocation2 + $0x7d0] sm:$0xff]
    %v360 = vld [vmem:[#allocation2 + $0x7d8] sm:$0xff]
    %v361 = vld [vmem:[#allocation2 + $0x7e0] sm:$0xff]
    %v362 = vld [vmem:[#allocation2 + $0x7e8] sm:$0xff]
    %v363 = vld [vmem:[#allocation2 + $0x7f0] sm:$0xff]
    %v364 = vld [vmem:[#allocation2 + $0x7f8] sm:$0xff]
    %v365 = vld [vmem:[#allocation2 + $0x800] sm:$0xff]
    %v366 = vld [vmem:[#allocation2 + $0x808] sm:$0xff]
    %v367 = vld [vmem:[#allocation2 + $0x810] sm:$0xff]
    %v368 = vld [vmem:[#allocation2 + $0x818] sm:$0xff]
    %v369 = vld [vmem:[#allocation2 + $0x820] sm:$0xff]
    %v370 = vld [vmem:[#allocation2 + $0x828] sm:$0xff]
    %v371 = vld [vmem:[#allocation2 + $0x830] sm:$0xff]
    %v372 = vld [vmem:[#allocation2 + $0x838] sm:$0xff]
    %v373 = vld [vmem:[#allocation2 + $0x840] sm:$0xff]
    %v374 = vld [vmem:[#allocation2 + $0x848] sm:$0xff]
    %v375 = vld [vmem:[#allocation2 + $0x850] sm:$0xff]
    %v376 = vld [vmem:[#allocation2 + $0x858] sm:$0xff]
    %v377 = vld [vmem:[#allocation2 + $0x860] sm:$0xff]
    %v378 = vld [vmem:[#allocation2 + $0x868] sm:$0xff]
    %v379 = vld [vmem:[#allocation2 + $0x870] sm:$0xff]
    %v380 = vld [vmem:[#allocation2 + $0x878] sm:$0xff]
    %v381 = vld [vmem:[#allocation2 + $0x880] sm:$0xff]
    %v382 = vld [vmem:[#allocation2 + $0x888] sm:$0xff]
    %v383 = vld [vmem:[#allocation2 + $0x890] sm:$0xff]
    %v384 = vld [vmem:[#allocation2 + $0x898] sm:$0xff]
    %v385 = vld [vmem:[#allocation2 + $0x8a0] sm:$0xff]
    %v386 = vld [vmem:[#allocation2 + $0x8a8] sm:$0xff]
    %v387 = vld [vmem:[#allocation2 + $0x8b0] sm:$0xff]
    %v388 = vld [vmem:[#allocation2 + $0x8b8] sm:$0xff]
    %v389 = vld [vmem:[#allocation2 + $0x8c0] sm:$0xff]
    %v390 = vld [vmem:[#allocation2 + $0x8c8] sm:$0xff]
    %v391 = vld [vmem:[#allocation2 + $0x8d0] sm:$0xff]
    %v392 = vld [vmem:[#allocation2 + $0x8d8] sm:$0xff]
    %v393 = vld [vmem:[#allocation2 + $0x8e0] sm:$0xff]
    %v394 = vld [vmem:[#allocation2 + $0x8e8] sm:$0xff]
    %v395 = vld [vmem:[#allocation2 + $0x8f0] sm:$0xff]
    %v396 = vld [vmem:[#allocation2 + $0x8f8] sm:$0xff]
    %v397 = vld [vmem:[#allocation2 + $0x900] sm:$0xff]
    %v398 = vld [vmem:[#allocation2 + $0x908] sm:$0xff]
    %v399 = vld [vmem:[#allocation2 + $0x910] sm:$0xff]
    %v400 = vld [vmem:[#allocation2 + $0x918] sm:$0xff]
    %v401 = vld [vmem:[#allocation2 + $0x920] sm:$0xff]
    %v402 = vld [vmem:[#allocation2 + $0x928] sm:$0xff]
    %v403 = vld [vmem:[#allocation2 + $0x930] sm:$0xff]
    %v404 = vld [vmem:[#allocation2 + $0x938] sm:$0xff]
    %v405 = vld [vmem:[#allocation2 + $0x940] sm:$0xff]
    %v406 = vld [vmem:[#allocation2 + $0x948] sm:$0xff]
    %v407 = vld [vmem:[#allocation2 + $0x950] sm:$0xff]
    %v408 = vld [vmem:[#allocation2 + $0x958] sm:$0xff]
    %v409 = vld [vmem:[#allocation2 + $0x960] sm:$0xff]
    %v410 = vld [vmem:[#allocation2 + $0x968] sm:$0xff]
    %v411 = vld [vmem:[#allocation2 + $0x970] sm:$0xff]
    %v412 = vld [vmem:[#allocation2 + $0x978] sm:$0xff]
    %v413 = vld [vmem:[#allocation2 + $0x980] sm:$0xff]
    %v414 = vld [vmem:[#allocation2 + $0x988] sm:$0xff]
    %v415 = vld [vmem:[#allocation2 + $0x990] sm:$0xff]
    %v416 = vld [vmem:[#allocation2 + $0x998] sm:$0xff]
    %v417 = vld [vmem:[#allocation2 + $0x9a0] sm:$0xff]
    %v418 = vld [vmem:[#allocation2 + $0x9a8] sm:$0xff]
    %v419 = vld [vmem:[#allocation2 + $0x9b0] sm:$0xff]
    %v420 = vld [vmem:[#allocation2 + $0x9b8] sm:$0xff]
    %v421 = vld [vmem:[#allocation2 + $0x9c0] sm:$0xff]
    %v422 = vld [vmem:[#allocation2 + $0x9c8] sm:$0xff]
    %v423 = vld [vmem:[#allocation2 + $0x9d0] sm:$0xff]
    %v424 = vld [vmem:[#allocation2 + $0x9d8] sm:$0xff]
    %v425 = vld [vmem:[#allocation2 + $0x9e0] sm:$0xff]
    %v426 = vld [vmem:[#allocation2 + $0x9e8] sm:$0xff]
    %v427 = vld [vmem:[#allocation2 + $0x9f0] sm:$0xff]
    %v428 = vld [vmem:[#allocation2 + $0x9f8] sm:$0xff]
    %v429 = vld [vmem:[#allocation5] sm:$0xf]
    %v431 = vlaneseq
    %v432 = vshrl.u32 %v431, 7
    %v433 = vsub.s32 0, %v432
    %v434 = vrot.slane %v429, %v433
    %v435 = vlaneseq
    %v436 = vshrl.u32 %v435, 7
    %v437 = vsub.s32 1, %v436
    %v438 = vrot.slane %v429, %v437
    %v439 = vlaneseq
    %v440 = vshrl.u32 %v439, 7
    %v441 = vsub.s32 2, %v440
    %v442 = vrot.slane %v429, %v441
    %v443 = vlaneseq
    %v444 = vshrl.u32 %v443, 7
    %v445 = vsub.s32 3, %v444
    %v446 = vrot.slane %v429, %v445
    %v771 = vunpack.c.l.b16 %v109
    %v772 = vunpack.c.h.b16 %v109
    %v773 = vunpack.c.l.b16 %v110
    %v774 = vunpack.c.h.b16 %v110
    %v775 = vunpack.c.l.b16 %v111
    %v776 = vunpack.c.h.b16 %v111
    %v777 = vunpack.c.l.b16 %v112
    %v778 = vunpack.c.h.b16 %v112
    %v779 = vunpack.c.l.b16 %v113
    %v780 = vunpack.c.h.b16 %v113
    %v781 = vunpack.c.l.b16 %v114
    %v782 = vunpack.c.h.b16 %v114
    %v783 = vunpack.c.l.b16 %v115
    %v784 = vunpack.c.h.b16 %v115
    %v785 = vunpack.c.l.b16 %v116
    %v786 = vunpack.c.h.b16 %v116
    %v787 = vunpack.c.l.b16 %v117
    %v788 = vunpack.c.h.b16 %v117
    %v789 = vunpack.c.l.b16 %v118
    %v790 = vunpack.c.h.b16 %v118
    %v791 = vunpack.c.l.b16 %v119
    %v792 = vunpack.c.h.b16 %v119
    %v793 = vunpack.c.l.b16 %v120
    %v794 = vunpack.c.h.b16 %v120
    %v795 = vunpack.c.l.b16 %v121
    %v796 = vunpack.c.h.b16 %v121
    %v797 = vunpack.c.l.b16 %v122
    %v798 = vunpack.c.h.b16 %v122
    %v799 = vunpack.c.l.b16 %v123
    %v800 = vunpack.c.h.b16 %v123
    %v801 = vunpack.c.l.b16 %v124
    %v802 = vunpack.c.h.b16 %v124
    %v803 = vunpack.c.l.b16 %v125
    %v804 = vunpack.c.h.b16 %v125
    %v805 = vunpack.c.l.b16 %v126
    %v806 = vunpack.c.h.b16 %v126
    %v807 = vunpack.c.l.b16 %v127
    %v808 = vunpack.c.h.b16 %v127
    %v809 = vunpack.c.l.b16 %v128
    %v810 = vunpack.c.h.b16 %v128
    %v811 = vunpack.c.l.b16 %v129
    %v812 = vunpack.c.h.b16 %v129
    %v813 = vunpack.c.l.b16 %v130
    %v814 = vunpack.c.h.b16 %v130
    %v815 = vunpack.c.l.b16 %v131
    %v816 = vunpack.c.h.b16 %v131
    %v817 = vunpack.c.l.b16 %v132
    %v818 = vunpack.c.h.b16 %v132
    %v819 = vunpack.c.l.b16 %v133
    %v820 = vunpack.c.h.b16 %v133
    %v821 = vunpack.c.l.b16 %v134
    %v822 = vunpack.c.h.b16 %v134
    %v823 = vunpack.c.l.b16 %v135
    %v824 = vunpack.c.h.b16 %v135
    %v825 = vunpack.c.l.b16 %v136
    %v826 = vunpack.c.h.b16 %v136
    %v827 = vunpack.c.l.b16 %v137
    %v828 = vunpack.c.h.b16 %v137
    %v829 = vunpack.c.l.b16 %v138
    %v830 = vunpack.c.h.b16 %v138
    %v831 = vunpack.c.l.b16 %v139
    %v832 = vunpack.c.h.b16 %v139
    %v833 = vunpack.c.l.b16 %v140
    %v834 = vunpack.c.h.b16 %v140
    %v835 = vunpack.c.l.b16 %v141
    %v836 = vunpack.c.h.b16 %v141
    %v837 = vunpack.c.l.b16 %v142
    %v838 = vunpack.c.h.b16 %v142
    %v839 = vunpack.c.l.b16 %v143
    %v840 = vunpack.c.h.b16 %v143
    %v841 = vunpack.c.l.b16 %v144
    %v842 = vunpack.c.h.b16 %v144
    %v843 = vunpack.c.l.b16 %v145
    %v844 = vunpack.c.h.b16 %v145
    %v845 = vunpack.c.l.b16 %v146
    %v846 = vunpack.c.h.b16 %v146
    %v847 = vunpack.c.l.b16 %v147
    %v848 = vunpack.c.h.b16 %v147
    %v849 = vunpack.c.l.b16 %v148
    %v850 = vunpack.c.h.b16 %v148
    %v851 = vunpack.c.l.b16 %v149
    %v852 = vunpack.c.h.b16 %v149
    %v853 = vunpack.c.l.b16 %v150
    %v854 = vunpack.c.h.b16 %v150
    %v855 = vunpack.c.l.b16 %v151
    %v856 = vunpack.c.h.b16 %v151
    %v857 = vunpack.c.l.b16 %v152
    %v858 = vunpack.c.h.b16 %v152
    %v859 = vunpack.c.l.b16 %v153
    %v860 = vunpack.c.h.b16 %v153
    %v861 = vunpack.c.l.b16 %v154
    %v862 = vunpack.c.h.b16 %v154
    %v863 = vunpack.c.l.b16 %v155
    %v864 = vunpack.c.h.b16 %v155
    %v865 = vunpack.c.l.b16 %v156
    %v866 = vunpack.c.h.b16 %v156
    %v867 = vunpack.c.l.b16 %v157
    %v868 = vunpack.c.h.b16 %v157
    %v869 = vunpack.c.l.b16 %v158
    %v870 = vunpack.c.h.b16 %v158
    %v871 = vunpack.c.l.b16 %v159
    %v872 = vunpack.c.h.b16 %v159
    %v873 = vunpack.c.l.b16 %v160
    %v874 = vunpack.c.h.b16 %v160
    %v875 = vunpack.c.l.b16 %v161
    %v876 = vunpack.c.h.b16 %v161
    %v877 = vunpack.c.l.b16 %v162
    %v878 = vunpack.c.h.b16 %v162
    %v879 = vunpack.c.l.b16 %v163
    %v880 = vunpack.c.h.b16 %v163
    %v881 = vunpack.c.l.b16 %v164
    %v882 = vunpack.c.h.b16 %v164
    %v883 = vunpack.c.l.b16 %v165
    %v884 = vunpack.c.h.b16 %v165
    %v885 = vunpack.c.l.b16 %v166
    %v886 = vunpack.c.h.b16 %v166
    %v887 = vunpack.c.l.b16 %v167
    %v888 = vunpack.c.h.b16 %v167
    %v889 = vunpack.c.l.b16 %v168
    %v890 = vunpack.c.h.b16 %v168
    %v891 = vunpack.c.l.b16 %v169
    %v892 = vunpack.c.h.b16 %v169
    %v893 = vunpack.c.l.b16 %v170
    %v894 = vunpack.c.h.b16 %v170
    %v895 = vunpack.c.l.b16 %v171
    %v896 = vunpack.c.h.b16 %v171
    %v897 = vunpack.c.l.b16 %v172
    %v898 = vunpack.c.h.b16 %v172
    %v899 = vunpack.c.l.b16 %v173
    %v900 = vunpack.c.h.b16 %v173
    %v901 = vunpack.c.l.b16 %v174
    %v902 = vunpack.c.h.b16 %v174
    %v903 = vunpack.c.l.b16 %v175
    %v904 = vunpack.c.h.b16 %v175
    %v905 = vunpack.c.l.b16 %v176
    %v906 = vunpack.c.h.b16 %v176
    %v907 = vunpack.c.l.b16 %v177
    %v908 = vunpack.c.h.b16 %v177
    %v909 = vunpack.c.l.b16 %v178
    %v910 = vunpack.c.h.b16 %v178
    %v911 = vunpack.c.l.b16 %v179
    %v912 = vunpack.c.h.b16 %v179
    %v913 = vunpack.c.l.b16 %v180
    %v914 = vunpack.c.h.b16 %v180
    %v915 = vunpack.c.l.b16 %v181
    %v916 = vunpack.c.h.b16 %v181
    %v917 = vunpack.c.l.b16 %v182
    %v918 = vunpack.c.h.b16 %v182
    %v919 = vunpack.c.l.b16 %v183
    %v920 = vunpack.c.h.b16 %v183
    %v921 = vunpack.c.l.b16 %v184
    %v922 = vunpack.c.h.b16 %v184
    %v923 = vunpack.c.l.b16 %v185
    %v924 = vunpack.c.h.b16 %v185
    %v925 = vunpack.c.l.b16 %v186
    %v926 = vunpack.c.h.b16 %v186
    %v927 = vunpack.c.l.b16 %v187
    %v928 = vunpack.c.h.b16 %v187
    %v929 = vunpack.c.l.b16 %v188
    %v930 = vunpack.c.h.b16 %v188
    %v931 = vunpack.c.l.b16 %v189
    %v932 = vunpack.c.h.b16 %v189
    %v933 = vunpack.c.l.b16 %v190
    %v934 = vunpack.c.h.b16 %v190
    %v935 = vunpack.c.l.b16 %v191
    %v936 = vunpack.c.h.b16 %v191
    %v937 = vunpack.c.l.b16 %v192
    %v938 = vunpack.c.h.b16 %v192
    %v939 = vunpack.c.l.b16 %v193
    %v940 = vunpack.c.h.b16 %v193
    %v941 = vunpack.c.l.b16 %v194
    %v942 = vunpack.c.h.b16 %v194
    %v943 = vunpack.c.l.b16 %v195
    %v944 = vunpack.c.h.b16 %v195
    %v945 = vunpack.c.l.b16 %v196
    %v946 = vunpack.c.h.b16 %v196
    %v947 = vunpack.c.l.b16 %v197
    %v948 = vunpack.c.h.b16 %v197
    %v949 = vunpack.c.l.b16 %v198
    %v950 = vunpack.c.h.b16 %v198
    %v951 = vunpack.c.l.b16 %v199
    %v952 = vunpack.c.h.b16 %v199
    %v953 = vunpack.c.l.b16 %v200
    %v954 = vunpack.c.h.b16 %v200
    %v955 = vunpack.c.l.b16 %v201
    %v956 = vunpack.c.h.b16 %v201
    %v957 = vunpack.c.l.b16 %v202
    %v958 = vunpack.c.h.b16 %v202
    %v959 = vunpack.c.l.b16 %v203
    %v960 = vunpack.c.h.b16 %v203
    %v961 = vunpack.c.l.b16 %v204
    %v962 = vunpack.c.h.b16 %v204
    %v963 = vunpack.c.l.b16 %v205
    %v964 = vunpack.c.h.b16 %v205
    %v965 = vunpack.c.l.b16 %v206
    %v966 = vunpack.c.h.b16 %v206
    %v967 = vunpack.c.l.b16 %v207
    %v968 = vunpack.c.h.b16 %v207
    %v969 = vunpack.c.l.b16 %v208
    %v970 = vunpack.c.h.b16 %v208
    %v971 = vunpack.c.l.b16 %v209
    %v972 = vunpack.c.h.b16 %v209
    %v973 = vunpack.c.l.b16 %v210
    %v974 = vunpack.c.h.b16 %v210
    %v975 = vunpack.c.l.b16 %v211
    %v976 = vunpack.c.h.b16 %v211
    %v977 = vunpack.c.l.b16 %v212
    %v978 = vunpack.c.h.b16 %v212
    %v979 = vunpack.c.l.b16 %v213
    %v980 = vunpack.c.h.b16 %v213
    %v981 = vunpack.c.l.b16 %v214
    %v982 = vunpack.c.h.b16 %v214
    %v983 = vunpack.c.l.b16 %v215
    %v984 = vunpack.c.h.b16 %v215
    %v985 = vunpack.c.l.b16 %v216
    %v986 = vunpack.c.h.b16 %v216
    %v987 = vunpack.c.l.b16 %v217
    %v988 = vunpack.c.h.b16 %v217
    %v989 = vunpack.c.l.b16 %v218
    %v990 = vunpack.c.h.b16 %v218
    %v991 = vunpack.c.l.b16 %v219
    %v992 = vunpack.c.h.b16 %v219
    %v993 = vunpack.c.l.b16 %v220
    %v994 = vunpack.c.h.b16 %v220
    %v995 = vunpack.c.l.b16 %v221
    %v996 = vunpack.c.h.b16 %v221
    %v997 = vunpack.c.l.b16 %v222
    %v998 = vunpack.c.h.b16 %v222
    %v999 = vunpack.c.l.b16 %v223
    %v1000 = vunpack.c.h.b16 %v223
    %v1001 = vunpack.c.l.b16 %v224
    %v1002 = vunpack.c.h.b16 %v224
    %v1003 = vunpack.c.l.b16 %v225
    %v1004 = vunpack.c.h.b16 %v225
    %v1005 = vunpack.c.l.b16 %v226
    %v1006 = vunpack.c.h.b16 %v226
    %v1007 = vunpack.c.l.b16 %v227
    %v1008 = vunpack.c.h.b16 %v227
    %v1009 = vunpack.c.l.b16 %v228
    %v1010 = vunpack.c.h.b16 %v228
    %v1011 = vunpack.c.l.b16 %v229
    %v1012 = vunpack.c.h.b16 %v229
    %v1013 = vunpack.c.l.b16 %v230
    %v1014 = vunpack.c.h.b16 %v230
    %v1015 = vunpack.c.l.b16 %v231
    %v1016 = vunpack.c.h.b16 %v231
    %v1017 = vunpack.c.l.b16 %v232
    %v1018 = vunpack.c.h.b16 %v232
    %v1019 = vunpack.c.l.b16 %v233
    %v1020 = vunpack.c.h.b16 %v233
    %v1021 = vunpack.c.l.b16 %v234
    %v1022 = vunpack.c.h.b16 %v234
    %v1023 = vunpack.c.l.b16 %v235
    %v1024 = vunpack.c.h.b16 %v235
    %v1025 = vunpack.c.l.b16 %v236
    %v1026 = vunpack.c.h.b16 %v236
    %v1027 = vunpack.c.l.b16 %v237
    %v1028 = vunpack.c.h.b16 %v237
    %v1029 = vunpack.c.l.b16 %v238
    %v1030 = vunpack.c.h.b16 %v238
    %v1031 = vunpack.c.l.b16 %v239
    %v1032 = vunpack.c.h.b16 %v239
    %v1033 = vunpack.c.l.b16 %v240
    %v1034 = vunpack.c.h.b16 %v240
    %v1035 = vunpack.c.l.b16 %v241
    %v1036 = vunpack.c.h.b16 %v241
    %v1037 = vunpack.c.l.b16 %v242
    %v1038 = vunpack.c.h.b16 %v242
    %v1039 = vunpack.c.l.b16 %v243
    %v1040 = vunpack.c.h.b16 %v243
    %v1041 = vunpack.c.l.b16 %v244
    %v1042 = vunpack.c.h.b16 %v244
    %v1043 = vunpack.c.l.b16 %v245
    %v1044 = vunpack.c.h.b16 %v245
    %v1045 = vunpack.c.l.b16 %v246
    %v1046 = vunpack.c.h.b16 %v246
    %v1047 = vunpack.c.l.b16 %v247
    %v1048 = vunpack.c.h.b16 %v247
    %v1049 = vunpack.c.l.b16 %v248
    %v1050 = vunpack.c.h.b16 %v248
    %v1051 = vunpack.c.l.b16 %v249
    %v1052 = vunpack.c.h.b16 %v249
    %v1053 = vunpack.c.l.b16 %v250
    %v1054 = vunpack.c.h.b16 %v250
    %v1055 = vunpack.c.l.b16 %v251
    %v1056 = vunpack.c.h.b16 %v251
    %v1057 = vunpack.c.l.b16 %v252
    %v1058 = vunpack.c.h.b16 %v252
    %v1059 = vunpack.c.l.b16 %v253
    %v1060 = vunpack.c.h.b16 %v253
    %v1061 = vunpack.c.l.b16 %v254
    %v1062 = vunpack.c.h.b16 %v254
    %v1063 = vunpack.c.l.b16 %v255
    %v1064 = vunpack.c.h.b16 %v255
    %v1065 = vunpack.c.l.b16 %v256
    %v1066 = vunpack.c.h.b16 %v256
    %v1067 = vunpack.c.l.b16 %v257
    %v1068 = vunpack.c.h.b16 %v257
    %v1069 = vunpack.c.l.b16 %v258
    %v1070 = vunpack.c.h.b16 %v258
    %v1071 = vunpack.c.l.b16 %v259
    %v1072 = vunpack.c.h.b16 %v259
    %v1073 = vunpack.c.l.b16 %v260
    %v1074 = vunpack.c.h.b16 %v260
    %v1075 = vunpack.c.l.b16 %v261
    %v1076 = vunpack.c.h.b16 %v261
    %v1077 = vunpack.c.l.b16 %v262
    %v1078 = vunpack.c.h.b16 %v262
    %v1079 = vunpack.c.l.b16 %v263
    %v1080 = vunpack.c.h.b16 %v263
    %v1081 = vunpack.c.l.b16 %v264
    %v1082 = vunpack.c.h.b16 %v264
    %v1083 = vunpack.c.l.b16 %v265
    %v1084 = vunpack.c.h.b16 %v265
    %v1085 = vunpack.c.l.b16 %v266
    %v1086 = vunpack.c.h.b16 %v266
    %v1087 = vunpack.c.l.b16 %v267
    %v1088 = vunpack.c.h.b16 %v267
    %v1089 = vunpack.c.l.b16 %v268
    %v1090 = vunpack.c.h.b16 %v268
    %v1091 = vunpack.c.l.b16 %v269
    %v1092 = vunpack.c.h.b16 %v269
    %v1093 = vunpack.c.l.b16 %v270
    %v1094 = vunpack.c.h.b16 %v270
    %v1095 = vunpack.c.l.b16 %v271
    %v1096 = vunpack.c.h.b16 %v271
    %v1097 = vunpack.c.l.b16 %v272
    %v1098 = vunpack.c.h.b16 %v272
    %v1099 = vunpack.c.l.b16 %v273
    %v1100 = vunpack.c.h.b16 %v273
    %v1101 = vunpack.c.l.b16 %v274
    %v1102 = vunpack.c.h.b16 %v274
    %v1103 = vunpack.c.l.b16 %v275
    %v1104 = vunpack.c.h.b16 %v275
    %v1105 = vunpack.c.l.b16 %v276
    %v1106 = vunpack.c.h.b16 %v276
    %v1107 = vunpack.c.l.b16 %v277
    %v1108 = vunpack.c.h.b16 %v277
    %v1109 = vunpack.c.l.b16 %v278
    %v1110 = vunpack.c.h.b16 %v278
    %v1111 = vunpack.c.l.b16 %v279
    %v1112 = vunpack.c.h.b16 %v279
    %v1113 = vunpack.c.l.b16 %v280
    %v1114 = vunpack.c.h.b16 %v280
    %v1115 = vunpack.c.l.b16 %v281
    %v1116 = vunpack.c.h.b16 %v281
    %v1117 = vunpack.c.l.b16 %v282
    %v1118 = vunpack.c.h.b16 %v282
    %v1119 = vunpack.c.l.b16 %v283
    %v1120 = vunpack.c.h.b16 %v283
    %v1121 = vunpack.c.l.b16 %v284
    %v1122 = vunpack.c.h.b16 %v284
    %v1123 = vunpack.c.l.b16 %v285
    %v1124 = vunpack.c.h.b16 %v285
    %v1125 = vunpack.c.l.b16 %v286
    %v1126 = vunpack.c.h.b16 %v286
    %v1127 = vunpack.c.l.b16 %v287
    %v1128 = vunpack.c.h.b16 %v287
    %v1129 = vunpack.c.l.b16 %v288
    %v1130 = vunpack.c.h.b16 %v288
    %v1131 = vunpack.c.l.b16 %v289
    %v1132 = vunpack.c.h.b16 %v289
    %v1133 = vunpack.c.l.b16 %v290
    %v1134 = vunpack.c.h.b16 %v290
    %v1135 = vunpack.c.l.b16 %v291
    %v1136 = vunpack.c.h.b16 %v291
    %v1137 = vunpack.c.l.b16 %v292
    %v1138 = vunpack.c.h.b16 %v292
    %v1139 = vunpack.c.l.b16 %v293
    %v1140 = vunpack.c.h.b16 %v293
    %v1141 = vunpack.c.l.b16 %v294
    %v1142 = vunpack.c.h.b16 %v294
    %v1143 = vunpack.c.l.b16 %v295
    %v1144 = vunpack.c.h.b16 %v295
    %v1145 = vunpack.c.l.b16 %v296
    %v1146 = vunpack.c.h.b16 %v296
    %v1147 = vunpack.c.l.b16 %v297
    %v1148 = vunpack.c.h.b16 %v297
    %v1149 = vunpack.c.l.b16 %v298
    %v1150 = vunpack.c.h.b16 %v298
    %v1151 = vunpack.c.l.b16 %v299
    %v1152 = vunpack.c.h.b16 %v299
    %v1153 = vunpack.c.l.b16 %v300
    %v1154 = vunpack.c.h.b16 %v300
    %v1155 = vunpack.c.l.b16 %v301
    %v1156 = vunpack.c.h.b16 %v301
    %v1157 = vunpack.c.l.b16 %v302
    %v1158 = vunpack.c.h.b16 %v302
    %v1159 = vunpack.c.l.b16 %v303
    %v1160 = vunpack.c.h.b16 %v303
    %v1161 = vunpack.c.l.b16 %v304
    %v1162 = vunpack.c.h.b16 %v304
    %v1163 = vunpack.c.l.b16 %v305
    %v1164 = vunpack.c.h.b16 %v305
    %v1165 = vunpack.c.l.b16 %v306
    %v1166 = vunpack.c.h.b16 %v306
    %v1167 = vunpack.c.l.b16 %v307
    %v1168 = vunpack.c.h.b16 %v307
    %v1169 = vunpack.c.l.b16 %v308
    %v1170 = vunpack.c.h.b16 %v308
    %v1171 = vunpack.c.l.b16 %v309
    %v1172 = vunpack.c.h.b16 %v309
    %v1173 = vunpack.c.l.b16 %v310
    %v1174 = vunpack.c.h.b16 %v310
    %v1175 = vunpack.c.l.b16 %v311
    %v1176 = vunpack.c.h.b16 %v311
    %v1177 = vunpack.c.l.b16 %v312
    %v1178 = vunpack.c.h.b16 %v312
    %v1179 = vunpack.c.l.b16 %v313
    %v1180 = vunpack.c.h.b16 %v313
    %v1181 = vunpack.c.l.b16 %v314
    %v1182 = vunpack.c.h.b16 %v314
    %v1183 = vunpack.c.l.b16 %v315
    %v1184 = vunpack.c.h.b16 %v315
    %v1185 = vunpack.c.l.b16 %v316
    %v1186 = vunpack.c.h.b16 %v316
    %v1187 = vunpack.c.l.b16 %v317
    %v1188 = vunpack.c.h.b16 %v317
    %v1189 = vunpack.c.l.b16 %v318
    %v1190 = vunpack.c.h.b16 %v318
    %v1191 = vunpack.c.l.b16 %v319
    %v1192 = vunpack.c.h.b16 %v319
    %v1193 = vunpack.c.l.b16 %v320
    %v1194 = vunpack.c.h.b16 %v320
    %v1195 = vunpack.c.l.b16 %v321
    %v1196 = vunpack.c.h.b16 %v321
    %v1197 = vunpack.c.l.b16 %v322
    %v1198 = vunpack.c.h.b16 %v322
    %v1199 = vunpack.c.l.b16 %v323
    %v1200 = vunpack.c.h.b16 %v323
    %v1201 = vunpack.c.l.b16 %v324
    %v1202 = vunpack.c.h.b16 %v324
    %v1203 = vunpack.c.l.b16 %v325
    %v1204 = vunpack.c.h.b16 %v325
    %v1205 = vunpack.c.l.b16 %v326
    %v1206 = vunpack.c.h.b16 %v326
    %v1207 = vunpack.c.l.b16 %v327
    %v1208 = vunpack.c.h.b16 %v327
    %v1209 = vunpack.c.l.b16 %v328
    %v1210 = vunpack.c.h.b16 %v328
    %v1211 = vunpack.c.l.b16 %v329
    %v1212 = vunpack.c.h.b16 %v329
    %v1213 = vunpack.c.l.b16 %v330
    %v1214 = vunpack.c.h.b16 %v330
    %v1215 = vunpack.c.l.b16 %v331
    %v1216 = vunpack.c.h.b16 %v331
    %v1217 = vunpack.c.l.b16 %v332
    %v1218 = vunpack.c.h.b16 %v332
    %v1219 = vunpack.c.l.b16 %v333
    %v1220 = vunpack.c.h.b16 %v333
    %v1221 = vunpack.c.l.b16 %v334
    %v1222 = vunpack.c.h.b16 %v334
    %v1223 = vunpack.c.l.b16 %v335
    %v1224 = vunpack.c.h.b16 %v335
    %v1225 = vunpack.c.l.b16 %v336
    %v1226 = vunpack.c.h.b16 %v336
    %v1227 = vunpack.c.l.b16 %v337
    %v1228 = vunpack.c.h.b16 %v337
    %v1229 = vunpack.c.l.b16 %v338
    %v1230 = vunpack.c.h.b16 %v338
    %v1231 = vunpack.c.l.b16 %v339
    %v1232 = vunpack.c.h.b16 %v339
    %v1233 = vunpack.c.l.b16 %v340
    %v1234 = vunpack.c.h.b16 %v340
    %v1235 = vunpack.c.l.b16 %v341
    %v1236 = vunpack.c.h.b16 %v341
    %v1237 = vunpack.c.l.b16 %v342
    %v1238 = vunpack.c.h.b16 %v342
    %v1239 = vunpack.c.l.b16 %v343
    %v1240 = vunpack.c.h.b16 %v343
    %v1241 = vunpack.c.l.b16 %v344
    %v1242 = vunpack.c.h.b16 %v344
    %v1243 = vunpack.c.l.b16 %v345
    %v1244 = vunpack.c.h.b16 %v345
    %v1245 = vunpack.c.l.b16 %v346
    %v1246 = vunpack.c.h.b16 %v346
    %v1247 = vunpack.c.l.b16 %v347
    %v1248 = vunpack.c.h.b16 %v347
    %v1249 = vunpack.c.l.b16 %v348
    %v1250 = vunpack.c.h.b16 %v348
    %v1251 = vunpack.c.l.b16 %v349
    %v1252 = vunpack.c.h.b16 %v349
    %v1253 = vunpack.c.l.b16 %v350
    %v1254 = vunpack.c.h.b16 %v350
    %v1255 = vunpack.c.l.b16 %v351
    %v1256 = vunpack.c.h.b16 %v351
    %v1257 = vunpack.c.l.b16 %v352
    %v1258 = vunpack.c.h.b16 %v352
    %v1259 = vunpack.c.l.b16 %v353
    %v1260 = vunpack.c.h.b16 %v353
    %v1261 = vunpack.c.l.b16 %v354
    %v1262 = vunpack.c.h.b16 %v354
    %v1263 = vunpack.c.l.b16 %v355
    %v1264 = vunpack.c.h.b16 %v355
    %v1265 = vunpack.c.l.b16 %v356
    %v1266 = vunpack.c.h.b16 %v356
    %v1267 = vunpack.c.l.b16 %v357
    %v1268 = vunpack.c.h.b16 %v357
    %v1269 = vunpack.c.l.b16 %v358
    %v1270 = vunpack.c.h.b16 %v358
    %v1271 = vunpack.c.l.b16 %v359
    %v1272 = vunpack.c.h.b16 %v359
    %v1273 = vunpack.c.l.b16 %v360
    %v1274 = vunpack.c.h.b16 %v360
    %v1275 = vunpack.c.l.b16 %v361
    %v1276 = vunpack.c.h.b16 %v361
    %v1277 = vunpack.c.l.b16 %v362
    %v1278 = vunpack.c.h.b16 %v362
    %v1279 = vunpack.c.l.b16 %v363
    %v1280 = vunpack.c.h.b16 %v363
    %v1281 = vunpack.c.l.b16 %v364
    %v1282 = vunpack.c.h.b16 %v364
    %v1283 = vunpack.c.l.b16 %v365
    %v1284 = vunpack.c.h.b16 %v365
    %v1285 = vunpack.c.l.b16 %v366
    %v1286 = vunpack.c.h.b16 %v366
    %v1287 = vunpack.c.l.b16 %v367
    %v1288 = vunpack.c.h.b16 %v367
    %v1289 = vunpack.c.l.b16 %v368
    %v1290 = vunpack.c.h.b16 %v368
    %v1291 = vunpack.c.l.b16 %v369
    %v1292 = vunpack.c.h.b16 %v369
    %v1293 = vunpack.c.l.b16 %v370
    %v1294 = vunpack.c.h.b16 %v370
    %v1295 = vunpack.c.l.b16 %v371
    %v1296 = vunpack.c.h.b16 %v371
    %v1297 = vunpack.c.l.b16 %v372
    %v1298 = vunpack.c.h.b16 %v372
    %v1299 = vunpack.c.l.b16 %v373
    %v1300 = vunpack.c.h.b16 %v373
    %v1301 = vunpack.c.l.b16 %v374
    %v1302 = vunpack.c.h.b16 %v374
    %v1303 = vunpack.c.l.b16 %v375
    %v1304 = vunpack.c.h.b16 %v375
    %v1305 = vunpack.c.l.b16 %v376
    %v1306 = vunpack.c.h.b16 %v376
    %v1307 = vunpack.c.l.b16 %v377
    %v1308 = vunpack.c.h.b16 %v377
    %v1309 = vunpack.c.l.b16 %v378
    %v1310 = vunpack.c.h.b16 %v378
    %v1311 = vunpack.c.l.b16 %v379
    %v1312 = vunpack.c.h.b16 %v379
    %v1313 = vunpack.c.l.b16 %v380
    %v1314 = vunpack.c.h.b16 %v380
    %v1315 = vunpack.c.l.b16 %v381
    %v1316 = vunpack.c.h.b16 %v381
    %v1317 = vunpack.c.l.b16 %v382
    %v1318 = vunpack.c.h.b16 %v382
    %v1319 = vunpack.c.l.b16 %v383
    %v1320 = vunpack.c.h.b16 %v383
    %v1321 = vunpack.c.l.b16 %v384
    %v1322 = vunpack.c.h.b16 %v384
    %v1323 = vunpack.c.l.b16 %v385
    %v1324 = vunpack.c.h.b16 %v385
    %v1325 = vunpack.c.l.b16 %v386
    %v1326 = vunpack.c.h.b16 %v386
    %v1327 = vunpack.c.l.b16 %v387
    %v1328 = vunpack.c.h.b16 %v387
    %v1329 = vunpack.c.l.b16 %v388
    %v1330 = vunpack.c.h.b16 %v388
    %v1331 = vunpack.c.l.b16 %v389
    %v1332 = vunpack.c.h.b16 %v389
    %v1333 = vunpack.c.l.b16 %v390
    %v1334 = vunpack.c.h.b16 %v390
    %v1335 = vunpack.c.l.b16 %v391
    %v1336 = vunpack.c.h.b16 %v391
    %v1337 = vunpack.c.l.b16 %v392
    %v1338 = vunpack.c.h.b16 %v392
    %v1339 = vunpack.c.l.b16 %v393
    %v1340 = vunpack.c.h.b16 %v393
    %v1341 = vunpack.c.l.b16 %v394
    %v1342 = vunpack.c.h.b16 %v394
    %v1343 = vunpack.c.l.b16 %v395
    %v1344 = vunpack.c.h.b16 %v395
    %v1345 = vunpack.c.l.b16 %v396
    %v1346 = vunpack.c.h.b16 %v396
    %v1347 = vunpack.c.l.b16 %v397
    %v1348 = vunpack.c.h.b16 %v397
    %v1349 = vunpack.c.l.b16 %v398
    %v1350 = vunpack.c.h.b16 %v398
    %v1351 = vunpack.c.l.b16 %v399
    %v1352 = vunpack.c.h.b16 %v399
    %v1353 = vunpack.c.l.b16 %v400
    %v1354 = vunpack.c.h.b16 %v400
    %v1355 = vunpack.c.l.b16 %v401
    %v1356 = vunpack.c.h.b16 %v401
    %v1357 = vunpack.c.l.b16 %v402
    %v1358 = vunpack.c.h.b16 %v402
    %v1359 = vunpack.c.l.b16 %v403
    %v1360 = vunpack.c.h.b16 %v403
    %v1361 = vunpack.c.l.b16 %v404
    %v1362 = vunpack.c.h.b16 %v404
    %v1363 = vunpack.c.l.b16 %v405
    %v1364 = vunpack.c.h.b16 %v405
    %v1365 = vunpack.c.l.b16 %v406
    %v1366 = vunpack.c.h.b16 %v406
    %v1367 = vunpack.c.l.b16 %v407
    %v1368 = vunpack.c.h.b16 %v407
    %v1369 = vunpack.c.l.b16 %v408
    %v1370 = vunpack.c.h.b16 %v408
    %v1371 = vunpack.c.l.b16 %v409
    %v1372 = vunpack.c.h.b16 %v409
    %v1373 = vunpack.c.l.b16 %v410
    %v1374 = vunpack.c.h.b16 %v410
    %v1375 = vunpack.c.l.b16 %v411
    %v1376 = vunpack.c.h.b16 %v411
    %v1377 = vunpack.c.l.b16 %v412
    %v1378 = vunpack.c.h.b16 %v412
    %v1379 = vunpack.c.l.b16 %v413
    %v1380 = vunpack.c.h.b16 %v413
    %v1381 = vunpack.c.l.b16 %v414
    %v1382 = vunpack.c.h.b16 %v414
    %v1383 = vunpack.c.l.b16 %v415
    %v1384 = vunpack.c.h.b16 %v415
    %v1385 = vunpack.c.l.b16 %v416
    %v1386 = vunpack.c.h.b16 %v416
    %v1387 = vunpack.c.l.b16 %v417
    %v1388 = vunpack.c.h.b16 %v417
    %v1389 = vunpack.c.l.b16 %v418
    %v1390 = vunpack.c.h.b16 %v418
    %v1391 = vunpack.c.l.b16 %v419
    %v1392 = vunpack.c.h.b16 %v419
    %v1393 = vunpack.c.l.b16 %v420
    %v1394 = vunpack.c.h.b16 %v420
    %v1395 = vunpack.c.l.b16 %v421
    %v1396 = vunpack.c.h.b16 %v421
    %v1397 = vunpack.c.l.b16 %v422
    %v1398 = vunpack.c.h.b16 %v422
    %v1399 = vunpack.c.l.b16 %v423
    %v1400 = vunpack.c.h.b16 %v423
    %v1401 = vunpack.c.l.b16 %v424
    %v1402 = vunpack.c.h.b16 %v424
    %v1403 = vunpack.c.l.b16 %v425
    %v1404 = vunpack.c.h.b16 %v425
    %v1405 = vunpack.c.l.b16 %v426
    %v1406 = vunpack.c.h.b16 %v426
    %v1407 = vunpack.c.l.b16 %v427
    %v1408 = vunpack.c.h.b16 %v427
    %v1409 = vunpack.c.l.b16 %v428
    %v1410 = vunpack.c.h.b16 %v428
    %v1411 = vpack.c.b16 %v775, %v771
    %v1412 = vpack.c.b16 %v776, %v772
    %v1413 = vpack.c.b16 %v777, %v773
    %v1414 = vpack.c.b16 %v778, %v774
    %v1415 = vpack.c.b16 %v783, %v779
    %v1416 = vpack.c.b16 %v784, %v780
    %v1417 = vpack.c.b16 %v785, %v781
    %v1418 = vpack.c.b16 %v786, %v782
    %v1419 = vpack.c.b16 %v791, %v787
    %v1420 = vpack.c.b16 %v792, %v788
    %v1421 = vpack.c.b16 %v793, %v789
    %v1422 = vpack.c.b16 %v794, %v790
    %v1423 = vpack.c.b16 %v799, %v795
    %v1424 = vpack.c.b16 %v800, %v796
    %v1425 = vpack.c.b16 %v801, %v797
    %v1426 = vpack.c.b16 %v802, %v798
    %v1427 = vpack.c.b16 %v807, %v803
    %v1428 = vpack.c.b16 %v808, %v804
    %v1429 = vpack.c.b16 %v809, %v805
    %v1430 = vpack.c.b16 %v810, %v806
    %v1431 = vpack.c.b16 %v815, %v811
    %v1432 = vpack.c.b16 %v816, %v812
    %v1433 = vpack.c.b16 %v817, %v813
    %v1434 = vpack.c.b16 %v818, %v814
    %v1435 = vpack.c.b16 %v823, %v819
    %v1436 = vpack.c.b16 %v824, %v820
    %v1437 = vpack.c.b16 %v825, %v821
    %v1438 = vpack.c.b16 %v826, %v822
    %v1439 = vpack.c.b16 %v831, %v827
    %v1440 = vpack.c.b16 %v832, %v828
    %v1441 = vpack.c.b16 %v833, %v829
    %v1442 = vpack.c.b16 %v834, %v830
    %v1443 = vpack.c.b16 %v839, %v835
    %v1444 = vpack.c.b16 %v840, %v836
    %v1445 = vpack.c.b16 %v841, %v837
    %v1446 = vpack.c.b16 %v842, %v838
    %v1447 = vpack.c.b16 %v847, %v843
    %v1448 = vpack.c.b16 %v848, %v844
    %v1449 = vpack.c.b16 %v849, %v845
    %v1450 = vpack.c.b16 %v850, %v846
    %v1451 = vpack.c.b16 %v855, %v851
    %v1452 = vpack.c.b16 %v856, %v852
    %v1453 = vpack.c.b16 %v857, %v853
    %v1454 = vpack.c.b16 %v858, %v854
    %v1455 = vpack.c.b16 %v863, %v859
    %v1456 = vpack.c.b16 %v864, %v860
    %v1457 = vpack.c.b16 %v865, %v861
    %v1458 = vpack.c.b16 %v866, %v862
    %v1459 = vpack.c.b16 %v871, %v867
    %v1460 = vpack.c.b16 %v872, %v868
    %v1461 = vpack.c.b16 %v873, %v869
    %v1462 = vpack.c.b16 %v874, %v870
    %v1463 = vpack.c.b16 %v879, %v875
    %v1464 = vpack.c.b16 %v880, %v876
    %v1465 = vpack.c.b16 %v881, %v877
    %v1466 = vpack.c.b16 %v882, %v878
    %v1467 = vpack.c.b16 %v887, %v883
    %v1468 = vpack.c.b16 %v888, %v884
    %v1469 = vpack.c.b16 %v889, %v885
    %v1470 = vpack.c.b16 %v890, %v886
    %v1471 = vpack.c.b16 %v895, %v891
    %v1472 = vpack.c.b16 %v896, %v892
    %v1473 = vpack.c.b16 %v897, %v893
    %v1474 = vpack.c.b16 %v898, %v894
    %v1475 = vpack.c.b16 %v903, %v899
    %v1476 = vpack.c.b16 %v904, %v900
    %v1477 = vpack.c.b16 %v905, %v901
    %v1478 = vpack.c.b16 %v906, %v902
    %v1479 = vpack.c.b16 %v911, %v907
    %v1480 = vpack.c.b16 %v912, %v908
    %v1481 = vpack.c.b16 %v913, %v909
    %v1482 = vpack.c.b16 %v914, %v910
    %v1483 = vpack.c.b16 %v919, %v915
    %v1484 = vpack.c.b16 %v920, %v916
    %v1485 = vpack.c.b16 %v921, %v917
    %v1486 = vpack.c.b16 %v922, %v918
    %v1487 = vpack.c.b16 %v927, %v923
    %v1488 = vpack.c.b16 %v928, %v924
    %v1489 = vpack.c.b16 %v929, %v925
    %v1490 = vpack.c.b16 %v930, %v926
    %v1491 = vpack.c.b16 %v935, %v931
    %v1492 = vpack.c.b16 %v936, %v932
    %v1493 = vpack.c.b16 %v937, %v933
    %v1494 = vpack.c.b16 %v938, %v934
    %v1495 = vpack.c.b16 %v943, %v939
    %v1496 = vpack.c.b16 %v944, %v940
    %v1497 = vpack.c.b16 %v945, %v941
    %v1498 = vpack.c.b16 %v946, %v942
    %v1499 = vpack.c.b16 %v951, %v947
    %v1500 = vpack.c.b16 %v952, %v948
    %v1501 = vpack.c.b16 %v953, %v949
    %v1502 = vpack.c.b16 %v954, %v950
    %v1503 = vpack.c.b16 %v959, %v955
    %v1504 = vpack.c.b16 %v960, %v956
    %v1505 = vpack.c.b16 %v961, %v957
    %v1506 = vpack.c.b16 %v962, %v958
    %v1507 = vpack.c.b16 %v967, %v963
    %v1508 = vpack.c.b16 %v968, %v964
    %v1509 = vpack.c.b16 %v969, %v965
    %v1510 = vpack.c.b16 %v970, %v966
    %v1511 = vpack.c.b16 %v975, %v971
    %v1512 = vpack.c.b16 %v976, %v972
    %v1513 = vpack.c.b16 %v977, %v973
    %v1514 = vpack.c.b16 %v978, %v974
    %v1515 = vpack.c.b16 %v983, %v979
    %v1516 = vpack.c.b16 %v984, %v980
    %v1517 = vpack.c.b16 %v985, %v981
    %v1518 = vpack.c.b16 %v986, %v982
    %v1519 = vpack.c.b16 %v991, %v987
    %v1520 = vpack.c.b16 %v992, %v988
    %v1521 = vpack.c.b16 %v993, %v989
    %v1522 = vpack.c.b16 %v994, %v990
    %v1523 = vpack.c.b16 %v999, %v995
    %v1524 = vpack.c.b16 %v1000, %v996
    %v1525 = vpack.c.b16 %v1001, %v997
    %v1526 = vpack.c.b16 %v1002, %v998
    %v1527 = vpack.c.b16 %v1007, %v1003
    %v1528 = vpack.c.b16 %v1008, %v1004
    %v1529 = vpack.c.b16 %v1009, %v1005
    %v1530 = vpack.c.b16 %v1010, %v1006
    %v1531 = vpack.c.b16 %v1015, %v1011
    %v1532 = vpack.c.b16 %v1016, %v1012
    %v1533 = vpack.c.b16 %v1017, %v1013
    %v1534 = vpack.c.b16 %v1018, %v1014
    %v1535 = vpack.c.b16 %v1023, %v1019
    %v1536 = vpack.c.b16 %v1024, %v1020
    %v1537 = vpack.c.b16 %v1025, %v1021
    %v1538 = vpack.c.b16 %v1026, %v1022
    %v1539 = vpack.c.b16 %v1031, %v1027
    %v1540 = vpack.c.b16 %v1032, %v1028
    %v1541 = vpack.c.b16 %v1033, %v1029
    %v1542 = vpack.c.b16 %v1034, %v1030
    %v1543 = vpack.c.b16 %v1039, %v1035
    %v1544 = vpack.c.b16 %v1040, %v1036
    %v1545 = vpack.c.b16 %v1041, %v1037
    %v1546 = vpack.c.b16 %v1042, %v1038
    %v1547 = vpack.c.b16 %v1047, %v1043
    %v1548 = vpack.c.b16 %v1048, %v1044
    %v1549 = vpack.c.b16 %v1049, %v1045
    %v1550 = vpack.c.b16 %v1050, %v1046
    %v1551 = vpack.c.b16 %v1055, %v1051
    %v1552 = vpack.c.b16 %v1056, %v1052
    %v1553 = vpack.c.b16 %v1057, %v1053
    %v1554 = vpack.c.b16 %v1058, %v1054
    %v1555 = vpack.c.b16 %v1063, %v1059
    %v1556 = vpack.c.b16 %v1064, %v1060
    %v1557 = vpack.c.b16 %v1065, %v1061
    %v1558 = vpack.c.b16 %v1066, %v1062
    %v1559 = vpack.c.b16 %v1071, %v1067
    %v1560 = vpack.c.b16 %v1072, %v1068
    %v1561 = vpack.c.b16 %v1073, %v1069
    %v1562 = vpack.c.b16 %v1074, %v1070
    %v1563 = vpack.c.b16 %v1079, %v1075
    %v1564 = vpack.c.b16 %v1080, %v1076
    %v1565 = vpack.c.b16 %v1081, %v1077
    %v1566 = vpack.c.b16 %v1082, %v1078
    %v1567 = vpack.c.b16 %v1087, %v1083
    %v1568 = vpack.c.b16 %v1088, %v1084
    %v1569 = vpack.c.b16 %v1089, %v1085
    %v1570 = vpack.c.b16 %v1090, %v1086
    %v1571 = vpack.c.b16 %v1095, %v1091
    %v1572 = vpack.c.b16 %v1096, %v1092
    %v1573 = vpack.c.b16 %v1097, %v1093
    %v1574 = vpack.c.b16 %v1098, %v1094
    %v1575 = vpack.c.b16 %v1103, %v1099
    %v1576 = vpack.c.b16 %v1104, %v1100
    %v1577 = vpack.c.b16 %v1105, %v1101
    %v1578 = vpack.c.b16 %v1106, %v1102
    %v1579 = vpack.c.b16 %v1111, %v1107
    %v1580 = vpack.c.b16 %v1112, %v1108
    %v1581 = vpack.c.b16 %v1113, %v1109
    %v1582 = vpack.c.b16 %v1114, %v1110
    %v1583 = vpack.c.b16 %v1119, %v1115
    %v1584 = vpack.c.b16 %v1120, %v1116
    %v1585 = vpack.c.b16 %v1121, %v1117
    %v1586 = vpack.c.b16 %v1122, %v1118
    %v1587 = vpack.c.b16 %v1127, %v1123
    %v1588 = vpack.c.b16 %v1128, %v1124
    %v1589 = vpack.c.b16 %v1129, %v1125
    %v1590 = vpack.c.b16 %v1130, %v1126
    %v1591 = vpack.c.b16 %v1135, %v1131
    %v1592 = vpack.c.b16 %v1136, %v1132
    %v1593 = vpack.c.b16 %v1137, %v1133
    %v1594 = vpack.c.b16 %v1138, %v1134
    %v1595 = vpack.c.b16 %v1143, %v1139
    %v1596 = vpack.c.b16 %v1144, %v1140
    %v1597 = vpack.c.b16 %v1145, %v1141
    %v1598 = vpack.c.b16 %v1146, %v1142
    %v1599 = vpack.c.b16 %v1151, %v1147
    %v1600 = vpack.c.b16 %v1152, %v1148
    %v1601 = vpack.c.b16 %v1153, %v1149
    %v1602 = vpack.c.b16 %v1154, %v1150
    %v1603 = vpack.c.b16 %v1159, %v1155
    %v1604 = vpack.c.b16 %v1160, %v1156
    %v1605 = vpack.c.b16 %v1161, %v1157
    %v1606 = vpack.c.b16 %v1162, %v1158
    %v1607 = vpack.c.b16 %v1167, %v1163
    %v1608 = vpack.c.b16 %v1168, %v1164
    %v1609 = vpack.c.b16 %v1169, %v1165
    %v1610 = vpack.c.b16 %v1170, %v1166
    %v1611 = vpack.c.b16 %v1175, %v1171
    %v1612 = vpack.c.b16 %v1176, %v1172
    %v1613 = vpack.c.b16 %v1177, %v1173
    %v1614 = vpack.c.b16 %v1178, %v1174
    %v1615 = vpack.c.b16 %v1183, %v1179
    %v1616 = vpack.c.b16 %v1184, %v1180
    %v1617 = vpack.c.b16 %v1185, %v1181
    %v1618 = vpack.c.b16 %v1186, %v1182
    %v1619 = vpack.c.b16 %v1191, %v1187
    %v1620 = vpack.c.b16 %v1192, %v1188
    %v1621 = vpack.c.b16 %v1193, %v1189
    %v1622 = vpack.c.b16 %v1194, %v1190
    %v1623 = vpack.c.b16 %v1199, %v1195
    %v1624 = vpack.c.b16 %v1200, %v1196
    %v1625 = vpack.c.b16 %v1201, %v1197
    %v1626 = vpack.c.b16 %v1202, %v1198
    %v1627 = vpack.c.b16 %v1207, %v1203
    %v1628 = vpack.c.b16 %v1208, %v1204
    %v1629 = vpack.c.b16 %v1209, %v1205
    %v1630 = vpack.c.b16 %v1210, %v1206
    %v1631 = vpack.c.b16 %v1215, %v1211
    %v1632 = vpack.c.b16 %v1216, %v1212
    %v1633 = vpack.c.b16 %v1217, %v1213
    %v1634 = vpack.c.b16 %v1218, %v1214
    %v1635 = vpack.c.b16 %v1223, %v1219
    %v1636 = vpack.c.b16 %v1224, %v1220
    %v1637 = vpack.c.b16 %v1225, %v1221
    %v1638 = vpack.c.b16 %v1226, %v1222
    %v1639 = vpack.c.b16 %v1231, %v1227
    %v1640 = vpack.c.b16 %v1232, %v1228
    %v1641 = vpack.c.b16 %v1233, %v1229
    %v1642 = vpack.c.b16 %v1234, %v1230
    %v1643 = vpack.c.b16 %v1239, %v1235
    %v1644 = vpack.c.b16 %v1240, %v1236
    %v1645 = vpack.c.b16 %v1241, %v1237
    %v1646 = vpack.c.b16 %v1242, %v1238
    %v1647 = vpack.c.b16 %v1247, %v1243
    %v1648 = vpack.c.b16 %v1248, %v1244
    %v1649 = vpack.c.b16 %v1249, %v1245
    %v1650 = vpack.c.b16 %v1250, %v1246
    %v1651 = vpack.c.b16 %v1255, %v1251
    %v1652 = vpack.c.b16 %v1256, %v1252
    %v1653 = vpack.c.b16 %v1257, %v1253
    %v1654 = vpack.c.b16 %v1258, %v1254
    %v1655 = vpack.c.b16 %v1263, %v1259
    %v1656 = vpack.c.b16 %v1264, %v1260
    %v1657 = vpack.c.b16 %v1265, %v1261
    %v1658 = vpack.c.b16 %v1266, %v1262
    %v1659 = vpack.c.b16 %v1271, %v1267
    %v1660 = vpack.c.b16 %v1272, %v1268
    %v1661 = vpack.c.b16 %v1273, %v1269
    %v1662 = vpack.c.b16 %v1274, %v1270
    %v1663 = vpack.c.b16 %v1279, %v1275
    %v1664 = vpack.c.b16 %v1280, %v1276
    %v1665 = vpack.c.b16 %v1281, %v1277
    %v1666 = vpack.c.b16 %v1282, %v1278
    %v1667 = vpack.c.b16 %v1287, %v1283
    %v1668 = vpack.c.b16 %v1288, %v1284
    %v1669 = vpack.c.b16 %v1289, %v1285
    %v1670 = vpack.c.b16 %v1290, %v1286
    %v1671 = vpack.c.b16 %v1295, %v1291
    %v1672 = vpack.c.b16 %v1296, %v1292
    %v1673 = vpack.c.b16 %v1297, %v1293
    %v1674 = vpack.c.b16 %v1298, %v1294
    %v1675 = vpack.c.b16 %v1303, %v1299
    %v1676 = vpack.c.b16 %v1304, %v1300
    %v1677 = vpack.c.b16 %v1305, %v1301
    %v1678 = vpack.c.b16 %v1306, %v1302
    %v1679 = vpack.c.b16 %v1311, %v1307
    %v1680 = vpack.c.b16 %v1312, %v1308
    %v1681 = vpack.c.b16 %v1313, %v1309
    %v1682 = vpack.c.b16 %v1314, %v1310
    %v1683 = vpack.c.b16 %v1319, %v1315
    %v1684 = vpack.c.b16 %v1320, %v1316
    %v1685 = vpack.c.b16 %v1321, %v1317
    %v1686 = vpack.c.b16 %v1322, %v1318
    %v1687 = vpack.c.b16 %v1327, %v1323
    %v1688 = vpack.c.b16 %v1328, %v1324
    %v1689 = vpack.c.b16 %v1329, %v1325
    %v1690 = vpack.c.b16 %v1330, %v1326
    %v1691 = vpack.c.b16 %v1335, %v1331
    %v1692 = vpack.c.b16 %v1336, %v1332
    %v1693 = vpack.c.b16 %v1337, %v1333
    %v1694 = vpack.c.b16 %v1338, %v1334
    %v1695 = vpack.c.b16 %v1343, %v1339
    %v1696 = vpack.c.b16 %v1344, %v1340
    %v1697 = vpack.c.b16 %v1345, %v1341
    %v1698 = vpack.c.b16 %v1346, %v1342
    %v1699 = vpack.c.b16 %v1351, %v1347
    %v1700 = vpack.c.b16 %v1352, %v1348
    %v1701 = vpack.c.b16 %v1353, %v1349
    %v1702 = vpack.c.b16 %v1354, %v1350
    %v1703 = vpack.c.b16 %v1359, %v1355
    %v1704 = vpack.c.b16 %v1360, %v1356
    %v1705 = vpack.c.b16 %v1361, %v1357
    %v1706 = vpack.c.b16 %v1362, %v1358
    %v1707 = vpack.c.b16 %v1367, %v1363
    %v1708 = vpack.c.b16 %v1368, %v1364
    %v1709 = vpack.c.b16 %v1369, %v1365
    %v1710 = vpack.c.b16 %v1370, %v1366
    %v1711 = vpack.c.b16 %v1375, %v1371
    %v1712 = vpack.c.b16 %v1376, %v1372
    %v1713 = vpack.c.b16 %v1377, %v1373
    %v1714 = vpack.c.b16 %v1378, %v1374
    %v1715 = vpack.c.b16 %v1383, %v1379
    %v1716 = vpack.c.b16 %v1384, %v1380
    %v1717 = vpack.c.b16 %v1385, %v1381
    %v1718 = vpack.c.b16 %v1386, %v1382
    %v1719 = vpack.c.b16 %v1391, %v1387
    %v1720 = vpack.c.b16 %v1392, %v1388
    %v1721 = vpack.c.b16 %v1393, %v1389
    %v1722 = vpack.c.b16 %v1394, %v1390
    %v1723 = vpack.c.b16 %v1399, %v1395
    %v1724 = vpack.c.b16 %v1400, %v1396
    %v1725 = vpack.c.b16 %v1401, %v1397
    %v1726 = vpack.c.b16 %v1402, %v1398
    %v1727 = vpack.c.b16 %v1407, %v1403
    %v1728 = vpack.c.b16 %v1408, %v1404
    %v1729 = vpack.c.b16 %v1409, %v1405
    %v1730 = vpack.c.b16 %v1410, %v1406
    %2051 = vmatprep.subr.bf16.mxu0 %v1412
    %2052 = vmatpush1.bf16.msra.mxu0 %v1411
    %2053 = vmatprep.subr.bf16.mxu0 %v1416
    %2054 = vmatpush1.bf16.msra.mxu0 %v1415
    %2055 = vmatprep.subr.bf16.mxu0 %v1420
    %2056 = vmatpush1.bf16.msra.mxu0 %v1419
    %2057 = vmatprep.subr.bf16.mxu0 %v1424
    %2058 = vmatpush1.bf16.msra.mxu0 %v1423
    %2059 = vmatprep.subr.bf16.mxu0 %v1428
    %2060 = vmatpush1.bf16.msra.mxu0 %v1427
    %2061 = vmatprep.subr.bf16.mxu0 %v1432
    %2062 = vmatpush1.bf16.msra.mxu0 %v1431
    %2063 = vmatprep.subr.bf16.mxu0 %v1436
    %2064 = vmatpush1.bf16.msra.mxu0 %v1435
    %2065 = vmatprep.subr.bf16.mxu0 %v1440
    %2066 = vmatpush1.bf16.msra.mxu0 %v1439
    %2067 = vmatprep.subr.bf16.mxu0 %v1444
    %2068 = vmatpush1.bf16.msra.mxu0 %v1443
    %2069 = vmatprep.subr.bf16.mxu0 %v1448
    %2070 = vmatpush1.bf16.msra.mxu0 %v1447
    %2071 = vmatprep.subr.bf16.mxu0 %v1452
    %2072 = vmatpush1.bf16.msra.mxu0 %v1451
    %2073 = vmatprep.subr.bf16.mxu0 %v1456
    %2074 = vmatpush1.bf16.msra.mxu0 %v1455
    %2075 = vmatprep.subr.bf16.mxu0 %v1460
    %2076 = vmatpush1.bf16.msra.mxu0 %v1459
    %2077 = vmatprep.subr.bf16.mxu0 %v1464
    %2078 = vmatpush1.bf16.msra.mxu0 %v1463
    %2079 = vmatprep.subr.bf16.mxu0 %v1468
    %2080 = vmatpush1.bf16.msra.mxu0 %v1467
    %2081 = vmatprep.subr.bf16.mxu0 %v1472
    %2082 = vmatpush1.bf16.msra.mxu0 %v1471
    %2083 = vmatprep.mubr.bf16.mxu0 %v100
    %2084 = vmatmul.mubr.bf16.gmra.mrb[0].mxu0 %v99
    %v2085 = vpop.f32.mrb[0].mxu0
    %v2086 = vadd.f32 %v434, %v2085
    %v2087 = vpop.f32.mrb[0].mxu0
    %v2088 = vadd.f32 %v438, %v2087
    %v2089 = vpop.f32.mrb[0].mxu0
    %v2090 = vpop.f32.mrb[0].mxu0
    %2091 = vdwg.mxu0
    %2092 = vmatprep.subr.bf16.mxu0 %v1476
    %2093 = vmatpush1.bf16.msra.mxu0 %v1475
    %2094 = vmatprep.subr.bf16.mxu0 %v1480
    %2095 = vmatpush1.bf16.msra.mxu0 %v1479
    %2096 = vmatprep.subr.bf16.mxu0 %v1484
    %2097 = vmatpush1.bf16.msra.mxu0 %v1483
    %2098 = vmatprep.subr.bf16.mxu0 %v1488
    %2099 = vmatpush1.bf16.msra.mxu0 %v1487
    %2100 = vmatprep.subr.bf16.mxu0 %v1492
    %2101 = vmatpush1.bf16.msra.mxu0 %v1491
    %2102 = vmatprep.subr.bf16.mxu0 %v1496
    %2103 = vmatpush1.bf16.msra.mxu0 %v1495
    %2104 = vmatprep.subr.bf16.mxu0 %v1500
    %2105 = vmatpush1.bf16.msra.mxu0 %v1499
    %2106 = vmatprep.subr.bf16.mxu0 %v1504
    %2107 = vmatpush1.bf16.msra.mxu0 %v1503
    %2108 = vmatprep.subr.bf16.mxu0 %v1508
    %2109 = vmatpush1.bf16.msra.mxu0 %v1507
    %2110 = vmatprep.subr.bf16.mxu0 %v1512
    %2111 = vmatpush1.bf16.msra.mxu0 %v1511
    %2112 = vmatprep.subr.bf16.mxu0 %v1516
    %2113 = vmatpush1.bf16.msra.mxu0 %v1515
    %2114 = vmatprep.subr.bf16.mxu0 %v1520
    %2115 = vmatpush1.bf16.msra.mxu0 %v1519
    %2116 = vmatprep.subr.bf16.mxu0 %v1524
    %2117 = vmatpush1.bf16.msra.mxu0 %v1523
    %2118 = vmatprep.subr.bf16.mxu0 %v1528
    %2119 = vmatpush1.bf16.msra.mxu0 %v1527
    %2120 = vmatprep.subr.bf16.mxu0 %v1532
    %2121 = vmatpush1.bf16.msra.mxu0 %v1531
    %2122 = vmatprep.subr.bf16.mxu0 %v1536
    %2123 = vmatpush1.bf16.msra.mxu0 %v1535
    %2124 = vmatprep.mubr.bf16.mxu0 %v102
    %2125 = vmatmul.mubr.bf16.gmra.mrb[0].mxu0 %v101
    %v2126 = vpop.f32.mrb[0].mxu0
    %v2127 = vadd.f32 %v2086, %v2126
    %v2128 = vpop.f32.mrb[0].mxu0
    %v2129 = vadd.f32 %v2088, %v2128
    %v2130 = vpop.f32.mrb[0].mxu0
    %v2131 = vpop.f32.mrb[0].mxu0
    %2132 = vdwg.mxu0
    %2133 = vmatprep.subr.bf16.mxu0 %v1540
    %2134 = vmatpush1.bf16.msra.mxu0 %v1539
    %2135 = vmatprep.subr.bf16.mxu0 %v1544
    %2136 = vmatpush1.bf16.msra.mxu0 %v1543
    %2137 = vmatprep.subr.bf16.mxu0 %v1548
    %2138 = vmatpush1.bf16.msra.mxu0 %v1547
    %2139 = vmatprep.subr.bf16.mxu0 %v1552
    %2140 = vmatpush1.bf16.msra.mxu0 %v1551
    %2141 = vmatprep.subr.bf16.mxu0 %v1556
    %2142 = vmatpush1.bf16.msra.mxu0 %v1555
    %2143 = vmatprep.subr.bf16.mxu0 %v1560
    %2144 = vmatpush1.bf16.msra.mxu0 %v1559
    %2145 = vmatprep.subr.bf16.mxu0 %v1564
    %2146 = vmatpush1.bf16.msra.mxu0 %v1563
    %2147 = vmatprep.subr.bf16.mxu0 %v1568
    %2148 = vmatpush1.bf16.msra.mxu0 %v1567
    %2149 = vmatprep.subr.bf16.mxu0 %v1572
    %2150 = vmatpush1.bf16.msra.mxu0 %v1571
    %2151 = vmatprep.subr.bf16.mxu0 %v1576
    %2152 = vmatpush1.bf16.msra.mxu0 %v1575
    %2153 = vmatprep.subr.bf16.mxu0 %v1580
    %2154 = vmatpush1.bf16.msra.mxu0 %v1579
    %2155 = vmatprep.subr.bf16.mxu0 %v1584
    %2156 = vmatpush1.bf16.msra.mxu0 %v1583
    %2157 = vmatprep.subr.bf16.mxu0 %v1588
    %2158 = vmatpush1.bf16.msra.mxu0 %v1587
    %2159 = vmatprep.subr.bf16.mxu0 %v1592
    %2160 = vmatpush1.bf16.msra.mxu0 %v1591
    %2161 = vmatprep.subr.bf16.mxu0 %v1596
    %2162 = vmatpush1.bf16.msra.mxu0 %v1595
    %2163 = vmatprep.subr.bf16.mxu0 %v1600
    %2164 = vmatpush1.bf16.msra.mxu0 %v1599
    %2165 = vmatprep.mubr.bf16.mxu0 %v104
    %2166 = vmatmul.mubr.bf16.gmra.mrb[0].mxu0 %v103
    %v2167 = vpop.f32.mrb[0].mxu0
    %v2168 = vadd.f32 %v2127, %v2167
    %v2169 = vpop.f32.mrb[0].mxu0
    %v2170 = vadd.f32 %v2129, %v2169
    %v2171 = vpop.f32.mrb[0].mxu0
    %v2172 = vpop.f32.mrb[0].mxu0
    %2173 = vdwg.mxu0
    %2174 = vmatprep.subr.bf16.mxu0 %v1604
    %2175 = vmatpush1.bf16.msra.mxu0 %v1603
    %2176 = vmatprep.subr.bf16.mxu0 %v1608
    %2177 = vmatpush1.bf16.msra.mxu0 %v1607
    %2178 = vmatprep.subr.bf16.mxu0 %v1612
    %2179 = vmatpush1.bf16.msra.mxu0 %v1611
    %2180 = vmatprep.subr.bf16.mxu0 %v1616
    %2181 = vmatpush1.bf16.msra.mxu0 %v1615
    %2182 = vmatprep.subr.bf16.mxu0 %v1620
    %2183 = vmatpush1.bf16.msra.mxu0 %v1619
    %2184 = vmatprep.subr.bf16.mxu0 %v1624
    %2185 = vmatpush1.bf16.msra.mxu0 %v1623
    %2186 = vmatprep.subr.bf16.mxu0 %v1628
    %2187 = vmatpush1.bf16.msra.mxu0 %v1627
    %2188 = vmatprep.subr.bf16.mxu0 %v1632
    %2189 = vmatpush1.bf16.msra.mxu0 %v1631
    %2190 = vmatprep.subr.bf16.mxu0 %v1636
    %2191 = vmatpush1.bf16.msra.mxu0 %v1635
    %2192 = vmatprep.subr.bf16.mxu0 %v1640
    %2193 = vmatpush1.bf16.msra.mxu0 %v1639
    %2194 = vmatprep.subr.bf16.mxu0 %v1644
    %2195 = vmatpush1.bf16.msra.mxu0 %v1643
    %2196 = vmatprep.subr.bf16.mxu0 %v1648
    %2197 = vmatpush1.bf16.msra.mxu0 %v1647
    %2198 = vmatprep.subr.bf16.mxu0 %v1652
    %2199 = vmatpush1.bf16.msra.mxu0 %v1651
    %2200 = vmatprep.subr.bf16.mxu0 %v1656
    %2201 = vmatpush1.bf16.msra.mxu0 %v1655
    %2202 = vmatprep.subr.bf16.mxu0 %v1660
    %2203 = vmatpush1.bf16.msra.mxu0 %v1659
    %2204 = vmatprep.subr.bf16.mxu0 %v1664
    %2205 = vmatpush1.bf16.msra.mxu0 %v1663
    %2206 = vmatprep.mubr.bf16.mxu0 %v106
    %2207 = vmatmul.mubr.bf16.gmra.mrb[0].mxu0 %v105
    %v2208 = vpop.f32.mrb[0].mxu0
    %v2209 = vadd.f32 %v2168, %v2208
    %v2210 = vpop.f32.mrb[0].mxu0
    %v2211 = vadd.f32 %v2170, %v2210
    %v2212 = vpop.f32.mrb[0].mxu0
    %v2213 = vpop.f32.mrb[0].mxu0
    %2214 = vdwg.mxu0
    %2215 = vmatprep.subr.bf16.mxu0 %v1668
    %2216 = vmatpush1.bf16.msra.mxu0 %v1667
    %2217 = vmatprep.subr.bf16.mxu0 %v1672
    %2218 = vmatpush1.bf16.msra.mxu0 %v1671
    %2219 = vmatprep.subr.bf16.mxu0 %v1676
    %2220 = vmatpush1.bf16.msra.mxu0 %v1675
    %2221 = vmatprep.subr.bf16.mxu0 %v1680
    %2222 = vmatpush1.bf16.msra.mxu0 %v1679
    %2223 = vmatprep.subr.bf16.mxu0 %v1684
    %2224 = vmatpush1.bf16.msra.mxu0 %v1683
    %2225 = vmatprep.subr.bf16.mxu0 %v1688
    %2226 = vmatpush1.bf16.msra.mxu0 %v1687
    %2227 = vmatprep.subr.bf16.mxu0 %v1692
    %2228 = vmatpush1.bf16.msra.mxu0 %v1691
    %2229 = vmatprep.subr.bf16.mxu0 %v1696
    %2230 = vmatpush1.bf16.msra.mxu0 %v1695
    %2231 = vmatprep.subr.bf16.mxu0 %v1700
    %2232 = vmatpush1.bf16.msra.mxu0 %v1699
    %2233 = vmatprep.subr.bf16.mxu0 %v1704
    %2234 = vmatpush1.bf16.msra.mxu0 %v1703
    %2235 = vmatprep.subr.bf16.mxu0 %v1708
    %2236 = vmatpush1.bf16.msra.mxu0 %v1707
    %2237 = vmatprep.subr.bf16.mxu0 %v1712
    %2238 = vmatpush1.bf16.msra.mxu0 %v1711
    %2239 = vmatprep.subr.bf16.mxu0 %v1716
    %2240 = vmatpush1.bf16.msra.mxu0 %v1715
    %2241 = vmatprep.subr.bf16.mxu0 %v1720
    %2242 = vmatpush1.bf16.msra.mxu0 %v1719
    %2243 = vmatprep.subr.bf16.mxu0 %v1724
    %2244 = vmatpush1.bf16.msra.mxu0 %v1723
    %2245 = vmatprep.subr.bf16.mxu0 %v1728
    %2246 = vmatpush1.bf16.msra.mxu0 %v1727
    %2247 = vmatprep.mubr.bf16.mxu0 %v108
    %2248 = vmatmul.mubr.bf16.gmra.mrb[0].mxu0 %v107
    %v2249 = vpop.f32.mrb[0].mxu0
    %v2250 = vadd.f32 %v2209, %v2249
    %v2251 = vpop.f32.mrb[0].mxu0
    %v2252 = vadd.f32 %v2211, %v2251
    %v2253 = vpop.f32.mrb[0].mxu0
    %v2254 = vpop.f32.mrb[0].mxu0
    %2255 = vdwg.mxu0
    %2256 = vmatprep.subr.bf16.mxu0 %v1414
    %2257 = vmatpush1.bf16.msra.mxu0 %v1413
    %2258 = vmatprep.subr.bf16.mxu0 %v1418
    %2259 = vmatpush1.bf16.msra.mxu0 %v1417
    %2260 = vmatprep.subr.bf16.mxu0 %v1422
    %2261 = vmatpush1.bf16.msra.mxu0 %v1421
    %2262 = vmatprep.subr.bf16.mxu0 %v1426
    %2263 = vmatpush1.bf16.msra.mxu0 %v1425
    %2264 = vmatprep.subr.bf16.mxu0 %v1430
    %2265 = vmatpush1.bf16.msra.mxu0 %v1429
    %2266 = vmatprep.subr.bf16.mxu0 %v1434
    %2267 = vmatpush1.bf16.msra.mxu0 %v1433
    %2268 = vmatprep.subr.bf16.mxu0 %v1438
    %2269 = vmatpush1.bf16.msra.mxu0 %v1437
    %2270 = vmatprep.subr.bf16.mxu0 %v1442
    %2271 = vmatpush1.bf16.msra.mxu0 %v1441
    %2272 = vmatprep.subr.bf16.mxu0 %v1446
    %2273 = vmatpush1.bf16.msra.mxu0 %v1445
    %2274 = vmatprep.subr.bf16.mxu0 %v1450
    %2275 = vmatpush1.bf16.msra.mxu0 %v1449
    %2276 = vmatprep.subr.bf16.mxu0 %v1454
    %2277 = vmatpush1.bf16.msra.mxu0 %v1453
    %2278 = vmatprep.subr.bf16.mxu0 %v1458
    %2279 = vmatpush1.bf16.msra.mxu0 %v1457
    %2280 = vmatprep.subr.bf16.mxu0 %v1462
    %2281 = vmatpush1.bf16.msra.mxu0 %v1461
    %2282 = vmatprep.subr.bf16.mxu0 %v1466
    %2283 = vmatpush1.bf16.msra.mxu0 %v1465
    %2284 = vmatprep.subr.bf16.mxu0 %v1470
    %2285 = vmatpush1.bf16.msra.mxu0 %v1469
    %2286 = vmatprep.subr.bf16.mxu0 %v1474
    %2287 = vmatpush1.bf16.msra.mxu0 %v1473
    %2288 = vmatprep.mubr.bf16.mxu0 %v100
    %2289 = vmatmul.mubr.bf16.gmra.mrb[0].mxu0 %v99
    %v2290 = vpop.f32.mrb[0].mxu0
    %v2291 = vadd.f32 %v442, %v2290
    %v2292 = vpop.f32.mrb[0].mxu0
    %v2293 = vadd.f32 %v446, %v2292
    %v2294 = vpop.f32.mrb[0].mxu0
    %v2295 = vpop.f32.mrb[0].mxu0
    %2296 = vdwg.mxu0
    %2297 = vmatprep.subr.bf16.mxu0 %v1478
    %2298 = vmatpush1.bf16.msra.mxu0 %v1477
    %2299 = vmatprep.subr.bf16.mxu0 %v1482
    %2300 = vmatpush1.bf16.msra.mxu0 %v1481
    %2301 = vmatprep.subr.bf16.mxu0 %v1486
    %2302 = vmatpush1.bf16.msra.mxu0 %v1485
    %2303 = vmatprep.subr.bf16.mxu0 %v1490
    %2304 = vmatpush1.bf16.msra.mxu0 %v1489
    %2305 = vmatprep.subr.bf16.mxu0 %v1494
    %2306 = vmatpush1.bf16.msra.mxu0 %v1493
    %2307 = vmatprep.subr.bf16.mxu0 %v1498
    %2308 = vmatpush1.bf16.msra.mxu0 %v1497
    %2309 = vmatprep.subr.bf16.mxu0 %v1502
    %2310 = vmatpush1.bf16.msra.mxu0 %v1501
    %2311 = vmatprep.subr.bf16.mxu0 %v1506
    %2312 = vmatpush1.bf16.msra.mxu0 %v1505
    %2313 = vmatprep.subr.bf16.mxu0 %v1510
    %2314 = vmatpush1.bf16.msra.mxu0 %v1509
    %2315 = vmatprep.subr.bf16.mxu0 %v1514
    %2316 = vmatpush1.bf16.msra.mxu0 %v1513
    %2317 = vmatprep.subr.bf16.mxu0 %v1518
    %2318 = vmatpush1.bf16.msra.mxu0 %v1517
    %2319 = vmatprep.subr.bf16.mxu0 %v1522
    %2320 = vmatpush1.bf16.msra.mxu0 %v1521
    %2321 = vmatprep.subr.bf16.mxu0 %v1526
    %2322 = vmatpush1.bf16.msra.mxu0 %v1525
    %2323 = vmatprep.subr.bf16.mxu0 %v1530
    %2324 = vmatpush1.bf16.msra.mxu0 %v1529
    %2325 = vmatprep.subr.bf16.mxu0 %v1534
    %2326 = vmatpush1.bf16.msra.mxu0 %v1533
    %2327 = vmatprep.subr.bf16.mxu0 %v1538
    %2328 = vmatpush1.bf16.msra.mxu0 %v1537
    %2329 = vmatprep.mubr.bf16.mxu0 %v102
    %2330 = vmatmul.mubr.bf16.gmra.mrb[0].mxu0 %v101
    %v2331 = vpop.f32.mrb[0].mxu0
    %v2332 = vadd.f32 %v2291, %v2331
    %v2333 = vpop.f32.mrb[0].mxu0
    %v2334 = vadd.f32 %v2293, %v2333
    %v2335 = vpop.f32.mrb[0].mxu0
    %v2336 = vpop.f32.mrb[0].mxu0
    %2337 = vdwg.mxu0
    %2338 = vmatprep.subr.bf16.mxu0 %v1542
    %2339 = vmatpush1.bf16.msra.mxu0 %v1541
    %2340 = vmatprep.subr.bf16.mxu0 %v1546
    %2341 = vmatpush1.bf16.msra.mxu0 %v1545
    %2342 = vmatprep.subr.bf16.mxu0 %v1550
    %2343 = vmatpush1.bf16.msra.mxu0 %v1549
    %2344 = vmatprep.subr.bf16.mxu0 %v1554
    %2345 = vmatpush1.bf16.msra.mxu0 %v1553
    %2346 = vmatprep.subr.bf16.mxu0 %v1558
    %2347 = vmatpush1.bf16.msra.mxu0 %v1557
    %2348 = vmatprep.subr.bf16.mxu0 %v1562
    %2349 = vmatpush1.bf16.msra.mxu0 %v1561
    %2350 = vmatprep.subr.bf16.mxu0 %v1566
    %2351 = vmatpush1.bf16.msra.mxu0 %v1565
    %2352 = vmatprep.subr.bf16.mxu0 %v1570
    %2353 = vmatpush1.bf16.msra.mxu0 %v1569
    %2354 = vmatprep.subr.bf16.mxu0 %v1574
    %2355 = vmatpush1.bf16.msra.mxu0 %v1573
    %2356 = vmatprep.subr.bf16.mxu0 %v1578
    %2357 = vmatpush1.bf16.msra.mxu0 %v1577
    %2358 = vmatprep.subr.bf16.mxu0 %v1582
    %2359 = vmatpush1.bf16.msra.mxu0 %v1581
    %2360 = vmatprep.subr.bf16.mxu0 %v1586
    %2361 = vmatpush1.bf16.msra.mxu0 %v1585
    %2362 = vmatprep.subr.bf16.mxu0 %v1590
    %2363 = vmatpush1.bf16.msra.mxu0 %v1589
    %2364 = vmatprep.subr.bf16.mxu0 %v1594
    %2365 = vmatpush1.bf16.msra.mxu0 %v1593
    %2366 = vmatprep.subr.bf16.mxu0 %v1598
    %2367 = vmatpush1.bf16.msra.mxu0 %v1597
    %2368 = vmatprep.subr.bf16.mxu0 %v1602
    %2369 = vmatpush1.bf16.msra.mxu0 %v1601
    %2370 = vmatprep.mubr.bf16.mxu0 %v104
    %2371 = vmatmul.mubr.bf16.gmra.mrb[0].mxu0 %v103
    %v2372 = vpop.f32.mrb[0].mxu0
    %v2373 = vadd.f32 %v2332, %v2372
    %v2374 = vpop.f32.mrb[0].mxu0
    %v2375 = vadd.f32 %v2334, %v2374
    %v2376 = vpop.f32.mrb[0].mxu0
    %v2377 = vpop.f32.mrb[0].mxu0
    %2378 = vdwg.mxu0
    %2379 = vmatprep.subr.bf16.mxu0 %v1606
    %2380 = vmatpush1.bf16.msra.mxu0 %v1605
    %2381 = vmatprep.subr.bf16.mxu0 %v1610
    %2382 = vmatpush1.bf16.msra.mxu0 %v1609
    %2383 = vmatprep.subr.bf16.mxu0 %v1614
    %2384 = vmatpush1.bf16.msra.mxu0 %v1613
    %2385 = vmatprep.subr.bf16.mxu0 %v1618
    %2386 = vmatpush1.bf16.msra.mxu0 %v1617
    %2387 = vmatprep.subr.bf16.mxu0 %v1622
    %2388 = vmatpush1.bf16.msra.mxu0 %v1621
    %2389 = vmatprep.subr.bf16.mxu0 %v1626
    %2390 = vmatpush1.bf16.msra.mxu0 %v1625
    %2391 = vmatprep.subr.bf16.mxu0 %v1630
    %2392 = vmatpush1.bf16.msra.mxu0 %v1629
    %2393 = vmatprep.subr.bf16.mxu0 %v1634
    %2394 = vmatpush1.bf16.msra.mxu0 %v1633
    %2395 = vmatprep.subr.bf16.mxu0 %v1638
    %2396 = vmatpush1.bf16.msra.mxu0 %v1637
    %2397 = vmatprep.subr.bf16.mxu0 %v1642
    %2398 = vmatpush1.bf16.msra.mxu0 %v1641
    %2399 = vmatprep.subr.bf16.mxu0 %v1646
    %2400 = vmatpush1.bf16.msra.mxu0 %v1645
    %2401 = vmatprep.subr.bf16.mxu0 %v1650
    %2402 = vmatpush1.bf16.msra.mxu0 %v1649
    %2403 = vmatprep.subr.bf16.mxu0 %v1654
    %2404 = vmatpush1.bf16.msra.mxu0 %v1653
    %2405 = vmatprep.subr.bf16.mxu0 %v1658
    %2406 = vmatpush1.bf16.msra.mxu0 %v1657
    %2407 = vmatprep.subr.bf16.mxu0 %v1662
    %2408 = vmatpush1.bf16.msra.mxu0 %v1661
    %2409 = vmatprep.subr.bf16.mxu0 %v1666
    %2410 = vmatpush1.bf16.msra.mxu0 %v1665
    %2411 = vmatprep.mubr.bf16.mxu0 %v106
    %2412 = vmatmul.mubr.bf16.gmra.mrb[0].mxu0 %v105
    %v2413 = vpop.f32.mrb[0].mxu0
    %v2414 = vadd.f32 %v2373, %v2413
    %v2415 = vpop.f32.mrb[0].mxu0
    %v2416 = vadd.f32 %v2375, %v2415
    %v2417 = vpop.f32.mrb[0].mxu0
    %v2418 = vpop.f32.mrb[0].mxu0
    %2419 = vdwg.mxu0
    %2420 = vmatprep.subr.bf16.mxu0 %v1670
    %2421 = vmatpush1.bf16.msra.mxu0 %v1669
    %2422 = vmatprep.subr.bf16.mxu0 %v1674
    %2423 = vmatpush1.bf16.msra.mxu0 %v1673
    %2424 = vmatprep.subr.bf16.mxu0 %v1678
    %2425 = vmatpush1.bf16.msra.mxu0 %v1677
    %2426 = vmatprep.subr.bf16.mxu0 %v1682
    %2427 = vmatpush1.bf16.msra.mxu0 %v1681
    %2428 = vmatprep.subr.bf16.mxu0 %v1686
    %2429 = vmatpush1.bf16.msra.mxu0 %v1685
    %2430 = vmatprep.subr.bf16.mxu0 %v1690
    %2431 = vmatpush1.bf16.msra.mxu0 %v1689
    %2432 = vmatprep.subr.bf16.mxu0 %v1694
    %2433 = vmatpush1.bf16.msra.mxu0 %v1693
    %2434 = vmatprep.subr.bf16.mxu0 %v1698
    %2435 = vmatpush1.bf16.msra.mxu0 %v1697
    %2436 = vmatprep.subr.bf16.mxu0 %v1702
    %2437 = vmatpush1.bf16.msra.mxu0 %v1701
    %2438 = vmatprep.subr.bf16.mxu0 %v1706
    %2439 = vmatpush1.bf16.msra.mxu0 %v1705
    %2440 = vmatprep.subr.bf16.mxu0 %v1710
    %2441 = vmatpush1.bf16.msra.mxu0 %v1709
    %2442 = vmatprep.subr.bf16.mxu0 %v1714
    %2443 = vmatpush1.bf16.msra.mxu0 %v1713
    %2444 = vmatprep.subr.bf16.mxu0 %v1718
    %2445 = vmatpush1.bf16.msra.mxu0 %v1717
    %2446 = vmatprep.subr.bf16.mxu0 %v1722
    %2447 = vmatpush1.bf16.msra.mxu0 %v1721
    %2448 = vmatprep.subr.bf16.mxu0 %v1726
    %2449 = vmatpush1.bf16.msra.mxu0 %v1725
    %2450 = vmatprep.subr.bf16.mxu0 %v1730
    %2451 = vmatpush1.bf16.msra.mxu0 %v1729
    %2452 = vmatprep.mubr.bf16.mxu0 %v108
    %2453 = vmatmul.mubr.bf16.gmra.mrb[0].mxu0 %v107
    %v2454 = vpop.f32.mrb[0].mxu0
    %v2455 = vadd.f32 %v2414, %v2454
    %v2456 = vpop.f32.mrb[0].mxu0
    %v2457 = vadd.f32 %v2416, %v2456
    %v2458 = vpop.f32.mrb[0].mxu0
    %v2459 = vpop.f32.mrb[0].mxu0
    %2460 = vdwg.mxu0
    %v2465 = vcombine.low %v2250, %v2252
    %v2466 = vcombine.low %v2455, %v2457
    %v2468 = vunpack.c.l.s4 1983009808
    %v2469 = vunpack.c.0.s8 %v2468
    %v2470 = vlaneseq
    %v2471 = vshrl.u32 %v2470, 7
    %v2472 = vsub.s32 %v2469, %v2471
    %v2473 = vrot.slane %v2465, %v2472
    %v2475 = vunpack.c.l.s4 1983009808
    %v2476 = vunpack.c.0.s8 %v2475
    %v2477 = vlaneseq
    %v2478 = vshrl.u32 %v2477, 7
    %v2479 = vsub.s32 %v2476, %v2478
    %v2480 = vrot.slane %v2466, %v2479
    %v2481 = vcombine.low %v2473, %v2480
    %2483 = vst [vmem:[#allocation7] sm:$0xff] %v2481
    // Predicated region
    $region22: #{n_vcnn_lstm_forward.5} parent=1 // pred_check
      _
    $region23: #{n_vcnn_lstm_forward.5} parent=1 // pred_check_branch
      %2485 = sbr.rel (0) target = $region25
    $region24: #{n_vcnn_lstm_forward.5} parent=1 // pred_region
      %s2487 = ssub.s32 128, 128
      %2488 = vsyncadd [#allocation4], %s2487
      %s2490 = sshll.u32 [#allocation7], 4
      %s2491 = int_to_ptr.vmem [resolvable:$true] %s2490
      %2493 = dma.vmem_to_hbm [thread:$0]  %s2491, 128, %s3, [#allocation4]
    $region25: #{n_vcnn_lstm_forward.5} parent=1 // pred_fallthru
      _
    // Predicated region
    $region26: #{n_vcnn_lstm_forward.5} parent=1 // pred_check
      _
    $region27: #{n_vcnn_lstm_forward.5} parent=1 // pred_check_branch
      %2495 = sbr.rel (0) target = $region29
    $region28: #{n_vcnn_lstm_forward.5} parent=1 // pred_region
      %2496 = dma.done [#allocation4], 128
    $region29: #{n_vcnn_lstm_forward.5} parent=1 // pred_fallthru
      _
    %2497 = vsyncpa [#allocation3], 1
    %2498 = vsyncpa [#allocation6], 1
    %2499 = vsyncpa [#allocation4], 1

</llo_original>
